<compile_context>
chip_gen: v7x
topology: tpu7x:2x2x1
jax: 0.10.0
libtpu: 0.0.40
codegen_flags: <defaults>
</compile_context>

<pallas_src>
import jax
import jax.numpy as jnp
from jax.experimental import pallas as pl
from jax.experimental.pallas import tpu as pltpu


# ---------------------------------------------------------------------------
# Pallas kernels
# ---------------------------------------------------------------------------
def _conv_pool_bn_kernel(p_ref, w_ref, b_ref, s_ref, t_ref, o_ref):
    """Fused conv (matmul over im2col taps) + 2x2 maxpool + ELU + BN affine.

    p_ref: [4, 1, M, K] bf16  -- one im2col patch matrix per 2x2 pool tap
    w_ref: [K, N]       bf16
    b/s/t: [1, N]       f32   -- conv bias, folded-BN scale, folded-BN shift
    o_ref: [1, M, N]    bf16
    """
    w = w_ref[...]
    # Max over the four pool-window taps on the raw conv outputs; valid since
    # the bias is shared across taps and ELU is monotone increasing.
    m = jnp.dot(p_ref[0, 0], w, preferred_element_type=jnp.float32)
    for t in range(1, 4):
        m = jnp.maximum(m, jnp.dot(p_ref[t, 0], w,
                                   preferred_element_type=jnp.float32))
    y = m + b_ref[...]
    # ELU(alpha=1); clamp the exp argument of the unselected branch.
    y = jnp.where(y > 0.0, y, jnp.exp(jnp.minimum(y, 0.0)) - 1.0)
    o_ref[0] = (y * s_ref[...] + t_ref[...]).astype(o_ref.dtype)


def _fc_head_kernel(x_ref, w1_ref, b1_ref, s1_ref, t1_ref, w2_ref, b2_ref,
                    o_ref):
    """fc1 + ELU + BN1d affine + fc2; the hidden activation stays in VMEM."""
    h = jnp.dot(x_ref[...], w1_ref[...], preferred_element_type=jnp.float32)
    h = h + b1_ref[...]
    h = jnp.where(h > 0.0, h, jnp.exp(jnp.minimum(h, 0.0)) - 1.0)
    h = h * s1_ref[...] + t1_ref[...]
    o_ref[...] = jnp.dot(h.astype(w2_ref.dtype), w2_ref[...],
                         preferred_element_type=jnp.float32) + b2_ref[...]


# ---------------------------------------------------------------------------
# Wrappers around pallas_call
# ---------------------------------------------------------------------------
_VMEM = pl.BlockSpec(memory_space=pltpu.MemorySpace.VMEM)


def conv_pool_bn(x, w, b, scale, shift, *, k):
    """x: [B, H, W, Cin] bf16 -> [B, Hp, Wp, N] bf16 (valid conv, pool 2x2, BN)."""
    B, H, W, Cin = x.shape
    Hp, Wp = (H - k + 1) // 2, (W - k + 1) // 2
    K, N = w.shape
    assert K == k * k * Cin, (K, k, Cin)

    # One im2col patch matrix per pool-window tap (a, c) in {0,1}^2, built with
    # XLA strided slices of the compact NHWC activation (channels on lanes).
    taps = []
    for a in (0, 1):
        for c in (0, 1):
            pieces = []
            for di in range(k):
                for dj in range(k):
                    r0, c0 = a + di, c + dj
                    pieces.append(
                        x[:, r0:r0 + 2 * Hp - 1:2, c0:c0 + 2 * Wp - 1:2, :])
            taps.append(jnp.concatenate(pieces, axis=-1)
                        .reshape(B, Hp * Wp, K))
    p = jnp.stack(taps, axis=0)                           # [4, B, Hp*Wp, K]

    out = pl.pallas_call(
        _conv_pool_bn_kernel,
        out_shape=jax.ShapeDtypeStruct((B, Hp * Wp, N), jnp.bfloat16),
        grid=(B,),
        in_specs=[
            pl.BlockSpec((4, 1, Hp * Wp, K), lambda i: (0, i, 0, 0)),
            pl.BlockSpec((K, N), lambda i: (0, 0)),
            pl.BlockSpec((1, N), lambda i: (0, 0)),
            pl.BlockSpec((1, N), lambda i: (0, 0)),
            pl.BlockSpec((1, N), lambda i: (0, 0)),
        ],
        out_specs=pl.BlockSpec((1, Hp * Wp, N), lambda i: (i, 0, 0)),
        compiler_params=pltpu.CompilerParams(
            dimension_semantics=("parallel",)),
    )(p, w, b, scale, shift)
    return out.reshape(B, Hp, Wp, N)


def fc_head(x, w1, b1, s1, t1, w2, b2):
    B = x.shape[0]
    return pl.pallas_call(
        _fc_head_kernel,
        out_shape=jax.ShapeDtypeStruct((B, w2.shape[1]), jnp.float32),
        in_specs=[_VMEM] * 7,
        out_specs=_VMEM,
    )(x, w1, b1, s1, t1, w2, b2)


# ---------------------------------------------------------------------------
# Parameters (deterministic, synthetic; generated at true PyTorch shapes, then
# zero-padded / permuted into the lane-dense kernel layouts)
# ---------------------------------------------------------------------------
C1, C2, C3, F1, NCLS = 100, 150, 250, 350, 43        # true channel counts
P1, P2, P3, PF1, PCLS = 128, 256, 256, 384, 128      # padded to 128-multiples
_EPS = 1e-5                                           # PyTorch BatchNorm eps


def _pad_to(a, n, axis):
    pad = [(0, 0)] * a.ndim
    pad[axis] = (0, n - a.shape[axis])
    return jnp.pad(a, pad)


def init_params(key):
    ks = jax.random.split(key, 14)

    def w_init(k, shape):
        return jax.random.normal(k, shape, jnp.float32) / jnp.sqrt(float(shape[0]))

    def b_init(k, n):
        return jax.random.normal(k, (n,), jnp.float32) * 0.01

    def bn_init(k, n):
        k1, k2, k3, k4 = jax.random.split(k, 4)
        gamma = jax.random.uniform(k1, (n,), jnp.float32, 0.5, 1.5)
        beta = jax.random.normal(k2, (n,), jnp.float32) * 0.1
        mean = jax.random.normal(k3, (n,), jnp.float32) * 0.1
        var = jax.random.uniform(k4, (n,), jnp.float32, 0.5, 1.5)
        scale = gamma / jnp.sqrt(var + _EPS)          # eval-mode BN -> affine
        shift = beta - mean * scale
        return scale, shift

    def vec(v, n):                                    # zero-pad, shape [1, n], f32
        return _pad_to(v, n, 0).reshape(1, n)

    p = {}

    # conv1: 3 -> 100 (N padded to 128), k=5, K rows ordered (kh, kw, cin).
    w1 = w_init(ks[0], (5 * 5 * 3, C1))
    s1, t1 = bn_init(ks[2], C1)
    p['c1'] = (_pad_to(w1, P1, 1).astype(jnp.bfloat16),
               vec(b_init(ks[1], C1), P1), vec(s1, P1), vec(t1, P1))

    # conv2: 100 -> 150, k=3.  The incoming activation has 128 (padded)
    # channels, so pad the K rows per tap (100 -> 128) and N 150 -> 256.
    w2 = w_init(ks[3], (3 * 3 * C1, C2))
    w2 = _pad_to(w2.reshape(9, C1, C2), P1, 1).reshape(9 * P1, C2)
    s2, t2 = bn_init(ks[5], C2)
    p['c2'] = (_pad_to(w2, P2, 1).astype(jnp.bfloat16),
               vec(b_init(ks[4], C2), P2), vec(s2, P2), vec(t2, P2))

    # conv3: 150 -> 250, k=1.  Pad K 150 -> 256 and N 250 -> 256.
    w3 = w_init(ks[6], (C2, C3))
    s3, t3 = bn_init(ks[8], C3)
    p['c3'] = (_pad_to(_pad_to(w3, P2, 0), P3, 1).astype(jnp.bfloat16),
               vec(b_init(ks[7], C3), P3), vec(s3, P3), vec(t3, P3))

    # fc1: 250*3*3 -> 350.  PyTorch flattens NCHW (c, h, w); our activation is
    # flattened NHWC with padded channels (h, w, c_pad), so permute the K rows
    # once here (zero runtime cost), pad c 250 -> 256 and N 350 -> 384.
    wf1 = w_init(ks[9], (C3 * 3 * 3, F1))
    wf1 = wf1.reshape(C3, 3, 3, F1).transpose(1, 2, 0, 3)       # (h, w, c, N)
    wf1 = _pad_to(wf1, P3, 2).reshape(3 * 3 * P3, F1)
    sf, tf = bn_init(ks[11], F1)
    p['f1'] = (_pad_to(wf1, PF1, 1).astype(jnp.bfloat16),
               vec(b_init(ks[10], F1), PF1), vec(sf, PF1), vec(tf, PF1))

    # fc2: 350 -> 43.  Pad K 350 -> 384 and N 43 -> 128 (logits sliced later).
    wf2 = w_init(ks[12], (F1, NCLS))
    p['f2'] = (_pad_to(_pad_to(wf2, PF1, 0), PCLS, 1).astype(jnp.bfloat16),
               vec(b_init(ks[13], NCLS), PCLS))

    return p


# ---------------------------------------------------------------------------
# Forward pass (inference mode)
# ---------------------------------------------------------------------------
def gtsrb_forward(params, x_nchw):
    # TODO(synk): Dropout(p=0.5) is eval-mode identity here (no RNG masking).
    x = jnp.transpose(x_nchw, (0, 2, 3, 1)).astype(jnp.bfloat16)  # NCHW -> NHWC

    y = conv_pool_bn(x, *params['c1'], k=5)     # [B, 14, 14, 128]
    y = conv_pool_bn(y, *params['c2'], k=3)     # [B,  6,  6, 256]
    y = conv_pool_bn(y, *params['c3'], k=1)     # [B,  3,  3, 256]

    B = y.shape[0]
    y = y.reshape(B, 3 * 3 * P3)                # NHWC flatten (wf1 pre-permuted)
    logits = fc_head(y, *params['f1'], *params['f2'])             # [B, 128] f32
    return logits[:, :NCLS]                                       # [B, 43]


if __name__ == "__main__":
    key = jax.random.PRNGKey(0)
    kp, kx = jax.random.split(key)
    params = init_params(kp)
    # GtsrbNet's fc1 (250*3*3) implies 32x32 RGB inputs; batch = 2.
    x = jax.random.normal(kx, (2, 3, 32, 32), jnp.float32)

    out = jax.jit(gtsrb_forward)(params, x)
    out = jax.block_until_ready(out)

    assert out.shape == (2, 43), out.shape
    assert bool(jnp.all(jnp.isfinite(out)))
    print("KERNEL_OK")
</pallas_src>

<mosaic_0001>
module attributes {stable_mosaic.version = 11 : i64} {
  func.func @_conv_pool_bn_kernel(%arg0: i32, %arg1: memref<4x1x196x75xbf16, #tpu.memory_space<vmem>>, %arg2: memref<75x128xbf16, #tpu.memory_space<vmem>>, %arg3: memref<1x128xf32, #tpu.memory_space<vmem>>, %arg4: memref<1x128xf32, #tpu.memory_space<vmem>>, %arg5: memref<1x128xf32, #tpu.memory_space<vmem>>, %arg6: memref<1x196x128xbf16, #tpu.memory_space<vmem>>) attributes {dimension_semantics = [#tpu.dimension_semantics<parallel>], iteration_bounds = array<i64: 2>, scalar_prefetch = 0 : i64, scratch_operands = 0 : i64, tpu.core_type = #tpu.core_type<tc>, window_params = [{transform_indices = @transform_0, window_bounds = array<i64: 4, 1, 196, 75>}, {pipeline_mode = #tpu.pipeline_mode<synchronous>, transform_indices = @transform_1, window_bounds = array<i64: 75, 128>}, {pipeline_mode = #tpu.pipeline_mode<synchronous>, transform_indices = @transform_2, window_bounds = array<i64: 1, 128>}, {pipeline_mode = #tpu.pipeline_mode<synchronous>, transform_indices = @transform_3, window_bounds = array<i64: 1, 128>}, {pipeline_mode = #tpu.pipeline_mode<synchronous>, transform_indices = @transform_4, window_bounds = array<i64: 1, 128>}, {transform_indices = @transform_5, window_bounds = array<i64: 1, 196, 128>}]} {
    %c0 = arith.constant 0 : index
    %c0_0 = arith.constant 0 : index
    %0 = vector.load %arg2[%c0, %c0_0] : memref<75x128xbf16, #tpu.memory_space<vmem>>, vector<75x128xbf16>
    %c0_1 = arith.constant 0 : index
    %c0_2 = arith.constant 0 : index
    %c0_3 = arith.constant 0 : index
    %c0_4 = arith.constant 0 : index
    %1 = vector.load %arg1[%c0_1, %c0_2, %c0_3, %c0_4] : memref<4x1x196x75xbf16, #tpu.memory_space<vmem>>, vector<1x1x196x75xbf16>
    %2 = vector.shape_cast %1 : vector<1x1x196x75xbf16> to vector<196x75xbf16>
    %cst = arith.constant dense<0.000000e+00> : vector<196x128xf32>
    %3 = tpu.matmul %2, %0, %cst {dimension_numbers = #tpu.dot_dimension_numbers<[1], [0], [0], [1], [0, 0, 1, 1], [], []>} : vector<196x75xbf16>, vector<75x128xbf16>, vector<196x128xf32> -> vector<196x128xf32>
    %c1 = arith.constant 1 : index
    %c0_5 = arith.constant 0 : index
    %c0_6 = arith.constant 0 : index
    %c0_7 = arith.constant 0 : index
    %4 = vector.load %arg1[%c1, %c0_5, %c0_6, %c0_7] : memref<4x1x196x75xbf16, #tpu.memory_space<vmem>>, vector<1x1x196x75xbf16>
    %5 = vector.shape_cast %4 : vector<1x1x196x75xbf16> to vector<196x75xbf16>
    %cst_8 = arith.constant dense<0.000000e+00> : vector<196x128xf32>
    %6 = tpu.matmul %5, %0, %cst_8 {dimension_numbers = #tpu.dot_dimension_numbers<[1], [0], [0], [1], [0, 0, 1, 1], [], []>} : vector<196x75xbf16>, vector<75x128xbf16>, vector<196x128xf32> -> vector<196x128xf32>
    %7 = arith.maximumf %3, %6 : vector<196x128xf32>
    %c2 = arith.constant 2 : index
    %c0_9 = arith.constant 0 : index
    %c0_10 = arith.constant 0 : index
    %c0_11 = arith.constant 0 : index
    %8 = vector.load %arg1[%c2, %c0_9, %c0_10, %c0_11] : memref<4x1x196x75xbf16, #tpu.memory_space<vmem>>, vector<1x1x196x75xbf16>
    %9 = vector.shape_cast %8 : vector<1x1x196x75xbf16> to vector<196x75xbf16>
    %cst_12 = arith.constant dense<0.000000e+00> : vector<196x128xf32>
    %10 = tpu.matmul %9, %0, %cst_12 {dimension_numbers = #tpu.dot_dimension_numbers<[1], [0], [0], [1], [0, 0, 1, 1], [], []>} : vector<196x75xbf16>, vector<75x128xbf16>, vector<196x128xf32> -> vector<196x128xf32>
    %11 = arith.maximumf %7, %10 : vector<196x128xf32>
    %c3 = arith.constant 3 : index
    %c0_13 = arith.constant 0 : index
    %c0_14 = arith.constant 0 : index
    %c0_15 = arith.constant 0 : index
    %12 = vector.load %arg1[%c3, %c0_13, %c0_14, %c0_15] : memref<4x1x196x75xbf16, #tpu.memory_space<vmem>>, vector<1x1x196x75xbf16>
    %13 = vector.shape_cast %12 : vector<1x1x196x75xbf16> to vector<196x75xbf16>
    %cst_16 = arith.constant dense<0.000000e+00> : vector<196x128xf32>
    %14 = tpu.matmul %13, %0, %cst_16 {dimension_numbers = #tpu.dot_dimension_numbers<[1], [0], [0], [1], [0, 0, 1, 1], [], []>} : vector<196x75xbf16>, vector<75x128xbf16>, vector<196x128xf32> -> vector<196x128xf32>
    %15 = arith.maximumf %11, %14 : vector<196x128xf32>
    %c0_17 = arith.constant 0 : index
    %c0_18 = arith.constant 0 : index
    %16 = vector.load %arg3[%c0_17, %c0_18] : memref<1x128xf32, #tpu.memory_space<vmem>>, vector<1x128xf32>
    %17 = vector.broadcast %16 : vector<1x128xf32> to vector<196x128xf32>
    %18 = arith.addf %15, %17 : vector<196x128xf32>
    %cst_19 = arith.constant 0.000000e+00 : f32
    %19 = vector.broadcast %cst_19 : f32 to vector<196x128xf32>
    %20 = arith.cmpf ogt, %18, %19 : vector<196x128xf32>
    %cst_20 = arith.constant 0.000000e+00 : f32
    %21 = vector.broadcast %cst_20 : f32 to vector<196x128xf32>
    %22 = arith.minimumf %18, %21 : vector<196x128xf32>
    %23 = math.exp %22 : vector<196x128xf32>
    %cst_21 = arith.constant 1.000000e+00 : f32
    %24 = vector.broadcast %cst_21 : f32 to vector<196x128xf32>
    %25 = arith.subf %23, %24 : vector<196x128xf32>
    %26 = arith.select %20, %18, %25 : vector<196x128xi1>, vector<196x128xf32>
    %c0_22 = arith.constant 0 : index
    %c0_23 = arith.constant 0 : index
    %27 = vector.load %arg4[%c0_22, %c0_23] : memref<1x128xf32, #tpu.memory_space<vmem>>, vector<1x128xf32>
    %28 = vector.broadcast %27 : vector<1x128xf32> to vector<196x128xf32>
    %29 = arith.mulf %26, %28 : vector<196x128xf32>
    %c0_24 = arith.constant 0 : index
    %c0_25 = arith.constant 0 : index
    %30 = vector.load %arg5[%c0_24, %c0_25] : memref<1x128xf32, #tpu.memory_space<vmem>>, vector<1x128xf32>
    %31 = vector.broadcast %30 : vector<1x128xf32> to vector<196x128xf32>
    %32 = arith.addf %29, %31 : vector<196x128xf32>
    %33 = arith.truncf %32 : vector<196x128xf32> to vector<196x128xbf16>
    %c0_26 = arith.constant 0 : index
    %c0_27 = arith.constant 0 : index
    %c0_28 = arith.constant 0 : index
    %34 = vector.load %arg6[%c0_26, %c0_27, %c0_28] : memref<1x196x128xbf16, #tpu.memory_space<vmem>>, vector<1x196x128xbf16>
    %35 = vector.shape_cast %34 : vector<1x196x128xbf16> to vector<196x128xbf16>
    %36 = vector.shape_cast %33 : vector<196x128xbf16> to vector<1x196x128xbf16>
    tpu.vector_store %arg6[%c0_26, %c0_27, %c0_28], %36 {strides = array<i32>} : memref<1x196x128xbf16, #tpu.memory_space<vmem>>, vector<1x196x128xbf16>,
    return
  }
  func.func @transform_0(%arg0: i32) -> (i32, i32, i32, i32) {
    %c0_i32 = arith.constant 0 : i32
    %c0_i32_0 = arith.constant 0 : i32
    %c0_i32_1 = arith.constant 0 : i32
    %c0_i32_2 = arith.constant 0 : i32
    return %c0_i32, %arg0, %c0_i32_0, %c0_i32_1 : i32, i32, i32, i32
  }
  func.func @transform_1(%arg0: i32) -> (i32, i32) {
    %c0_i32 = arith.constant 0 : i32
    %c0_i32_0 = arith.constant 0 : i32
    %c0_i32_1 = arith.constant 0 : i32
    return %c0_i32, %c0_i32_0 : i32, i32
  }
  func.func @transform_2(%arg0: i32) -> (i32, i32) {
    %c0_i32 = arith.constant 0 : i32
    %c0_i32_0 = arith.constant 0 : i32
    %c0_i32_1 = arith.constant 0 : i32
    return %c0_i32, %c0_i32_0 : i32, i32
  }
  func.func @transform_3(%arg0: i32) -> (i32, i32) {
    %c0_i32 = arith.constant 0 : i32
    %c0_i32_0 = arith.constant 0 : i32
    %c0_i32_1 = arith.constant 0 : i32
    return %c0_i32, %c0_i32_0 : i32, i32
  }
  func.func @transform_4(%arg0: i32) -> (i32, i32) {
    %c0_i32 = arith.constant 0 : i32
    %c0_i32_0 = arith.constant 0 : i32
    %c0_i32_1 = arith.constant 0 : i32
    return %c0_i32, %c0_i32_0 : i32, i32
  }
  func.func @transform_5(%arg0: i32) -> (i32, i32, i32) {
    %c0_i32 = arith.constant 0 : i32
    %c0_i32_0 = arith.constant 0 : i32
    %c0_i32_1 = arith.constant 0 : i32
    return %arg0, %c0_i32, %c0_i32_0 : i32, i32, i32
  }
}

module attributes {stable_mosaic.version = 11 : i64} {
  func.func @_conv_pool_bn_kernel(%arg0: i32, %arg1: memref<4x1x36x1152xbf16, #tpu.memory_space<vmem>>, %arg2: memref<1152x256xbf16, #tpu.memory_space<vmem>>, %arg3: memref<1x256xf32, #tpu.memory_space<vmem>>, %arg4: memref<1x256xf32, #tpu.memory_space<vmem>>, %arg5: memref<1x256xf32, #tpu.memory_space<vmem>>, %arg6: memref<1x36x256xbf16, #tpu.memory_space<vmem>>) attributes {dimension_semantics = [#tpu.dimension_semantics<parallel>], iteration_bounds = array<i64: 2>, scalar_prefetch = 0 : i64, scratch_operands = 0 : i64, tpu.core_type = #tpu.core_type<tc>, window_params = [{transform_indices = @transform_0, window_bounds = array<i64: 4, 1, 36, 1152>}, {pipeline_mode = #tpu.pipeline_mode<synchronous>, transform_indices = @transform_1, window_bounds = array<i64: 1152, 256>}, {pipeline_mode = #tpu.pipeline_mode<synchronous>, transform_indices = @transform_2, window_bounds = array<i64: 1, 256>}, {pipeline_mode = #tpu.pipeline_mode<synchronous>, transform_indices = @transform_3, window_bounds = array<i64: 1, 256>}, {pipeline_mode = #tpu.pipeline_mode<synchronous>, transform_indices = @transform_4, window_bounds = array<i64: 1, 256>}, {transform_indices = @transform_5, window_bounds = array<i64: 1, 36, 256>}]} {
    %c0 = arith.constant 0 : index
    %c0_0 = arith.constant 0 : index
    %0 = vector.load %arg2[%c0, %c0_0] : memref<1152x256xbf16, #tpu.memory_space<vmem>>, vector<1152x256xbf16>
    %c0_1 = arith.constant 0 : index
    %c0_2 = arith.constant 0 : index
    %c0_3 = arith.constant 0 : index
    %c0_4 = arith.constant 0 : index
    %1 = vector.load %arg1[%c0_1, %c0_2, %c0_3, %c0_4] : memref<4x1x36x1152xbf16, #tpu.memory_space<vmem>>, vector<1x1x36x1152xbf16>
    %2 = vector.shape_cast %1 : vector<1x1x36x1152xbf16> to vector<36x1152xbf16>
    %cst = arith.constant dense<0.000000e+00> : vector<36x256xf32>
    %3 = tpu.matmul %2, %0, %cst {dimension_numbers = #tpu.dot_dimension_numbers<[1], [0], [0], [1], [0, 0, 1, 1], [], []>} : vector<36x1152xbf16>, vector<1152x256xbf16>, vector<36x256xf32> -> vector<36x256xf32>
    %c1 = arith.constant 1 : index
    %c0_5 = arith.constant 0 : index
    %c0_6 = arith.constant 0 : index
    %c0_7 = arith.constant 0 : index
    %4 = vector.load %arg1[%c1, %c0_5, %c0_6, %c0_7] : memref<4x1x36x1152xbf16, #tpu.memory_space<vmem>>, vector<1x1x36x1152xbf16>
    %5 = vector.shape_cast %4 : vector<1x1x36x1152xbf16> to vector<36x1152xbf16>
    %cst_8 = arith.constant dense<0.000000e+00> : vector<36x256xf32>
    %6 = tpu.matmul %5, %0, %cst_8 {dimension_numbers = #tpu.dot_dimension_numbers<[1], [0], [0], [1], [0, 0, 1, 1], [], []>} : vector<36x1152xbf16>, vector<1152x256xbf16>, vector<36x256xf32> -> vector<36x256xf32>
    %7 = arith.maximumf %3, %6 : vector<36x256xf32>
    %c2 = arith.constant 2 : index
    %c0_9 = arith.constant 0 : index
    %c0_10 = arith.constant 0 : index
    %c0_11 = arith.constant 0 : index
    %8 = vector.load %arg1[%c2, %c0_9, %c0_10, %c0_11] : memref<4x1x36x1152xbf16, #tpu.memory_space<vmem>>, vector<1x1x36x1152xbf16>
    %9 = vector.shape_cast %8 : vector<1x1x36x1152xbf16> to vector<36x1152xbf16>
    %cst_12 = arith.constant dense<0.000000e+00> : vector<36x256xf32>
    %10 = tpu.matmul %9, %0, %cst_12 {dimension_numbers = #tpu.dot_dimension_numbers<[1], [0], [0], [1], [0, 0, 1, 1], [], []>} : vector<36x1152xbf16>, vector<1152x256xbf16>, vector<36x256xf32> -> vector<36x256xf32>
    %11 = arith.maximumf %7, %10 : vector<36x256xf32>
    %c3 = arith.constant 3 : index
    %c0_13 = arith.constant 0 : index
    %c0_14 = arith.constant 0 : index
    %c0_15 = arith.constant 0 : index
    %12 = vector.load %arg1[%c3, %c0_13, %c0_14, %c0_15] : memref<4x1x36x1152xbf16, #tpu.memory_space<vmem>>, vector<1x1x36x1152xbf16>
    %13 = vector.shape_cast %12 : vector<1x1x36x1152xbf16> to vector<36x1152xbf16>
    %cst_16 = arith.constant dense<0.000000e+00> : vector<36x256xf32>
    %14 = tpu.matmul %13, %0, %cst_16 {dimension_numbers = #tpu.dot_dimension_numbers<[1], [0], [0], [1], [0, 0, 1, 1], [], []>} : vector<36x1152xbf16>, vector<1152x256xbf16>, vector<36x256xf32> -> vector<36x256xf32>
    %15 = arith.maximumf %11, %14 : vector<36x256xf32>
    %c0_17 = arith.constant 0 : index
    %c0_18 = arith.constant 0 : index
    %16 = vector.load %arg3[%c0_17, %c0_18] : memref<1x256xf32, #tpu.memory_space<vmem>>, vector<1x256xf32>
    %17 = vector.broadcast %16 : vector<1x256xf32> to vector<36x256xf32>
    %18 = arith.addf %15, %17 : vector<36x256xf32>
    %cst_19 = arith.constant 0.000000e+00 : f32
    %19 = vector.broadcast %cst_19 : f32 to vector<36x256xf32>
    %20 = arith.cmpf ogt, %18, %19 : vector<36x256xf32>
    %cst_20 = arith.constant 0.000000e+00 : f32
    %21 = vector.broadcast %cst_20 : f32 to vector<36x256xf32>
    %22 = arith.minimumf %18, %21 : vector<36x256xf32>
    %23 = math.exp %22 : vector<36x256xf32>
    %cst_21 = arith.constant 1.000000e+00 : f32
    %24 = vector.broadcast %cst_21 : f32 to vector<36x256xf32>
    %25 = arith.subf %23, %24 : vector<36x256xf32>
    %26 = arith.select %20, %18, %25 : vector<36x256xi1>, vector<36x256xf32>
    %c0_22 = arith.constant 0 : index
    %c0_23 = arith.constant 0 : index
    %27 = vector.load %arg4[%c0_22, %c0_23] : memref<1x256xf32, #tpu.memory_space<vmem>>, vector<1x256xf32>
    %28 = vector.broadcast %27 : vector<1x256xf32> to vector<36x256xf32>
    %29 = arith.mulf %26, %28 : vector<36x256xf32>
    %c0_24 = arith.constant 0 : index
    %c0_25 = arith.constant 0 : index
    %30 = vector.load %arg5[%c0_24, %c0_25] : memref<1x256xf32, #tpu.memory_space<vmem>>, vector<1x256xf32>
    %31 = vector.broadcast %30 : vector<1x256xf32> to vector<36x256xf32>
    %32 = arith.addf %29, %31 : vector<36x256xf32>
    %33 = arith.truncf %32 : vector<36x256xf32> to vector<36x256xbf16>
    %c0_26 = arith.constant 0 : index
    %c0_27 = arith.constant 0 : index
    %c0_28 = arith.constant 0 : index
    %34 = vector.load %arg6[%c0_26, %c0_27, %c0_28] : memref<1x36x256xbf16, #tpu.memory_space<vmem>>, vector<1x36x256xbf16>
    %35 = vector.shape_cast %34 : vector<1x36x256xbf16> to vector<36x256xbf16>
    %36 = vector.shape_cast %33 : vector<36x256xbf16> to vector<1x36x256xbf16>
    tpu.vector_store %arg6[%c0_26, %c0_27, %c0_28], %36 {strides = array<i32>} : memref<1x36x256xbf16, #tpu.memory_space<vmem>>, vector<1x36x256xbf16>,
    return
  }
  func.func @transform_0(%arg0: i32) -> (i32, i32, i32, i32) {
    %c0_i32 = arith.constant 0 : i32
    %c0_i32_0 = arith.constant 0 : i32
    %c0_i32_1 = arith.constant 0 : i32
    %c0_i32_2 = arith.constant 0 : i32
    return %c0_i32, %arg0, %c0_i32_0, %c0_i32_1 : i32, i32, i32, i32
  }
  func.func @transform_1(%arg0: i32) -> (i32, i32) {
    %c0_i32 = arith.constant 0 : i32
    %c0_i32_0 = arith.constant 0 : i32
    %c0_i32_1 = arith.constant 0 : i32
    return %c0_i32, %c0_i32_0 : i32, i32
  }
  func.func @transform_2(%arg0: i32) -> (i32, i32) {
    %c0_i32 = arith.constant 0 : i32
    %c0_i32_0 = arith.constant 0 : i32
    %c0_i32_1 = arith.constant 0 : i32
    return %c0_i32, %c0_i32_0 : i32, i32
  }
  func.func @transform_3(%arg0: i32) -> (i32, i32) {
    %c0_i32 = arith.constant 0 : i32
    %c0_i32_0 = arith.constant 0 : i32
    %c0_i32_1 = arith.constant 0 : i32
    return %c0_i32, %c0_i32_0 : i32, i32
  }
  func.func @transform_4(%arg0: i32) -> (i32, i32) {
    %c0_i32 = arith.constant 0 : i32
    %c0_i32_0 = arith.constant 0 : i32
    %c0_i32_1 = arith.constant 0 : i32
    return %c0_i32, %c0_i32_0 : i32, i32
  }
  func.func @transform_5(%arg0: i32) -> (i32, i32, i32) {
    %c0_i32 = arith.constant 0 : i32
    %c0_i32_0 = arith.constant 0 : i32
    %c0_i32_1 = arith.constant 0 : i32
    return %arg0, %c0_i32, %c0_i32_0 : i32, i32, i32
  }
}

module attributes {stable_mosaic.version = 11 : i64} {
  func.func @_conv_pool_bn_kernel(%arg0: i32, %arg1: memref<4x1x9x256xbf16, #tpu.memory_space<vmem>>, %arg2: memref<256x256xbf16, #tpu.memory_space<vmem>>, %arg3: memref<1x256xf32, #tpu.memory_space<vmem>>, %arg4: memref<1x256xf32, #tpu.memory_space<vmem>>, %arg5: memref<1x256xf32, #tpu.memory_space<vmem>>, %arg6: memref<1x9x256xbf16, #tpu.memory_space<vmem>>) attributes {dimension_semantics = [#tpu.dimension_semantics<parallel>], iteration_bounds = array<i64: 2>, scalar_prefetch = 0 : i64, scratch_operands = 0 : i64, tpu.core_type = #tpu.core_type<tc>, window_params = [{transform_indices = @transform_0, window_bounds = array<i64: 4, 1, 9, 256>}, {pipeline_mode = #tpu.pipeline_mode<synchronous>, transform_indices = @transform_1, window_bounds = array<i64: 256, 256>}, {pipeline_mode = #tpu.pipeline_mode<synchronous>, transform_indices = @transform_2, window_bounds = array<i64: 1, 256>}, {pipeline_mode = #tpu.pipeline_mode<synchronous>, transform_indices = @transform_3, window_bounds = array<i64: 1, 256>}, {pipeline_mode = #tpu.pipeline_mode<synchronous>, transform_indices = @transform_4, window_bounds = array<i64: 1, 256>}, {transform_indices = @transform_5, window_bounds = array<i64: 1, 9, 256>}]} {
    %c0 = arith.constant 0 : index
    %c0_0 = arith.constant 0 : index
    %0 = vector.load %arg2[%c0, %c0_0] : memref<256x256xbf16, #tpu.memory_space<vmem>>, vector<256x256xbf16>
    %c0_1 = arith.constant 0 : index
    %c0_2 = arith.constant 0 : index
    %c0_3 = arith.constant 0 : index
    %c0_4 = arith.constant 0 : index
    %1 = vector.load %arg1[%c0_1, %c0_2, %c0_3, %c0_4] : memref<4x1x9x256xbf16, #tpu.memory_space<vmem>>, vector<1x1x9x256xbf16>
    %2 = vector.shape_cast %1 : vector<1x1x9x256xbf16> to vector<9x256xbf16>
    %cst = arith.constant dense<0.000000e+00> : vector<9x256xf32>
    %3 = tpu.matmul %2, %0, %cst {dimension_numbers = #tpu.dot_dimension_numbers<[1], [0], [0], [1], [0, 0, 1, 1], [], []>} : vector<9x256xbf16>, vector<256x256xbf16>, vector<9x256xf32> -> vector<9x256xf32>
    %c1 = arith.constant 1 : index
    %c0_5 = arith.constant 0 : index
    %c0_6 = arith.constant 0 : index
    %c0_7 = arith.constant 0 : index
    %4 = vector.load %arg1[%c1, %c0_5, %c0_6, %c0_7] : memref<4x1x9x256xbf16, #tpu.memory_space<vmem>>, vector<1x1x9x256xbf16>
    %5 = vector.shape_cast %4 : vector<1x1x9x256xbf16> to vector<9x256xbf16>
    %cst_8 = arith.constant dense<0.000000e+00> : vector<9x256xf32>
    %6 = tpu.matmul %5, %0, %cst_8 {dimension_numbers = #tpu.dot_dimension_numbers<[1], [0], [0], [1], [0, 0, 1, 1], [], []>} : vector<9x256xbf16>, vector<256x256xbf16>, vector<9x256xf32> -> vector<9x256xf32>
    %7 = arith.maximumf %3, %6 : vector<9x256xf32>
    %c2 = arith.constant 2 : index
    %c0_9 = arith.constant 0 : index
    %c0_10 = arith.constant 0 : index
    %c0_11 = arith.constant 0 : index
    %8 = vector.load %arg1[%c2, %c0_9, %c0_10, %c0_11] : memref<4x1x9x256xbf16, #tpu.memory_space<vmem>>, vector<1x1x9x256xbf16>
    %9 = vector.shape_cast %8 : vector<1x1x9x256xbf16> to vector<9x256xbf16>
    %cst_12 = arith.constant dense<0.000000e+00> : vector<9x256xf32>
    %10 = tpu.matmul %9, %0, %cst_12 {dimension_numbers = #tpu.dot_dimension_numbers<[1], [0], [0], [1], [0, 0, 1, 1], [], []>} : vector<9x256xbf16>, vector<256x256xbf16>, vector<9x256xf32> -> vector<9x256xf32>
    %11 = arith.maximumf %7, %10 : vector<9x256xf32>
    %c3 = arith.constant 3 : index
    %c0_13 = arith.constant 0 : index
    %c0_14 = arith.constant 0 : index
    %c0_15 = arith.constant 0 : index
    %12 = vector.load %arg1[%c3, %c0_13, %c0_14, %c0_15] : memref<4x1x9x256xbf16, #tpu.memory_space<vmem>>, vector<1x1x9x256xbf16>
    %13 = vector.shape_cast %12 : vector<1x1x9x256xbf16> to vector<9x256xbf16>
    %cst_16 = arith.constant dense<0.000000e+00> : vector<9x256xf32>
    %14 = tpu.matmul %13, %0, %cst_16 {dimension_numbers = #tpu.dot_dimension_numbers<[1], [0], [0], [1], [0, 0, 1, 1], [], []>} : vector<9x256xbf16>, vector<256x256xbf16>, vector<9x256xf32> -> vector<9x256xf32>
    %15 = arith.maximumf %11, %14 : vector<9x256xf32>
    %c0_17 = arith.constant 0 : index
    %c0_18 = arith.constant 0 : index
    %16 = vector.load %arg3[%c0_17, %c0_18] : memref<1x256xf32, #tpu.memory_space<vmem>>, vector<1x256xf32>
    %17 = vector.broadcast %16 : vector<1x256xf32> to vector<9x256xf32>
    %18 = arith.addf %15, %17 : vector<9x256xf32>
    %cst_19 = arith.constant 0.000000e+00 : f32
    %19 = vector.broadcast %cst_19 : f32 to vector<9x256xf32>
    %20 = arith.cmpf ogt, %18, %19 : vector<9x256xf32>
    %cst_20 = arith.constant 0.000000e+00 : f32
    %21 = vector.broadcast %cst_20 : f32 to vector<9x256xf32>
    %22 = arith.minimumf %18, %21 : vector<9x256xf32>
    %23 = math.exp %22 : vector<9x256xf32>
    %cst_21 = arith.constant 1.000000e+00 : f32
    %24 = vector.broadcast %cst_21 : f32 to vector<9x256xf32>
    %25 = arith.subf %23, %24 : vector<9x256xf32>
    %26 = arith.select %20, %18, %25 : vector<9x256xi1>, vector<9x256xf32>
    %c0_22 = arith.constant 0 : index
    %c0_23 = arith.constant 0 : index
    %27 = vector.load %arg4[%c0_22, %c0_23] : memref<1x256xf32, #tpu.memory_space<vmem>>, vector<1x256xf32>
    %28 = vector.broadcast %27 : vector<1x256xf32> to vector<9x256xf32>
    %29 = arith.mulf %26, %28 : vector<9x256xf32>
    %c0_24 = arith.constant 0 : index
    %c0_25 = arith.constant 0 : index
    %30 = vector.load %arg5[%c0_24, %c0_25] : memref<1x256xf32, #tpu.memory_space<vmem>>, vector<1x256xf32>
    %31 = vector.broadcast %30 : vector<1x256xf32> to vector<9x256xf32>
    %32 = arith.addf %29, %31 : vector<9x256xf32>
    %33 = arith.truncf %32 : vector<9x256xf32> to vector<9x256xbf16>
    %c0_26 = arith.constant 0 : index
    %c0_27 = arith.constant 0 : index
    %c0_28 = arith.constant 0 : index
    %34 = vector.load %arg6[%c0_26, %c0_27, %c0_28] : memref<1x9x256xbf16, #tpu.memory_space<vmem>>, vector<1x9x256xbf16>
    %35 = vector.shape_cast %34 : vector<1x9x256xbf16> to vector<9x256xbf16>
    %36 = vector.shape_cast %33 : vector<9x256xbf16> to vector<1x9x256xbf16>
    tpu.vector_store %arg6[%c0_26, %c0_27, %c0_28], %36 {strides = array<i32>} : memref<1x9x256xbf16, #tpu.memory_space<vmem>>, vector<1x9x256xbf16>,
    return
  }
  func.func @transform_0(%arg0: i32) -> (i32, i32, i32, i32) {
    %c0_i32 = arith.constant 0 : i32
    %c0_i32_0 = arith.constant 0 : i32
    %c0_i32_1 = arith.constant 0 : i32
    %c0_i32_2 = arith.constant 0 : i32
    return %c0_i32, %arg0, %c0_i32_0, %c0_i32_1 : i32, i32, i32, i32
  }
  func.func @transform_1(%arg0: i32) -> (i32, i32) {
    %c0_i32 = arith.constant 0 : i32
    %c0_i32_0 = arith.constant 0 : i32
    %c0_i32_1 = arith.constant 0 : i32
    return %c0_i32, %c0_i32_0 : i32, i32
  }
  func.func @transform_2(%arg0: i32) -> (i32, i32) {
    %c0_i32 = arith.constant 0 : i32
    %c0_i32_0 = arith.constant 0 : i32
    %c0_i32_1 = arith.constant 0 : i32
    return %c0_i32, %c0_i32_0 : i32, i32
  }
  func.func @transform_3(%arg0: i32) -> (i32, i32) {
    %c0_i32 = arith.constant 0 : i32
    %c0_i32_0 = arith.constant 0 : i32
    %c0_i32_1 = arith.constant 0 : i32
    return %c0_i32, %c0_i32_0 : i32, i32
  }
  func.func @transform_4(%arg0: i32) -> (i32, i32) {
    %c0_i32 = arith.constant 0 : i32
    %c0_i32_0 = arith.constant 0 : i32
    %c0_i32_1 = arith.constant 0 : i32
    return %c0_i32, %c0_i32_0 : i32, i32
  }
  func.func @transform_5(%arg0: i32) -> (i32, i32, i32) {
    %c0_i32 = arith.constant 0 : i32
    %c0_i32_0 = arith.constant 0 : i32
    %c0_i32_1 = arith.constant 0 : i32
    return %arg0, %c0_i32, %c0_i32_0 : i32, i32, i32
  }
}

module attributes {stable_mosaic.version = 11 : i64} {
  func.func @_fc_head_kernel(%arg0: memref<2x2304xbf16, #tpu.memory_space<vmem>>, %arg1: memref<2304x384xbf16, #tpu.memory_space<vmem>>, %arg2: memref<1x384xf32, #tpu.memory_space<vmem>>, %arg3: memref<1x384xf32, #tpu.memory_space<vmem>>, %arg4: memref<1x384xf32, #tpu.memory_space<vmem>>, %arg5: memref<384x128xbf16, #tpu.memory_space<vmem>>, %arg6: memref<1x128xf32, #tpu.memory_space<vmem>>, %arg7: memref<2x128xf32, #tpu.memory_space<vmem>>) attributes {dimension_semantics = [], scalar_prefetch = 0 : i64, scratch_operands = 0 : i64, tpu.core_type = #tpu.core_type<tc>} {
    %c0 = arith.constant 0 : index
    %c0_0 = arith.constant 0 : index
    %0 = vector.load %arg0[%c0, %c0_0] : memref<2x2304xbf16, #tpu.memory_space<vmem>>, vector<2x2304xbf16>
    %c0_1 = arith.constant 0 : index
    %c0_2 = arith.constant 0 : index
    %1 = vector.load %arg1[%c0_1, %c0_2] : memref<2304x384xbf16, #tpu.memory_space<vmem>>, vector<2304x384xbf16>
    %cst = arith.constant dense<0.000000e+00> : vector<2x384xf32>
    %2 = tpu.matmul %0, %1, %cst {dimension_numbers = #tpu.dot_dimension_numbers<[1], [0], [0], [1], [0, 0, 1, 1], [], []>} : vector<2x2304xbf16>, vector<2304x384xbf16>, vector<2x384xf32> -> vector<2x384xf32>
    %c0_3 = arith.constant 0 : index
    %c0_4 = arith.constant 0 : index
    %3 = vector.load %arg2[%c0_3, %c0_4] : memref<1x384xf32, #tpu.memory_space<vmem>>, vector<1x384xf32>
    %4 = vector.broadcast %3 : vector<1x384xf32> to vector<2x384xf32>
    %5 = arith.addf %2, %4 : vector<2x384xf32>
    %cst_5 = arith.constant 0.000000e+00 : f32
    %6 = vector.broadcast %cst_5 : f32 to vector<2x384xf32>
    %7 = arith.cmpf ogt, %5, %6 : vector<2x384xf32>
    %cst_6 = arith.constant 0.000000e+00 : f32
    %8 = vector.broadcast %cst_6 : f32 to vector<2x384xf32>
    %9 = arith.minimumf %5, %8 : vector<2x384xf32>
    %10 = math.exp %9 : vector<2x384xf32>
    %cst_7 = arith.constant 1.000000e+00 : f32
    %11 = vector.broadcast %cst_7 : f32 to vector<2x384xf32>
    %12 = arith.subf %10, %11 : vector<2x384xf32>
    %13 = arith.select %7, %5, %12 : vector<2x384xi1>, vector<2x384xf32>
    %c0_8 = arith.constant 0 : index
    %c0_9 = arith.constant 0 : index
    %14 = vector.load %arg3[%c0_8, %c0_9] : memref<1x384xf32, #tpu.memory_space<vmem>>, vector<1x384xf32>
    %15 = vector.broadcast %14 : vector<1x384xf32> to vector<2x384xf32>
    %16 = arith.mulf %13, %15 : vector<2x384xf32>
    %c0_10 = arith.constant 0 : index
    %c0_11 = arith.constant 0 : index
    %17 = vector.load %arg4[%c0_10, %c0_11] : memref<1x384xf32, #tpu.memory_space<vmem>>, vector<1x384xf32>
    %18 = vector.broadcast %17 : vector<1x384xf32> to vector<2x384xf32>
    %19 = arith.addf %16, %18 : vector<2x384xf32>
    %20 = arith.truncf %19 : vector<2x384xf32> to vector<2x384xbf16>
    %c0_12 = arith.constant 0 : index
    %c0_13 = arith.constant 0 : index
    %21 = vector.load %arg5[%c0_12, %c0_13] : memref<384x128xbf16, #tpu.memory_space<vmem>>, vector<384x128xbf16>
    %cst_14 = arith.constant dense<0.000000e+00> : vector<2x128xf32>
    %22 = tpu.matmul %20, %21, %cst_14 {dimension_numbers = #tpu.dot_dimension_numbers<[1], [0], [0], [1], [0, 0, 1, 1], [], []>} : vector<2x384xbf16>, vector<384x128xbf16>, vector<2x128xf32> -> vector<2x128xf32>
    %c0_15 = arith.constant 0 : index
    %c0_16 = arith.constant 0 : index
    %23 = vector.load %arg6[%c0_15, %c0_16] : memref<1x128xf32, #tpu.memory_space<vmem>>, vector<1x128xf32>
    %24 = vector.broadcast %23 : vector<1x128xf32> to vector<2x128xf32>
    %25 = arith.addf %22, %24 : vector<2x128xf32>
    %c0_17 = arith.constant 0 : index
    %c0_18 = arith.constant 0 : index
    %26 = vector.load %arg7[%c0_17, %c0_18] : memref<2x128xf32, #tpu.memory_space<vmem>>, vector<2x128xf32>
    tpu.vector_store %arg7[%c0_17, %c0_18], %25 {strides = array<i32>} : memref<2x128xf32, #tpu.memory_space<vmem>>, vector<2x128xf32>,
    return
  }
}

</mosaic_0001>

<llo_original>
// kernel: gtsrb_forward.4
$region0: #{gtsrb_forward.4}
  #allocation0 [shape = 'u32[]', space=smem, size = 0x4, offset = 0x4, fixed_abs, tag = 'smem constant byte address 0x4 - core index']
  #allocation1 [shape = 'u32[144,128]{1,0:T(1,128)}', space=vmem, size = 0x12000, scoped, tag = 'internal scratch']
  %s0 = inlined_call_operand.vmem [shape: bf16[4,2,196,75], index: 0, kind: input, shape index: {}]
  %s1 = inlined_call_operand.vmem [shape: bf16[75,128], index: 1, kind: input, shape index: {}]
  %s2 = inlined_call_operand.vmem [shape: f32[1,128], index: 2, kind: input, shape index: {}]
  %s3 = inlined_call_operand.vmem [shape: f32[1,128], index: 3, kind: input, shape index: {}]
  %s4 = inlined_call_operand.vmem [shape: f32[1,128], index: 4, kind: input, shape index: {}]
  %s5 = inlined_call_operand.vmem [shape: bf16[2,196,128], index: 5, kind: output, shape index: {}]
  %s6 = sld [smem:[#allocation0]]
  $region94: #{gtsrb_forward.4} parent=0
    _
  %s8 = ssub.s32 1, %s6
  %s9 = scalar_select 0, %s8, %s6
  $region1: #{gtsrb_forward.4} parent=0
    #allocation2 [shape = 'u8[409600]{0}', space=vmem, size = 0x64000, scoped, tag = 'input window, operand 0']
    loop: start=0, step=1, limit=4
    $region2: #{gtsrb_forward.4} parent=1 // loop_pre_header
      _
    $region3: #{gtsrb_forward.4} parent=1 // loop_header
      %s11 = sphi 0, %s15
      %p12 = scmp.ge.s32.totalorder %s11, 4
      %s21 = sphi 0, %s23
      %s24 = sphi 0, %s21
      %s25 = sphi 0, %s24
      %s41 = sphi 0, %s25
      %s45 = sphi 0, %s45
      %s47 = sphi 0, %s45
      %s48 = sphi 0, %s47
      %s62 = sphi 0, %s48
      %s66 = sphi 0, %s66
      %s68 = sphi 0, %s66
      %s69 = sphi 0, %s68
      %s83 = sphi 0, %s69
      %s87 = sphi 0, %s87
      %s89 = sphi 0, %s87
      %s90 = sphi 0, %s89
      %s104 = sphi 0, %s90
      %s108 = sphi 0, %s108
      %s110 = sphi 0, %s108
      %s111 = sphi 0, %s110
      %s125 = sphi 0, %s111
      %s131 = sphi 0, %s133
      %s134 = sphi 0, %s131
      %s135 = sphi 0, %s134
      %s151 = sphi 0, %s135
    $region4: #{gtsrb_forward.4} parent=1 // loop_header_branch
      %14 = sbr.rel (%p12) target = $region8
    $region5: #{gtsrb_forward.4} parent=1 // loop_body
      %s16 = ssub.s32 %s11, 1
      %s17 = ssub.s32 %s11, 2
      %s18 = sadd.s32 %s11, 1
      %s19 = ssub.s32 %s11, %s18
      %p20 = scmp.eq.s32.totalorder %s19, 0
      %s22 = sadd.s32 %s21, 1
      %s23 = scalar_select %p20, %s21, %s22
      %p26 = pneg %p20
      %p27 = scmp.eq.s32.totalorder %s11, 1
      %p28 = por %p26, %p27
      %p29 = scmp.ne.s32.totalorder %s21, %s24
      %p30 = scmp.eq.s32.totalorder %s11, 0
      %p31 = por %p29, %p30
      %p32 = scmp.ne.s32.totalorder %s21, %s24
      %p33 = scmp.eq.s32.totalorder %s16, 1
      %p34 = por %p32, %p33
      %p35 = scmp.ne.s32.totalorder %s24, %s25
      %p36 = scmp.eq.s32.totalorder %s16, 0
      %p37 = por %p35, %p36
      %p38 = scmp.ne.s32.totalorder %s24, %s25
      %p39 = scmp.eq.s32.totalorder %s17, 1
      %p40 = por %p38, %p39
      %p42 = scmp.ne.s32.totalorder %s25, %s41
      %p43 = scmp.eq.s32.totalorder %s17, 0
      %p44 = por %p42, %p43
      %s46 = sadd.s32 %s45, 1
      %p49 = scmp.eq.s32.totalorder %s11, 1
      %p50 = scmp.ne.s32.totalorder %s45, %s47
      %p51 = scmp.eq.s32.totalorder %s11, 0
      %p52 = por %p50, %p51
      %p53 = scmp.ne.s32.totalorder %s45, %s47
      %p54 = scmp.eq.s32.totalorder %s16, 1
      %p55 = por %p53, %p54
      %p56 = scmp.ne.s32.totalorder %s47, %s48
      %p57 = scmp.eq.s32.totalorder %s16, 0
      %p58 = por %p56, %p57
      %p59 = scmp.ne.s32.totalorder %s47, %s48
      %p60 = scmp.eq.s32.totalorder %s17, 1
      %p61 = por %p59, %p60
      %p63 = scmp.ne.s32.totalorder %s48, %s62
      %p64 = scmp.eq.s32.totalorder %s17, 0
      %p65 = por %p63, %p64
      %s67 = sadd.s32 %s66, 1
      %p70 = scmp.eq.s32.totalorder %s11, 1
      %p71 = scmp.ne.s32.totalorder %s66, %s68
      %p72 = scmp.eq.s32.totalorder %s11, 0
      %p73 = por %p71, %p72
      %p74 = scmp.ne.s32.totalorder %s66, %s68
      %p75 = scmp.eq.s32.totalorder %s16, 1
      %p76 = por %p74, %p75
      %p77 = scmp.ne.s32.totalorder %s68, %s69
      %p78 = scmp.eq.s32.totalorder %s16, 0
      %p79 = por %p77, %p78
      %p80 = scmp.ne.s32.totalorder %s68, %s69
      %p81 = scmp.eq.s32.totalorder %s17, 1
      %p82 = por %p80, %p81
      %p84 = scmp.ne.s32.totalorder %s69, %s83
      %p85 = scmp.eq.s32.totalorder %s17, 0
      %p86 = por %p84, %p85
      %s88 = sadd.s32 %s87, 1
      %p91 = scmp.eq.s32.totalorder %s11, 1
      %p92 = scmp.ne.s32.totalorder %s87, %s89
      %p93 = scmp.eq.s32.totalorder %s11, 0
      %p94 = por %p92, %p93
      %p95 = scmp.ne.s32.totalorder %s87, %s89
      %p96 = scmp.eq.s32.totalorder %s16, 1
      %p97 = por %p95, %p96
      %p98 = scmp.ne.s32.totalorder %s89, %s90
      %p99 = scmp.eq.s32.totalorder %s16, 0
      %p100 = por %p98, %p99
      %p101 = scmp.ne.s32.totalorder %s89, %s90
      %p102 = scmp.eq.s32.totalorder %s17, 1
      %p103 = por %p101, %p102
      %p105 = scmp.ne.s32.totalorder %s90, %s104
      %p106 = scmp.eq.s32.totalorder %s17, 0
      %p107 = por %p105, %p106
      %s109 = sadd.s32 %s108, 1
      %p112 = scmp.eq.s32.totalorder %s11, 1
      %p113 = scmp.ne.s32.totalorder %s108, %s110
      %p114 = scmp.eq.s32.totalorder %s11, 0
      %p115 = por %p113, %p114
      %p116 = scmp.ne.s32.totalorder %s108, %s110
      %p117 = scmp.eq.s32.totalorder %s16, 1
      %p118 = por %p116, %p117
      %p119 = scmp.ne.s32.totalorder %s110, %s111
      %p120 = scmp.eq.s32.totalorder %s16, 0
      %p121 = por %p119, %p120
      %p122 = scmp.ne.s32.totalorder %s110, %s111
      %p123 = scmp.eq.s32.totalorder %s17, 1
      %p124 = por %p122, %p123
      %p126 = scmp.ne.s32.totalorder %s111, %s125
      %p127 = scmp.eq.s32.totalorder %s17, 0
      %p128 = por %p126, %p127
      %s129 = ssub.s32 %s11, %s18
      %p130 = scmp.eq.s32.totalorder %s129, 0
      %s132 = sadd.s32 %s131, 1
      %s133 = scalar_select %p130, %s131, %s132
      %p136 = pneg %p130
      %p137 = scmp.eq.s32.totalorder %s11, 1
      %p138 = por %p136, %p137
      %p139 = scmp.ne.s32.totalorder %s131, %s134
      %p140 = scmp.eq.s32.totalorder %s11, 0
      %p141 = por %p139, %p140
      %p142 = scmp.ne.s32.totalorder %s131, %s134
      %p143 = scmp.eq.s32.totalorder %s16, 1
      %p144 = por %p142, %p143
      %p145 = scmp.ne.s32.totalorder %s134, %s135
      %p146 = scmp.eq.s32.totalorder %s16, 0
      %p147 = por %p145, %p146
      %p148 = scmp.ne.s32.totalorder %s134, %s135
      %p149 = scmp.eq.s32.totalorder %s17, 1
      %p150 = por %p148, %p149
      %p152 = scmp.ne.s32.totalorder %s135, %s151
      %p153 = scmp.eq.s32.totalorder %s17, 0
      %p154 = por %p152, %p153
      %p155 = scmp.le.s32.totalorder 1, %s11
      %p156 = scmp.lt.s32.totalorder %s11, 3
      %p157 = pnand %p155, %p156
      %p158 = pneg %p157
      // Predicated region
      $region9: #{gtsrb_forward.4} parent=5 // pred_check
        _
      $region10: #{gtsrb_forward.4} parent=5 // pred_check_branch
        %160 = sbr.rel (%p157) target = $region12
      $region11: #{gtsrb_forward.4} parent=5 // pred_region
        %s161 = ssub.s32 %s11, 1
        // Predicated region
        $region13: #{gtsrb_forward.4} parent=11 // pred_check
          %p162 = pneg %p58
        $region14: #{gtsrb_forward.4} parent=11 // pred_check_branch
          %164 = sbr.rel (%p162) target = $region16
        $region15: #{gtsrb_forward.4} parent=11 // pred_region
          _
        $region16: #{gtsrb_forward.4} parent=11 // pred_fallthru
          _
        // Predicated region
        $region17: #{gtsrb_forward.4} parent=11 // pred_check
          %p165 = pneg %p79
        $region18: #{gtsrb_forward.4} parent=11 // pred_check_branch
          %167 = sbr.rel (%p165) target = $region20
        $region19: #{gtsrb_forward.4} parent=11 // pred_region
          _
        $region20: #{gtsrb_forward.4} parent=11 // pred_fallthru
          _
        // Predicated region
        $region21: #{gtsrb_forward.4} parent=11 // pred_check
          %p168 = pneg %p100
        $region22: #{gtsrb_forward.4} parent=11 // pred_check_branch
          %170 = sbr.rel (%p168) target = $region24
        $region23: #{gtsrb_forward.4} parent=11 // pred_region
          _
        $region24: #{gtsrb_forward.4} parent=11 // pred_fallthru
          _
        // Predicated region
        $region25: #{gtsrb_forward.4} parent=11 // pred_check
          %p171 = pneg %p121
        $region26: #{gtsrb_forward.4} parent=11 // pred_check_branch
          %173 = sbr.rel (%p171) target = $region28
        $region27: #{gtsrb_forward.4} parent=11 // pred_region
          _
        $region28: #{gtsrb_forward.4} parent=11 // pred_fallthru
          _
      $region12: #{gtsrb_forward.4} parent=5 // pred_fallthru
        _
      %p174 = scmp.lt.s32.totalorder %s11, 2
      // Predicated region
      $region29: #{gtsrb_forward.4} parent=5 // pred_check
        %p175 = pneg %p174
      $region30: #{gtsrb_forward.4} parent=5 // pred_check_branch
        %177 = sbr.rel (%p175) target = $region32
      $region31: #{gtsrb_forward.4} parent=5 // pred_region
        // Predicated region
        $region33: #{gtsrb_forward.4} parent=31 // pred_check
          %p178 = pneg %p31
        $region34: #{gtsrb_forward.4} parent=31 // pred_check_branch
          %180 = sbr.rel (%p178) target = $region36
        $region35: #{gtsrb_forward.4} parent=31 // pred_region
          %s181 = sand.u32 %s21, 1
          %s182 = sand.u32 %s21, 1
          %s183 = smul.addr %s182, 400
          %s184 = scalar_lea.vmem [#allocation2], %s183
          %s185 = smul.addr %s11, 25
          %s186 = smul.addr %s185, 4
          %s187 = scalar_lea.vmem %s0, %s186
          // Predicated region
          $region37: #{gtsrb_forward.4} parent=35 // pred_check
            _
          $region38: #{gtsrb_forward.4} parent=35 // pred_check_branch
            %189 = sbr.rel (0) target = $region40
          $region39: #{gtsrb_forward.4} parent=35 // pred_region
            // Predicated region
            $region41: #{gtsrb_forward.4} parent=39 // pred_check
              _
            $region42: #{gtsrb_forward.4} parent=39 // pred_check_branch
              %191 = sbr.rel target = $region44
            $region43: #{gtsrb_forward.4} parent=39 // pred_region
              // Predicated region
              $region56: #{gtsrb_forward.4} parent=43 // pred_check
                _
              $region57: #{gtsrb_forward.4} parent=43 // pred_check_branch
                %404 = sbr.rel (0) target = $region59
              $region58: #{gtsrb_forward.4} parent=43 // pred_region
                loop: start=0, step=1, limit=1
                $region60: #{gtsrb_forward.4} parent=58 // loop_pre_header
                  _
                $region61: #{gtsrb_forward.4} parent=58 // loop_header
                  %s406 = sphi 0, %s410
                  %p407 = scmp.ge.s32.totalorder %s406, 1
                  %s411 = sphi %s187, %s187
                  %s412 = sphi %s184, %s184
                $region62: #{gtsrb_forward.4} parent=58 // loop_header_branch
                  %409 = sbr.rel (%p407) target = $region66
                $region63: #{gtsrb_forward.4} parent=58 // loop_body
                  _
                $region64: #{gtsrb_forward.4} parent=58 // loop_footer
                  %s410 = sadd.s32 1, %s406
                $region65: #{gtsrb_forward.4} parent=58 // loop_footer_branch
                  %405 = sbr.rel target = $region61
                $region66: #{gtsrb_forward.4} parent=58 // loop_exit
                  _
                loop: start=0, step=1, limit=1
                $region67: #{gtsrb_forward.4} parent=58 // loop_pre_header
                  _
                $region68: #{gtsrb_forward.4} parent=58 // loop_header
                  %s415 = sphi 0, %s419
                  %p416 = scmp.ge.s32.totalorder %s415, 1
                  %s420 = sphi %s187, %s187
                  %s421 = sphi %s184, %s184
                $region69: #{gtsrb_forward.4} parent=58 // loop_header_branch
                  %418 = sbr.rel (%p416) target = $region73
                $region70: #{gtsrb_forward.4} parent=58 // loop_body
                  %v422 = vld [vmem:[%s420] sm:$0xf]
                  %423 = vst [vmem:[%s421] sm:$0xf] %v422
                  %v424 = vld [vmem:[%s420 + $0x4] sm:$0xf]
                  %425 = vst [vmem:[%s421 + $0x4] sm:$0xf] %v424
                  %v426 = vld [vmem:[%s420 + $0x8] sm:$0xf]
                  %427 = vst [vmem:[%s421 + $0x8] sm:$0xf] %v426
                  %v428 = vld [vmem:[%s420 + $0xc] sm:$0xf]
                  %429 = vst [vmem:[%s421 + $0xc] sm:$0xf] %v428
                  %v430 = vld [vmem:[%s420 + $0x10] sm:$0xf]
                  %431 = vst [vmem:[%s421 + $0x10] sm:$0xf] %v430
                  %v432 = vld [vmem:[%s420 + $0x14] sm:$0xf]
                  %433 = vst [vmem:[%s421 + $0x14] sm:$0xf] %v432
                  %v434 = vld [vmem:[%s420 + $0x18] sm:$0xf]
                  %435 = vst [vmem:[%s421 + $0x18] sm:$0xf] %v434
                  %v436 = vld [vmem:[%s420 + $0x1c] sm:$0xf]
                  %437 = vst [vmem:[%s421 + $0x1c] sm:$0xf] %v436
                  %v438 = vld [vmem:[%s420 + $0x20] sm:$0xf]
                  %439 = vst [vmem:[%s421 + $0x20] sm:$0xf] %v438
                  %v440 = vld [vmem:[%s420 + $0x24] sm:$0xf]
                  %441 = vst [vmem:[%s421 + $0x24] sm:$0xf] %v440
                  %v442 = vld [vmem:[%s420 + $0x28] sm:$0xf]
                  %443 = vst [vmem:[%s421 + $0x28] sm:$0xf] %v442
                  %v444 = vld [vmem:[%s420 + $0x2c] sm:$0xf]
                  %445 = vst [vmem:[%s421 + $0x2c] sm:$0xf] %v444
                  %v446 = vld [vmem:[%s420 + $0x30] sm:$0xf]
                  %447 = vst [vmem:[%s421 + $0x30] sm:$0xf] %v446
                  %v448 = vld [vmem:[%s420 + $0x34] sm:$0xf]
                  %449 = vst [vmem:[%s421 + $0x34] sm:$0xf] %v448
                  %v450 = vld [vmem:[%s420 + $0x38] sm:$0xf]
                  %451 = vst [vmem:[%s421 + $0x38] sm:$0xf] %v450
                  %v452 = vld [vmem:[%s420 + $0x3c] sm:$0xf]
                  %453 = vst [vmem:[%s421 + $0x3c] sm:$0xf] %v452
                  %v454 = vld [vmem:[%s420 + $0x40] sm:$0xf]
                  %455 = vst [vmem:[%s421 + $0x40] sm:$0xf] %v454
                  %v456 = vld [vmem:[%s420 + $0x44] sm:$0xf]
                  %457 = vst [vmem:[%s421 + $0x44] sm:$0xf] %v456
                  %v458 = vld [vmem:[%s420 + $0x48] sm:$0xf]
                  %459 = vst [vmem:[%s421 + $0x48] sm:$0xf] %v458
                  %v460 = vld [vmem:[%s420 + $0x4c] sm:$0xf]
                  %461 = vst [vmem:[%s421 + $0x4c] sm:$0xf] %v460
                  %v462 = vld [vmem:[%s420 + $0x50] sm:$0xf]
                  %463 = vst [vmem:[%s421 + $0x50] sm:$0xf] %v462
                  %v464 = vld [vmem:[%s420 + $0x54] sm:$0xf]
                  %465 = vst [vmem:[%s421 + $0x54] sm:$0xf] %v464
                  %v466 = vld [vmem:[%s420 + $0x58] sm:$0xf]
                  %467 = vst [vmem:[%s421 + $0x58] sm:$0xf] %v466
                  %v468 = vld [vmem:[%s420 + $0x5c] sm:$0xf]
                  %469 = vst [vmem:[%s421 + $0x5c] sm:$0xf] %v468
                  %v470 = vld [vmem:[%s420 + $0x60] sm:$0xf]
                  %471 = vst [vmem:[%s421 + $0x60] sm:$0xf] %v470
                  %v472 = vld [vmem:[%s420 + $0xc8] sm:$0xf]
                  %473 = vst [vmem:[%s421 + $0x64] sm:$0xf] %v472
                  %v474 = vld [vmem:[%s420 + $0xcc] sm:$0xf]
                  %475 = vst [vmem:[%s421 + $0x68] sm:$0xf] %v474
                  %v476 = vld [vmem:[%s420 + $0xd0] sm:$0xf]
                  %477 = vst [vmem:[%s421 + $0x6c] sm:$0xf] %v476
                  %v478 = vld [vmem:[%s420 + $0xd4] sm:$0xf]
                  %479 = vst [vmem:[%s421 + $0x70] sm:$0xf] %v478
                  %v480 = vld [vmem:[%s420 + $0xd8] sm:$0xf]
                  %481 = vst [vmem:[%s421 + $0x74] sm:$0xf] %v480
                  %v482 = vld [vmem:[%s420 + $0xdc] sm:$0xf]
                  %483 = vst [vmem:[%s421 + $0x78] sm:$0xf] %v482
                  %v484 = vld [vmem:[%s420 + $0xe0] sm:$0xf]
                  %485 = vst [vmem:[%s421 + $0x7c] sm:$0xf] %v484
                  %v486 = vld [vmem:[%s420 + $0xe4] sm:$0xf]
                  %487 = vst [vmem:[%s421 + $0x80] sm:$0xf] %v486
                  %v488 = vld [vmem:[%s420 + $0xe8] sm:$0xf]
                  %489 = vst [vmem:[%s421 + $0x84] sm:$0xf] %v488
                  %v490 = vld [vmem:[%s420 + $0xec] sm:$0xf]
                  %491 = vst [vmem:[%s421 + $0x88] sm:$0xf] %v490
                  %v492 = vld [vmem:[%s420 + $0xf0] sm:$0xf]
                  %493 = vst [vmem:[%s421 + $0x8c] sm:$0xf] %v492
                  %v494 = vld [vmem:[%s420 + $0xf4] sm:$0xf]
                  %495 = vst [vmem:[%s421 + $0x90] sm:$0xf] %v494
                  %v496 = vld [vmem:[%s420 + $0xf8] sm:$0xf]
                  %497 = vst [vmem:[%s421 + $0x94] sm:$0xf] %v496
                  %v498 = vld [vmem:[%s420 + $0xfc] sm:$0xf]
                  %499 = vst [vmem:[%s421 + $0x98] sm:$0xf] %v498
                  %v500 = vld [vmem:[%s420 + $0x100] sm:$0xf]
                  %501 = vst [vmem:[%s421 + $0x9c] sm:$0xf] %v500
                  %v502 = vld [vmem:[%s420 + $0x104] sm:$0xf]
                  %503 = vst [vmem:[%s421 + $0xa0] sm:$0xf] %v502
                  %v504 = vld [vmem:[%s420 + $0x108] sm:$0xf]
                  %505 = vst [vmem:[%s421 + $0xa4] sm:$0xf] %v504
                  %v506 = vld [vmem:[%s420 + $0x10c] sm:$0xf]
                  %507 = vst [vmem:[%s421 + $0xa8] sm:$0xf] %v506
                  %v508 = vld [vmem:[%s420 + $0x110] sm:$0xf]
                  %509 = vst [vmem:[%s421 + $0xac] sm:$0xf] %v508
                  %v510 = vld [vmem:[%s420 + $0x114] sm:$0xf]
                  %511 = vst [vmem:[%s421 + $0xb0] sm:$0xf] %v510
                  %v512 = vld [vmem:[%s420 + $0x118] sm:$0xf]
                  %513 = vst [vmem:[%s421 + $0xb4] sm:$0xf] %v512
                  %v514 = vld [vmem:[%s420 + $0x11c] sm:$0xf]
                  %515 = vst [vmem:[%s421 + $0xb8] sm:$0xf] %v514
                  %v516 = vld [vmem:[%s420 + $0x120] sm:$0xf]
                  %517 = vst [vmem:[%s421 + $0xbc] sm:$0xf] %v516
                  %v518 = vld [vmem:[%s420 + $0x124] sm:$0xf]
                  %519 = vst [vmem:[%s421 + $0xc0] sm:$0xf] %v518
                  %v520 = vld [vmem:[%s420 + $0x128] sm:$0xf]
                  %521 = vst [vmem:[%s421 + $0xc4] sm:$0xf] %v520
                  %v522 = vld [vmem:[%s420 + $0x190] sm:$0xf]
                  %523 = vst [vmem:[%s421 + $0xc8] sm:$0xf] %v522
                  %v524 = vld [vmem:[%s420 + $0x194] sm:$0xf]
                  %525 = vst [vmem:[%s421 + $0xcc] sm:$0xf] %v524
                  %v526 = vld [vmem:[%s420 + $0x198] sm:$0xf]
                  %527 = vst [vmem:[%s421 + $0xd0] sm:$0xf] %v526
                  %v528 = vld [vmem:[%s420 + $0x19c] sm:$0xf]
                  %529 = vst [vmem:[%s421 + $0xd4] sm:$0xf] %v528
                  %v530 = vld [vmem:[%s420 + $0x1a0] sm:$0xf]
                  %531 = vst [vmem:[%s421 + $0xd8] sm:$0xf] %v530
                  %v532 = vld [vmem:[%s420 + $0x1a4] sm:$0xf]
                  %533 = vst [vmem:[%s421 + $0xdc] sm:$0xf] %v532
                  %v534 = vld [vmem:[%s420 + $0x1a8] sm:$0xf]
                  %535 = vst [vmem:[%s421 + $0xe0] sm:$0xf] %v534
                  %v536 = vld [vmem:[%s420 + $0x1ac] sm:$0xf]
                  %537 = vst [vmem:[%s421 + $0xe4] sm:$0xf] %v536
                  %v538 = vld [vmem:[%s420 + $0x1b0] sm:$0xf]
                  %539 = vst [vmem:[%s421 + $0xe8] sm:$0xf] %v538
                  %v540 = vld [vmem:[%s420 + $0x1b4] sm:$0xf]
                  %541 = vst [vmem:[%s421 + $0xec] sm:$0xf] %v540
                  %v542 = vld [vmem:[%s420 + $0x1b8] sm:$0xf]
                  %543 = vst [vmem:[%s421 + $0xf0] sm:$0xf] %v542
                  %v544 = vld [vmem:[%s420 + $0x1bc] sm:$0xf]
                  %545 = vst [vmem:[%s421 + $0xf4] sm:$0xf] %v544
                  %v546 = vld [vmem:[%s420 + $0x1c0] sm:$0xf]
                  %547 = vst [vmem:[%s421 + $0xf8] sm:$0xf] %v546
                  %v548 = vld [vmem:[%s420 + $0x1c4] sm:$0xf]
                  %549 = vst [vmem:[%s421 + $0xfc] sm:$0xf] %v548
                  %v550 = vld [vmem:[%s420 + $0x1c8] sm:$0xf]
                  %551 = vst [vmem:[%s421 + $0x100] sm:$0xf] %v550
                  %v552 = vld [vmem:[%s420 + $0x1cc] sm:$0xf]
                  %553 = vst [vmem:[%s421 + $0x104] sm:$0xf] %v552
                  %v554 = vld [vmem:[%s420 + $0x1d0] sm:$0xf]
                  %555 = vst [vmem:[%s421 + $0x108] sm:$0xf] %v554
                  %v556 = vld [vmem:[%s420 + $0x1d4] sm:$0xf]
                  %557 = vst [vmem:[%s421 + $0x10c] sm:$0xf] %v556
                  %v558 = vld [vmem:[%s420 + $0x1d8] sm:$0xf]
                  %559 = vst [vmem:[%s421 + $0x110] sm:$0xf] %v558
                  %v560 = vld [vmem:[%s420 + $0x1dc] sm:$0xf]
                  %561 = vst [vmem:[%s421 + $0x114] sm:$0xf] %v560
                  %v562 = vld [vmem:[%s420 + $0x1e0] sm:$0xf]
                  %563 = vst [vmem:[%s421 + $0x118] sm:$0xf] %v562
                  %v564 = vld [vmem:[%s420 + $0x1e4] sm:$0xf]
                  %565 = vst [vmem:[%s421 + $0x11c] sm:$0xf] %v564
                  %v566 = vld [vmem:[%s420 + $0x1e8] sm:$0xf]
                  %567 = vst [vmem:[%s421 + $0x120] sm:$0xf] %v566
                  %v568 = vld [vmem:[%s420 + $0x1ec] sm:$0xf]
                  %569 = vst [vmem:[%s421 + $0x124] sm:$0xf] %v568
                  %v570 = vld [vmem:[%s420 + $0x1f0] sm:$0xf]
                  %571 = vst [vmem:[%s421 + $0x128] sm:$0xf] %v570
                  %v572 = vld [vmem:[%s420 + $0x258] sm:$0xf]
                  %573 = vst [vmem:[%s421 + $0x12c] sm:$0xf] %v572
                  %v574 = vld [vmem:[%s420 + $0x25c] sm:$0xf]
                  %575 = vst [vmem:[%s421 + $0x130] sm:$0xf] %v574
                  %v576 = vld [vmem:[%s420 + $0x260] sm:$0xf]
                  %577 = vst [vmem:[%s421 + $0x134] sm:$0xf] %v576
                  %v578 = vld [vmem:[%s420 + $0x264] sm:$0xf]
                  %579 = vst [vmem:[%s421 + $0x138] sm:$0xf] %v578
                  %v580 = vld [vmem:[%s420 + $0x268] sm:$0xf]
                  %581 = vst [vmem:[%s421 + $0x13c] sm:$0xf] %v580
                  %v582 = vld [vmem:[%s420 + $0x26c] sm:$0xf]
                  %583 = vst [vmem:[%s421 + $0x140] sm:$0xf] %v582
                  %v584 = vld [vmem:[%s420 + $0x270] sm:$0xf]
                  %585 = vst [vmem:[%s421 + $0x144] sm:$0xf] %v584
                  %v586 = vld [vmem:[%s420 + $0x274] sm:$0xf]
                  %587 = vst [vmem:[%s421 + $0x148] sm:$0xf] %v586
                  %v588 = vld [vmem:[%s420 + $0x278] sm:$0xf]
                  %589 = vst [vmem:[%s421 + $0x14c] sm:$0xf] %v588
                  %v590 = vld [vmem:[%s420 + $0x27c] sm:$0xf]
                  %591 = vst [vmem:[%s421 + $0x150] sm:$0xf] %v590
                  %v592 = vld [vmem:[%s420 + $0x280] sm:$0xf]
                  %593 = vst [vmem:[%s421 + $0x154] sm:$0xf] %v592
                  %v594 = vld [vmem:[%s420 + $0x284] sm:$0xf]
                  %595 = vst [vmem:[%s421 + $0x158] sm:$0xf] %v594
                  %v596 = vld [vmem:[%s420 + $0x288] sm:$0xf]
                  %597 = vst [vmem:[%s421 + $0x15c] sm:$0xf] %v596
                  %v598 = vld [vmem:[%s420 + $0x28c] sm:$0xf]
                  %599 = vst [vmem:[%s421 + $0x160] sm:$0xf] %v598
                  %v600 = vld [vmem:[%s420 + $0x290] sm:$0xf]
                  %601 = vst [vmem:[%s421 + $0x164] sm:$0xf] %v600
                  %v602 = vld [vmem:[%s420 + $0x294] sm:$0xf]
                  %603 = vst [vmem:[%s421 + $0x168] sm:$0xf] %v602
                  %v604 = vld [vmem:[%s420 + $0x298] sm:$0xf]
                  %605 = vst [vmem:[%s421 + $0x16c] sm:$0xf] %v604
                  %v606 = vld [vmem:[%s420 + $0x29c] sm:$0xf]
                  %607 = vst [vmem:[%s421 + $0x170] sm:$0xf] %v606
                  %v608 = vld [vmem:[%s420 + $0x2a0] sm:$0xf]
                  %609 = vst [vmem:[%s421 + $0x174] sm:$0xf] %v608
                  %v610 = vld [vmem:[%s420 + $0x2a4] sm:$0xf]
                  %611 = vst [vmem:[%s421 + $0x178] sm:$0xf] %v610
                  %v612 = vld [vmem:[%s420 + $0x2a8] sm:$0xf]
                  %613 = vst [vmem:[%s421 + $0x17c] sm:$0xf] %v612
                  %v614 = vld [vmem:[%s420 + $0x2ac] sm:$0xf]
                  %615 = vst [vmem:[%s421 + $0x180] sm:$0xf] %v614
                  %v616 = vld [vmem:[%s420 + $0x2b0] sm:$0xf]
                  %617 = vst [vmem:[%s421 + $0x184] sm:$0xf] %v616
                  %v618 = vld [vmem:[%s420 + $0x2b4] sm:$0xf]
                  %619 = vst [vmem:[%s421 + $0x188] sm:$0xf] %v618
                  %v620 = vld [vmem:[%s420 + $0x2b8] sm:$0xf]
                  %621 = vst [vmem:[%s421 + $0x18c] sm:$0xf] %v620
                $region71: #{gtsrb_forward.4} parent=58 // loop_footer
                  %s419 = sadd.s32 1, %s415
                $region72: #{gtsrb_forward.4} parent=58 // loop_footer_branch
                  %414 = sbr.rel target = $region68
                $region73: #{gtsrb_forward.4} parent=58 // loop_exit
                  _
              $region59: #{gtsrb_forward.4} parent=43 // pred_fallthru
                _
            $region44: #{gtsrb_forward.4} parent=39 // pred_fallthru
              _
            // Predicated region
            $region45: #{gtsrb_forward.4} parent=39 // pred_check
              _
            $region46: #{gtsrb_forward.4} parent=39 // pred_check_branch
              %193 = sbr.rel (0) target = $region48
            $region47: #{gtsrb_forward.4} parent=39 // pred_region
              loop: start=0, step=1, limit=1
              $region49: #{gtsrb_forward.4} parent=47 // loop_pre_header
                _
              $region50: #{gtsrb_forward.4} parent=47 // loop_header
                %s196 = sphi 0, %s200
                %p197 = scmp.ge.s32.totalorder %s196, 1
                %s201 = sphi %s187, %s187
                %s202 = sphi %s184, %s184
              $region51: #{gtsrb_forward.4} parent=47 // loop_header_branch
                %199 = sbr.rel (%p197) target = $region55
              $region52: #{gtsrb_forward.4} parent=47 // loop_body
                %v203 = vld [vmem:[%s201] sm:$0xf]
                %204 = vst [vmem:[%s202] sm:$0xf] %v203
                %v205 = vld [vmem:[%s201 + $0x4] sm:$0xf]
                %206 = vst [vmem:[%s202 + $0x4] sm:$0xf] %v205
                %v207 = vld [vmem:[%s201 + $0x8] sm:$0xf]
                %208 = vst [vmem:[%s202 + $0x8] sm:$0xf] %v207
                %v209 = vld [vmem:[%s201 + $0xc] sm:$0xf]
                %210 = vst [vmem:[%s202 + $0xc] sm:$0xf] %v209
                %v211 = vld [vmem:[%s201 + $0x10] sm:$0xf]
                %212 = vst [vmem:[%s202 + $0x10] sm:$0xf] %v211
                %v213 = vld [vmem:[%s201 + $0x14] sm:$0xf]
                %214 = vst [vmem:[%s202 + $0x14] sm:$0xf] %v213
                %v215 = vld [vmem:[%s201 + $0x18] sm:$0xf]
                %216 = vst [vmem:[%s202 + $0x18] sm:$0xf] %v215
                %v217 = vld [vmem:[%s201 + $0x1c] sm:$0xf]
                %218 = vst [vmem:[%s202 + $0x1c] sm:$0xf] %v217
                %v219 = vld [vmem:[%s201 + $0x20] sm:$0xf]
                %220 = vst [vmem:[%s202 + $0x20] sm:$0xf] %v219
                %v221 = vld [vmem:[%s201 + $0x24] sm:$0xf]
                %222 = vst [vmem:[%s202 + $0x24] sm:$0xf] %v221
                %v223 = vld [vmem:[%s201 + $0x28] sm:$0xf]
                %224 = vst [vmem:[%s202 + $0x28] sm:$0xf] %v223
                %v225 = vld [vmem:[%s201 + $0x2c] sm:$0xf]
                %226 = vst [vmem:[%s202 + $0x2c] sm:$0xf] %v225
                %v227 = vld [vmem:[%s201 + $0x30] sm:$0xf]
                %228 = vst [vmem:[%s202 + $0x30] sm:$0xf] %v227
                %v229 = vld [vmem:[%s201 + $0x34] sm:$0xf]
                %230 = vst [vmem:[%s202 + $0x34] sm:$0xf] %v229
                %v231 = vld [vmem:[%s201 + $0x38] sm:$0xf]
                %232 = vst [vmem:[%s202 + $0x38] sm:$0xf] %v231
                %v233 = vld [vmem:[%s201 + $0x3c] sm:$0xf]
                %234 = vst [vmem:[%s202 + $0x3c] sm:$0xf] %v233
                %v235 = vld [vmem:[%s201 + $0x40] sm:$0xf]
                %236 = vst [vmem:[%s202 + $0x40] sm:$0xf] %v235
                %v237 = vld [vmem:[%s201 + $0x44] sm:$0xf]
                %238 = vst [vmem:[%s202 + $0x44] sm:$0xf] %v237
                %v239 = vld [vmem:[%s201 + $0x48] sm:$0xf]
                %240 = vst [vmem:[%s202 + $0x48] sm:$0xf] %v239
                %v241 = vld [vmem:[%s201 + $0x4c] sm:$0xf]
                %242 = vst [vmem:[%s202 + $0x4c] sm:$0xf] %v241
                %v243 = vld [vmem:[%s201 + $0x50] sm:$0xf]
                %244 = vst [vmem:[%s202 + $0x50] sm:$0xf] %v243
                %v245 = vld [vmem:[%s201 + $0x54] sm:$0xf]
                %246 = vst [vmem:[%s202 + $0x54] sm:$0xf] %v245
                %v247 = vld [vmem:[%s201 + $0x58] sm:$0xf]
                %248 = vst [vmem:[%s202 + $0x58] sm:$0xf] %v247
                %v249 = vld [vmem:[%s201 + $0x5c] sm:$0xf]
                %250 = vst [vmem:[%s202 + $0x5c] sm:$0xf] %v249
                %v251 = vld [vmem:[%s201 + $0x60] sm:$0xf]
                %252 = vst [vmem:[%s202 + $0x60] sm:$0xf] %v251
                %v253 = vld [vmem:[%s201 + $0xc8] sm:$0xf]
                %254 = vst [vmem:[%s202 + $0x64] sm:$0xf] %v253
                %v255 = vld [vmem:[%s201 + $0xcc] sm:$0xf]
                %256 = vst [vmem:[%s202 + $0x68] sm:$0xf] %v255
                %v257 = vld [vmem:[%s201 + $0xd0] sm:$0xf]
                %258 = vst [vmem:[%s202 + $0x6c] sm:$0xf] %v257
                %v259 = vld [vmem:[%s201 + $0xd4] sm:$0xf]
                %260 = vst [vmem:[%s202 + $0x70] sm:$0xf] %v259
                %v261 = vld [vmem:[%s201 + $0xd8] sm:$0xf]
                %262 = vst [vmem:[%s202 + $0x74] sm:$0xf] %v261
                %v263 = vld [vmem:[%s201 + $0xdc] sm:$0xf]
                %264 = vst [vmem:[%s202 + $0x78] sm:$0xf] %v263
                %v265 = vld [vmem:[%s201 + $0xe0] sm:$0xf]
                %266 = vst [vmem:[%s202 + $0x7c] sm:$0xf] %v265
                %v267 = vld [vmem:[%s201 + $0xe4] sm:$0xf]
                %268 = vst [vmem:[%s202 + $0x80] sm:$0xf] %v267
                %v269 = vld [vmem:[%s201 + $0xe8] sm:$0xf]
                %270 = vst [vmem:[%s202 + $0x84] sm:$0xf] %v269
                %v271 = vld [vmem:[%s201 + $0xec] sm:$0xf]
                %272 = vst [vmem:[%s202 + $0x88] sm:$0xf] %v271
                %v273 = vld [vmem:[%s201 + $0xf0] sm:$0xf]
                %274 = vst [vmem:[%s202 + $0x8c] sm:$0xf] %v273
                %v275 = vld [vmem:[%s201 + $0xf4] sm:$0xf]
                %276 = vst [vmem:[%s202 + $0x90] sm:$0xf] %v275
                %v277 = vld [vmem:[%s201 + $0xf8] sm:$0xf]
                %278 = vst [vmem:[%s202 + $0x94] sm:$0xf] %v277
                %v279 = vld [vmem:[%s201 + $0xfc] sm:$0xf]
                %280 = vst [vmem:[%s202 + $0x98] sm:$0xf] %v279
                %v281 = vld [vmem:[%s201 + $0x100] sm:$0xf]
                %282 = vst [vmem:[%s202 + $0x9c] sm:$0xf] %v281
                %v283 = vld [vmem:[%s201 + $0x104] sm:$0xf]
                %284 = vst [vmem:[%s202 + $0xa0] sm:$0xf] %v283
                %v285 = vld [vmem:[%s201 + $0x108] sm:$0xf]
                %286 = vst [vmem:[%s202 + $0xa4] sm:$0xf] %v285
                %v287 = vld [vmem:[%s201 + $0x10c] sm:$0xf]
                %288 = vst [vmem:[%s202 + $0xa8] sm:$0xf] %v287
                %v289 = vld [vmem:[%s201 + $0x110] sm:$0xf]
                %290 = vst [vmem:[%s202 + $0xac] sm:$0xf] %v289
                %v291 = vld [vmem:[%s201 + $0x114] sm:$0xf]
                %292 = vst [vmem:[%s202 + $0xb0] sm:$0xf] %v291
                %v293 = vld [vmem:[%s201 + $0x118] sm:$0xf]
                %294 = vst [vmem:[%s202 + $0xb4] sm:$0xf] %v293
                %v295 = vld [vmem:[%s201 + $0x11c] sm:$0xf]
                %296 = vst [vmem:[%s202 + $0xb8] sm:$0xf] %v295
                %v297 = vld [vmem:[%s201 + $0x120] sm:$0xf]
                %298 = vst [vmem:[%s202 + $0xbc] sm:$0xf] %v297
                %v299 = vld [vmem:[%s201 + $0x124] sm:$0xf]
                %300 = vst [vmem:[%s202 + $0xc0] sm:$0xf] %v299
                %v301 = vld [vmem:[%s201 + $0x128] sm:$0xf]
                %302 = vst [vmem:[%s202 + $0xc4] sm:$0xf] %v301
                %v303 = vld [vmem:[%s201 + $0x190] sm:$0xf]
                %304 = vst [vmem:[%s202 + $0xc8] sm:$0xf] %v303
                %v305 = vld [vmem:[%s201 + $0x194] sm:$0xf]
                %306 = vst [vmem:[%s202 + $0xcc] sm:$0xf] %v305
                %v307 = vld [vmem:[%s201 + $0x198] sm:$0xf]
                %308 = vst [vmem:[%s202 + $0xd0] sm:$0xf] %v307
                %v309 = vld [vmem:[%s201 + $0x19c] sm:$0xf]
                %310 = vst [vmem:[%s202 + $0xd4] sm:$0xf] %v309
                %v311 = vld [vmem:[%s201 + $0x1a0] sm:$0xf]
                %312 = vst [vmem:[%s202 + $0xd8] sm:$0xf] %v311
                %v313 = vld [vmem:[%s201 + $0x1a4] sm:$0xf]
                %314 = vst [vmem:[%s202 + $0xdc] sm:$0xf] %v313
                %v315 = vld [vmem:[%s201 + $0x1a8] sm:$0xf]
                %316 = vst [vmem:[%s202 + $0xe0] sm:$0xf] %v315
                %v317 = vld [vmem:[%s201 + $0x1ac] sm:$0xf]
                %318 = vst [vmem:[%s202 + $0xe4] sm:$0xf] %v317
                %v319 = vld [vmem:[%s201 + $0x1b0] sm:$0xf]
                %320 = vst [vmem:[%s202 + $0xe8] sm:$0xf] %v319
                %v321 = vld [vmem:[%s201 + $0x1b4] sm:$0xf]
                %322 = vst [vmem:[%s202 + $0xec] sm:$0xf] %v321
                %v323 = vld [vmem:[%s201 + $0x1b8] sm:$0xf]
                %324 = vst [vmem:[%s202 + $0xf0] sm:$0xf] %v323
                %v325 = vld [vmem:[%s201 + $0x1bc] sm:$0xf]
                %326 = vst [vmem:[%s202 + $0xf4] sm:$0xf] %v325
                %v327 = vld [vmem:[%s201 + $0x1c0] sm:$0xf]
                %328 = vst [vmem:[%s202 + $0xf8] sm:$0xf] %v327
                %v329 = vld [vmem:[%s201 + $0x1c4] sm:$0xf]
                %330 = vst [vmem:[%s202 + $0xfc] sm:$0xf] %v329
                %v331 = vld [vmem:[%s201 + $0x1c8] sm:$0xf]
                %332 = vst [vmem:[%s202 + $0x100] sm:$0xf] %v331
                %v333 = vld [vmem:[%s201 + $0x1cc] sm:$0xf]
                %334 = vst [vmem:[%s202 + $0x104] sm:$0xf] %v333
                %v335 = vld [vmem:[%s201 + $0x1d0] sm:$0xf]
                %336 = vst [vmem:[%s202 + $0x108] sm:$0xf] %v335
                %v337 = vld [vmem:[%s201 + $0x1d4] sm:$0xf]
                %338 = vst [vmem:[%s202 + $0x10c] sm:$0xf] %v337
                %v339 = vld [vmem:[%s201 + $0x1d8] sm:$0xf]
                %340 = vst [vmem:[%s202 + $0x110] sm:$0xf] %v339
                %v341 = vld [vmem:[%s201 + $0x1dc] sm:$0xf]
                %342 = vst [vmem:[%s202 + $0x114] sm:$0xf] %v341
                %v343 = vld [vmem:[%s201 + $0x1e0] sm:$0xf]
                %344 = vst [vmem:[%s202 + $0x118] sm:$0xf] %v343
                %v345 = vld [vmem:[%s201 + $0x1e4] sm:$0xf]
                %346 = vst [vmem:[%s202 + $0x11c] sm:$0xf] %v345
                %v347 = vld [vmem:[%s201 + $0x1e8] sm:$0xf]
                %348 = vst [vmem:[%s202 + $0x120] sm:$0xf] %v347
                %v349 = vld [vmem:[%s201 + $0x1ec] sm:$0xf]
                %350 = vst [vmem:[%s202 + $0x124] sm:$0xf] %v349
                %v351 = vld [vmem:[%s201 + $0x1f0] sm:$0xf]
                %352 = vst [vmem:[%s202 + $0x128] sm:$0xf] %v351
                %v353 = vld [vmem:[%s201 + $0x258] sm:$0xf]
                %354 = vst [vmem:[%s202 + $0x12c] sm:$0xf] %v353
                %v355 = vld [vmem:[%s201 + $0x25c] sm:$0xf]
                %356 = vst [vmem:[%s202 + $0x130] sm:$0xf] %v355
                %v357 = vld [vmem:[%s201 + $0x260] sm:$0xf]
                %358 = vst [vmem:[%s202 + $0x134] sm:$0xf] %v357
                %v359 = vld [vmem:[%s201 + $0x264] sm:$0xf]
                %360 = vst [vmem:[%s202 + $0x138] sm:$0xf] %v359
                %v361 = vld [vmem:[%s201 + $0x268] sm:$0xf]
                %362 = vst [vmem:[%s202 + $0x13c] sm:$0xf] %v361
                %v363 = vld [vmem:[%s201 + $0x26c] sm:$0xf]
                %364 = vst [vmem:[%s202 + $0x140] sm:$0xf] %v363
                %v365 = vld [vmem:[%s201 + $0x270] sm:$0xf]
                %366 = vst [vmem:[%s202 + $0x144] sm:$0xf] %v365
                %v367 = vld [vmem:[%s201 + $0x274] sm:$0xf]
                %368 = vst [vmem:[%s202 + $0x148] sm:$0xf] %v367
                %v369 = vld [vmem:[%s201 + $0x278] sm:$0xf]
                %370 = vst [vmem:[%s202 + $0x14c] sm:$0xf] %v369
                %v371 = vld [vmem:[%s201 + $0x27c] sm:$0xf]
                %372 = vst [vmem:[%s202 + $0x150] sm:$0xf] %v371
                %v373 = vld [vmem:[%s201 + $0x280] sm:$0xf]
                %374 = vst [vmem:[%s202 + $0x154] sm:$0xf] %v373
                %v375 = vld [vmem:[%s201 + $0x284] sm:$0xf]
                %376 = vst [vmem:[%s202 + $0x158] sm:$0xf] %v375
                %v377 = vld [vmem:[%s201 + $0x288] sm:$0xf]
                %378 = vst [vmem:[%s202 + $0x15c] sm:$0xf] %v377
                %v379 = vld [vmem:[%s201 + $0x28c] sm:$0xf]
                %380 = vst [vmem:[%s202 + $0x160] sm:$0xf] %v379
                %v381 = vld [vmem:[%s201 + $0x290] sm:$0xf]
                %382 = vst [vmem:[%s202 + $0x164] sm:$0xf] %v381
                %v383 = vld [vmem:[%s201 + $0x294] sm:$0xf]
                %384 = vst [vmem:[%s202 + $0x168] sm:$0xf] %v383
                %v385 = vld [vmem:[%s201 + $0x298] sm:$0xf]
                %386 = vst [vmem:[%s202 + $0x16c] sm:$0xf] %v385
                %v387 = vld [vmem:[%s201 + $0x29c] sm:$0xf]
                %388 = vst [vmem:[%s202 + $0x170] sm:$0xf] %v387
                %v389 = vld [vmem:[%s201 + $0x2a0] sm:$0xf]
                %390 = vst [vmem:[%s202 + $0x174] sm:$0xf] %v389
                %v391 = vld [vmem:[%s201 + $0x2a4] sm:$0xf]
                %392 = vst [vmem:[%s202 + $0x178] sm:$0xf] %v391
                %v393 = vld [vmem:[%s201 + $0x2a8] sm:$0xf]
                %394 = vst [vmem:[%s202 + $0x17c] sm:$0xf] %v393
                %v395 = vld [vmem:[%s201 + $0x2ac] sm:$0xf]
                %396 = vst [vmem:[%s202 + $0x180] sm:$0xf] %v395
                %v397 = vld [vmem:[%s201 + $0x2b0] sm:$0xf]
                %398 = vst [vmem:[%s202 + $0x184] sm:$0xf] %v397
                %v399 = vld [vmem:[%s201 + $0x2b4] sm:$0xf]
                %400 = vst [vmem:[%s202 + $0x188] sm:$0xf] %v399
                %v401 = vld [vmem:[%s201 + $0x2b8] sm:$0xf]
                %402 = vst [vmem:[%s202 + $0x18c] sm:$0xf] %v401
              $region53: #{gtsrb_forward.4} parent=47 // loop_footer
                %s200 = sadd.s32 1, %s196
              $region54: #{gtsrb_forward.4} parent=47 // loop_footer_branch
                %195 = sbr.rel target = $region50
              $region55: #{gtsrb_forward.4} parent=47 // loop_exit
                _
            $region48: #{gtsrb_forward.4} parent=39 // pred_fallthru
              _
          $region40: #{gtsrb_forward.4} parent=35 // pred_fallthru
            _
          %622 = vnop
        $region36: #{gtsrb_forward.4} parent=31 // pred_fallthru
          _
      $region32: #{gtsrb_forward.4} parent=5 // pred_fallthru
        _
      %p623 = scmp.le.s32.totalorder 1, %s11
      %p624 = scmp.lt.s32.totalorder %s11, 3
      %p625 = pnand %p623, %p624
      %p626 = pneg %p625
      // Predicated region
      $region74: #{gtsrb_forward.4} parent=5 // pred_check
        _
      $region75: #{gtsrb_forward.4} parent=5 // pred_check_branch
        %628 = sbr.rel (%p625) target = $region77
      $region76: #{gtsrb_forward.4} parent=5 // pred_region
        %s629 = ssub.s32 %s11, 1
        %s630 = sand.u32 %s24, 1
        %s631 = sand.u32 %s24, 1
        %s632 = smul.addr %s631, 400
        %s633 = scalar_lea.vmem [#allocation2], %s632
        // Predicated region
        $region78: #{gtsrb_forward.4} parent=76 // pred_check
          %p634 = pneg %p37
        $region79: #{gtsrb_forward.4} parent=76 // pred_check_branch
          %636 = sbr.rel (%p634) target = $region81
        $region80: #{gtsrb_forward.4} parent=76 // pred_region
          _
        $region81: #{gtsrb_forward.4} parent=76 // pred_fallthru
          _
        %s637 = sand.u32 %s24, 1
        %s638 = sand.u32 %s24, 1
        %s639 = smul.addr %s638, 400
        %s640 = scalar_lea.vmem [#allocation2], %s639
        %p641 = pneg %p37
        %p642 = pneg %p34
        %p643 = pneg %p58
        %p644 = pneg %p55
        %p645 = pneg %p79
        %p646 = pneg %p76
        %p647 = pneg %p100
        %p648 = pneg %p97
        %p649 = pneg %p121
        %p650 = pneg %p118
        %p651 = pneg %p147
        %p652 = pneg %p144
        %p653 = scmp.lt.s32.totalorder %s16, 1
        %s654 = scalar_select %p653, %s16, 1
        %s655 = smul.addr %s654, 25
        %s656 = smul.addr %s655, 4
        %s657 = scalar_lea.vmem %s5, %s656
        %p658 = scmp.lt.s32.totalorder %s16, 1
        %s659 = scalar_select %p658, %s16, 1
        %s660 = smul.addr %s659, 25
        %s661 = smul.addr %s660, 4
        %s662 = scalar_lea.vmem %s5, %s661
        %v664 = vld [vmem:[%s1] sm:$0xf]
        %v665 = vld [vmem:[%s1 + $0x4] sm:$0xf]
        %v666 = vld [vmem:[%s1 + $0x8] sm:$0xf]
        %v667 = vld [vmem:[%s1 + $0xc] sm:$0xf]
        %v668 = vld [vmem:[%s1 + $0x10] sm:$0xf]
        %v669 = vld [vmem:[%s1 + $0x14] sm:$0xf]
        %v670 = vld [vmem:[%s1 + $0x18] sm:$0xf]
        %v671 = vld [vmem:[%s1 + $0x1c] sm:$0xf]
        %v672 = vld [vmem:[%s1 + $0x20] sm:$0xf]
        %v673 = vld [vmem:[%s1 + $0x24] sm:$0x3]
        %v674 = vld [vmem:[%s633] sm:$0xf]
        %v675 = vld [vmem:[%s633 + $0x4] sm:$0xf]
        %v676 = vld [vmem:[%s633 + $0x8] sm:$0xf]
        %v677 = vld [vmem:[%s633 + $0xc] sm:$0xf]
        %v678 = vld [vmem:[%s633 + $0x10] sm:$0xf]
        %v679 = vld [vmem:[%s633 + $0x14] sm:$0xf]
        %v680 = vld [vmem:[%s633 + $0x18] sm:$0xf]
        %v681 = vld [vmem:[%s633 + $0x1c] sm:$0xf]
        %v682 = vld [vmem:[%s633 + $0x20] sm:$0xf]
        %v683 = vld [vmem:[%s633 + $0x24] sm:$0xf]
        %v684 = vld [vmem:[%s633 + $0x28] sm:$0xf]
        %v685 = vld [vmem:[%s633 + $0x2c] sm:$0xf]
        %v686 = vld [vmem:[%s633 + $0x30] sm:$0xf]
        %v687 = vld [vmem:[%s633 + $0x34] sm:$0xf]
        %v688 = vld [vmem:[%s633 + $0x38] sm:$0xf]
        %v689 = vld [vmem:[%s633 + $0x3c] sm:$0xf]
        %v690 = vld [vmem:[%s633 + $0x40] sm:$0xf]
        %v691 = vld [vmem:[%s633 + $0x44] sm:$0xf]
        %v692 = vld [vmem:[%s633 + $0x48] sm:$0xf]
        %v693 = vld [vmem:[%s633 + $0x4c] sm:$0xf]
        %v694 = vld [vmem:[%s633 + $0x50] sm:$0xf]
        %v695 = vld [vmem:[%s633 + $0x54] sm:$0xf]
        %v696 = vld [vmem:[%s633 + $0x58] sm:$0xf]
        %v697 = vld [vmem:[%s633 + $0x5c] sm:$0xf]
        %v698 = vld [vmem:[%s633 + $0x60] sm:$0x3]
        %v724 = vunpack.c.l.b16 %v674
        %v725 = vunpack.c.l.b16 %v675
        %v726 = vunpack.c.l.b16 %v676
        %v727 = vunpack.c.l.b16 %v677
        %v728 = vunpack.c.l.b16 %v678
        %v729 = vunpack.c.l.b16 %v679
        %v730 = vunpack.c.l.b16 %v680
        %v731 = vunpack.c.l.b16 %v681
        %v732 = vunpack.c.l.b16 %v682
        %v733 = vunpack.c.l.b16 %v683
        %v734 = vunpack.c.l.b16 %v684
        %v735 = vunpack.c.l.b16 %v685
        %v736 = vunpack.c.l.b16 %v686
        %v737 = vunpack.c.l.b16 %v687
        %v738 = vunpack.c.l.b16 %v688
        %v739 = vunpack.c.l.b16 %v689
        %v740 = vunpack.c.l.b16 %v690
        %v741 = vunpack.c.l.b16 %v691
        %v742 = vunpack.c.l.b16 %v692
        %v743 = vunpack.c.l.b16 %v693
        %v744 = vunpack.c.l.b16 %v694
        %v745 = vunpack.c.l.b16 %v695
        %v746 = vunpack.c.l.b16 %v696
        %v747 = vunpack.c.l.b16 %v697
        %v748 = vunpack.c.l.b16 %v698
        %v749 = vpack.c.b16 %v725, %v724
        %v750 = vpack.c.b16 %v727, %v726
        %v751 = vpack.c.b16 %v729, %v728
        %v752 = vpack.c.b16 %v731, %v730
        %v753 = vpack.c.b16 %v733, %v732
        %v754 = vpack.c.b16 %v735, %v734
        %v755 = vpack.c.b16 %v737, %v736
        %v756 = vpack.c.b16 %v739, %v738
        %v757 = vpack.c.b16 %v741, %v740
        %v758 = vpack.c.b16 %v743, %v742
        %v759 = vpack.c.b16 %v745, %v744
        %v760 = vpack.c.b16 %v747, %v746
        %v761 = vpack.c.b16 %v748, %v748
        %v772 = vunpack.c.l.b16 %v664
        %v773 = vunpack.c.l.b16 %v665
        %v774 = vunpack.c.l.b16 %v666
        %v775 = vunpack.c.l.b16 %v667
        %v776 = vunpack.c.l.b16 %v668
        %v777 = vunpack.c.l.b16 %v669
        %v778 = vunpack.c.l.b16 %v670
        %v779 = vunpack.c.l.b16 %v671
        %v780 = vunpack.c.l.b16 %v672
        %v781 = vunpack.c.l.b16 %v673
        %v782 = vpack.c.b16 %v773, %v772
        %v783 = vpack.c.b16 %v775, %v774
        %v784 = vpack.c.b16 %v777, %v776
        %v785 = vpack.c.b16 %v779, %v778
        %v786 = vpack.c.b16 %v781, %v780
        %vm791 = vcmask 613376
        %v793 = vsel %vm791, %v749, 0
        %v796 = vsel %vm791, %v750, 0
        %v799 = vsel %vm791, %v751, 0
        %v802 = vsel %vm791, %v752, 0
        %v805 = vsel %vm791, %v753, 0
        %v808 = vsel %vm791, %v754, 0
        %v811 = vsel %vm791, %v755, 0
        %v814 = vsel %vm791, %v756, 0
        %v817 = vsel %vm791, %v757, 0
        %v820 = vsel %vm791, %v758, 0
        %v823 = vsel %vm791, %v759, 0
        %v826 = vsel %vm791, %v760, 0
        %v829 = vsel %vm791, %v761, 0
        %vm831 = vcmask 1044480
        %vm832 = vcmask 1045504
        %v833 = vsel %vm831, 4294967295, 65535
        %v834 = vsel %vm832, %v833, 0
        %v836 = vand.u32 %v786, %v834
        %838 = vmatprep.subr.bf16.mxu0 0
        %839 = vmatpush1.bf16.msra.mxu0 %v782
        %840 = vmatprep.subr.bf16.mxu0 0
        %841 = vmatpush1.bf16.msra.mxu0 %v783
        %842 = vmatprep.subr.bf16.mxu0 0
        %843 = vmatpush1.bf16.msra.mxu0 %v784
        %844 = vmatprep.subr.bf16.mxu0 0
        %845 = vmatpush1.bf16.msra.mxu0 %v785
        %846 = vmatprep.subr.bf16.mxu0 0
        %847 = vmatpush1.bf16.msra.mxu0 %v836
        %848 = vmatprep.subr.bf16.mxu0 0
        %849 = vmatpush1.bf16.msra.mxu0 0
        %850 = vmatprep.subr.bf16.mxu0 0
        %851 = vmatpush1.bf16.msra.mxu0 0
        %852 = vmatprep.subr.bf16.mxu0 0
        %853 = vmatpush1.bf16.msra.mxu0 0
        %854 = vmatprep.subr.bf16.mxu0 0
        %855 = vmatpush1.bf16.msra.mxu0 0
        %856 = vmatprep.subr.bf16.mxu0 0
        %857 = vmatpush1.bf16.msra.mxu0 0
        %858 = vmatprep.subr.bf16.mxu0 0
        %859 = vmatpush1.bf16.msra.mxu0 0
        %860 = vmatprep.subr.bf16.mxu0 0
        %861 = vmatpush1.bf16.msra.mxu0 0
        %862 = vmatprep.subr.bf16.mxu0 0
        %863 = vmatpush1.bf16.msra.mxu0 0
        %864 = vmatprep.subr.bf16.mxu0 0
        %865 = vmatpush1.bf16.msra.mxu0 0
        %866 = vmatprep.subr.bf16.mxu0 0
        %867 = vmatpush1.bf16.msra.mxu0 0
        %868 = vmatprep.subr.bf16.mxu0 0
        %869 = vmatpush1.bf16.msra.mxu0 0
        %870 = vmatprep.mubr.bf16.mxu0 0
        %871 = vmatmul.mubr.bf16.gmra.mrb[0].mxu0 %v793
        %v872 = vpop.f32.mrb[0].mxu0
        %v873 = vadd.f32 0.0, %v872
        %v874 = vpop.f32.mrb[0].mxu0
        %v875 = vpop.f32.mrb[0].mxu0
        %v876 = vadd.f32 0.0, %v875
        %v877 = vpop.f32.mrb[0].mxu0
        %878 = vmatprep.mubr.bf16.mxu0 0
        %879 = vmatmul.mubr.bf16.gmra.mrb[0].mxu0 %v796
        %v880 = vpop.f32.mrb[0].mxu0
        %v881 = vadd.f32 0.0, %v880
        %v882 = vpop.f32.mrb[0].mxu0
        %v883 = vpop.f32.mrb[0].mxu0
        %v884 = vadd.f32 0.0, %v883
        %v885 = vpop.f32.mrb[0].mxu0
        %886 = vmatprep.mubr.bf16.mxu0 0
        %887 = vmatmul.mubr.bf16.gmra.mrb[0].mxu0 %v799
        %v888 = vpop.f32.mrb[0].mxu0
        %v889 = vadd.f32 0.0, %v888
        %v890 = vpop.f32.mrb[0].mxu0
        %v891 = vpop.f32.mrb[0].mxu0
        %v892 = vadd.f32 0.0, %v891
        %v893 = vpop.f32.mrb[0].mxu0
        %894 = vmatprep.mubr.bf16.mxu0 0
        %895 = vmatmul.mubr.bf16.gmra.mrb[0].mxu0 %v802
        %v896 = vpop.f32.mrb[0].mxu0
        %v897 = vadd.f32 0.0, %v896
        %v898 = vpop.f32.mrb[0].mxu0
        %v899 = vpop.f32.mrb[0].mxu0
        %v900 = vadd.f32 0.0, %v899
        %v901 = vpop.f32.mrb[0].mxu0
        %902 = vmatprep.mubr.bf16.mxu0 0
        %903 = vmatmul.mubr.bf16.gmra.mrb[0].mxu0 %v805
        %v904 = vpop.f32.mrb[0].mxu0
        %v905 = vadd.f32 0.0, %v904
        %v906 = vpop.f32.mrb[0].mxu0
        %v907 = vpop.f32.mrb[0].mxu0
        %v908 = vadd.f32 0.0, %v907
        %v909 = vpop.f32.mrb[0].mxu0
        %910 = vmatprep.mubr.bf16.mxu0 0
        %911 = vmatmul.mubr.bf16.gmra.mrb[0].mxu0 %v808
        %v912 = vpop.f32.mrb[0].mxu0
        %v913 = vadd.f32 0.0, %v912
        %v914 = vpop.f32.mrb[0].mxu0
        %v915 = vpop.f32.mrb[0].mxu0
        %v916 = vadd.f32 0.0, %v915
        %v917 = vpop.f32.mrb[0].mxu0
        %918 = vmatprep.mubr.bf16.mxu0 0
        %919 = vmatmul.mubr.bf16.gmra.mrb[0].mxu0 %v811
        %v920 = vpop.f32.mrb[0].mxu0
        %v921 = vadd.f32 0.0, %v920
        %v922 = vpop.f32.mrb[0].mxu0
        %v923 = vpop.f32.mrb[0].mxu0
        %v924 = vadd.f32 0.0, %v923
        %v925 = vpop.f32.mrb[0].mxu0
        %926 = vmatprep.mubr.bf16.mxu0 0
        %927 = vmatmul.mubr.bf16.gmra.mrb[0].mxu0 %v814
        %v928 = vpop.f32.mrb[0].mxu0
        %v929 = vadd.f32 0.0, %v928
        %v930 = vpop.f32.mrb[0].mxu0
        %v931 = vpop.f32.mrb[0].mxu0
        %v932 = vadd.f32 0.0, %v931
        %v933 = vpop.f32.mrb[0].mxu0
        %934 = vmatprep.mubr.bf16.mxu0 0
        %935 = vmatmul.mubr.bf16.gmra.mrb[0].mxu0 %v817
        %v936 = vpop.f32.mrb[0].mxu0
        %v937 = vadd.f32 0.0, %v936
        %v938 = vpop.f32.mrb[0].mxu0
        %v939 = vpop.f32.mrb[0].mxu0
        %v940 = vadd.f32 0.0, %v939
        %v941 = vpop.f32.mrb[0].mxu0
        %942 = vmatprep.mubr.bf16.mxu0 0
        %943 = vmatmul.mubr.bf16.gmra.mrb[0].mxu0 %v820
        %v944 = vpop.f32.mrb[0].mxu0
        %v945 = vadd.f32 0.0, %v944
        %v946 = vpop.f32.mrb[0].mxu0
        %v947 = vpop.f32.mrb[0].mxu0
        %v948 = vadd.f32 0.0, %v947
        %v949 = vpop.f32.mrb[0].mxu0
        %950 = vmatprep.mubr.bf16.mxu0 0
        %951 = vmatmul.mubr.bf16.gmra.mrb[0].mxu0 %v823
        %v952 = vpop.f32.mrb[0].mxu0
        %v953 = vadd.f32 0.0, %v952
        %v954 = vpop.f32.mrb[0].mxu0
        %v955 = vpop.f32.mrb[0].mxu0
        %v956 = vadd.f32 0.0, %v955
        %v957 = vpop.f32.mrb[0].mxu0
        %958 = vmatprep.mubr.bf16.mxu0 0
        %959 = vmatmul.mubr.bf16.gmra.mrb[0].mxu0 %v826
        %v960 = vpop.f32.mrb[0].mxu0
        %v961 = vadd.f32 0.0, %v960
        %v962 = vpop.f32.mrb[0].mxu0
        %v963 = vpop.f32.mrb[0].mxu0
        %v964 = vadd.f32 0.0, %v963
        %v965 = vpop.f32.mrb[0].mxu0
        %966 = vmatprep.mubr.bf16.mxu0 0
        %967 = vmatmul.mubr.bf16.gmra.mrb[0].mxu0 %v829
        %v968 = vpop.f32.mrb[0].mxu0
        %v969 = vadd.f32 0.0, %v968
        %v970 = vpop.f32.mrb[0].mxu0
        %v971 = vpop.f32.mrb[0].mxu0
        %v972 = vpop.f32.mrb[0].mxu0
        %973 = vdwg.mxu0
        %s974 = scalar_lea.vmem %s633, 100 [#allocation2]
        %v975 = vld [vmem:[%s974] sm:$0xf]
        %v976 = vld [vmem:[%s974 + $0x4] sm:$0xf]
        %v977 = vld [vmem:[%s974 + $0x8] sm:$0xf]
        %v978 = vld [vmem:[%s974 + $0xc] sm:$0xf]
        %v979 = vld [vmem:[%s974 + $0x10] sm:$0xf]
        %v980 = vld [vmem:[%s974 + $0x14] sm:$0xf]
        %v981 = vld [vmem:[%s974 + $0x18] sm:$0xf]
        %v982 = vld [vmem:[%s974 + $0x1c] sm:$0xf]
        %v983 = vld [vmem:[%s974 + $0x20] sm:$0xf]
        %v984 = vld [vmem:[%s974 + $0x24] sm:$0xf]
        %v985 = vld [vmem:[%s974 + $0x28] sm:$0xf]
        %v986 = vld [vmem:[%s974 + $0x2c] sm:$0xf]
        %v987 = vld [vmem:[%s974 + $0x30] sm:$0xf]
        %v988 = vld [vmem:[%s974 + $0x34] sm:$0xf]
        %v989 = vld [vmem:[%s974 + $0x38] sm:$0xf]
        %v990 = vld [vmem:[%s974 + $0x3c] sm:$0xf]
        %v991 = vld [vmem:[%s974 + $0x40] sm:$0xf]
        %v992 = vld [vmem:[%s974 + $0x44] sm:$0xf]
        %v993 = vld [vmem:[%s974 + $0x48] sm:$0xf]
        %v994 = vld [vmem:[%s974 + $0x4c] sm:$0xf]
        %v995 = vld [vmem:[%s974 + $0x50] sm:$0xf]
        %v996 = vld [vmem:[%s974 + $0x54] sm:$0xf]
        %v997 = vld [vmem:[%s974 + $0x58] sm:$0xf]
        %v998 = vld [vmem:[%s974 + $0x5c] sm:$0xf]
        %v999 = vld [vmem:[%s974 + $0x60] sm:$0x3]
        %v1025 = vunpack.c.l.b16 %v975
        %v1026 = vunpack.c.l.b16 %v976
        %v1027 = vunpack.c.l.b16 %v977
        %v1028 = vunpack.c.l.b16 %v978
        %v1029 = vunpack.c.l.b16 %v979
        %v1030 = vunpack.c.l.b16 %v980
        %v1031 = vunpack.c.l.b16 %v981
        %v1032 = vunpack.c.l.b16 %v982
        %v1033 = vunpack.c.l.b16 %v983
        %v1034 = vunpack.c.l.b16 %v984
        %v1035 = vunpack.c.l.b16 %v985
        %v1036 = vunpack.c.l.b16 %v986
        %v1037 = vunpack.c.l.b16 %v987
        %v1038 = vunpack.c.l.b16 %v988
        %v1039 = vunpack.c.l.b16 %v989
        %v1040 = vunpack.c.l.b16 %v990
        %v1041 = vunpack.c.l.b16 %v991
        %v1042 = vunpack.c.l.b16 %v992
        %v1043 = vunpack.c.l.b16 %v993
        %v1044 = vunpack.c.l.b16 %v994
        %v1045 = vunpack.c.l.b16 %v995
        %v1046 = vunpack.c.l.b16 %v996
        %v1047 = vunpack.c.l.b16 %v997
        %v1048 = vunpack.c.l.b16 %v998
        %v1049 = vunpack.c.l.b16 %v999
        %v1050 = vpack.c.b16 %v1026, %v1025
        %v1051 = vpack.c.b16 %v1028, %v1027
        %v1052 = vpack.c.b16 %v1030, %v1029
        %v1053 = vpack.c.b16 %v1032, %v1031
        %v1054 = vpack.c.b16 %v1034, %v1033
        %v1055 = vpack.c.b16 %v1036, %v1035
        %v1056 = vpack.c.b16 %v1038, %v1037
        %v1057 = vpack.c.b16 %v1040, %v1039
        %v1058 = vpack.c.b16 %v1042, %v1041
        %v1059 = vpack.c.b16 %v1044, %v1043
        %v1060 = vpack.c.b16 %v1046, %v1045
        %v1061 = vpack.c.b16 %v1048, %v1047
        %v1062 = vpack.c.b16 %v1049, %v1049
        %v1064 = vsel %vm791, %v1050, 0
        %v1067 = vsel %vm791, %v1051, 0
        %v1070 = vsel %vm791, %v1052, 0
        %v1073 = vsel %vm791, %v1053, 0
        %v1076 = vsel %vm791, %v1054, 0
        %v1079 = vsel %vm791, %v1055, 0
        %v1082 = vsel %vm791, %v1056, 0
        %v1085 = vsel %vm791, %v1057, 0
        %v1088 = vsel %vm791, %v1058, 0
        %v1091 = vsel %vm791, %v1059, 0
        %v1094 = vsel %vm791, %v1060, 0
        %v1097 = vsel %vm791, %v1061, 0
        %v1100 = vsel %vm791, %v1062, 0
        %1102 = vmatprep.subr.bf16.mxu0 0
        %1103 = vmatpush1.bf16.msra.mxu0 %v782
        %1104 = vmatprep.subr.bf16.mxu0 0
        %1105 = vmatpush1.bf16.msra.mxu0 %v783
        %1106 = vmatprep.subr.bf16.mxu0 0
        %1107 = vmatpush1.bf16.msra.mxu0 %v784
        %1108 = vmatprep.subr.bf16.mxu0 0
        %1109 = vmatpush1.bf16.msra.mxu0 %v785
        %1110 = vmatprep.subr.bf16.mxu0 0
        %1111 = vmatpush1.bf16.msra.mxu0 %v836
        %1112 = vmatprep.subr.bf16.mxu0 0
        %1113 = vmatpush1.bf16.msra.mxu0 0
        %1114 = vmatprep.subr.bf16.mxu0 0
        %1115 = vmatpush1.bf16.msra.mxu0 0
        %1116 = vmatprep.subr.bf16.mxu0 0
        %1117 = vmatpush1.bf16.msra.mxu0 0
        %1118 = vmatprep.subr.bf16.mxu0 0
        %1119 = vmatpush1.bf16.msra.mxu0 0
        %1120 = vmatprep.subr.bf16.mxu0 0
        %1121 = vmatpush1.bf16.msra.mxu0 0
        %1122 = vmatprep.subr.bf16.mxu0 0
        %1123 = vmatpush1.bf16.msra.mxu0 0
        %1124 = vmatprep.subr.bf16.mxu0 0
        %1125 = vmatpush1.bf16.msra.mxu0 0
        %1126 = vmatprep.subr.bf16.mxu0 0
        %1127 = vmatpush1.bf16.msra.mxu0 0
        %1128 = vmatprep.subr.bf16.mxu0 0
        %1129 = vmatpush1.bf16.msra.mxu0 0
        %1130 = vmatprep.subr.bf16.mxu0 0
        %1131 = vmatpush1.bf16.msra.mxu0 0
        %1132 = vmatprep.subr.bf16.mxu0 0
        %1133 = vmatpush1.bf16.msra.mxu0 0
        %1134 = vmatprep.mubr.bf16.mxu0 0
        %1135 = vmatmul.mubr.bf16.gmra.mrb[0].mxu0 %v1064
        %v1136 = vpop.f32.mrb[0].mxu0
        %v1137 = vadd.f32 0.0, %v1136
        %v1138 = vpop.f32.mrb[0].mxu0
        %v1139 = vpop.f32.mrb[0].mxu0
        %v1140 = vadd.f32 0.0, %v1139
        %v1141 = vpop.f32.mrb[0].mxu0
        %1142 = vmatprep.mubr.bf16.mxu0 0
        %1143 = vmatmul.mubr.bf16.gmra.mrb[0].mxu0 %v1067
        %v1144 = vpop.f32.mrb[0].mxu0
        %v1145 = vadd.f32 0.0, %v1144
        %v1146 = vpop.f32.mrb[0].mxu0
        %v1147 = vpop.f32.mrb[0].mxu0
        %v1148 = vadd.f32 0.0, %v1147
        %v1149 = vpop.f32.mrb[0].mxu0
        %1150 = vmatprep.mubr.bf16.mxu0 0
        %1151 = vmatmul.mubr.bf16.gmra.mrb[0].mxu0 %v1070
        %v1152 = vpop.f32.mrb[0].mxu0
        %v1153 = vadd.f32 0.0, %v1152
        %v1154 = vpop.f32.mrb[0].mxu0
        %v1155 = vpop.f32.mrb[0].mxu0
        %v1156 = vadd.f32 0.0, %v1155
        %v1157 = vpop.f32.mrb[0].mxu0
        %1158 = vmatprep.mubr.bf16.mxu0 0
        %1159 = vmatmul.mubr.bf16.gmra.mrb[0].mxu0 %v1073
        %v1160 = vpop.f32.mrb[0].mxu0
        %v1161 = vadd.f32 0.0, %v1160
        %v1162 = vpop.f32.mrb[0].mxu0
        %v1163 = vpop.f32.mrb[0].mxu0
        %v1164 = vadd.f32 0.0, %v1163
        %v1165 = vpop.f32.mrb[0].mxu0
        %1166 = vmatprep.mubr.bf16.mxu0 0
        %1167 = vmatmul.mubr.bf16.gmra.mrb[0].mxu0 %v1076
        %v1168 = vpop.f32.mrb[0].mxu0
        %v1169 = vadd.f32 0.0, %v1168
        %v1170 = vpop.f32.mrb[0].mxu0
        %v1171 = vpop.f32.mrb[0].mxu0
        %v1172 = vadd.f32 0.0, %v1171
        %v1173 = vpop.f32.mrb[0].mxu0
        %1174 = vmatprep.mubr.bf16.mxu0 0
        %1175 = vmatmul.mubr.bf16.gmra.mrb[0].mxu0 %v1079
        %v1176 = vpop.f32.mrb[0].mxu0
        %v1177 = vadd.f32 0.0, %v1176
        %v1178 = vpop.f32.mrb[0].mxu0
        %v1179 = vpop.f32.mrb[0].mxu0
        %v1180 = vadd.f32 0.0, %v1179
        %v1181 = vpop.f32.mrb[0].mxu0
        %1182 = vmatprep.mubr.bf16.mxu0 0
        %1183 = vmatmul.mubr.bf16.gmra.mrb[0].mxu0 %v1082
        %v1184 = vpop.f32.mrb[0].mxu0
        %v1185 = vadd.f32 0.0, %v1184
        %v1186 = vpop.f32.mrb[0].mxu0
        %v1187 = vpop.f32.mrb[0].mxu0
        %v1188 = vadd.f32 0.0, %v1187
        %v1189 = vpop.f32.mrb[0].mxu0
        %1190 = vmatprep.mubr.bf16.mxu0 0
        %1191 = vmatmul.mubr.bf16.gmra.mrb[0].mxu0 %v1085
        %v1192 = vpop.f32.mrb[0].mxu0
        %v1193 = vadd.f32 0.0, %v1192
        %v1194 = vpop.f32.mrb[0].mxu0
        %v1195 = vpop.f32.mrb[0].mxu0
        %v1196 = vadd.f32 0.0, %v1195
        %v1197 = vpop.f32.mrb[0].mxu0
        %1198 = vmatprep.mubr.bf16.mxu0 0
        %1199 = vmatmul.mubr.bf16.gmra.mrb[0].mxu0 %v1088
        %v1200 = vpop.f32.mrb[0].mxu0
        %v1201 = vadd.f32 0.0, %v1200
        %v1202 = vpop.f32.mrb[0].mxu0
        %v1203 = vpop.f32.mrb[0].mxu0
        %v1204 = vadd.f32 0.0, %v1203
        %v1205 = vpop.f32.mrb[0].mxu0
        %1206 = vmatprep.mubr.bf16.mxu0 0
        %1207 = vmatmul.mubr.bf16.gmra.mrb[0].mxu0 %v1091
        %v1208 = vpop.f32.mrb[0].mxu0
        %v1209 = vadd.f32 0.0, %v1208
        %v1210 = vpop.f32.mrb[0].mxu0
        %v1211 = vpop.f32.mrb[0].mxu0
        %v1212 = vadd.f32 0.0, %v1211
        %v1213 = vpop.f32.mrb[0].mxu0
        %1214 = vmatprep.mubr.bf16.mxu0 0
        %1215 = vmatmul.mubr.bf16.gmra.mrb[0].mxu0 %v1094
        %v1216 = vpop.f32.mrb[0].mxu0
        %v1217 = vadd.f32 0.0, %v1216
        %v1218 = vpop.f32.mrb[0].mxu0
        %v1219 = vpop.f32.mrb[0].mxu0
        %v1220 = vadd.f32 0.0, %v1219
        %v1221 = vpop.f32.mrb[0].mxu0
        %1222 = vmatprep.mubr.bf16.mxu0 0
        %1223 = vmatmul.mubr.bf16.gmra.mrb[0].mxu0 %v1097
        %v1224 = vpop.f32.mrb[0].mxu0
        %v1225 = vadd.f32 0.0, %v1224
        %v1226 = vpop.f32.mrb[0].mxu0
        %v1227 = vpop.f32.mrb[0].mxu0
        %v1228 = vadd.f32 0.0, %v1227
        %v1229 = vpop.f32.mrb[0].mxu0
        %1230 = vmatprep.mubr.bf16.mxu0 0
        %1231 = vmatmul.mubr.bf16.gmra.mrb[0].mxu0 %v1100
        %v1232 = vpop.f32.mrb[0].mxu0
        %v1233 = vadd.f32 0.0, %v1232
        %v1234 = vpop.f32.mrb[0].mxu0
        %v1235 = vpop.f32.mrb[0].mxu0
        %v1236 = vpop.f32.mrb[0].mxu0
        %1237 = vdwg.mxu0
        %v1238 = vmax.f32 %v873, %v1137
        %v1239 = vmax.f32 %v876, %v1140
        %v1240 = vmax.f32 %v881, %v1145
        %v1241 = vmax.f32 %v884, %v1148
        %v1242 = vmax.f32 %v889, %v1153
        %v1243 = vmax.f32 %v892, %v1156
        %v1244 = vmax.f32 %v897, %v1161
        %v1245 = vmax.f32 %v900, %v1164
        %v1246 = vmax.f32 %v905, %v1169
        %v1247 = vmax.f32 %v908, %v1172
        %v1248 = vmax.f32 %v913, %v1177
        %v1249 = vmax.f32 %v916, %v1180
        %v1250 = vmax.f32 %v921, %v1185
        %v1251 = vmax.f32 %v924, %v1188
        %v1252 = vmax.f32 %v929, %v1193
        %v1253 = vmax.f32 %v932, %v1196
        %v1254 = vmax.f32 %v937, %v1201
        %v1255 = vmax.f32 %v940, %v1204
        %v1256 = vmax.f32 %v945, %v1209
        %v1257 = vmax.f32 %v948, %v1212
        %v1258 = vmax.f32 %v953, %v1217
        %v1259 = vmax.f32 %v956, %v1220
        %v1260 = vmax.f32 %v961, %v1225
        %v1261 = vmax.f32 %v964, %v1228
        %v1262 = vmax.f32 %v969, %v1233
        %s1263 = scalar_lea.vmem %s633, 200 [#allocation2]
        %v1264 = vld [vmem:[%s1263] sm:$0xf]
        %v1265 = vld [vmem:[%s1263 + $0x4] sm:$0xf]
        %v1266 = vld [vmem:[%s1263 + $0x8] sm:$0xf]
        %v1267 = vld [vmem:[%s1263 + $0xc] sm:$0xf]
        %v1268 = vld [vmem:[%s1263 + $0x10] sm:$0xf]
        %v1269 = vld [vmem:[%s1263 + $0x14] sm:$0xf]
        %v1270 = vld [vmem:[%s1263 + $0x18] sm:$0xf]
        %v1271 = vld [vmem:[%s1263 + $0x1c] sm:$0xf]
        %v1272 = vld [vmem:[%s1263 + $0x20] sm:$0xf]
        %v1273 = vld [vmem:[%s1263 + $0x24] sm:$0xf]
        %v1274 = vld [vmem:[%s1263 + $0x28] sm:$0xf]
        %v1275 = vld [vmem:[%s1263 + $0x2c] sm:$0xf]
        %v1276 = vld [vmem:[%s1263 + $0x30] sm:$0xf]
        %v1277 = vld [vmem:[%s1263 + $0x34] sm:$0xf]
        %v1278 = vld [vmem:[%s1263 + $0x38] sm:$0xf]
        %v1279 = vld [vmem:[%s1263 + $0x3c] sm:$0xf]
        %v1280 = vld [vmem:[%s1263 + $0x40] sm:$0xf]
        %v1281 = vld [vmem:[%s1263 + $0x44] sm:$0xf]
        %v1282 = vld [vmem:[%s1263 + $0x48] sm:$0xf]
        %v1283 = vld [vmem:[%s1263 + $0x4c] sm:$0xf]
        %v1284 = vld [vmem:[%s1263 + $0x50] sm:$0xf]
        %v1285 = vld [vmem:[%s1263 + $0x54] sm:$0xf]
        %v1286 = vld [vmem:[%s1263 + $0x58] sm:$0xf]
        %v1287 = vld [vmem:[%s1263 + $0x5c] sm:$0xf]
        %v1288 = vld [vmem:[%s1263 + $0x60] sm:$0x3]
        %v1314 = vunpack.c.l.b16 %v1264
        %v1315 = vunpack.c.l.b16 %v1265
        %v1316 = vunpack.c.l.b16 %v1266
        %v1317 = vunpack.c.l.b16 %v1267
        %v1318 = vunpack.c.l.b16 %v1268
        %v1319 = vunpack.c.l.b16 %v1269
        %v1320 = vunpack.c.l.b16 %v1270
        %v1321 = vunpack.c.l.b16 %v1271
        %v1322 = vunpack.c.l.b16 %v1272
        %v1323 = vunpack.c.l.b16 %v1273
        %v1324 = vunpack.c.l.b16 %v1274
        %v1325 = vunpack.c.l.b16 %v1275
        %v1326 = vunpack.c.l.b16 %v1276
        %v1327 = vunpack.c.l.b16 %v1277
        %v1328 = vunpack.c.l.b16 %v1278
        %v1329 = vunpack.c.l.b16 %v1279
        %v1330 = vunpack.c.l.b16 %v1280
        %v1331 = vunpack.c.l.b16 %v1281
        %v1332 = vunpack.c.l.b16 %v1282
        %v1333 = vunpack.c.l.b16 %v1283
        %v1334 = vunpack.c.l.b16 %v1284
        %v1335 = vunpack.c.l.b16 %v1285
        %v1336 = vunpack.c.l.b16 %v1286
        %v1337 = vunpack.c.l.b16 %v1287
        %v1338 = vunpack.c.l.b16 %v1288
        %v1339 = vpack.c.b16 %v1315, %v1314
        %v1340 = vpack.c.b16 %v1317, %v1316
        %v1341 = vpack.c.b16 %v1319, %v1318
        %v1342 = vpack.c.b16 %v1321, %v1320
        %v1343 = vpack.c.b16 %v1323, %v1322
        %v1344 = vpack.c.b16 %v1325, %v1324
        %v1345 = vpack.c.b16 %v1327, %v1326
        %v1346 = vpack.c.b16 %v1329, %v1328
        %v1347 = vpack.c.b16 %v1331, %v1330
        %v1348 = vpack.c.b16 %v1333, %v1332
        %v1349 = vpack.c.b16 %v1335, %v1334
        %v1350 = vpack.c.b16 %v1337, %v1336
        %v1351 = vpack.c.b16 %v1338, %v1338
        %v1353 = vsel %vm791, %v1339, 0
        %v1356 = vsel %vm791, %v1340, 0
        %v1359 = vsel %vm791, %v1341, 0
        %v1362 = vsel %vm791, %v1342, 0
        %v1365 = vsel %vm791, %v1343, 0
        %v1368 = vsel %vm791, %v1344, 0
        %v1371 = vsel %vm791, %v1345, 0
        %v1374 = vsel %vm791, %v1346, 0
        %v1377 = vsel %vm791, %v1347, 0
        %v1380 = vsel %vm791, %v1348, 0
        %v1383 = vsel %vm791, %v1349, 0
        %v1386 = vsel %vm791, %v1350, 0
        %v1389 = vsel %vm791, %v1351, 0
        %1391 = vmatprep.subr.bf16.mxu0 0
        %1392 = vmatpush1.bf16.msra.mxu0 %v782
        %1393 = vmatprep.subr.bf16.mxu0 0
        %1394 = vmatpush1.bf16.msra.mxu0 %v783
        %1395 = vmatprep.subr.bf16.mxu0 0
        %1396 = vmatpush1.bf16.msra.mxu0 %v784
        %1397 = vmatprep.subr.bf16.mxu0 0
        %1398 = vmatpush1.bf16.msra.mxu0 %v785
        %1399 = vmatprep.subr.bf16.mxu0 0
        %1400 = vmatpush1.bf16.msra.mxu0 %v836
        %1401 = vmatprep.subr.bf16.mxu0 0
        %1402 = vmatpush1.bf16.msra.mxu0 0
        %1403 = vmatprep.subr.bf16.mxu0 0
        %1404 = vmatpush1.bf16.msra.mxu0 0
        %1405 = vmatprep.subr.bf16.mxu0 0
        %1406 = vmatpush1.bf16.msra.mxu0 0
        %1407 = vmatprep.subr.bf16.mxu0 0
        %1408 = vmatpush1.bf16.msra.mxu0 0
        %1409 = vmatprep.subr.bf16.mxu0 0
        %1410 = vmatpush1.bf16.msra.mxu0 0
        %1411 = vmatprep.subr.bf16.mxu0 0
        %1412 = vmatpush1.bf16.msra.mxu0 0
        %1413 = vmatprep.subr.bf16.mxu0 0
        %1414 = vmatpush1.bf16.msra.mxu0 0
        %1415 = vmatprep.subr.bf16.mxu0 0
        %1416 = vmatpush1.bf16.msra.mxu0 0
        %1417 = vmatprep.subr.bf16.mxu0 0
        %1418 = vmatpush1.bf16.msra.mxu0 0
        %1419 = vmatprep.subr.bf16.mxu0 0
        %1420 = vmatpush1.bf16.msra.mxu0 0
        %1421 = vmatprep.subr.bf16.mxu0 0
        %1422 = vmatpush1.bf16.msra.mxu0 0
        %1423 = vmatprep.mubr.bf16.mxu0 0
        %1424 = vmatmul.mubr.bf16.gmra.mrb[0].mxu0 %v1353
        %v1425 = vpop.f32.mrb[0].mxu0
        %v1426 = vadd.f32 0.0, %v1425
        %v1427 = vpop.f32.mrb[0].mxu0
        %v1428 = vpop.f32.mrb[0].mxu0
        %v1429 = vadd.f32 0.0, %v1428
        %v1430 = vpop.f32.mrb[0].mxu0
        %1431 = vmatprep.mubr.bf16.mxu0 0
        %1432 = vmatmul.mubr.bf16.gmra.mrb[0].mxu0 %v1356
        %v1433 = vpop.f32.mrb[0].mxu0
        %v1434 = vadd.f32 0.0, %v1433
        %v1435 = vpop.f32.mrb[0].mxu0
        %v1436 = vpop.f32.mrb[0].mxu0
        %v1437 = vadd.f32 0.0, %v1436
        %v1438 = vpop.f32.mrb[0].mxu0
        %1439 = vmatprep.mubr.bf16.mxu0 0
        %1440 = vmatmul.mubr.bf16.gmra.mrb[0].mxu0 %v1359
        %v1441 = vpop.f32.mrb[0].mxu0
        %v1442 = vadd.f32 0.0, %v1441
        %v1443 = vpop.f32.mrb[0].mxu0
        %v1444 = vpop.f32.mrb[0].mxu0
        %v1445 = vadd.f32 0.0, %v1444
        %v1446 = vpop.f32.mrb[0].mxu0
        %1447 = vmatprep.mubr.bf16.mxu0 0
        %1448 = vmatmul.mubr.bf16.gmra.mrb[0].mxu0 %v1362
        %v1449 = vpop.f32.mrb[0].mxu0
        %v1450 = vadd.f32 0.0, %v1449
        %v1451 = vpop.f32.mrb[0].mxu0
        %v1452 = vpop.f32.mrb[0].mxu0
        %v1453 = vadd.f32 0.0, %v1452
        %v1454 = vpop.f32.mrb[0].mxu0
        %1455 = vmatprep.mubr.bf16.mxu0 0
        %1456 = vmatmul.mubr.bf16.gmra.mrb[0].mxu0 %v1365
        %v1457 = vpop.f32.mrb[0].mxu0
        %v1458 = vadd.f32 0.0, %v1457
        %v1459 = vpop.f32.mrb[0].mxu0
        %v1460 = vpop.f32.mrb[0].mxu0
        %v1461 = vadd.f32 0.0, %v1460
        %v1462 = vpop.f32.mrb[0].mxu0
        %1463 = vmatprep.mubr.bf16.mxu0 0
        %1464 = vmatmul.mubr.bf16.gmra.mrb[0].mxu0 %v1368
        %v1465 = vpop.f32.mrb[0].mxu0
        %v1466 = vadd.f32 0.0, %v1465
        %v1467 = vpop.f32.mrb[0].mxu0
        %v1468 = vpop.f32.mrb[0].mxu0
        %v1469 = vadd.f32 0.0, %v1468
        %v1470 = vpop.f32.mrb[0].mxu0
        %1471 = vmatprep.mubr.bf16.mxu0 0
        %1472 = vmatmul.mubr.bf16.gmra.mrb[0].mxu0 %v1371
        %v1473 = vpop.f32.mrb[0].mxu0
        %v1474 = vadd.f32 0.0, %v1473
        %v1475 = vpop.f32.mrb[0].mxu0
        %v1476 = vpop.f32.mrb[0].mxu0
        %v1477 = vadd.f32 0.0, %v1476
        %v1478 = vpop.f32.mrb[0].mxu0
        %1479 = vmatprep.mubr.bf16.mxu0 0
        %1480 = vmatmul.mubr.bf16.gmra.mrb[0].mxu0 %v1374
        %v1481 = vpop.f32.mrb[0].mxu0
        %v1482 = vadd.f32 0.0, %v1481
        %v1483 = vpop.f32.mrb[0].mxu0
        %v1484 = vpop.f32.mrb[0].mxu0
        %v1485 = vadd.f32 0.0, %v1484
        %v1486 = vpop.f32.mrb[0].mxu0
        %1487 = vmatprep.mubr.bf16.mxu0 0
        %1488 = vmatmul.mubr.bf16.gmra.mrb[0].mxu0 %v1377
        %v1489 = vpop.f32.mrb[0].mxu0
        %v1490 = vadd.f32 0.0, %v1489
        %v1491 = vpop.f32.mrb[0].mxu0
        %v1492 = vpop.f32.mrb[0].mxu0
        %v1493 = vadd.f32 0.0, %v1492
        %v1494 = vpop.f32.mrb[0].mxu0
        %1495 = vmatprep.mubr.bf16.mxu0 0
        %1496 = vmatmul.mubr.bf16.gmra.mrb[0].mxu0 %v1380
        %v1497 = vpop.f32.mrb[0].mxu0
        %v1498 = vadd.f32 0.0, %v1497
        %v1499 = vpop.f32.mrb[0].mxu0
        %v1500 = vpop.f32.mrb[0].mxu0
        %v1501 = vadd.f32 0.0, %v1500
        %v1502 = vpop.f32.mrb[0].mxu0
        %1503 = vmatprep.mubr.bf16.mxu0 0
        %1504 = vmatmul.mubr.bf16.gmra.mrb[0].mxu0 %v1383
        %v1505 = vpop.f32.mrb[0].mxu0
        %v1506 = vadd.f32 0.0, %v1505
        %v1507 = vpop.f32.mrb[0].mxu0
        %v1508 = vpop.f32.mrb[0].mxu0
        %v1509 = vadd.f32 0.0, %v1508
        %v1510 = vpop.f32.mrb[0].mxu0
        %1511 = vmatprep.mubr.bf16.mxu0 0
        %1512 = vmatmul.mubr.bf16.gmra.mrb[0].mxu0 %v1386
        %v1513 = vpop.f32.mrb[0].mxu0
        %v1514 = vadd.f32 0.0, %v1513
        %v1515 = vpop.f32.mrb[0].mxu0
        %v1516 = vpop.f32.mrb[0].mxu0
        %v1517 = vadd.f32 0.0, %v1516
        %v1518 = vpop.f32.mrb[0].mxu0
        %1519 = vmatprep.mubr.bf16.mxu0 0
        %1520 = vmatmul.mubr.bf16.gmra.mrb[0].mxu0 %v1389
        %v1521 = vpop.f32.mrb[0].mxu0
        %v1522 = vadd.f32 0.0, %v1521
        %v1523 = vpop.f32.mrb[0].mxu0
        %v1524 = vpop.f32.mrb[0].mxu0
        %v1525 = vpop.f32.mrb[0].mxu0
        %1526 = vdwg.mxu0
        %v1527 = vmax.f32 %v1238, %v1426
        %v1528 = vmax.f32 %v1239, %v1429
        %v1529 = vmax.f32 %v1240, %v1434
        %v1530 = vmax.f32 %v1241, %v1437
        %v1531 = vmax.f32 %v1242, %v1442
        %v1532 = vmax.f32 %v1243, %v1445
        %v1533 = vmax.f32 %v1244, %v1450
        %v1534 = vmax.f32 %v1245, %v1453
        %v1535 = vmax.f32 %v1246, %v1458
        %v1536 = vmax.f32 %v1247, %v1461
        %v1537 = vmax.f32 %v1248, %v1466
        %v1538 = vmax.f32 %v1249, %v1469
        %v1539 = vmax.f32 %v1250, %v1474
        %v1540 = vmax.f32 %v1251, %v1477
        %v1541 = vmax.f32 %v1252, %v1482
        %v1542 = vmax.f32 %v1253, %v1485
        %v1543 = vmax.f32 %v1254, %v1490
        %v1544 = vmax.f32 %v1255, %v1493
        %v1545 = vmax.f32 %v1256, %v1498
        %v1546 = vmax.f32 %v1257, %v1501
        %v1547 = vmax.f32 %v1258, %v1506
        %v1548 = vmax.f32 %v1259, %v1509
        %v1549 = vmax.f32 %v1260, %v1514
        %v1550 = vmax.f32 %v1261, %v1517
        %v1551 = vmax.f32 %v1262, %v1522
        %s1552 = scalar_lea.vmem %s633, 300 [#allocation2]
        %v1553 = vld [vmem:[%s1552] sm:$0xf]
        %v1554 = vld [vmem:[%s1552 + $0x4] sm:$0xf]
        %v1555 = vld [vmem:[%s1552 + $0x8] sm:$0xf]
        %v1556 = vld [vmem:[%s1552 + $0xc] sm:$0xf]
        %v1557 = vld [vmem:[%s1552 + $0x10] sm:$0xf]
        %v1558 = vld [vmem:[%s1552 + $0x14] sm:$0xf]
        %v1559 = vld [vmem:[%s1552 + $0x18] sm:$0xf]
        %v1560 = vld [vmem:[%s1552 + $0x1c] sm:$0xf]
        %v1561 = vld [vmem:[%s1552 + $0x20] sm:$0xf]
        %v1562 = vld [vmem:[%s1552 + $0x24] sm:$0xf]
        %v1563 = vld [vmem:[%s1552 + $0x28] sm:$0xf]
        %v1564 = vld [vmem:[%s1552 + $0x2c] sm:$0xf]
        %v1565 = vld [vmem:[%s1552 + $0x30] sm:$0xf]
        %v1566 = vld [vmem:[%s1552 + $0x34] sm:$0xf]
        %v1567 = vld [vmem:[%s1552 + $0x38] sm:$0xf]
        %v1568 = vld [vmem:[%s1552 + $0x3c] sm:$0xf]
        %v1569 = vld [vmem:[%s1552 + $0x40] sm:$0xf]
        %v1570 = vld [vmem:[%s1552 + $0x44] sm:$0xf]
        %v1571 = vld [vmem:[%s1552 + $0x48] sm:$0xf]
        %v1572 = vld [vmem:[%s1552 + $0x4c] sm:$0xf]
        %v1573 = vld [vmem:[%s1552 + $0x50] sm:$0xf]
        %v1574 = vld [vmem:[%s1552 + $0x54] sm:$0xf]
        %v1575 = vld [vmem:[%s1552 + $0x58] sm:$0xf]
        %v1576 = vld [vmem:[%s1552 + $0x5c] sm:$0xf]
        %v1577 = vld [vmem:[%s1552 + $0x60] sm:$0x3]
        %v1603 = vunpack.c.l.b16 %v1553
        %v1604 = vunpack.c.l.b16 %v1554
        %v1605 = vunpack.c.l.b16 %v1555
        %v1606 = vunpack.c.l.b16 %v1556
        %v1607 = vunpack.c.l.b16 %v1557
        %v1608 = vunpack.c.l.b16 %v1558
        %v1609 = vunpack.c.l.b16 %v1559
        %v1610 = vunpack.c.l.b16 %v1560
        %v1611 = vunpack.c.l.b16 %v1561
        %v1612 = vunpack.c.l.b16 %v1562
        %v1613 = vunpack.c.l.b16 %v1563
        %v1614 = vunpack.c.l.b16 %v1564
        %v1615 = vunpack.c.l.b16 %v1565
        %v1616 = vunpack.c.l.b16 %v1566
        %v1617 = vunpack.c.l.b16 %v1567
        %v1618 = vunpack.c.l.b16 %v1568
        %v1619 = vunpack.c.l.b16 %v1569
        %v1620 = vunpack.c.l.b16 %v1570
        %v1621 = vunpack.c.l.b16 %v1571
        %v1622 = vunpack.c.l.b16 %v1572
        %v1623 = vunpack.c.l.b16 %v1573
        %v1624 = vunpack.c.l.b16 %v1574
        %v1625 = vunpack.c.l.b16 %v1575
        %v1626 = vunpack.c.l.b16 %v1576
        %v1627 = vunpack.c.l.b16 %v1577
        %v1628 = vpack.c.b16 %v1604, %v1603
        %v1629 = vpack.c.b16 %v1606, %v1605
        %v1630 = vpack.c.b16 %v1608, %v1607
        %v1631 = vpack.c.b16 %v1610, %v1609
        %v1632 = vpack.c.b16 %v1612, %v1611
        %v1633 = vpack.c.b16 %v1614, %v1613
        %v1634 = vpack.c.b16 %v1616, %v1615
        %v1635 = vpack.c.b16 %v1618, %v1617
        %v1636 = vpack.c.b16 %v1620, %v1619
        %v1637 = vpack.c.b16 %v1622, %v1621
        %v1638 = vpack.c.b16 %v1624, %v1623
        %v1639 = vpack.c.b16 %v1626, %v1625
        %v1640 = vpack.c.b16 %v1627, %v1627
        %v1642 = vsel %vm791, %v1628, 0
        %v1645 = vsel %vm791, %v1629, 0
        %v1648 = vsel %vm791, %v1630, 0
        %v1651 = vsel %vm791, %v1631, 0
        %v1654 = vsel %vm791, %v1632, 0
        %v1657 = vsel %vm791, %v1633, 0
        %v1660 = vsel %vm791, %v1634, 0
        %v1663 = vsel %vm791, %v1635, 0
        %v1666 = vsel %vm791, %v1636, 0
        %v1669 = vsel %vm791, %v1637, 0
        %v1672 = vsel %vm791, %v1638, 0
        %v1675 = vsel %vm791, %v1639, 0
        %v1678 = vsel %vm791, %v1640, 0
        %1680 = vmatprep.subr.bf16.mxu0 0
        %1681 = vmatpush1.bf16.msra.mxu0 %v782
        %1682 = vmatprep.subr.bf16.mxu0 0
        %1683 = vmatpush1.bf16.msra.mxu0 %v783
        %1684 = vmatprep.subr.bf16.mxu0 0
        %1685 = vmatpush1.bf16.msra.mxu0 %v784
        %1686 = vmatprep.subr.bf16.mxu0 0
        %1687 = vmatpush1.bf16.msra.mxu0 %v785
        %1688 = vmatprep.subr.bf16.mxu0 0
        %1689 = vmatpush1.bf16.msra.mxu0 %v836
        %1690 = vmatprep.subr.bf16.mxu0 0
        %1691 = vmatpush1.bf16.msra.mxu0 0
        %1692 = vmatprep.subr.bf16.mxu0 0
        %1693 = vmatpush1.bf16.msra.mxu0 0
        %1694 = vmatprep.subr.bf16.mxu0 0
        %1695 = vmatpush1.bf16.msra.mxu0 0
        %1696 = vmatprep.subr.bf16.mxu0 0
        %1697 = vmatpush1.bf16.msra.mxu0 0
        %1698 = vmatprep.subr.bf16.mxu0 0
        %1699 = vmatpush1.bf16.msra.mxu0 0
        %1700 = vmatprep.subr.bf16.mxu0 0
        %1701 = vmatpush1.bf16.msra.mxu0 0
        %1702 = vmatprep.subr.bf16.mxu0 0
        %1703 = vmatpush1.bf16.msra.mxu0 0
        %1704 = vmatprep.subr.bf16.mxu0 0
        %1705 = vmatpush1.bf16.msra.mxu0 0
        %1706 = vmatprep.subr.bf16.mxu0 0
        %1707 = vmatpush1.bf16.msra.mxu0 0
        %1708 = vmatprep.subr.bf16.mxu0 0
        %1709 = vmatpush1.bf16.msra.mxu0 0
        %1710 = vmatprep.subr.bf16.mxu0 0
        %1711 = vmatpush1.bf16.msra.mxu0 0
        %1712 = vmatprep.mubr.bf16.mxu0 0
        %1713 = vmatmul.mubr.bf16.gmra.mrb[0].mxu0 %v1642
        %v1714 = vpop.f32.mrb[0].mxu0
        %v1715 = vadd.f32 0.0, %v1714
        %v1716 = vpop.f32.mrb[0].mxu0
        %v1717 = vpop.f32.mrb[0].mxu0
        %v1718 = vadd.f32 0.0, %v1717
        %v1719 = vpop.f32.mrb[0].mxu0
        %1720 = vmatprep.mubr.bf16.mxu0 0
        %1721 = vmatmul.mubr.bf16.gmra.mrb[0].mxu0 %v1645
        %v1722 = vpop.f32.mrb[0].mxu0
        %v1723 = vadd.f32 0.0, %v1722
        %v1724 = vpop.f32.mrb[0].mxu0
        %v1725 = vpop.f32.mrb[0].mxu0
        %v1726 = vadd.f32 0.0, %v1725
        %v1727 = vpop.f32.mrb[0].mxu0
        %1728 = vmatprep.mubr.bf16.mxu0 0
        %1729 = vmatmul.mubr.bf16.gmra.mrb[0].mxu0 %v1648
        %v1730 = vpop.f32.mrb[0].mxu0
        %v1731 = vadd.f32 0.0, %v1730
        %v1732 = vpop.f32.mrb[0].mxu0
        %v1733 = vpop.f32.mrb[0].mxu0
        %v1734 = vadd.f32 0.0, %v1733
        %v1735 = vpop.f32.mrb[0].mxu0
        %1736 = vmatprep.mubr.bf16.mxu0 0
        %1737 = vmatmul.mubr.bf16.gmra.mrb[0].mxu0 %v1651
        %v1738 = vpop.f32.mrb[0].mxu0
        %v1739 = vadd.f32 0.0, %v1738
        %v1740 = vpop.f32.mrb[0].mxu0
        %v1741 = vpop.f32.mrb[0].mxu0
        %v1742 = vadd.f32 0.0, %v1741
        %v1743 = vpop.f32.mrb[0].mxu0
        %1744 = vmatprep.mubr.bf16.mxu0 0
        %1745 = vmatmul.mubr.bf16.gmra.mrb[0].mxu0 %v1654
        %v1746 = vpop.f32.mrb[0].mxu0
        %v1747 = vadd.f32 0.0, %v1746
        %v1748 = vpop.f32.mrb[0].mxu0
        %v1749 = vpop.f32.mrb[0].mxu0
        %v1750 = vadd.f32 0.0, %v1749
        %v1751 = vpop.f32.mrb[0].mxu0
        %1752 = vmatprep.mubr.bf16.mxu0 0
        %1753 = vmatmul.mubr.bf16.gmra.mrb[0].mxu0 %v1657
        %v1754 = vpop.f32.mrb[0].mxu0
        %v1755 = vadd.f32 0.0, %v1754
        %v1756 = vpop.f32.mrb[0].mxu0
        %v1757 = vpop.f32.mrb[0].mxu0
        %v1758 = vadd.f32 0.0, %v1757
        %v1759 = vpop.f32.mrb[0].mxu0
        %1760 = vmatprep.mubr.bf16.mxu0 0
        %1761 = vmatmul.mubr.bf16.gmra.mrb[0].mxu0 %v1660
        %v1762 = vpop.f32.mrb[0].mxu0
        %v1763 = vadd.f32 0.0, %v1762
        %v1764 = vpop.f32.mrb[0].mxu0
        %v1765 = vpop.f32.mrb[0].mxu0
        %v1766 = vadd.f32 0.0, %v1765
        %v1767 = vpop.f32.mrb[0].mxu0
        %1768 = vmatprep.mubr.bf16.mxu0 0
        %1769 = vmatmul.mubr.bf16.gmra.mrb[0].mxu0 %v1663
        %v1770 = vpop.f32.mrb[0].mxu0
        %v1771 = vadd.f32 0.0, %v1770
        %v1772 = vpop.f32.mrb[0].mxu0
        %v1773 = vpop.f32.mrb[0].mxu0
        %v1774 = vadd.f32 0.0, %v1773
        %v1775 = vpop.f32.mrb[0].mxu0
        %1776 = vmatprep.mubr.bf16.mxu0 0
        %1777 = vmatmul.mubr.bf16.gmra.mrb[0].mxu0 %v1666
        %v1778 = vpop.f32.mrb[0].mxu0
        %v1779 = vadd.f32 0.0, %v1778
        %v1780 = vpop.f32.mrb[0].mxu0
        %v1781 = vpop.f32.mrb[0].mxu0
        %v1782 = vadd.f32 0.0, %v1781
        %v1783 = vpop.f32.mrb[0].mxu0
        %1784 = vmatprep.mubr.bf16.mxu0 0
        %1785 = vmatmul.mubr.bf16.gmra.mrb[0].mxu0 %v1669
        %v1786 = vpop.f32.mrb[0].mxu0
        %v1787 = vadd.f32 0.0, %v1786
        %v1788 = vpop.f32.mrb[0].mxu0
        %v1789 = vpop.f32.mrb[0].mxu0
        %v1790 = vadd.f32 0.0, %v1789
        %v1791 = vpop.f32.mrb[0].mxu0
        %1792 = vmatprep.mubr.bf16.mxu0 0
        %1793 = vmatmul.mubr.bf16.gmra.mrb[0].mxu0 %v1672
        %v1794 = vpop.f32.mrb[0].mxu0
        %v1795 = vadd.f32 0.0, %v1794
        %v1796 = vpop.f32.mrb[0].mxu0
        %v1797 = vpop.f32.mrb[0].mxu0
        %v1798 = vadd.f32 0.0, %v1797
        %v1799 = vpop.f32.mrb[0].mxu0
        %1800 = vmatprep.mubr.bf16.mxu0 0
        %1801 = vmatmul.mubr.bf16.gmra.mrb[0].mxu0 %v1675
        %v1802 = vpop.f32.mrb[0].mxu0
        %v1803 = vadd.f32 0.0, %v1802
        %v1804 = vpop.f32.mrb[0].mxu0
        %v1805 = vpop.f32.mrb[0].mxu0
        %v1806 = vadd.f32 0.0, %v1805
        %v1807 = vpop.f32.mrb[0].mxu0
        %1808 = vmatprep.mubr.bf16.mxu0 0
        %1809 = vmatmul.mubr.bf16.gmra.mrb[0].mxu0 %v1678
        %v1810 = vpop.f32.mrb[0].mxu0
        %v1811 = vadd.f32 0.0, %v1810
        %v1812 = vpop.f32.mrb[0].mxu0
        %v1813 = vpop.f32.mrb[0].mxu0
        %v1814 = vpop.f32.mrb[0].mxu0
        %1815 = vdwg.mxu0
        %v1816 = vmax.f32 %v1527, %v1715
        %v1817 = vmax.f32 %v1528, %v1718
        %v1818 = vmax.f32 %v1529, %v1723
        %v1819 = vmax.f32 %v1530, %v1726
        %v1820 = vmax.f32 %v1531, %v1731
        %v1821 = vmax.f32 %v1532, %v1734
        %v1822 = vmax.f32 %v1533, %v1739
        %v1823 = vmax.f32 %v1534, %v1742
        %v1824 = vmax.f32 %v1535, %v1747
        %v1825 = vmax.f32 %v1536, %v1750
        %v1826 = vmax.f32 %v1537, %v1755
        %v1827 = vmax.f32 %v1538, %v1758
        %v1828 = vmax.f32 %v1539, %v1763
        %v1829 = vmax.f32 %v1540, %v1766
        %v1830 = vmax.f32 %v1541, %v1771
        %v1831 = vmax.f32 %v1542, %v1774
        %v1832 = vmax.f32 %v1543, %v1779
        %v1833 = vmax.f32 %v1544, %v1782
        %v1834 = vmax.f32 %v1545, %v1787
        %v1835 = vmax.f32 %v1546, %v1790
        %v1836 = vmax.f32 %v1547, %v1795
        %v1837 = vmax.f32 %v1548, %v1798
        %v1838 = vmax.f32 %v1549, %v1803
        %v1839 = vmax.f32 %v1550, %v1806
        %v1840 = vmax.f32 %v1551, %v1811
        %v1841 = vld [vmem:[%s2] sm:$0x1]
        %v1843 = vlaneseq
        %v1844 = vshrl.u32 %v1843, 7
        %v1845 = vsub.s32 0, %v1844
        %v1846 = vrot.slane %v1841, %v1845
        %v1848 = vadd.f32 %v1816, %v1846
        %v1849 = vadd.f32 %v1817, %v1846
        %v1850 = vadd.f32 %v1818, %v1846
        %v1851 = vadd.f32 %v1819, %v1846
        %v1852 = vadd.f32 %v1820, %v1846
        %v1853 = vadd.f32 %v1821, %v1846
        %v1854 = vadd.f32 %v1822, %v1846
        %v1855 = vadd.f32 %v1823, %v1846
        %v1856 = vadd.f32 %v1824, %v1846
        %v1857 = vadd.f32 %v1825, %v1846
        %v1858 = vadd.f32 %v1826, %v1846
        %v1859 = vadd.f32 %v1827, %v1846
        %v1860 = vadd.f32 %v1828, %v1846
        %v1861 = vadd.f32 %v1829, %v1846
        %v1862 = vadd.f32 %v1830, %v1846
        %v1863 = vadd.f32 %v1831, %v1846
        %v1864 = vadd.f32 %v1832, %v1846
        %v1865 = vadd.f32 %v1833, %v1846
        %v1866 = vadd.f32 %v1834, %v1846
        %v1867 = vadd.f32 %v1835, %v1846
        %v1868 = vadd.f32 %v1836, %v1846
        %v1869 = vadd.f32 %v1837, %v1846
        %v1870 = vadd.f32 %v1838, %v1846
        %v1871 = vadd.f32 %v1839, %v1846
        %v1872 = vadd.f32 %v1840, %v1846
        %vm1873 = vcmp.gt.f32.partialorder %v1848, 0.0
        %vm1874 = vcmp.gt.f32.partialorder %v1849, 0.0
        %vm1875 = vcmp.gt.f32.partialorder %v1850, 0.0
        %vm1876 = vcmp.gt.f32.partialorder %v1851, 0.0
        %vm1877 = vcmp.gt.f32.partialorder %v1852, 0.0
        %vm1878 = vcmp.gt.f32.partialorder %v1853, 0.0
        %vm1879 = vcmp.gt.f32.partialorder %v1854, 0.0
        %vm1880 = vcmp.gt.f32.partialorder %v1855, 0.0
        %vm1881 = vcmp.gt.f32.partialorder %v1856, 0.0
        %vm1882 = vcmp.gt.f32.partialorder %v1857, 0.0
        %vm1883 = vcmp.gt.f32.partialorder %v1858, 0.0
        %vm1884 = vcmp.gt.f32.partialorder %v1859, 0.0
        %vm1885 = vcmp.gt.f32.partialorder %v1860, 0.0
        %vm1886 = vcmp.gt.f32.partialorder %v1861, 0.0
        %vm1887 = vcmp.gt.f32.partialorder %v1862, 0.0
        %vm1888 = vcmp.gt.f32.partialorder %v1863, 0.0
        %vm1889 = vcmp.gt.f32.partialorder %v1864, 0.0
        %vm1890 = vcmp.gt.f32.partialorder %v1865, 0.0
        %vm1891 = vcmp.gt.f32.partialorder %v1866, 0.0
        %vm1892 = vcmp.gt.f32.partialorder %v1867, 0.0
        %vm1893 = vcmp.gt.f32.partialorder %v1868, 0.0
        %vm1894 = vcmp.gt.f32.partialorder %v1869, 0.0
        %vm1895 = vcmp.gt.f32.partialorder %v1870, 0.0
        %vm1896 = vcmp.gt.f32.partialorder %v1871, 0.0
        %vm1897 = vcmp.gt.f32.partialorder %v1872, 0.0
        %v1898 = vmin.f32 %v1848, 0.0
        %v1899 = vmin.f32 %v1849, 0.0
        %v1900 = vmin.f32 %v1850, 0.0
        %v1901 = vmin.f32 %v1851, 0.0
        %v1902 = vmin.f32 %v1852, 0.0
        %v1903 = vmin.f32 %v1853, 0.0
        %v1904 = vmin.f32 %v1854, 0.0
        %v1905 = vmin.f32 %v1855, 0.0
        %v1906 = vmin.f32 %v1856, 0.0
        %v1907 = vmin.f32 %v1857, 0.0
        %v1908 = vmin.f32 %v1858, 0.0
        %v1909 = vmin.f32 %v1859, 0.0
        %v1910 = vmin.f32 %v1860, 0.0
        %v1911 = vmin.f32 %v1861, 0.0
        %v1912 = vmin.f32 %v1862, 0.0
        %v1913 = vmin.f32 %v1863, 0.0
        %v1914 = vmin.f32 %v1864, 0.0
        %v1915 = vmin.f32 %v1865, 0.0
        %v1916 = vmin.f32 %v1866, 0.0
        %v1917 = vmin.f32 %v1867, 0.0
        %v1918 = vmin.f32 %v1868, 0.0
        %v1919 = vmin.f32 %v1869, 0.0
        %v1920 = vmin.f32 %v1870, 0.0
        %v1921 = vmin.f32 %v1871, 0.0
        %v1922 = vmin.f32 %v1872, 0.0
        %v1923 = vmul.f32 %v1898, 1.442695
        %v1924 = vpow.pop %v1923
        %v1925 = vmul.f32 %v1899, 1.442695
        %v1926 = vpow.pop %v1925
        %v1927 = vmul.f32 %v1900, 1.442695
        %v1928 = vpow.pop %v1927
        %v1929 = vmul.f32 %v1901, 1.442695
        %v1930 = vpow.pop %v1929
        %v1931 = vmul.f32 %v1902, 1.442695
        %v1932 = vpow.pop %v1931
        %v1933 = vmul.f32 %v1903, 1.442695
        %v1934 = vpow.pop %v1933
        %v1935 = vmul.f32 %v1904, 1.442695
        %v1936 = vpow.pop %v1935
        %v1937 = vmul.f32 %v1905, 1.442695
        %v1938 = vpow.pop %v1937
        %v1939 = vmul.f32 %v1906, 1.442695
        %v1940 = vpow.pop %v1939
        %v1941 = vmul.f32 %v1907, 1.442695
        %v1942 = vpow.pop %v1941
        %v1943 = vmul.f32 %v1908, 1.442695
        %v1944 = vpow.pop %v1943
        %v1945 = vmul.f32 %v1909, 1.442695
        %v1946 = vpow.pop %v1945
        %v1947 = vmul.f32 %v1910, 1.442695
        %v1948 = vpow.pop %v1947
        %v1949 = vmul.f32 %v1911, 1.442695
        %v1950 = vpow.pop %v1949
        %v1951 = vmul.f32 %v1912, 1.442695
        %v1952 = vpow.pop %v1951
        %v1953 = vmul.f32 %v1913, 1.442695
        %v1954 = vpow.pop %v1953
        %v1955 = vmul.f32 %v1914, 1.442695
        %v1956 = vpow.pop %v1955
        %v1957 = vmul.f32 %v1915, 1.442695
        %v1958 = vpow.pop %v1957
        %v1959 = vmul.f32 %v1916, 1.442695
        %v1960 = vpow.pop %v1959
        %v1961 = vmul.f32 %v1917, 1.442695
        %v1962 = vpow.pop %v1961
        %v1963 = vmul.f32 %v1918, 1.442695
        %v1964 = vpow.pop %v1963
        %v1965 = vmul.f32 %v1919, 1.442695
        %v1966 = vpow.pop %v1965
        %v1967 = vmul.f32 %v1920, 1.442695
        %v1968 = vpow.pop %v1967
        %v1969 = vmul.f32 %v1921, 1.442695
        %v1970 = vpow.pop %v1969
        %v1971 = vmul.f32 %v1922, 1.442695
        %v1972 = vpow.pop %v1971
        %v1973 = vsub.f32 %v1924, 1.0
        %v1974 = vsub.f32 %v1926, 1.0
        %v1975 = vsub.f32 %v1928, 1.0
        %v1976 = vsub.f32 %v1930, 1.0
        %v1977 = vsub.f32 %v1932, 1.0
        %v1978 = vsub.f32 %v1934, 1.0
        %v1979 = vsub.f32 %v1936, 1.0
        %v1980 = vsub.f32 %v1938, 1.0
        %v1981 = vsub.f32 %v1940, 1.0
        %v1982 = vsub.f32 %v1942, 1.0
        %v1983 = vsub.f32 %v1944, 1.0
        %v1984 = vsub.f32 %v1946, 1.0
        %v1985 = vsub.f32 %v1948, 1.0
        %v1986 = vsub.f32 %v1950, 1.0
        %v1987 = vsub.f32 %v1952, 1.0
        %v1988 = vsub.f32 %v1954, 1.0
        %v1989 = vsub.f32 %v1956, 1.0
        %v1990 = vsub.f32 %v1958, 1.0
        %v1991 = vsub.f32 %v1960, 1.0
        %v1992 = vsub.f32 %v1962, 1.0
        %v1993 = vsub.f32 %v1964, 1.0
        %v1994 = vsub.f32 %v1966, 1.0
        %v1995 = vsub.f32 %v1968, 1.0
        %v1996 = vsub.f32 %v1970, 1.0
        %v1997 = vsub.f32 %v1972, 1.0
        %v1998 = vsel %vm1873, %v1848, %v1973
        %v1999 = vsel %vm1874, %v1849, %v1974
        %v2000 = vsel %vm1875, %v1850, %v1975
        %v2001 = vsel %vm1876, %v1851, %v1976
        %v2002 = vsel %vm1877, %v1852, %v1977
        %v2003 = vsel %vm1878, %v1853, %v1978
        %v2004 = vsel %vm1879, %v1854, %v1979
        %v2005 = vsel %vm1880, %v1855, %v1980
        %v2006 = vsel %vm1881, %v1856, %v1981
        %v2007 = vsel %vm1882, %v1857, %v1982
        %v2008 = vsel %vm1883, %v1858, %v1983
        %v2009 = vsel %vm1884, %v1859, %v1984
        %v2010 = vsel %vm1885, %v1860, %v1985
        %v2011 = vsel %vm1886, %v1861, %v1986
        %v2012 = vsel %vm1887, %v1862, %v1987
        %v2013 = vsel %vm1888, %v1863, %v1988
        %v2014 = vsel %vm1889, %v1864, %v1989
        %v2015 = vsel %vm1890, %v1865, %v1990
        %v2016 = vsel %vm1891, %v1866, %v1991
        %v2017 = vsel %vm1892, %v1867, %v1992
        %v2018 = vsel %vm1893, %v1868, %v1993
        %v2019 = vsel %vm1894, %v1869, %v1994
        %v2020 = vsel %vm1895, %v1870, %v1995
        %v2021 = vsel %vm1896, %v1871, %v1996
        %v2022 = vsel %vm1897, %v1872, %v1997
        %v2023 = vld [vmem:[%s3] sm:$0x1]
        %v2025 = vlaneseq
        %v2026 = vshrl.u32 %v2025, 7
        %v2027 = vsub.s32 0, %v2026
        %v2028 = vrot.slane %v2023, %v2027
        %v2030 = vmul.f32 %v1998, %v2028
        %v2031 = vmul.f32 %v1999, %v2028
        %v2032 = vmul.f32 %v2000, %v2028
        %v2033 = vmul.f32 %v2001, %v2028
        %v2034 = vmul.f32 %v2002, %v2028
        %v2035 = vmul.f32 %v2003, %v2028
        %v2036 = vmul.f32 %v2004, %v2028
        %v2037 = vmul.f32 %v2005, %v2028
        %v2038 = vmul.f32 %v2006, %v2028
        %v2039 = vmul.f32 %v2007, %v2028
        %v2040 = vmul.f32 %v2008, %v2028
        %v2041 = vmul.f32 %v2009, %v2028
        %v2042 = vmul.f32 %v2010, %v2028
        %v2043 = vmul.f32 %v2011, %v2028
        %v2044 = vmul.f32 %v2012, %v2028
        %v2045 = vmul.f32 %v2013, %v2028
        %v2046 = vmul.f32 %v2014, %v2028
        %v2047 = vmul.f32 %v2015, %v2028
        %v2048 = vmul.f32 %v2016, %v2028
        %v2049 = vmul.f32 %v2017, %v2028
        %v2050 = vmul.f32 %v2018, %v2028
        %v2051 = vmul.f32 %v2019, %v2028
        %v2052 = vmul.f32 %v2020, %v2028
        %v2053 = vmul.f32 %v2021, %v2028
        %v2054 = vmul.f32 %v2022, %v2028
        %v2055 = vld [vmem:[%s4] sm:$0x1]
        %v2057 = vlaneseq
        %v2058 = vshrl.u32 %v2057, 7
        %v2059 = vsub.s32 0, %v2058
        %v2060 = vrot.slane %v2055, %v2059
        %v2062 = vadd.f32 %v2030, %v2060
        %v2063 = vadd.f32 %v2031, %v2060
        %v2064 = vadd.f32 %v2032, %v2060
        %v2065 = vadd.f32 %v2033, %v2060
        %v2066 = vadd.f32 %v2034, %v2060
        %v2067 = vadd.f32 %v2035, %v2060
        %v2068 = vadd.f32 %v2036, %v2060
        %v2069 = vadd.f32 %v2037, %v2060
        %v2070 = vadd.f32 %v2038, %v2060
        %v2071 = vadd.f32 %v2039, %v2060
        %v2072 = vadd.f32 %v2040, %v2060
        %v2073 = vadd.f32 %v2041, %v2060
        %v2074 = vadd.f32 %v2042, %v2060
        %v2075 = vadd.f32 %v2043, %v2060
        %v2076 = vadd.f32 %v2044, %v2060
        %v2077 = vadd.f32 %v2045, %v2060
        %v2078 = vadd.f32 %v2046, %v2060
        %v2079 = vadd.f32 %v2047, %v2060
        %v2080 = vadd.f32 %v2048, %v2060
        %v2081 = vadd.f32 %v2049, %v2060
        %v2082 = vadd.f32 %v2050, %v2060
        %v2083 = vadd.f32 %v2051, %v2060
        %v2084 = vadd.f32 %v2052, %v2060
        %v2085 = vadd.f32 %v2053, %v2060
        %v2086 = vadd.f32 %v2054, %v2060
        %v2087 = vpack.c.bf16 %v2063, %v2062
        %v2088 = vpack.c.bf16 %v2065, %v2064
        %v2089 = vpack.c.bf16 %v2067, %v2066
        %v2090 = vpack.c.bf16 %v2069, %v2068
        %v2091 = vpack.c.bf16 %v2071, %v2070
        %v2092 = vpack.c.bf16 %v2073, %v2072
        %v2093 = vpack.c.bf16 %v2075, %v2074
        %v2094 = vpack.c.bf16 %v2077, %v2076
        %v2095 = vpack.c.bf16 %v2079, %v2078
        %v2096 = vpack.c.bf16 %v2081, %v2080
        %v2097 = vpack.c.bf16 %v2083, %v2082
        %v2098 = vpack.c.bf16 %v2085, %v2084
        %v2099 = vpack.c.bf16 %v2086, %v2086
        %v2113 = vunpack.c.l.b16 %v2087
        %v2114 = vunpack.c.h.b16 %v2087
        %v2115 = vunpack.c.l.b16 %v2088
        %v2116 = vunpack.c.h.b16 %v2088
        %v2117 = vunpack.c.l.b16 %v2089
        %v2118 = vunpack.c.h.b16 %v2089
        %v2119 = vunpack.c.l.b16 %v2090
        %v2120 = vunpack.c.h.b16 %v2090
        %v2121 = vunpack.c.l.b16 %v2091
        %v2122 = vunpack.c.h.b16 %v2091
        %v2123 = vunpack.c.l.b16 %v2092
        %v2124 = vunpack.c.h.b16 %v2092
        %v2125 = vunpack.c.l.b16 %v2093
        %v2126 = vunpack.c.h.b16 %v2093
        %v2127 = vunpack.c.l.b16 %v2094
        %v2128 = vunpack.c.h.b16 %v2094
        %v2129 = vunpack.c.l.b16 %v2095
        %v2130 = vunpack.c.h.b16 %v2095
        %v2131 = vunpack.c.l.b16 %v2096
        %v2132 = vunpack.c.h.b16 %v2096
        %v2133 = vunpack.c.l.b16 %v2097
        %v2134 = vunpack.c.h.b16 %v2097
        %v2135 = vunpack.c.l.b16 %v2098
        %v2136 = vunpack.c.h.b16 %v2098
        %v2137 = vunpack.c.l.b16 %v2099
        %v2138 = vpack.c.b16 %v2113, %v2113
        %v2139 = vpack.c.b16 %v2114, %v2114
        %v2140 = vpack.c.b16 %v2115, %v2115
        %v2141 = vpack.c.b16 %v2116, %v2116
        %v2142 = vpack.c.b16 %v2117, %v2117
        %v2143 = vpack.c.b16 %v2118, %v2118
        %v2144 = vpack.c.b16 %v2119, %v2119
        %v2145 = vpack.c.b16 %v2120, %v2120
        %v2146 = vpack.c.b16 %v2121, %v2121
        %v2147 = vpack.c.b16 %v2122, %v2122
        %v2148 = vpack.c.b16 %v2123, %v2123
        %v2149 = vpack.c.b16 %v2124, %v2124
        %v2150 = vpack.c.b16 %v2125, %v2125
        %v2151 = vpack.c.b16 %v2126, %v2126
        %v2152 = vpack.c.b16 %v2127, %v2127
        %v2153 = vpack.c.b16 %v2128, %v2128
        %v2154 = vpack.c.b16 %v2129, %v2129
        %v2155 = vpack.c.b16 %v2130, %v2130
        %v2156 = vpack.c.b16 %v2131, %v2131
        %v2157 = vpack.c.b16 %v2132, %v2132
        %v2158 = vpack.c.b16 %v2133, %v2133
        %v2159 = vpack.c.b16 %v2134, %v2134
        %v2160 = vpack.c.b16 %v2135, %v2135
        %v2161 = vpack.c.b16 %v2136, %v2136
        %v2162 = vpack.c.b16 %v2137, %v2137
        %2188 = vst [vmem:[%s662] sm:$0xf] %v2138
        %2189 = vst [vmem:[%s662 + $0x4] sm:$0xf] %v2139
        %2190 = vst [vmem:[%s662 + $0x8] sm:$0xf] %v2140
        %2191 = vst [vmem:[%s662 + $0xc] sm:$0xf] %v2141
        %2192 = vst [vmem:[%s662 + $0x10] sm:$0xf] %v2142
        %2193 = vst [vmem:[%s662 + $0x14] sm:$0xf] %v2143
        %2194 = vst [vmem:[%s662 + $0x18] sm:$0xf] %v2144
        %2195 = vst [vmem:[%s662 + $0x1c] sm:$0xf] %v2145
        %2196 = vst [vmem:[%s662 + $0x20] sm:$0xf] %v2146
        %2197 = vst [vmem:[%s662 + $0x24] sm:$0xf] %v2147
        %2198 = vst [vmem:[%s662 + $0x28] sm:$0xf] %v2148
        %2199 = vst [vmem:[%s662 + $0x2c] sm:$0xf] %v2149
        %2200 = vst [vmem:[%s662 + $0x30] sm:$0xf] %v2150
        %2201 = vst [vmem:[%s662 + $0x34] sm:$0xf] %v2151
        %2202 = vst [vmem:[%s662 + $0x38] sm:$0xf] %v2152
        %2203 = vst [vmem:[%s662 + $0x3c] sm:$0xf] %v2153
        %2204 = vst [vmem:[%s662 + $0x40] sm:$0xf] %v2154
        %2205 = vst [vmem:[%s662 + $0x44] sm:$0xf] %v2155
        %2206 = vst [vmem:[%s662 + $0x48] sm:$0xf] %v2156
        %2207 = vst [vmem:[%s662 + $0x4c] sm:$0xf] %v2157
        %2208 = vst [vmem:[%s662 + $0x50] sm:$0xf] %v2158
        %2209 = vst [vmem:[%s662 + $0x54] sm:$0xf] %v2159
        %2210 = vst [vmem:[%s662 + $0x58] sm:$0xf] %v2160
        %2211 = vst [vmem:[%s662 + $0x5c] sm:$0xf] %v2161
        %2212 = vst [vmem:[%s662 + $0x60] sm:$0x3] %v2162
        %p2213 = scmp.lt.s32.totalorder %s16, 1
        %s2214 = scalar_select %p2213, %s16, 1
        %s2215 = smul.addr %s2214, 25
        %s2216 = smul.addr %s2215, 4
        %s2217 = scalar_lea.vmem %s5, %s2216
        // Predicated region
        $region82: #{gtsrb_forward.4} parent=76 // pred_check
          %p2218 = pneg %p144
        $region83: #{gtsrb_forward.4} parent=76 // pred_check_branch
          %2220 = sbr.rel (%p2218) target = $region85
        $region84: #{gtsrb_forward.4} parent=76 // pred_region
          _
        $region85: #{gtsrb_forward.4} parent=76 // pred_fallthru
          _
      $region77: #{gtsrb_forward.4} parent=5 // pred_fallthru
        _
      %p2221 = scmp.le.s32.totalorder 2, %s11
      // Predicated region
      $region86: #{gtsrb_forward.4} parent=5 // pred_check
        %p2222 = pneg %p2221
      $region87: #{gtsrb_forward.4} parent=5 // pred_check_branch
        %2224 = sbr.rel (%p2222) target = $region89
      $region88: #{gtsrb_forward.4} parent=5 // pred_region
        %s2225 = ssub.s32 %s11, 2
        // Predicated region
        $region90: #{gtsrb_forward.4} parent=88 // pred_check
          %p2226 = pneg %p150
        $region91: #{gtsrb_forward.4} parent=88 // pred_check_branch
          %2228 = sbr.rel (%p2226) target = $region93
        $region92: #{gtsrb_forward.4} parent=88 // pred_region
          %p2229 = scmp.lt.s32.totalorder %s17, 1
          %s2230 = scalar_select %p2229, %s17, 1
          %s2231 = smul.addr %s2230, 25
          %s2232 = smul.addr %s2231, 4
          %s2233 = scalar_lea.vmem %s5, %s2232
        $region93: #{gtsrb_forward.4} parent=88 // pred_fallthru
          _
      $region89: #{gtsrb_forward.4} parent=5 // pred_fallthru
        _
    $region6: #{gtsrb_forward.4} parent=1 // loop_footer
      %s15 = sadd.s32 1, %s11
    $region7: #{gtsrb_forward.4} parent=1 // loop_footer_branch
      %10 = sbr.rel target = $region3
    $region8: #{gtsrb_forward.4} parent=1 // loop_exit
      _

// kernel: gtsrb_forward.6
$region0: #{gtsrb_forward.6}
  #allocation0 [shape = 'u32[]', space=smem, size = 0x4, offset = 0x4, fixed_abs, tag = 'smem constant byte address 0x4 - core index']
  #allocation1 [shape = 'u32[144,128]{1,0:T(1,128)}', space=vmem, size = 0x12000, scoped, tag = 'internal scratch']
  %s0 = inlined_call_operand.vmem [shape: bf16[4,2,9,256], index: 0, kind: input, shape index: {}]
  %s1 = inlined_call_operand.vmem [shape: bf16[256,256], index: 1, kind: input, shape index: {}]
  %s2 = inlined_call_operand.vmem [shape: f32[1,256], index: 2, kind: input, shape index: {}]
  %s3 = inlined_call_operand.vmem [shape: f32[1,256], index: 3, kind: input, shape index: {}]
  %s4 = inlined_call_operand.vmem [shape: f32[1,256], index: 4, kind: input, shape index: {}]
  %s5 = inlined_call_operand.vmem [shape: bf16[2,9,256], index: 5, kind: output, shape index: {}]
  %s6 = sld [smem:[#allocation0]]
  $region91: #{gtsrb_forward.6} parent=0
    _
  %s8 = ssub.s32 1, %s6
  %s9 = scalar_select 0, %s8, %s6
  $region1: #{gtsrb_forward.6} parent=0
    #allocation2 [shape = 'u8[65536]{0}', space=vmem, size = 0x10000, scoped, tag = 'input window, operand 0']
    loop: start=0, step=1, limit=4
    $region2: #{gtsrb_forward.6} parent=1 // loop_pre_header
      _
    $region3: #{gtsrb_forward.6} parent=1 // loop_header
      %s11 = sphi 0, %s15
      %p12 = scmp.ge.s32.totalorder %s11, 4
      %s21 = sphi 0, %s23
      %s24 = sphi 0, %s21
      %s25 = sphi 0, %s24
      %s41 = sphi 0, %s25
      %s45 = sphi 0, %s45
      %s47 = sphi 0, %s45
      %s48 = sphi 0, %s47
      %s62 = sphi 0, %s48
      %s66 = sphi 0, %s66
      %s68 = sphi 0, %s66
      %s69 = sphi 0, %s68
      %s83 = sphi 0, %s69
      %s87 = sphi 0, %s87
      %s89 = sphi 0, %s87
      %s90 = sphi 0, %s89
      %s104 = sphi 0, %s90
      %s108 = sphi 0, %s108
      %s110 = sphi 0, %s108
      %s111 = sphi 0, %s110
      %s125 = sphi 0, %s111
      %s131 = sphi 0, %s133
      %s134 = sphi 0, %s131
      %s135 = sphi 0, %s134
      %s151 = sphi 0, %s135
    $region4: #{gtsrb_forward.6} parent=1 // loop_header_branch
      %14 = sbr.rel (%p12) target = $region8
    $region5: #{gtsrb_forward.6} parent=1 // loop_body
      %s16 = ssub.s32 %s11, 1
      %s17 = ssub.s32 %s11, 2
      %s18 = sadd.s32 %s11, 1
      %s19 = ssub.s32 %s11, %s18
      %p20 = scmp.eq.s32.totalorder %s19, 0
      %s22 = sadd.s32 %s21, 1
      %s23 = scalar_select %p20, %s21, %s22
      %p26 = pneg %p20
      %p27 = scmp.eq.s32.totalorder %s11, 1
      %p28 = por %p26, %p27
      %p29 = scmp.ne.s32.totalorder %s21, %s24
      %p30 = scmp.eq.s32.totalorder %s11, 0
      %p31 = por %p29, %p30
      %p32 = scmp.ne.s32.totalorder %s21, %s24
      %p33 = scmp.eq.s32.totalorder %s16, 1
      %p34 = por %p32, %p33
      %p35 = scmp.ne.s32.totalorder %s24, %s25
      %p36 = scmp.eq.s32.totalorder %s16, 0
      %p37 = por %p35, %p36
      %p38 = scmp.ne.s32.totalorder %s24, %s25
      %p39 = scmp.eq.s32.totalorder %s17, 1
      %p40 = por %p38, %p39
      %p42 = scmp.ne.s32.totalorder %s25, %s41
      %p43 = scmp.eq.s32.totalorder %s17, 0
      %p44 = por %p42, %p43
      %s46 = sadd.s32 %s45, 1
      %p49 = scmp.eq.s32.totalorder %s11, 1
      %p50 = scmp.ne.s32.totalorder %s45, %s47
      %p51 = scmp.eq.s32.totalorder %s11, 0
      %p52 = por %p50, %p51
      %p53 = scmp.ne.s32.totalorder %s45, %s47
      %p54 = scmp.eq.s32.totalorder %s16, 1
      %p55 = por %p53, %p54
      %p56 = scmp.ne.s32.totalorder %s47, %s48
      %p57 = scmp.eq.s32.totalorder %s16, 0
      %p58 = por %p56, %p57
      %p59 = scmp.ne.s32.totalorder %s47, %s48
      %p60 = scmp.eq.s32.totalorder %s17, 1
      %p61 = por %p59, %p60
      %p63 = scmp.ne.s32.totalorder %s48, %s62
      %p64 = scmp.eq.s32.totalorder %s17, 0
      %p65 = por %p63, %p64
      %s67 = sadd.s32 %s66, 1
      %p70 = scmp.eq.s32.totalorder %s11, 1
      %p71 = scmp.ne.s32.totalorder %s66, %s68
      %p72 = scmp.eq.s32.totalorder %s11, 0
      %p73 = por %p71, %p72
      %p74 = scmp.ne.s32.totalorder %s66, %s68
      %p75 = scmp.eq.s32.totalorder %s16, 1
      %p76 = por %p74, %p75
      %p77 = scmp.ne.s32.totalorder %s68, %s69
      %p78 = scmp.eq.s32.totalorder %s16, 0
      %p79 = por %p77, %p78
      %p80 = scmp.ne.s32.totalorder %s68, %s69
      %p81 = scmp.eq.s32.totalorder %s17, 1
      %p82 = por %p80, %p81
      %p84 = scmp.ne.s32.totalorder %s69, %s83
      %p85 = scmp.eq.s32.totalorder %s17, 0
      %p86 = por %p84, %p85
      %s88 = sadd.s32 %s87, 1
      %p91 = scmp.eq.s32.totalorder %s11, 1
      %p92 = scmp.ne.s32.totalorder %s87, %s89
      %p93 = scmp.eq.s32.totalorder %s11, 0
      %p94 = por %p92, %p93
      %p95 = scmp.ne.s32.totalorder %s87, %s89
      %p96 = scmp.eq.s32.totalorder %s16, 1
      %p97 = por %p95, %p96
      %p98 = scmp.ne.s32.totalorder %s89, %s90
      %p99 = scmp.eq.s32.totalorder %s16, 0
      %p100 = por %p98, %p99
      %p101 = scmp.ne.s32.totalorder %s89, %s90
      %p102 = scmp.eq.s32.totalorder %s17, 1
      %p103 = por %p101, %p102
      %p105 = scmp.ne.s32.totalorder %s90, %s104
      %p106 = scmp.eq.s32.totalorder %s17, 0
      %p107 = por %p105, %p106
      %s109 = sadd.s32 %s108, 1
      %p112 = scmp.eq.s32.totalorder %s11, 1
      %p113 = scmp.ne.s32.totalorder %s108, %s110
      %p114 = scmp.eq.s32.totalorder %s11, 0
      %p115 = por %p113, %p114
      %p116 = scmp.ne.s32.totalorder %s108, %s110
      %p117 = scmp.eq.s32.totalorder %s16, 1
      %p118 = por %p116, %p117
      %p119 = scmp.ne.s32.totalorder %s110, %s111
      %p120 = scmp.eq.s32.totalorder %s16, 0
      %p121 = por %p119, %p120
      %p122 = scmp.ne.s32.totalorder %s110, %s111
      %p123 = scmp.eq.s32.totalorder %s17, 1
      %p124 = por %p122, %p123
      %p126 = scmp.ne.s32.totalorder %s111, %s125
      %p127 = scmp.eq.s32.totalorder %s17, 0
      %p128 = por %p126, %p127
      %s129 = ssub.s32 %s11, %s18
      %p130 = scmp.eq.s32.totalorder %s129, 0
      %s132 = sadd.s32 %s131, 1
      %s133 = scalar_select %p130, %s131, %s132
      %p136 = pneg %p130
      %p137 = scmp.eq.s32.totalorder %s11, 1
      %p138 = por %p136, %p137
      %p139 = scmp.ne.s32.totalorder %s131, %s134
      %p140 = scmp.eq.s32.totalorder %s11, 0
      %p141 = por %p139, %p140
      %p142 = scmp.ne.s32.totalorder %s131, %s134
      %p143 = scmp.eq.s32.totalorder %s16, 1
      %p144 = por %p142, %p143
      %p145 = scmp.ne.s32.totalorder %s134, %s135
      %p146 = scmp.eq.s32.totalorder %s16, 0
      %p147 = por %p145, %p146
      %p148 = scmp.ne.s32.totalorder %s134, %s135
      %p149 = scmp.eq.s32.totalorder %s17, 1
      %p150 = por %p148, %p149
      %p152 = scmp.ne.s32.totalorder %s135, %s151
      %p153 = scmp.eq.s32.totalorder %s17, 0
      %p154 = por %p152, %p153
      %p155 = scmp.le.s32.totalorder 1, %s11
      %p156 = scmp.lt.s32.totalorder %s11, 3
      %p157 = pnand %p155, %p156
      %p158 = pneg %p157
      // Predicated region
      $region9: #{gtsrb_forward.6} parent=5 // pred_check
        _
      $region10: #{gtsrb_forward.6} parent=5 // pred_check_branch
        %160 = sbr.rel (%p157) target = $region12
      $region11: #{gtsrb_forward.6} parent=5 // pred_region
        %s161 = ssub.s32 %s11, 1
        // Predicated region
        $region13: #{gtsrb_forward.6} parent=11 // pred_check
          %p162 = pneg %p58
        $region14: #{gtsrb_forward.6} parent=11 // pred_check_branch
          %164 = sbr.rel (%p162) target = $region16
        $region15: #{gtsrb_forward.6} parent=11 // pred_region
          _
        $region16: #{gtsrb_forward.6} parent=11 // pred_fallthru
          _
        // Predicated region
        $region17: #{gtsrb_forward.6} parent=11 // pred_check
          %p165 = pneg %p79
        $region18: #{gtsrb_forward.6} parent=11 // pred_check_branch
          %167 = sbr.rel (%p165) target = $region20
        $region19: #{gtsrb_forward.6} parent=11 // pred_region
          _
        $region20: #{gtsrb_forward.6} parent=11 // pred_fallthru
          _
        // Predicated region
        $region21: #{gtsrb_forward.6} parent=11 // pred_check
          %p168 = pneg %p100
        $region22: #{gtsrb_forward.6} parent=11 // pred_check_branch
          %170 = sbr.rel (%p168) target = $region24
        $region23: #{gtsrb_forward.6} parent=11 // pred_region
          _
        $region24: #{gtsrb_forward.6} parent=11 // pred_fallthru
          _
        // Predicated region
        $region25: #{gtsrb_forward.6} parent=11 // pred_check
          %p171 = pneg %p121
        $region26: #{gtsrb_forward.6} parent=11 // pred_check_branch
          %173 = sbr.rel (%p171) target = $region28
        $region27: #{gtsrb_forward.6} parent=11 // pred_region
          _
        $region28: #{gtsrb_forward.6} parent=11 // pred_fallthru
          _
      $region12: #{gtsrb_forward.6} parent=5 // pred_fallthru
        _
      %p174 = scmp.lt.s32.totalorder %s11, 2
      // Predicated region
      $region29: #{gtsrb_forward.6} parent=5 // pred_check
        %p175 = pneg %p174
      $region30: #{gtsrb_forward.6} parent=5 // pred_check_branch
        %177 = sbr.rel (%p175) target = $region32
      $region31: #{gtsrb_forward.6} parent=5 // pred_region
        // Predicated region
        $region33: #{gtsrb_forward.6} parent=31 // pred_check
          %p178 = pneg %p31
        $region34: #{gtsrb_forward.6} parent=31 // pred_check_branch
          %180 = sbr.rel (%p178) target = $region36
        $region35: #{gtsrb_forward.6} parent=31 // pred_region
          %s181 = sand.u32 %s21, 1
          %s182 = sand.u32 %s21, 1
          %s183 = smul.addr %s182, 64
          %s184 = scalar_lea.vmem [#allocation2], %s183
          %s185 = smul.addr %s11, 4
          %s186 = smul.addr %s185, 4
          %s187 = scalar_lea.vmem %s0, %s186
          // Predicated region
          $region37: #{gtsrb_forward.6} parent=35 // pred_check
            _
          $region38: #{gtsrb_forward.6} parent=35 // pred_check_branch
            %189 = sbr.rel (0) target = $region40
          $region39: #{gtsrb_forward.6} parent=35 // pred_region
            // Predicated region
            $region41: #{gtsrb_forward.6} parent=39 // pred_check
              _
            $region42: #{gtsrb_forward.6} parent=39 // pred_check_branch
              %191 = sbr.rel (0) target = $region44
            $region43: #{gtsrb_forward.6} parent=39 // pred_region
              // Predicated region
              $region56: #{gtsrb_forward.6} parent=43 // pred_check
                _
              $region57: #{gtsrb_forward.6} parent=43 // pred_check_branch
                %220 = sbr.rel (0) target = $region59
              $region58: #{gtsrb_forward.6} parent=43 // pred_region
                loop: start=0, step=1, limit=1
                $region60: #{gtsrb_forward.6} parent=58 // loop_pre_header
                  _
                $region61: #{gtsrb_forward.6} parent=58 // loop_header
                  %s222 = sphi 0, %s226
                  %p223 = scmp.ge.s32.totalorder %s222, 1
                  %s227 = sphi %s187, %s187
                  %s228 = sphi %s184, %s184
                $region62: #{gtsrb_forward.6} parent=58 // loop_header_branch
                  %225 = sbr.rel (%p223) target = $region66
                $region63: #{gtsrb_forward.6} parent=58 // loop_body
                  %v229 = vld [vmem:[%s227] sm:$0xff]
                  %230 = vst [vmem:[%s228] sm:$0xff] %v229
                  %v231 = vld [vmem:[%s227 + $0x8] sm:$0xff]
                  %232 = vst [vmem:[%s228 + $0x8] sm:$0xff] %v231
                  %v233 = vld [vmem:[%s227 + $0x20] sm:$0xff]
                  %234 = vst [vmem:[%s228 + $0x10] sm:$0xff] %v233
                  %v235 = vld [vmem:[%s227 + $0x28] sm:$0xff]
                  %236 = vst [vmem:[%s228 + $0x18] sm:$0xff] %v235
                  %v237 = vld [vmem:[%s227 + $0x40] sm:$0xff]
                  %238 = vst [vmem:[%s228 + $0x20] sm:$0xff] %v237
                  %v239 = vld [vmem:[%s227 + $0x48] sm:$0xff]
                  %240 = vst [vmem:[%s228 + $0x28] sm:$0xff] %v239
                  %v241 = vld [vmem:[%s227 + $0x60] sm:$0xff]
                  %242 = vst [vmem:[%s228 + $0x30] sm:$0xff] %v241
                  %v243 = vld [vmem:[%s227 + $0x68] sm:$0xff]
                  %244 = vst [vmem:[%s228 + $0x38] sm:$0xff] %v243
                $region64: #{gtsrb_forward.6} parent=58 // loop_footer
                  %s226 = sadd.s32 1, %s222
                $region65: #{gtsrb_forward.6} parent=58 // loop_footer_branch
                  %221 = sbr.rel target = $region61
                $region66: #{gtsrb_forward.6} parent=58 // loop_exit
                  _
              $region59: #{gtsrb_forward.6} parent=43 // pred_fallthru
                _
              // Predicated region
              $region67: #{gtsrb_forward.6} parent=43 // pred_check
                _
              $region68: #{gtsrb_forward.6} parent=43 // pred_check_branch
                %246 = sbr.rel target = $region70
              $region69: #{gtsrb_forward.6} parent=43 // pred_region
                _
              $region70: #{gtsrb_forward.6} parent=43 // pred_fallthru
                _
            $region44: #{gtsrb_forward.6} parent=39 // pred_fallthru
              _
            // Predicated region
            $region45: #{gtsrb_forward.6} parent=39 // pred_check
              _
            $region46: #{gtsrb_forward.6} parent=39 // pred_check_branch
              %193 = sbr.rel target = $region48
            $region47: #{gtsrb_forward.6} parent=39 // pred_region
              loop: start=0, step=1, limit=1
              $region49: #{gtsrb_forward.6} parent=47 // loop_pre_header
                _
              $region50: #{gtsrb_forward.6} parent=47 // loop_header
                %s196 = sphi 0, %s200
                %p197 = scmp.ge.s32.totalorder %s196, 1
                %s201 = sphi %s187, %s187
                %s202 = sphi %s184, %s184
              $region51: #{gtsrb_forward.6} parent=47 // loop_header_branch
                %199 = sbr.rel (%p197) target = $region55
              $region52: #{gtsrb_forward.6} parent=47 // loop_body
                %v203 = vld [vmem:[%s201] sm:$0xff]
                %204 = vst [vmem:[%s202] sm:$0xff] %v203
                %v205 = vld [vmem:[%s201 + $0x8] sm:$0xff]
                %206 = vst [vmem:[%s202 + $0x8] sm:$0xff] %v205
                %v207 = vld [vmem:[%s201 + $0x20] sm:$0xff]
                %208 = vst [vmem:[%s202 + $0x10] sm:$0xff] %v207
                %v209 = vld [vmem:[%s201 + $0x28] sm:$0xff]
                %210 = vst [vmem:[%s202 + $0x18] sm:$0xff] %v209
                %v211 = vld [vmem:[%s201 + $0x40] sm:$0xff]
                %212 = vst [vmem:[%s202 + $0x20] sm:$0xff] %v211
                %v213 = vld [vmem:[%s201 + $0x48] sm:$0xff]
                %214 = vst [vmem:[%s202 + $0x28] sm:$0xff] %v213
                %v215 = vld [vmem:[%s201 + $0x60] sm:$0xff]
                %216 = vst [vmem:[%s202 + $0x30] sm:$0xff] %v215
                %v217 = vld [vmem:[%s201 + $0x68] sm:$0xff]
                %218 = vst [vmem:[%s202 + $0x38] sm:$0xff] %v217
              $region53: #{gtsrb_forward.6} parent=47 // loop_footer
                %s200 = sadd.s32 1, %s196
              $region54: #{gtsrb_forward.6} parent=47 // loop_footer_branch
                %195 = sbr.rel target = $region50
              $region55: #{gtsrb_forward.6} parent=47 // loop_exit
                _
            $region48: #{gtsrb_forward.6} parent=39 // pred_fallthru
              _
          $region40: #{gtsrb_forward.6} parent=35 // pred_fallthru
            _
          %247 = vnop
        $region36: #{gtsrb_forward.6} parent=31 // pred_fallthru
          _
      $region32: #{gtsrb_forward.6} parent=5 // pred_fallthru
        _
      %p248 = scmp.le.s32.totalorder 1, %s11
      %p249 = scmp.lt.s32.totalorder %s11, 3
      %p250 = pnand %p248, %p249
      %p251 = pneg %p250
      // Predicated region
      $region71: #{gtsrb_forward.6} parent=5 // pred_check
        _
      $region72: #{gtsrb_forward.6} parent=5 // pred_check_branch
        %253 = sbr.rel (%p250) target = $region74
      $region73: #{gtsrb_forward.6} parent=5 // pred_region
        %s254 = ssub.s32 %s11, 1
        %s255 = sand.u32 %s24, 1
        %s256 = sand.u32 %s24, 1
        %s257 = smul.addr %s256, 64
        %s258 = scalar_lea.vmem [#allocation2], %s257
        // Predicated region
        $region75: #{gtsrb_forward.6} parent=73 // pred_check
          %p259 = pneg %p37
        $region76: #{gtsrb_forward.6} parent=73 // pred_check_branch
          %261 = sbr.rel (%p259) target = $region78
        $region77: #{gtsrb_forward.6} parent=73 // pred_region
          _
        $region78: #{gtsrb_forward.6} parent=73 // pred_fallthru
          _
        %s262 = sand.u32 %s24, 1
        %s263 = sand.u32 %s24, 1
        %s264 = smul.addr %s263, 64
        %s265 = scalar_lea.vmem [#allocation2], %s264
        %p266 = pneg %p37
        %p267 = pneg %p34
        %p268 = pneg %p58
        %p269 = pneg %p55
        %p270 = pneg %p79
        %p271 = pneg %p76
        %p272 = pneg %p100
        %p273 = pneg %p97
        %p274 = pneg %p121
        %p275 = pneg %p118
        %p276 = pneg %p147
        %p277 = pneg %p144
        %p278 = scmp.lt.s32.totalorder %s16, 1
        %s279 = scalar_select %p278, %s16, 1
        %s280 = smul.addr %s279, 4
        %s281 = smul.addr %s280, 4
        %s282 = scalar_lea.vmem %s5, %s281
        %p283 = scmp.lt.s32.totalorder %s16, 1
        %s284 = scalar_select %p283, %s16, 1
        %s285 = smul.addr %s284, 4
        %s286 = smul.addr %s285, 4
        %s287 = scalar_lea.vmem %s5, %s286
        %v288 = vld [vmem:[%s1] sm:$0xff]
        %v289 = vld [vmem:[%s1 + $0x8] sm:$0xff]
        %v290 = vld [vmem:[%s1 + $0x10] sm:$0xff]
        %v291 = vld [vmem:[%s1 + $0x18] sm:$0xff]
        %v292 = vld [vmem:[%s1 + $0x20] sm:$0xff]
        %v293 = vld [vmem:[%s1 + $0x28] sm:$0xff]
        %v294 = vld [vmem:[%s1 + $0x30] sm:$0xff]
        %v295 = vld [vmem:[%s1 + $0x38] sm:$0xff]
        %v296 = vld [vmem:[%s1 + $0x40] sm:$0xff]
        %v297 = vld [vmem:[%s1 + $0x48] sm:$0xff]
        %v298 = vld [vmem:[%s1 + $0x50] sm:$0xff]
        %v299 = vld [vmem:[%s1 + $0x58] sm:$0xff]
        %v300 = vld [vmem:[%s1 + $0x60] sm:$0xff]
        %v301 = vld [vmem:[%s1 + $0x68] sm:$0xff]
        %v302 = vld [vmem:[%s1 + $0x70] sm:$0xff]
        %v303 = vld [vmem:[%s1 + $0x78] sm:$0xff]
        %v304 = vld [vmem:[%s1 + $0x80] sm:$0xff]
        %v305 = vld [vmem:[%s1 + $0x88] sm:$0xff]
        %v306 = vld [vmem:[%s1 + $0x90] sm:$0xff]
        %v307 = vld [vmem:[%s1 + $0x98] sm:$0xff]
        %v308 = vld [vmem:[%s1 + $0xa0] sm:$0xff]
        %v309 = vld [vmem:[%s1 + $0xa8] sm:$0xff]
        %v310 = vld [vmem:[%s1 + $0xb0] sm:$0xff]
        %v311 = vld [vmem:[%s1 + $0xb8] sm:$0xff]
        %v312 = vld [vmem:[%s1 + $0xc0] sm:$0xff]
        %v313 = vld [vmem:[%s1 + $0xc8] sm:$0xff]
        %v314 = vld [vmem:[%s1 + $0xd0] sm:$0xff]
        %v315 = vld [vmem:[%s1 + $0xd8] sm:$0xff]
        %v316 = vld [vmem:[%s1 + $0xe0] sm:$0xff]
        %v317 = vld [vmem:[%s1 + $0xe8] sm:$0xff]
        %v318 = vld [vmem:[%s1 + $0xf0] sm:$0xff]
        %v319 = vld [vmem:[%s1 + $0xf8] sm:$0xff]
        %v320 = vld [vmem:[%s258] sm:$0xff]
        %v321 = vld [vmem:[%s258 + $0x8] sm:$0x11]
        %v324 = vunpack.c.l.b16 %v320
        %v325 = vunpack.c.h.b16 %v320
        %v326 = vunpack.c.l.b16 %v321
        %v327 = vunpack.c.h.b16 %v321
        %v328 = vpack.c.b16 %v326, %v324
        %v329 = vpack.c.b16 %v327, %v325
        %v364 = vunpack.c.l.b16 %v288
        %v365 = vunpack.c.h.b16 %v288
        %v366 = vunpack.c.l.b16 %v289
        %v367 = vunpack.c.h.b16 %v289
        %v368 = vunpack.c.l.b16 %v290
        %v369 = vunpack.c.h.b16 %v290
        %v370 = vunpack.c.l.b16 %v291
        %v371 = vunpack.c.h.b16 %v291
        %v372 = vunpack.c.l.b16 %v292
        %v373 = vunpack.c.h.b16 %v292
        %v374 = vunpack.c.l.b16 %v293
        %v375 = vunpack.c.h.b16 %v293
        %v376 = vunpack.c.l.b16 %v294
        %v377 = vunpack.c.h.b16 %v294
        %v378 = vunpack.c.l.b16 %v295
        %v379 = vunpack.c.h.b16 %v295
        %v380 = vunpack.c.l.b16 %v296
        %v381 = vunpack.c.h.b16 %v296
        %v382 = vunpack.c.l.b16 %v297
        %v383 = vunpack.c.h.b16 %v297
        %v384 = vunpack.c.l.b16 %v298
        %v385 = vunpack.c.h.b16 %v298
        %v386 = vunpack.c.l.b16 %v299
        %v387 = vunpack.c.h.b16 %v299
        %v388 = vunpack.c.l.b16 %v300
        %v389 = vunpack.c.h.b16 %v300
        %v390 = vunpack.c.l.b16 %v301
        %v391 = vunpack.c.h.b16 %v301
        %v392 = vunpack.c.l.b16 %v302
        %v393 = vunpack.c.h.b16 %v302
        %v394 = vunpack.c.l.b16 %v303
        %v395 = vunpack.c.h.b16 %v303
        %v396 = vunpack.c.l.b16 %v304
        %v397 = vunpack.c.h.b16 %v304
        %v398 = vunpack.c.l.b16 %v305
        %v399 = vunpack.c.h.b16 %v305
        %v400 = vunpack.c.l.b16 %v306
        %v401 = vunpack.c.h.b16 %v306
        %v402 = vunpack.c.l.b16 %v307
        %v403 = vunpack.c.h.b16 %v307
        %v404 = vunpack.c.l.b16 %v308
        %v405 = vunpack.c.h.b16 %v308
        %v406 = vunpack.c.l.b16 %v309
        %v407 = vunpack.c.h.b16 %v309
        %v408 = vunpack.c.l.b16 %v310
        %v409 = vunpack.c.h.b16 %v310
        %v410 = vunpack.c.l.b16 %v311
        %v411 = vunpack.c.h.b16 %v311
        %v412 = vunpack.c.l.b16 %v312
        %v413 = vunpack.c.h.b16 %v312
        %v414 = vunpack.c.l.b16 %v313
        %v415 = vunpack.c.h.b16 %v313
        %v416 = vunpack.c.l.b16 %v314
        %v417 = vunpack.c.h.b16 %v314
        %v418 = vunpack.c.l.b16 %v315
        %v419 = vunpack.c.h.b16 %v315
        %v420 = vunpack.c.l.b16 %v316
        %v421 = vunpack.c.h.b16 %v316
        %v422 = vunpack.c.l.b16 %v317
        %v423 = vunpack.c.h.b16 %v317
        %v424 = vunpack.c.l.b16 %v318
        %v425 = vunpack.c.h.b16 %v318
        %v426 = vunpack.c.l.b16 %v319
        %v427 = vunpack.c.h.b16 %v319
        %v428 = vpack.c.b16 %v366, %v364
        %v429 = vpack.c.b16 %v367, %v365
        %v430 = vpack.c.b16 %v370, %v368
        %v431 = vpack.c.b16 %v371, %v369
        %v432 = vpack.c.b16 %v374, %v372
        %v433 = vpack.c.b16 %v375, %v373
        %v434 = vpack.c.b16 %v378, %v376
        %v435 = vpack.c.b16 %v379, %v377
        %v436 = vpack.c.b16 %v382, %v380
        %v437 = vpack.c.b16 %v383, %v381
        %v438 = vpack.c.b16 %v386, %v384
        %v439 = vpack.c.b16 %v387, %v385
        %v440 = vpack.c.b16 %v390, %v388
        %v441 = vpack.c.b16 %v391, %v389
        %v442 = vpack.c.b16 %v394, %v392
        %v443 = vpack.c.b16 %v395, %v393
        %v444 = vpack.c.b16 %v398, %v396
        %v445 = vpack.c.b16 %v399, %v397
        %v446 = vpack.c.b16 %v402, %v400
        %v447 = vpack.c.b16 %v403, %v401
        %v448 = vpack.c.b16 %v406, %v404
        %v449 = vpack.c.b16 %v407, %v405
        %v450 = vpack.c.b16 %v410, %v408
        %v451 = vpack.c.b16 %v411, %v409
        %v452 = vpack.c.b16 %v414, %v412
        %v453 = vpack.c.b16 %v415, %v413
        %v454 = vpack.c.b16 %v418, %v416
        %v455 = vpack.c.b16 %v419, %v417
        %v456 = vpack.c.b16 %v422, %v420
        %v457 = vpack.c.b16 %v423, %v421
        %v458 = vpack.c.b16 %v426, %v424
        %v459 = vpack.c.b16 %v427, %v425
        %492 = vmatprep.subr.bf16.mxu0 %v429
        %493 = vmatpush1.bf16.msra.mxu0 %v428
        %494 = vmatprep.subr.bf16.mxu0 %v431
        %495 = vmatpush1.bf16.msra.mxu0 %v430
        %496 = vmatprep.subr.bf16.mxu0 %v433
        %497 = vmatpush1.bf16.msra.mxu0 %v432
        %498 = vmatprep.subr.bf16.mxu0 %v435
        %499 = vmatpush1.bf16.msra.mxu0 %v434
        %500 = vmatprep.subr.bf16.mxu0 %v437
        %501 = vmatpush1.bf16.msra.mxu0 %v436
        %502 = vmatprep.subr.bf16.mxu0 %v439
        %503 = vmatpush1.bf16.msra.mxu0 %v438
        %504 = vmatprep.subr.bf16.mxu0 %v441
        %505 = vmatpush1.bf16.msra.mxu0 %v440
        %506 = vmatprep.subr.bf16.mxu0 %v443
        %507 = vmatpush1.bf16.msra.mxu0 %v442
        %508 = vmatprep.subr.bf16.mxu0 %v445
        %509 = vmatpush1.bf16.msra.mxu0 %v444
        %510 = vmatprep.subr.bf16.mxu0 %v447
        %511 = vmatpush1.bf16.msra.mxu0 %v446
        %512 = vmatprep.subr.bf16.mxu0 %v449
        %513 = vmatpush1.bf16.msra.mxu0 %v448
        %514 = vmatprep.subr.bf16.mxu0 %v451
        %515 = vmatpush1.bf16.msra.mxu0 %v450
        %516 = vmatprep.subr.bf16.mxu0 %v453
        %517 = vmatpush1.bf16.msra.mxu0 %v452
        %518 = vmatprep.subr.bf16.mxu0 %v455
        %519 = vmatpush1.bf16.msra.mxu0 %v454
        %520 = vmatprep.subr.bf16.mxu0 %v457
        %521 = vmatpush1.bf16.msra.mxu0 %v456
        %522 = vmatprep.subr.bf16.mxu0 %v459
        %523 = vmatpush1.bf16.msra.mxu0 %v458
        %524 = vmatprep.mubr.bf16.mxu0 %v329
        %525 = vmatmul.mubr.bf16.gmra.mrb[0].mxu0 %v328
        %v526 = vpop.f32.mrb[0].mxu0
        %v527 = vadd.f32 0.0, %v526
        %v528 = vpop.f32.mrb[0].mxu0
        %v529 = vadd.f32 0.0, %v528
        %v530 = vpop.f32.mrb[0].mxu0
        %v531 = vadd.f32 0.0, %v530
        %v532 = vpop.f32.mrb[0].mxu0
        %v533 = vadd.f32 0.0, %v532
        %534 = vdwg.mxu0
        %s535 = scalar_lea.vmem %s258, 16 [#allocation2]
        %v536 = vld [vmem:[%s535] sm:$0xff]
        %v537 = vld [vmem:[%s535 + $0x8] sm:$0x11]
        %v540 = vunpack.c.l.b16 %v536
        %v541 = vunpack.c.h.b16 %v536
        %v542 = vunpack.c.l.b16 %v537
        %v543 = vunpack.c.h.b16 %v537
        %v544 = vpack.c.b16 %v542, %v540
        %v545 = vpack.c.b16 %v543, %v541
        %548 = vmatprep.subr.bf16.mxu0 %v429
        %549 = vmatpush1.bf16.msra.mxu0 %v428
        %550 = vmatprep.subr.bf16.mxu0 %v431
        %551 = vmatpush1.bf16.msra.mxu0 %v430
        %552 = vmatprep.subr.bf16.mxu0 %v433
        %553 = vmatpush1.bf16.msra.mxu0 %v432
        %554 = vmatprep.subr.bf16.mxu0 %v435
        %555 = vmatpush1.bf16.msra.mxu0 %v434
        %556 = vmatprep.subr.bf16.mxu0 %v437
        %557 = vmatpush1.bf16.msra.mxu0 %v436
        %558 = vmatprep.subr.bf16.mxu0 %v439
        %559 = vmatpush1.bf16.msra.mxu0 %v438
        %560 = vmatprep.subr.bf16.mxu0 %v441
        %561 = vmatpush1.bf16.msra.mxu0 %v440
        %562 = vmatprep.subr.bf16.mxu0 %v443
        %563 = vmatpush1.bf16.msra.mxu0 %v442
        %564 = vmatprep.subr.bf16.mxu0 %v445
        %565 = vmatpush1.bf16.msra.mxu0 %v444
        %566 = vmatprep.subr.bf16.mxu0 %v447
        %567 = vmatpush1.bf16.msra.mxu0 %v446
        %568 = vmatprep.subr.bf16.mxu0 %v449
        %569 = vmatpush1.bf16.msra.mxu0 %v448
        %570 = vmatprep.subr.bf16.mxu0 %v451
        %571 = vmatpush1.bf16.msra.mxu0 %v450
        %572 = vmatprep.subr.bf16.mxu0 %v453
        %573 = vmatpush1.bf16.msra.mxu0 %v452
        %574 = vmatprep.subr.bf16.mxu0 %v455
        %575 = vmatpush1.bf16.msra.mxu0 %v454
        %576 = vmatprep.subr.bf16.mxu0 %v457
        %577 = vmatpush1.bf16.msra.mxu0 %v456
        %578 = vmatprep.subr.bf16.mxu0 %v459
        %579 = vmatpush1.bf16.msra.mxu0 %v458
        %580 = vmatprep.mubr.bf16.mxu0 %v545
        %581 = vmatmul.mubr.bf16.gmra.mrb[0].mxu0 %v544
        %v582 = vpop.f32.mrb[0].mxu0
        %v583 = vadd.f32 0.0, %v582
        %v584 = vpop.f32.mrb[0].mxu0
        %v585 = vadd.f32 0.0, %v584
        %v586 = vpop.f32.mrb[0].mxu0
        %v587 = vadd.f32 0.0, %v586
        %v588 = vpop.f32.mrb[0].mxu0
        %v589 = vadd.f32 0.0, %v588
        %590 = vdwg.mxu0
        %v591 = vmax.f32 %v527, %v583
        %v592 = vmax.f32 %v529, %v585
        %v593 = vmax.f32 %v531, %v587
        %v594 = vmax.f32 %v533, %v589
        %s595 = scalar_lea.vmem %s258, 32 [#allocation2]
        %v596 = vld [vmem:[%s595] sm:$0xff]
        %v597 = vld [vmem:[%s595 + $0x8] sm:$0x11]
        %v600 = vunpack.c.l.b16 %v596
        %v601 = vunpack.c.h.b16 %v596
        %v602 = vunpack.c.l.b16 %v597
        %v603 = vunpack.c.h.b16 %v597
        %v604 = vpack.c.b16 %v602, %v600
        %v605 = vpack.c.b16 %v603, %v601
        %608 = vmatprep.subr.bf16.mxu0 %v429
        %609 = vmatpush1.bf16.msra.mxu0 %v428
        %610 = vmatprep.subr.bf16.mxu0 %v431
        %611 = vmatpush1.bf16.msra.mxu0 %v430
        %612 = vmatprep.subr.bf16.mxu0 %v433
        %613 = vmatpush1.bf16.msra.mxu0 %v432
        %614 = vmatprep.subr.bf16.mxu0 %v435
        %615 = vmatpush1.bf16.msra.mxu0 %v434
        %616 = vmatprep.subr.bf16.mxu0 %v437
        %617 = vmatpush1.bf16.msra.mxu0 %v436
        %618 = vmatprep.subr.bf16.mxu0 %v439
        %619 = vmatpush1.bf16.msra.mxu0 %v438
        %620 = vmatprep.subr.bf16.mxu0 %v441
        %621 = vmatpush1.bf16.msra.mxu0 %v440
        %622 = vmatprep.subr.bf16.mxu0 %v443
        %623 = vmatpush1.bf16.msra.mxu0 %v442
        %624 = vmatprep.subr.bf16.mxu0 %v445
        %625 = vmatpush1.bf16.msra.mxu0 %v444
        %626 = vmatprep.subr.bf16.mxu0 %v447
        %627 = vmatpush1.bf16.msra.mxu0 %v446
        %628 = vmatprep.subr.bf16.mxu0 %v449
        %629 = vmatpush1.bf16.msra.mxu0 %v448
        %630 = vmatprep.subr.bf16.mxu0 %v451
        %631 = vmatpush1.bf16.msra.mxu0 %v450
        %632 = vmatprep.subr.bf16.mxu0 %v453
        %633 = vmatpush1.bf16.msra.mxu0 %v452
        %634 = vmatprep.subr.bf16.mxu0 %v455
        %635 = vmatpush1.bf16.msra.mxu0 %v454
        %636 = vmatprep.subr.bf16.mxu0 %v457
        %637 = vmatpush1.bf16.msra.mxu0 %v456
        %638 = vmatprep.subr.bf16.mxu0 %v459
        %639 = vmatpush1.bf16.msra.mxu0 %v458
        %640 = vmatprep.mubr.bf16.mxu0 %v605
        %641 = vmatmul.mubr.bf16.gmra.mrb[0].mxu0 %v604
        %v642 = vpop.f32.mrb[0].mxu0
        %v643 = vadd.f32 0.0, %v642
        %v644 = vpop.f32.mrb[0].mxu0
        %v645 = vadd.f32 0.0, %v644
        %v646 = vpop.f32.mrb[0].mxu0
        %v647 = vadd.f32 0.0, %v646
        %v648 = vpop.f32.mrb[0].mxu0
        %v649 = vadd.f32 0.0, %v648
        %650 = vdwg.mxu0
        %v651 = vmax.f32 %v591, %v643
        %v652 = vmax.f32 %v592, %v645
        %v653 = vmax.f32 %v593, %v647
        %v654 = vmax.f32 %v594, %v649
        %s655 = scalar_lea.vmem %s258, 48 [#allocation2]
        %v656 = vld [vmem:[%s655] sm:$0xff]
        %v657 = vld [vmem:[%s655 + $0x8] sm:$0x11]
        %v660 = vunpack.c.l.b16 %v656
        %v661 = vunpack.c.h.b16 %v656
        %v662 = vunpack.c.l.b16 %v657
        %v663 = vunpack.c.h.b16 %v657
        %v664 = vpack.c.b16 %v662, %v660
        %v665 = vpack.c.b16 %v663, %v661
        %668 = vmatprep.subr.bf16.mxu0 %v429
        %669 = vmatpush1.bf16.msra.mxu0 %v428
        %670 = vmatprep.subr.bf16.mxu0 %v431
        %671 = vmatpush1.bf16.msra.mxu0 %v430
        %672 = vmatprep.subr.bf16.mxu0 %v433
        %673 = vmatpush1.bf16.msra.mxu0 %v432
        %674 = vmatprep.subr.bf16.mxu0 %v435
        %675 = vmatpush1.bf16.msra.mxu0 %v434
        %676 = vmatprep.subr.bf16.mxu0 %v437
        %677 = vmatpush1.bf16.msra.mxu0 %v436
        %678 = vmatprep.subr.bf16.mxu0 %v439
        %679 = vmatpush1.bf16.msra.mxu0 %v438
        %680 = vmatprep.subr.bf16.mxu0 %v441
        %681 = vmatpush1.bf16.msra.mxu0 %v440
        %682 = vmatprep.subr.bf16.mxu0 %v443
        %683 = vmatpush1.bf16.msra.mxu0 %v442
        %684 = vmatprep.subr.bf16.mxu0 %v445
        %685 = vmatpush1.bf16.msra.mxu0 %v444
        %686 = vmatprep.subr.bf16.mxu0 %v447
        %687 = vmatpush1.bf16.msra.mxu0 %v446
        %688 = vmatprep.subr.bf16.mxu0 %v449
        %689 = vmatpush1.bf16.msra.mxu0 %v448
        %690 = vmatprep.subr.bf16.mxu0 %v451
        %691 = vmatpush1.bf16.msra.mxu0 %v450
        %692 = vmatprep.subr.bf16.mxu0 %v453
        %693 = vmatpush1.bf16.msra.mxu0 %v452
        %694 = vmatprep.subr.bf16.mxu0 %v455
        %695 = vmatpush1.bf16.msra.mxu0 %v454
        %696 = vmatprep.subr.bf16.mxu0 %v457
        %697 = vmatpush1.bf16.msra.mxu0 %v456
        %698 = vmatprep.subr.bf16.mxu0 %v459
        %699 = vmatpush1.bf16.msra.mxu0 %v458
        %700 = vmatprep.mubr.bf16.mxu0 %v665
        %701 = vmatmul.mubr.bf16.gmra.mrb[0].mxu0 %v664
        %v702 = vpop.f32.mrb[0].mxu0
        %v703 = vadd.f32 0.0, %v702
        %v704 = vpop.f32.mrb[0].mxu0
        %v705 = vadd.f32 0.0, %v704
        %v706 = vpop.f32.mrb[0].mxu0
        %v707 = vadd.f32 0.0, %v706
        %v708 = vpop.f32.mrb[0].mxu0
        %v709 = vadd.f32 0.0, %v708
        %710 = vdwg.mxu0
        %v711 = vmax.f32 %v651, %v703
        %v712 = vmax.f32 %v652, %v705
        %v713 = vmax.f32 %v653, %v707
        %v714 = vmax.f32 %v654, %v709
        %v715 = vld [vmem:[%s2] sm:$0x3]
        %v717 = vlaneseq
        %v718 = vshrl.u32 %v717, 7
        %v719 = vsub.s32 0, %v718
        %v720 = vrot.slane %v715, %v719
        %v721 = vlaneseq
        %v722 = vshrl.u32 %v721, 7
        %v723 = vsub.s32 1, %v722
        %v724 = vrot.slane %v715, %v723
        %v727 = vadd.f32 %v711, %v720
        %v728 = vadd.f32 %v712, %v724
        %v729 = vadd.f32 %v713, %v720
        %v730 = vadd.f32 %v714, %v724
        %vm731 = vcmp.gt.f32.partialorder %v727, 0.0
        %vm732 = vcmp.gt.f32.partialorder %v728, 0.0
        %vm733 = vcmp.gt.f32.partialorder %v729, 0.0
        %vm734 = vcmp.gt.f32.partialorder %v730, 0.0
        %v735 = vmin.f32 %v727, 0.0
        %v736 = vmin.f32 %v728, 0.0
        %v737 = vmin.f32 %v729, 0.0
        %v738 = vmin.f32 %v730, 0.0
        %v739 = vmul.f32 %v735, 1.442695
        %v740 = vpow.pop %v739
        %v741 = vmul.f32 %v736, 1.442695
        %v742 = vpow.pop %v741
        %v743 = vmul.f32 %v737, 1.442695
        %v744 = vpow.pop %v743
        %v745 = vmul.f32 %v738, 1.442695
        %v746 = vpow.pop %v745
        %v747 = vsub.f32 %v740, 1.0
        %v748 = vsub.f32 %v742, 1.0
        %v749 = vsub.f32 %v744, 1.0
        %v750 = vsub.f32 %v746, 1.0
        %v751 = vsel %vm731, %v727, %v747
        %v752 = vsel %vm732, %v728, %v748
        %v753 = vsel %vm733, %v729, %v749
        %v754 = vsel %vm734, %v730, %v750
        %v755 = vld [vmem:[%s3] sm:$0x3]
        %v757 = vlaneseq
        %v758 = vshrl.u32 %v757, 7
        %v759 = vsub.s32 0, %v758
        %v760 = vrot.slane %v755, %v759
        %v761 = vlaneseq
        %v762 = vshrl.u32 %v761, 7
        %v763 = vsub.s32 1, %v762
        %v764 = vrot.slane %v755, %v763
        %v767 = vmul.f32 %v751, %v760
        %v768 = vmul.f32 %v752, %v764
        %v769 = vmul.f32 %v753, %v760
        %v770 = vmul.f32 %v754, %v764
        %v771 = vld [vmem:[%s4] sm:$0x3]
        %v773 = vlaneseq
        %v774 = vshrl.u32 %v773, 7
        %v775 = vsub.s32 0, %v774
        %v776 = vrot.slane %v771, %v775
        %v777 = vlaneseq
        %v778 = vshrl.u32 %v777, 7
        %v779 = vsub.s32 1, %v778
        %v780 = vrot.slane %v771, %v779
        %v783 = vadd.f32 %v767, %v776
        %v784 = vadd.f32 %v768, %v780
        %v785 = vadd.f32 %v769, %v776
        %v786 = vadd.f32 %v770, %v780
        %v787 = vpack.c.bf16 %v785, %v783
        %v788 = vpack.c.bf16 %v786, %v784
        %v791 = vunpack.c.l.b16 %v787
        %v792 = vunpack.c.l.b16 %v788
        %v793 = vunpack.c.h.b16 %v787
        %v794 = vunpack.c.h.b16 %v788
        %v795 = vpack.c.b16 %v792, %v791
        %v796 = vpack.c.b16 %v794, %v793
        %799 = vst [vmem:[%s287] sm:$0xff] %v795
        %vm800 = vcmask 1040384
        %vm801 = vsmask.f32 256
        %vm802 = vmand %vm800, %vm801
        %vm803 = vcmask 1044484
        %vm804 = vsmask.f32 4352
        %vm805 = vmand %vm803, %vm804
        %vm806 = vmor %vm805, %vm802
        %v807 = vld [vmem:[%s287 + $0x8] sm:$0x11]
        %v808 = vsel %vm806, %v796, %v807
        %809 = vst [vmem:[%s287 + $0x8] sm:$0x11] %v808
        %p810 = scmp.lt.s32.totalorder %s16, 1
        %s811 = scalar_select %p810, %s16, 1
        %s812 = smul.addr %s811, 4
        %s813 = smul.addr %s812, 4
        %s814 = scalar_lea.vmem %s5, %s813
        // Predicated region
        $region79: #{gtsrb_forward.6} parent=73 // pred_check
          %p815 = pneg %p144
        $region80: #{gtsrb_forward.6} parent=73 // pred_check_branch
          %817 = sbr.rel (%p815) target = $region82
        $region81: #{gtsrb_forward.6} parent=73 // pred_region
          _
        $region82: #{gtsrb_forward.6} parent=73 // pred_fallthru
          _
      $region74: #{gtsrb_forward.6} parent=5 // pred_fallthru
        _
      %p818 = scmp.le.s32.totalorder 2, %s11
      // Predicated region
      $region83: #{gtsrb_forward.6} parent=5 // pred_check
        %p819 = pneg %p818
      $region84: #{gtsrb_forward.6} parent=5 // pred_check_branch
        %821 = sbr.rel (%p819) target = $region86
      $region85: #{gtsrb_forward.6} parent=5 // pred_region
        %s822 = ssub.s32 %s11, 2
        // Predicated region
        $region87: #{gtsrb_forward.6} parent=85 // pred_check
          %p823 = pneg %p150
        $region88: #{gtsrb_forward.6} parent=85 // pred_check_branch
          %825 = sbr.rel (%p823) target = $region90
        $region89: #{gtsrb_forward.6} parent=85 // pred_region
          %p826 = scmp.lt.s32.totalorder %s17, 1
          %s827 = scalar_select %p826, %s17, 1
          %s828 = smul.addr %s827, 4
          %s829 = smul.addr %s828, 4
          %s830 = scalar_lea.vmem %s5, %s829
        $region90: #{gtsrb_forward.6} parent=85 // pred_fallthru
          _
      $region86: #{gtsrb_forward.6} parent=5 // pred_fallthru
        _
    $region6: #{gtsrb_forward.6} parent=1 // loop_footer
      %s15 = sadd.s32 1, %s11
    $region7: #{gtsrb_forward.6} parent=1 // loop_footer_branch
      %10 = sbr.rel target = $region3
    $region8: #{gtsrb_forward.6} parent=1 // loop_exit
      _

// kernel: gtsrb_forward.5
$region0: #{gtsrb_forward.5}
  #allocation0 [shape = 'u32[]', space=smem, size = 0x4, offset = 0x4, fixed_abs, tag = 'smem constant byte address 0x4 - core index']
  #allocation1 [shape = 'u32[144,128]{1,0:T(1,128)}', space=vmem, size = 0x12000, scoped, tag = 'internal scratch']
  %s0 = inlined_call_operand.vmem [shape: bf16[4,2,36,1152], index: 0, kind: input, shape index: {}]
  %s1 = inlined_call_operand.vmem [shape: bf16[1152,256], index: 1, kind: input, shape index: {}]
  %s2 = inlined_call_operand.vmem [shape: f32[1,256], index: 2, kind: input, shape index: {}]
  %s3 = inlined_call_operand.vmem [shape: f32[1,256], index: 3, kind: input, shape index: {}]
  %s4 = inlined_call_operand.vmem [shape: f32[1,256], index: 4, kind: input, shape index: {}]
  %s5 = inlined_call_operand.vmem [shape: bf16[2,36,256], index: 5, kind: output, shape index: {}]
  %s6 = sld [smem:[#allocation0]]
  $region79: #{gtsrb_forward.5} parent=0
    _
  %s8 = ssub.s32 1, %s6
  %s9 = scalar_select 0, %s8, %s6
  $region1: #{gtsrb_forward.5} parent=0
    #allocation2 [shape = 'u8[737280]{0}', space=vmem, size = 0xb4000, scoped, tag = 'input window, operand 0']
    loop: start=0, step=1, limit=4
    $region2: #{gtsrb_forward.5} parent=1 // loop_pre_header
      _
    $region3: #{gtsrb_forward.5} parent=1 // loop_header
      %s11 = sphi 0, %s15
      %p12 = scmp.ge.s32.totalorder %s11, 4
      %s21 = sphi 0, %s23
      %s24 = sphi 0, %s21
      %s25 = sphi 0, %s24
      %s41 = sphi 0, %s25
      %s45 = sphi 0, %s45
      %s47 = sphi 0, %s45
      %s48 = sphi 0, %s47
      %s62 = sphi 0, %s48
      %s66 = sphi 0, %s66
      %s68 = sphi 0, %s66
      %s69 = sphi 0, %s68
      %s83 = sphi 0, %s69
      %s87 = sphi 0, %s87
      %s89 = sphi 0, %s87
      %s90 = sphi 0, %s89
      %s104 = sphi 0, %s90
      %s108 = sphi 0, %s108
      %s110 = sphi 0, %s108
      %s111 = sphi 0, %s110
      %s125 = sphi 0, %s111
      %s131 = sphi 0, %s133
      %s134 = sphi 0, %s131
      %s135 = sphi 0, %s134
      %s151 = sphi 0, %s135
    $region4: #{gtsrb_forward.5} parent=1 // loop_header_branch
      %14 = sbr.rel (%p12) target = $region8
    $region5: #{gtsrb_forward.5} parent=1 // loop_body
      %s16 = ssub.s32 %s11, 1
      %s17 = ssub.s32 %s11, 2
      %s18 = sadd.s32 %s11, 1
      %s19 = ssub.s32 %s11, %s18
      %p20 = scmp.eq.s32.totalorder %s19, 0
      %s22 = sadd.s32 %s21, 1
      %s23 = scalar_select %p20, %s21, %s22
      %p26 = pneg %p20
      %p27 = scmp.eq.s32.totalorder %s11, 1
      %p28 = por %p26, %p27
      %p29 = scmp.ne.s32.totalorder %s21, %s24
      %p30 = scmp.eq.s32.totalorder %s11, 0
      %p31 = por %p29, %p30
      %p32 = scmp.ne.s32.totalorder %s21, %s24
      %p33 = scmp.eq.s32.totalorder %s16, 1
      %p34 = por %p32, %p33
      %p35 = scmp.ne.s32.totalorder %s24, %s25
      %p36 = scmp.eq.s32.totalorder %s16, 0
      %p37 = por %p35, %p36
      %p38 = scmp.ne.s32.totalorder %s24, %s25
      %p39 = scmp.eq.s32.totalorder %s17, 1
      %p40 = por %p38, %p39
      %p42 = scmp.ne.s32.totalorder %s25, %s41
      %p43 = scmp.eq.s32.totalorder %s17, 0
      %p44 = por %p42, %p43
      %s46 = sadd.s32 %s45, 1
      %p49 = scmp.eq.s32.totalorder %s11, 1
      %p50 = scmp.ne.s32.totalorder %s45, %s47
      %p51 = scmp.eq.s32.totalorder %s11, 0
      %p52 = por %p50, %p51
      %p53 = scmp.ne.s32.totalorder %s45, %s47
      %p54 = scmp.eq.s32.totalorder %s16, 1
      %p55 = por %p53, %p54
      %p56 = scmp.ne.s32.totalorder %s47, %s48
      %p57 = scmp.eq.s32.totalorder %s16, 0
      %p58 = por %p56, %p57
      %p59 = scmp.ne.s32.totalorder %s47, %s48
      %p60 = scmp.eq.s32.totalorder %s17, 1
      %p61 = por %p59, %p60
      %p63 = scmp.ne.s32.totalorder %s48, %s62
      %p64 = scmp.eq.s32.totalorder %s17, 0
      %p65 = por %p63, %p64
      %s67 = sadd.s32 %s66, 1
      %p70 = scmp.eq.s32.totalorder %s11, 1
      %p71 = scmp.ne.s32.totalorder %s66, %s68
      %p72 = scmp.eq.s32.totalorder %s11, 0
      %p73 = por %p71, %p72
      %p74 = scmp.ne.s32.totalorder %s66, %s68
      %p75 = scmp.eq.s32.totalorder %s16, 1
      %p76 = por %p74, %p75
      %p77 = scmp.ne.s32.totalorder %s68, %s69
      %p78 = scmp.eq.s32.totalorder %s16, 0
      %p79 = por %p77, %p78
      %p80 = scmp.ne.s32.totalorder %s68, %s69
      %p81 = scmp.eq.s32.totalorder %s17, 1
      %p82 = por %p80, %p81
      %p84 = scmp.ne.s32.totalorder %s69, %s83
      %p85 = scmp.eq.s32.totalorder %s17, 0
      %p86 = por %p84, %p85
      %s88 = sadd.s32 %s87, 1
      %p91 = scmp.eq.s32.totalorder %s11, 1
      %p92 = scmp.ne.s32.totalorder %s87, %s89
      %p93 = scmp.eq.s32.totalorder %s11, 0
      %p94 = por %p92, %p93
      %p95 = scmp.ne.s32.totalorder %s87, %s89
      %p96 = scmp.eq.s32.totalorder %s16, 1
      %p97 = por %p95, %p96
      %p98 = scmp.ne.s32.totalorder %s89, %s90
      %p99 = scmp.eq.s32.totalorder %s16, 0
      %p100 = por %p98, %p99
      %p101 = scmp.ne.s32.totalorder %s89, %s90
      %p102 = scmp.eq.s32.totalorder %s17, 1
      %p103 = por %p101, %p102
      %p105 = scmp.ne.s32.totalorder %s90, %s104
      %p106 = scmp.eq.s32.totalorder %s17, 0
      %p107 = por %p105, %p106
      %s109 = sadd.s32 %s108, 1
      %p112 = scmp.eq.s32.totalorder %s11, 1
      %p113 = scmp.ne.s32.totalorder %s108, %s110
      %p114 = scmp.eq.s32.totalorder %s11, 0
      %p115 = por %p113, %p114
      %p116 = scmp.ne.s32.totalorder %s108, %s110
      %p117 = scmp.eq.s32.totalorder %s16, 1
      %p118 = por %p116, %p117
      %p119 = scmp.ne.s32.totalorder %s110, %s111
      %p120 = scmp.eq.s32.totalorder %s16, 0
      %p121 = por %p119, %p120
      %p122 = scmp.ne.s32.totalorder %s110, %s111
      %p123 = scmp.eq.s32.totalorder %s17, 1
      %p124 = por %p122, %p123
      %p126 = scmp.ne.s32.totalorder %s111, %s125
      %p127 = scmp.eq.s32.totalorder %s17, 0
      %p128 = por %p126, %p127
      %s129 = ssub.s32 %s11, %s18
      %p130 = scmp.eq.s32.totalorder %s129, 0
      %s132 = sadd.s32 %s131, 1
      %s133 = scalar_select %p130, %s131, %s132
      %p136 = pneg %p130
      %p137 = scmp.eq.s32.totalorder %s11, 1
      %p138 = por %p136, %p137
      %p139 = scmp.ne.s32.totalorder %s131, %s134
      %p140 = scmp.eq.s32.totalorder %s11, 0
      %p141 = por %p139, %p140
      %p142 = scmp.ne.s32.totalorder %s131, %s134
      %p143 = scmp.eq.s32.totalorder %s16, 1
      %p144 = por %p142, %p143
      %p145 = scmp.ne.s32.totalorder %s134, %s135
      %p146 = scmp.eq.s32.totalorder %s16, 0
      %p147 = por %p145, %p146
      %p148 = scmp.ne.s32.totalorder %s134, %s135
      %p149 = scmp.eq.s32.totalorder %s17, 1
      %p150 = por %p148, %p149
      %p152 = scmp.ne.s32.totalorder %s135, %s151
      %p153 = scmp.eq.s32.totalorder %s17, 0
      %p154 = por %p152, %p153
      %p155 = scmp.le.s32.totalorder 1, %s11
      %p156 = scmp.lt.s32.totalorder %s11, 3
      %p157 = pnand %p155, %p156
      %p158 = pneg %p157
      // Predicated region
      $region9: #{gtsrb_forward.5} parent=5 // pred_check
        _
      $region10: #{gtsrb_forward.5} parent=5 // pred_check_branch
        %160 = sbr.rel (%p157) target = $region12
      $region11: #{gtsrb_forward.5} parent=5 // pred_region
        %s161 = ssub.s32 %s11, 1
        // Predicated region
        $region13: #{gtsrb_forward.5} parent=11 // pred_check
          %p162 = pneg %p58
        $region14: #{gtsrb_forward.5} parent=11 // pred_check_branch
          %164 = sbr.rel (%p162) target = $region16
        $region15: #{gtsrb_forward.5} parent=11 // pred_region
          _
        $region16: #{gtsrb_forward.5} parent=11 // pred_fallthru
          _
        // Predicated region
        $region17: #{gtsrb_forward.5} parent=11 // pred_check
          %p165 = pneg %p79
        $region18: #{gtsrb_forward.5} parent=11 // pred_check_branch
          %167 = sbr.rel (%p165) target = $region20
        $region19: #{gtsrb_forward.5} parent=11 // pred_region
          _
        $region20: #{gtsrb_forward.5} parent=11 // pred_fallthru
          _
        // Predicated region
        $region21: #{gtsrb_forward.5} parent=11 // pred_check
          %p168 = pneg %p100
        $region22: #{gtsrb_forward.5} parent=11 // pred_check_branch
          %170 = sbr.rel (%p168) target = $region24
        $region23: #{gtsrb_forward.5} parent=11 // pred_region
          _
        $region24: #{gtsrb_forward.5} parent=11 // pred_fallthru
          _
        // Predicated region
        $region25: #{gtsrb_forward.5} parent=11 // pred_check
          %p171 = pneg %p121
        $region26: #{gtsrb_forward.5} parent=11 // pred_check_branch
          %173 = sbr.rel (%p171) target = $region28
        $region27: #{gtsrb_forward.5} parent=11 // pred_region
          _
        $region28: #{gtsrb_forward.5} parent=11 // pred_fallthru
          _
      $region12: #{gtsrb_forward.5} parent=5 // pred_fallthru
        _
      %p174 = scmp.lt.s32.totalorder %s11, 2
      // Predicated region
      $region29: #{gtsrb_forward.5} parent=5 // pred_check
        %p175 = pneg %p174
      $region30: #{gtsrb_forward.5} parent=5 // pred_check_branch
        %177 = sbr.rel (%p175) target = $region32
      $region31: #{gtsrb_forward.5} parent=5 // pred_region
        // Predicated region
        $region33: #{gtsrb_forward.5} parent=31 // pred_check
          %p178 = pneg %p31
        $region34: #{gtsrb_forward.5} parent=31 // pred_check_branch
          %180 = sbr.rel (%p178) target = $region36
        $region35: #{gtsrb_forward.5} parent=31 // pred_region
          %s181 = sand.u32 %s21, 1
          %s182 = sand.u32 %s21, 1
          %s183 = smul.addr %s182, 720
          %s184 = scalar_lea.vmem [#allocation2], %s183
          %s185 = smul.addr %s11, 45
          %s186 = smul.addr %s185, 4
          %s187 = scalar_lea.vmem %s0, %s186
          // Predicated region
          $region37: #{gtsrb_forward.5} parent=35 // pred_check
            _
          $region38: #{gtsrb_forward.5} parent=35 // pred_check_branch
            %189 = sbr.rel (0) target = $region40
          $region39: #{gtsrb_forward.5} parent=35 // pred_region
            // Predicated region
            $region41: #{gtsrb_forward.5} parent=39 // pred_check
              _
            $region42: #{gtsrb_forward.5} parent=39 // pred_check_branch
              %191 = sbr.rel (0) target = $region44
            $region43: #{gtsrb_forward.5} parent=39 // pred_region
              %s192 = scalar_lea.vmem %s187, 32
              %s193 = scalar_lea.vmem %s184, 32 [#allocation2]
              loop: start=0, step=1, limit=1
              $region45: #{gtsrb_forward.5} parent=43 // loop_pre_header
                _
              $region46: #{gtsrb_forward.5} parent=43 // loop_header
                %s195 = sphi 0, %s199
                %p196 = scmp.ge.s32.totalorder %s195, 1
                %s200 = sphi %s187, %s187
                %s201 = sphi %s184, %s184
              $region47: #{gtsrb_forward.5} parent=43 // loop_header_branch
                %198 = sbr.rel (%p196) target = $region51
              $region48: #{gtsrb_forward.5} parent=43 // loop_body
                %v202 = vld [vmem:[%s200] sm:$0xff]
                %203 = vst [vmem:[%s201] sm:$0xff] %v202
                %v204 = vld [vmem:[%s200 + $0x8] sm:$0xff]
                %205 = vst [vmem:[%s201 + $0x8] sm:$0xff] %v204
                %v206 = vld [vmem:[%s200 + $0x10] sm:$0xff]
                %207 = vst [vmem:[%s201 + $0x10] sm:$0xff] %v206
                %v208 = vld [vmem:[%s200 + $0x18] sm:$0xff]
                %209 = vst [vmem:[%s201 + $0x18] sm:$0xff] %v208
                %v210 = vld [vmem:[%s200 + $0x24] sm:$0xff]
                %211 = vst [vmem:[%s201 + $0x24] sm:$0xff] %v210
                %v212 = vld [vmem:[%s200 + $0x2c] sm:$0xff]
                %213 = vst [vmem:[%s201 + $0x2c] sm:$0xff] %v212
                %v214 = vld [vmem:[%s200 + $0x34] sm:$0xff]
                %215 = vst [vmem:[%s201 + $0x34] sm:$0xff] %v214
                %v216 = vld [vmem:[%s200 + $0x3c] sm:$0xff]
                %217 = vst [vmem:[%s201 + $0x3c] sm:$0xff] %v216
                %v218 = vld [vmem:[%s200 + $0x48] sm:$0xff]
                %219 = vst [vmem:[%s201 + $0x48] sm:$0xff] %v218
                %v220 = vld [vmem:[%s200 + $0x50] sm:$0xff]
                %221 = vst [vmem:[%s201 + $0x50] sm:$0xff] %v220
                %v222 = vld [vmem:[%s200 + $0x58] sm:$0xff]
                %223 = vst [vmem:[%s201 + $0x58] sm:$0xff] %v222
                %v224 = vld [vmem:[%s200 + $0x60] sm:$0xff]
                %225 = vst [vmem:[%s201 + $0x60] sm:$0xff] %v224
                %v226 = vld [vmem:[%s200 + $0x6c] sm:$0xff]
                %227 = vst [vmem:[%s201 + $0x6c] sm:$0xff] %v226
                %v228 = vld [vmem:[%s200 + $0x74] sm:$0xff]
                %229 = vst [vmem:[%s201 + $0x74] sm:$0xff] %v228
                %v230 = vld [vmem:[%s200 + $0x7c] sm:$0xff]
                %231 = vst [vmem:[%s201 + $0x7c] sm:$0xff] %v230
                %v232 = vld [vmem:[%s200 + $0x84] sm:$0xff]
                %233 = vst [vmem:[%s201 + $0x84] sm:$0xff] %v232
                %v234 = vld [vmem:[%s200 + $0x90] sm:$0xff]
                %235 = vst [vmem:[%s201 + $0x90] sm:$0xff] %v234
                %v236 = vld [vmem:[%s200 + $0x98] sm:$0xff]
                %237 = vst [vmem:[%s201 + $0x98] sm:$0xff] %v236
                %v238 = vld [vmem:[%s200 + $0xa0] sm:$0xff]
                %239 = vst [vmem:[%s201 + $0xa0] sm:$0xff] %v238
                %v240 = vld [vmem:[%s200 + $0xa8] sm:$0xff]
                %241 = vst [vmem:[%s201 + $0xa8] sm:$0xff] %v240
                %v242 = vld [vmem:[%s200 + $0x168] sm:$0xff]
                %243 = vst [vmem:[%s201 + $0xb4] sm:$0xff] %v242
                %v244 = vld [vmem:[%s200 + $0x170] sm:$0xff]
                %245 = vst [vmem:[%s201 + $0xbc] sm:$0xff] %v244
                %v246 = vld [vmem:[%s200 + $0x178] sm:$0xff]
                %247 = vst [vmem:[%s201 + $0xc4] sm:$0xff] %v246
                %v248 = vld [vmem:[%s200 + $0x180] sm:$0xff]
                %249 = vst [vmem:[%s201 + $0xcc] sm:$0xff] %v248
                %v250 = vld [vmem:[%s200 + $0x18c] sm:$0xff]
                %251 = vst [vmem:[%s201 + $0xd8] sm:$0xff] %v250
                %v252 = vld [vmem:[%s200 + $0x194] sm:$0xff]
                %253 = vst [vmem:[%s201 + $0xe0] sm:$0xff] %v252
                %v254 = vld [vmem:[%s200 + $0x19c] sm:$0xff]
                %255 = vst [vmem:[%s201 + $0xe8] sm:$0xff] %v254
                %v256 = vld [vmem:[%s200 + $0x1a4] sm:$0xff]
                %257 = vst [vmem:[%s201 + $0xf0] sm:$0xff] %v256
                %v258 = vld [vmem:[%s200 + $0x1b0] sm:$0xff]
                %259 = vst [vmem:[%s201 + $0xfc] sm:$0xff] %v258
                %v260 = vld [vmem:[%s200 + $0x1b8] sm:$0xff]
                %261 = vst [vmem:[%s201 + $0x104] sm:$0xff] %v260
                %v262 = vld [vmem:[%s200 + $0x1c0] sm:$0xff]
                %263 = vst [vmem:[%s201 + $0x10c] sm:$0xff] %v262
                %v264 = vld [vmem:[%s200 + $0x1c8] sm:$0xff]
                %265 = vst [vmem:[%s201 + $0x114] sm:$0xff] %v264
                %v266 = vld [vmem:[%s200 + $0x1d4] sm:$0xff]
                %267 = vst [vmem:[%s201 + $0x120] sm:$0xff] %v266
                %v268 = vld [vmem:[%s200 + $0x1dc] sm:$0xff]
                %269 = vst [vmem:[%s201 + $0x128] sm:$0xff] %v268
                %v270 = vld [vmem:[%s200 + $0x1e4] sm:$0xff]
                %271 = vst [vmem:[%s201 + $0x130] sm:$0xff] %v270
                %v272 = vld [vmem:[%s200 + $0x1ec] sm:$0xff]
                %273 = vst [vmem:[%s201 + $0x138] sm:$0xff] %v272
                %v274 = vld [vmem:[%s200 + $0x1f8] sm:$0xff]
                %275 = vst [vmem:[%s201 + $0x144] sm:$0xff] %v274
                %v276 = vld [vmem:[%s200 + $0x200] sm:$0xff]
                %277 = vst [vmem:[%s201 + $0x14c] sm:$0xff] %v276
                %v278 = vld [vmem:[%s200 + $0x208] sm:$0xff]
                %279 = vst [vmem:[%s201 + $0x154] sm:$0xff] %v278
                %v280 = vld [vmem:[%s200 + $0x210] sm:$0xff]
                %281 = vst [vmem:[%s201 + $0x15c] sm:$0xff] %v280
                %v282 = vld [vmem:[%s200 + $0x2d0] sm:$0xff]
                %283 = vst [vmem:[%s201 + $0x168] sm:$0xff] %v282
                %v284 = vld [vmem:[%s200 + $0x2d8] sm:$0xff]
                %285 = vst [vmem:[%s201 + $0x170] sm:$0xff] %v284
                %v286 = vld [vmem:[%s200 + $0x2e0] sm:$0xff]
                %287 = vst [vmem:[%s201 + $0x178] sm:$0xff] %v286
                %v288 = vld [vmem:[%s200 + $0x2e8] sm:$0xff]
                %289 = vst [vmem:[%s201 + $0x180] sm:$0xff] %v288
                %v290 = vld [vmem:[%s200 + $0x2f4] sm:$0xff]
                %291 = vst [vmem:[%s201 + $0x18c] sm:$0xff] %v290
                %v292 = vld [vmem:[%s200 + $0x2fc] sm:$0xff]
                %293 = vst [vmem:[%s201 + $0x194] sm:$0xff] %v292
                %v294 = vld [vmem:[%s200 + $0x304] sm:$0xff]
                %295 = vst [vmem:[%s201 + $0x19c] sm:$0xff] %v294
                %v296 = vld [vmem:[%s200 + $0x30c] sm:$0xff]
                %297 = vst [vmem:[%s201 + $0x1a4] sm:$0xff] %v296
                %v298 = vld [vmem:[%s200 + $0x318] sm:$0xff]
                %299 = vst [vmem:[%s201 + $0x1b0] sm:$0xff] %v298
                %v300 = vld [vmem:[%s200 + $0x320] sm:$0xff]
                %301 = vst [vmem:[%s201 + $0x1b8] sm:$0xff] %v300
                %v302 = vld [vmem:[%s200 + $0x328] sm:$0xff]
                %303 = vst [vmem:[%s201 + $0x1c0] sm:$0xff] %v302
                %v304 = vld [vmem:[%s200 + $0x330] sm:$0xff]
                %305 = vst [vmem:[%s201 + $0x1c8] sm:$0xff] %v304
                %v306 = vld [vmem:[%s200 + $0x33c] sm:$0xff]
                %307 = vst [vmem:[%s201 + $0x1d4] sm:$0xff] %v306
                %v308 = vld [vmem:[%s200 + $0x344] sm:$0xff]
                %309 = vst [vmem:[%s201 + $0x1dc] sm:$0xff] %v308
                %v310 = vld [vmem:[%s200 + $0x34c] sm:$0xff]
                %311 = vst [vmem:[%s201 + $0x1e4] sm:$0xff] %v310
                %v312 = vld [vmem:[%s200 + $0x354] sm:$0xff]
                %313 = vst [vmem:[%s201 + $0x1ec] sm:$0xff] %v312
                %v314 = vld [vmem:[%s200 + $0x360] sm:$0xff]
                %315 = vst [vmem:[%s201 + $0x1f8] sm:$0xff] %v314
                %v316 = vld [vmem:[%s200 + $0x368] sm:$0xff]
                %317 = vst [vmem:[%s201 + $0x200] sm:$0xff] %v316
                %v318 = vld [vmem:[%s200 + $0x370] sm:$0xff]
                %319 = vst [vmem:[%s201 + $0x208] sm:$0xff] %v318
                %v320 = vld [vmem:[%s200 + $0x378] sm:$0xff]
                %321 = vst [vmem:[%s201 + $0x210] sm:$0xff] %v320
                %v322 = vld [vmem:[%s200 + $0x438] sm:$0xff]
                %323 = vst [vmem:[%s201 + $0x21c] sm:$0xff] %v322
                %v324 = vld [vmem:[%s200 + $0x440] sm:$0xff]
                %325 = vst [vmem:[%s201 + $0x224] sm:$0xff] %v324
                %v326 = vld [vmem:[%s200 + $0x448] sm:$0xff]
                %327 = vst [vmem:[%s201 + $0x22c] sm:$0xff] %v326
                %v328 = vld [vmem:[%s200 + $0x450] sm:$0xff]
                %329 = vst [vmem:[%s201 + $0x234] sm:$0xff] %v328
                %v330 = vld [vmem:[%s200 + $0x45c] sm:$0xff]
                %331 = vst [vmem:[%s201 + $0x240] sm:$0xff] %v330
                %v332 = vld [vmem:[%s200 + $0x464] sm:$0xff]
                %333 = vst [vmem:[%s201 + $0x248] sm:$0xff] %v332
                %v334 = vld [vmem:[%s200 + $0x46c] sm:$0xff]
                %335 = vst [vmem:[%s201 + $0x250] sm:$0xff] %v334
                %v336 = vld [vmem:[%s200 + $0x474] sm:$0xff]
                %337 = vst [vmem:[%s201 + $0x258] sm:$0xff] %v336
                %v338 = vld [vmem:[%s200 + $0x480] sm:$0xff]
                %339 = vst [vmem:[%s201 + $0x264] sm:$0xff] %v338
                %v340 = vld [vmem:[%s200 + $0x488] sm:$0xff]
                %341 = vst [vmem:[%s201 + $0x26c] sm:$0xff] %v340
                %v342 = vld [vmem:[%s200 + $0x490] sm:$0xff]
                %343 = vst [vmem:[%s201 + $0x274] sm:$0xff] %v342
                %v344 = vld [vmem:[%s200 + $0x498] sm:$0xff]
                %345 = vst [vmem:[%s201 + $0x27c] sm:$0xff] %v344
                %v346 = vld [vmem:[%s200 + $0x4a4] sm:$0xff]
                %347 = vst [vmem:[%s201 + $0x288] sm:$0xff] %v346
                %v348 = vld [vmem:[%s200 + $0x4ac] sm:$0xff]
                %349 = vst [vmem:[%s201 + $0x290] sm:$0xff] %v348
                %v350 = vld [vmem:[%s200 + $0x4b4] sm:$0xff]
                %351 = vst [vmem:[%s201 + $0x298] sm:$0xff] %v350
                %v352 = vld [vmem:[%s200 + $0x4bc] sm:$0xff]
                %353 = vst [vmem:[%s201 + $0x2a0] sm:$0xff] %v352
                %v354 = vld [vmem:[%s200 + $0x4c8] sm:$0xff]
                %355 = vst [vmem:[%s201 + $0x2ac] sm:$0xff] %v354
                %v356 = vld [vmem:[%s200 + $0x4d0] sm:$0xff]
                %357 = vst [vmem:[%s201 + $0x2b4] sm:$0xff] %v356
                %v358 = vld [vmem:[%s200 + $0x4d8] sm:$0xff]
                %359 = vst [vmem:[%s201 + $0x2bc] sm:$0xff] %v358
                %v360 = vld [vmem:[%s200 + $0x4e0] sm:$0xff]
                %361 = vst [vmem:[%s201 + $0x2c4] sm:$0xff] %v360
              $region49: #{gtsrb_forward.5} parent=43 // loop_footer
                %s199 = sadd.s32 1, %s195
              $region50: #{gtsrb_forward.5} parent=43 // loop_footer_branch
                %194 = sbr.rel target = $region46
              $region51: #{gtsrb_forward.5} parent=43 // loop_exit
                _
              loop: start=0, step=1, limit=1
              $region52: #{gtsrb_forward.5} parent=43 // loop_pre_header
                _
              $region53: #{gtsrb_forward.5} parent=43 // loop_header
                %s364 = sphi 0, %s368
                %p365 = scmp.ge.s32.totalorder %s364, 1
                %s369 = sphi %s192, %s192
                %s370 = sphi %s193, %s193
              $region54: #{gtsrb_forward.5} parent=43 // loop_header_branch
                %367 = sbr.rel (%p365) target = $region58
              $region55: #{gtsrb_forward.5} parent=43 // loop_body
                %v371 = vld [vmem:[%s369] sm:$0xf]
                %372 = vst [vmem:[%s370] sm:$0xf] %v371
                %v373 = vld [vmem:[%s369 + $0x24] sm:$0xf]
                %374 = vst [vmem:[%s370 + $0x24] sm:$0xf] %v373
                %v375 = vld [vmem:[%s369 + $0x48] sm:$0xf]
                %376 = vst [vmem:[%s370 + $0x48] sm:$0xf] %v375
                %v377 = vld [vmem:[%s369 + $0x6c] sm:$0xf]
                %378 = vst [vmem:[%s370 + $0x6c] sm:$0xf] %v377
                %v379 = vld [vmem:[%s369 + $0x90] sm:$0xf]
                %380 = vst [vmem:[%s370 + $0x90] sm:$0xf] %v379
                %v381 = vld [vmem:[%s369 + $0x168] sm:$0xf]
                %382 = vst [vmem:[%s370 + $0xb4] sm:$0xf] %v381
                %v383 = vld [vmem:[%s369 + $0x18c] sm:$0xf]
                %384 = vst [vmem:[%s370 + $0xd8] sm:$0xf] %v383
                %v385 = vld [vmem:[%s369 + $0x1b0] sm:$0xf]
                %386 = vst [vmem:[%s370 + $0xfc] sm:$0xf] %v385
                %v387 = vld [vmem:[%s369 + $0x1d4] sm:$0xf]
                %388 = vst [vmem:[%s370 + $0x120] sm:$0xf] %v387
                %v389 = vld [vmem:[%s369 + $0x1f8] sm:$0xf]
                %390 = vst [vmem:[%s370 + $0x144] sm:$0xf] %v389
                %v391 = vld [vmem:[%s369 + $0x2d0] sm:$0xf]
                %392 = vst [vmem:[%s370 + $0x168] sm:$0xf] %v391
                %v393 = vld [vmem:[%s369 + $0x2f4] sm:$0xf]
                %394 = vst [vmem:[%s370 + $0x18c] sm:$0xf] %v393
                %v395 = vld [vmem:[%s369 + $0x318] sm:$0xf]
                %396 = vst [vmem:[%s370 + $0x1b0] sm:$0xf] %v395
                %v397 = vld [vmem:[%s369 + $0x33c] sm:$0xf]
                %398 = vst [vmem:[%s370 + $0x1d4] sm:$0xf] %v397
                %v399 = vld [vmem:[%s369 + $0x360] sm:$0xf]
                %400 = vst [vmem:[%s370 + $0x1f8] sm:$0xf] %v399
                %v401 = vld [vmem:[%s369 + $0x438] sm:$0xf]
                %402 = vst [vmem:[%s370 + $0x21c] sm:$0xf] %v401
                %v403 = vld [vmem:[%s369 + $0x45c] sm:$0xf]
                %404 = vst [vmem:[%s370 + $0x240] sm:$0xf] %v403
                %v405 = vld [vmem:[%s369 + $0x480] sm:$0xf]
                %406 = vst [vmem:[%s370 + $0x264] sm:$0xf] %v405
                %v407 = vld [vmem:[%s369 + $0x4a4] sm:$0xf]
                %408 = vst [vmem:[%s370 + $0x288] sm:$0xf] %v407
                %v409 = vld [vmem:[%s369 + $0x4c8] sm:$0xf]
                %410 = vst [vmem:[%s370 + $0x2ac] sm:$0xf] %v409
              $region56: #{gtsrb_forward.5} parent=43 // loop_footer
                %s368 = sadd.s32 1, %s364
              $region57: #{gtsrb_forward.5} parent=43 // loop_footer_branch
                %363 = sbr.rel target = $region53
              $region58: #{gtsrb_forward.5} parent=43 // loop_exit
                _
            $region44: #{gtsrb_forward.5} parent=39 // pred_fallthru
              _
          $region40: #{gtsrb_forward.5} parent=35 // pred_fallthru
            _
          %411 = vnop
        $region36: #{gtsrb_forward.5} parent=31 // pred_fallthru
          _
      $region32: #{gtsrb_forward.5} parent=5 // pred_fallthru
        _
      %p412 = scmp.le.s32.totalorder 1, %s11
      %p413 = scmp.lt.s32.totalorder %s11, 3
      %p414 = pnand %p412, %p413
      %p415 = pneg %p414
      // Predicated region
      $region59: #{gtsrb_forward.5} parent=5 // pred_check
        _
      $region60: #{gtsrb_forward.5} parent=5 // pred_check_branch
        %417 = sbr.rel (%p414) target = $region62
      $region61: #{gtsrb_forward.5} parent=5 // pred_region
        %s418 = ssub.s32 %s11, 1
        %s419 = sand.u32 %s24, 1
        %s420 = sand.u32 %s24, 1
        %s421 = smul.addr %s420, 720
        %s422 = scalar_lea.vmem [#allocation2], %s421
        // Predicated region
        $region63: #{gtsrb_forward.5} parent=61 // pred_check
          %p423 = pneg %p37
        $region64: #{gtsrb_forward.5} parent=61 // pred_check_branch
          %425 = sbr.rel (%p423) target = $region66
        $region65: #{gtsrb_forward.5} parent=61 // pred_region
          _
        $region66: #{gtsrb_forward.5} parent=61 // pred_fallthru
          _
        %s426 = sand.u32 %s24, 1
        %s427 = sand.u32 %s24, 1
        %s428 = smul.addr %s427, 720
        %s429 = scalar_lea.vmem [#allocation2], %s428
        %p430 = pneg %p37
        %p431 = pneg %p34
        %p432 = pneg %p58
        %p433 = pneg %p55
        %p434 = pneg %p79
        %p435 = pneg %p76
        %p436 = pneg %p100
        %p437 = pneg %p97
        %p438 = pneg %p121
        %p439 = pneg %p118
        %p440 = pneg %p147
        %p441 = pneg %p144
        %p442 = scmp.lt.s32.totalorder %s16, 1
        %s443 = scalar_select %p442, %s16, 1
        %s444 = smul.addr %s443, 10
        %s445 = smul.addr %s444, 4
        %s446 = scalar_lea.vmem %s5, %s445
        %p447 = scmp.lt.s32.totalorder %s16, 1
        %s448 = scalar_select %p447, %s16, 1
        %s449 = smul.addr %s448, 10
        %s450 = smul.addr %s449, 4
        %s451 = scalar_lea.vmem %s5, %s450
        %v453 = vld [vmem:[%s1] sm:$0xff]
        %v454 = vld [vmem:[%s1 + $0x8] sm:$0xff]
        %v455 = vld [vmem:[%s1 + $0x10] sm:$0xff]
        %v456 = vld [vmem:[%s1 + $0x18] sm:$0xff]
        %v457 = vld [vmem:[%s1 + $0x20] sm:$0xff]
        %v458 = vld [vmem:[%s1 + $0x28] sm:$0xff]
        %v459 = vld [vmem:[%s1 + $0x30] sm:$0xff]
        %v460 = vld [vmem:[%s1 + $0x38] sm:$0xff]
        %v461 = vld [vmem:[%s1 + $0x40] sm:$0xff]
        %v462 = vld [vmem:[%s1 + $0x48] sm:$0xff]
        %v463 = vld [vmem:[%s1 + $0x50] sm:$0xff]
        %v464 = vld [vmem:[%s1 + $0x58] sm:$0xff]
        %v465 = vld [vmem:[%s1 + $0x60] sm:$0xff]
        %v466 = vld [vmem:[%s1 + $0x68] sm:$0xff]
        %v467 = vld [vmem:[%s1 + $0x70] sm:$0xff]
        %v468 = vld [vmem:[%s1 + $0x78] sm:$0xff]
        %v469 = vld [vmem:[%s1 + $0x80] sm:$0xff]
        %v470 = vld [vmem:[%s1 + $0x88] sm:$0xff]
        %v471 = vld [vmem:[%s1 + $0x90] sm:$0xff]
        %v472 = vld [vmem:[%s1 + $0x98] sm:$0xff]
        %v473 = vld [vmem:[%s1 + $0xa0] sm:$0xff]
        %v474 = vld [vmem:[%s1 + $0xa8] sm:$0xff]
        %v475 = vld [vmem:[%s1 + $0xb0] sm:$0xff]
        %v476 = vld [vmem:[%s1 + $0xb8] sm:$0xff]
        %v477 = vld [vmem:[%s1 + $0xc0] sm:$0xff]
        %v478 = vld [vmem:[%s1 + $0xc8] sm:$0xff]
        %v479 = vld [vmem:[%s1 + $0xd0] sm:$0xff]
        %v480 = vld [vmem:[%s1 + $0xd8] sm:$0xff]
        %v481 = vld [vmem:[%s1 + $0xe0] sm:$0xff]
        %v482 = vld [vmem:[%s1 + $0xe8] sm:$0xff]
        %v483 = vld [vmem:[%s1 + $0xf0] sm:$0xff]
        %v484 = vld [vmem:[%s1 + $0xf8] sm:$0xff]
        %v485 = vld [vmem:[%s1 + $0x100] sm:$0xff]
        %v486 = vld [vmem:[%s1 + $0x108] sm:$0xff]
        %v487 = vld [vmem:[%s1 + $0x110] sm:$0xff]
        %v488 = vld [vmem:[%s1 + $0x118] sm:$0xff]
        %v489 = vld [vmem:[%s1 + $0x120] sm:$0xff]
        %v490 = vld [vmem:[%s1 + $0x128] sm:$0xff]
        %v491 = vld [vmem:[%s1 + $0x130] sm:$0xff]
        %v492 = vld [vmem:[%s1 + $0x138] sm:$0xff]
        %v493 = vld [vmem:[%s1 + $0x140] sm:$0xff]
        %v494 = vld [vmem:[%s1 + $0x148] sm:$0xff]
        %v495 = vld [vmem:[%s1 + $0x150] sm:$0xff]
        %v496 = vld [vmem:[%s1 + $0x158] sm:$0xff]
        %v497 = vld [vmem:[%s1 + $0x160] sm:$0xff]
        %v498 = vld [vmem:[%s1 + $0x168] sm:$0xff]
        %v499 = vld [vmem:[%s1 + $0x170] sm:$0xff]
        %v500 = vld [vmem:[%s1 + $0x178] sm:$0xff]
        %v501 = vld [vmem:[%s1 + $0x180] sm:$0xff]
        %v502 = vld [vmem:[%s1 + $0x188] sm:$0xff]
        %v503 = vld [vmem:[%s1 + $0x190] sm:$0xff]
        %v504 = vld [vmem:[%s1 + $0x198] sm:$0xff]
        %v505 = vld [vmem:[%s1 + $0x1a0] sm:$0xff]
        %v506 = vld [vmem:[%s1 + $0x1a8] sm:$0xff]
        %v507 = vld [vmem:[%s1 + $0x1b0] sm:$0xff]
        %v508 = vld [vmem:[%s1 + $0x1b8] sm:$0xff]
        %v509 = vld [vmem:[%s1 + $0x1c0] sm:$0xff]
        %v510 = vld [vmem:[%s1 + $0x1c8] sm:$0xff]
        %v511 = vld [vmem:[%s1 + $0x1d0] sm:$0xff]
        %v512 = vld [vmem:[%s1 + $0x1d8] sm:$0xff]
        %v513 = vld [vmem:[%s1 + $0x1e0] sm:$0xff]
        %v514 = vld [vmem:[%s1 + $0x1e8] sm:$0xff]
        %v515 = vld [vmem:[%s1 + $0x1f0] sm:$0xff]
        %v516 = vld [vmem:[%s1 + $0x1f8] sm:$0xff]
        %v517 = vld [vmem:[%s1 + $0x200] sm:$0xff]
        %v518 = vld [vmem:[%s1 + $0x208] sm:$0xff]
        %v519 = vld [vmem:[%s1 + $0x210] sm:$0xff]
        %v520 = vld [vmem:[%s1 + $0x218] sm:$0xff]
        %v521 = vld [vmem:[%s1 + $0x220] sm:$0xff]
        %v522 = vld [vmem:[%s1 + $0x228] sm:$0xff]
        %v523 = vld [vmem:[%s1 + $0x230] sm:$0xff]
        %v524 = vld [vmem:[%s1 + $0x238] sm:$0xff]
        %v525 = vld [vmem:[%s1 + $0x240] sm:$0xff]
        %v526 = vld [vmem:[%s1 + $0x248] sm:$0xff]
        %v527 = vld [vmem:[%s1 + $0x250] sm:$0xff]
        %v528 = vld [vmem:[%s1 + $0x258] sm:$0xff]
        %v529 = vld [vmem:[%s1 + $0x260] sm:$0xff]
        %v530 = vld [vmem:[%s1 + $0x268] sm:$0xff]
        %v531 = vld [vmem:[%s1 + $0x270] sm:$0xff]
        %v532 = vld [vmem:[%s1 + $0x278] sm:$0xff]
        %v533 = vld [vmem:[%s1 + $0x280] sm:$0xff]
        %v534 = vld [vmem:[%s1 + $0x288] sm:$0xff]
        %v535 = vld [vmem:[%s1 + $0x290] sm:$0xff]
        %v536 = vld [vmem:[%s1 + $0x298] sm:$0xff]
        %v537 = vld [vmem:[%s1 + $0x2a0] sm:$0xff]
        %v538 = vld [vmem:[%s1 + $0x2a8] sm:$0xff]
        %v539 = vld [vmem:[%s1 + $0x2b0] sm:$0xff]
        %v540 = vld [vmem:[%s1 + $0x2b8] sm:$0xff]
        %v541 = vld [vmem:[%s1 + $0x2c0] sm:$0xff]
        %v542 = vld [vmem:[%s1 + $0x2c8] sm:$0xff]
        %v543 = vld [vmem:[%s1 + $0x2d0] sm:$0xff]
        %v544 = vld [vmem:[%s1 + $0x2d8] sm:$0xff]
        %v545 = vld [vmem:[%s1 + $0x2e0] sm:$0xff]
        %v546 = vld [vmem:[%s1 + $0x2e8] sm:$0xff]
        %v547 = vld [vmem:[%s1 + $0x2f0] sm:$0xff]
        %v548 = vld [vmem:[%s1 + $0x2f8] sm:$0xff]
        %v549 = vld [vmem:[%s1 + $0x300] sm:$0xff]
        %v550 = vld [vmem:[%s1 + $0x308] sm:$0xff]
        %v551 = vld [vmem:[%s1 + $0x310] sm:$0xff]
        %v552 = vld [vmem:[%s1 + $0x318] sm:$0xff]
        %v553 = vld [vmem:[%s1 + $0x320] sm:$0xff]
        %v554 = vld [vmem:[%s1 + $0x328] sm:$0xff]
        %v555 = vld [vmem:[%s1 + $0x330] sm:$0xff]
        %v556 = vld [vmem:[%s1 + $0x338] sm:$0xff]
        %v557 = vld [vmem:[%s1 + $0x340] sm:$0xff]
        %v558 = vld [vmem:[%s1 + $0x348] sm:$0xff]
        %v559 = vld [vmem:[%s1 + $0x350] sm:$0xff]
        %v560 = vld [vmem:[%s1 + $0x358] sm:$0xff]
        %v561 = vld [vmem:[%s1 + $0x360] sm:$0xff]
        %v562 = vld [vmem:[%s1 + $0x368] sm:$0xff]
        %v563 = vld [vmem:[%s1 + $0x370] sm:$0xff]
        %v564 = vld [vmem:[%s1 + $0x378] sm:$0xff]
        %v565 = vld [vmem:[%s1 + $0x380] sm:$0xff]
        %v566 = vld [vmem:[%s1 + $0x388] sm:$0xff]
        %v567 = vld [vmem:[%s1 + $0x390] sm:$0xff]
        %v568 = vld [vmem:[%s1 + $0x398] sm:$0xff]
        %v569 = vld [vmem:[%s1 + $0x3a0] sm:$0xff]
        %v570 = vld [vmem:[%s1 + $0x3a8] sm:$0xff]
        %v571 = vld [vmem:[%s1 + $0x3b0] sm:$0xff]
        %v572 = vld [vmem:[%s1 + $0x3b8] sm:$0xff]
        %v573 = vld [vmem:[%s1 + $0x3c0] sm:$0xff]
        %v574 = vld [vmem:[%s1 + $0x3c8] sm:$0xff]
        %v575 = vld [vmem:[%s1 + $0x3d0] sm:$0xff]
        %v576 = vld [vmem:[%s1 + $0x3d8] sm:$0xff]
        %v577 = vld [vmem:[%s1 + $0x3e0] sm:$0xff]
        %v578 = vld [vmem:[%s1 + $0x3e8] sm:$0xff]
        %v579 = vld [vmem:[%s1 + $0x3f0] sm:$0xff]
        %v580 = vld [vmem:[%s1 + $0x3f8] sm:$0xff]
        %v581 = vld [vmem:[%s1 + $0x400] sm:$0xff]
        %v582 = vld [vmem:[%s1 + $0x408] sm:$0xff]
        %v583 = vld [vmem:[%s1 + $0x410] sm:$0xff]
        %v584 = vld [vmem:[%s1 + $0x418] sm:$0xff]
        %v585 = vld [vmem:[%s1 + $0x420] sm:$0xff]
        %v586 = vld [vmem:[%s1 + $0x428] sm:$0xff]
        %v587 = vld [vmem:[%s1 + $0x430] sm:$0xff]
        %v588 = vld [vmem:[%s1 + $0x438] sm:$0xff]
        %v589 = vld [vmem:[%s1 + $0x440] sm:$0xff]
        %v590 = vld [vmem:[%s1 + $0x448] sm:$0xff]
        %v591 = vld [vmem:[%s1 + $0x450] sm:$0xff]
        %v592 = vld [vmem:[%s1 + $0x458] sm:$0xff]
        %v593 = vld [vmem:[%s1 + $0x460] sm:$0xff]
        %v594 = vld [vmem:[%s1 + $0x468] sm:$0xff]
        %v595 = vld [vmem:[%s1 + $0x470] sm:$0xff]
        %v596 = vld [vmem:[%s1 + $0x478] sm:$0xff]
        %v597 = vld [vmem:[%s422] sm:$0xff]
        %v598 = vld [vmem:[%s422 + $0x8] sm:$0xff]
        %v599 = vld [vmem:[%s422 + $0x10] sm:$0xff]
        %v600 = vld [vmem:[%s422 + $0x18] sm:$0xff]
        %v601 = vld [vmem:[%s422 + $0x20] sm:$0xf]
        %v602 = vld [vmem:[%s422 + $0x24] sm:$0xff]
        %v603 = vld [vmem:[%s422 + $0x2c] sm:$0xff]
        %v604 = vld [vmem:[%s422 + $0x34] sm:$0xff]
        %v605 = vld [vmem:[%s422 + $0x3c] sm:$0xff]
        %v606 = vld [vmem:[%s422 + $0x44] sm:$0xf]
        %v607 = vld [vmem:[%s422 + $0x48] sm:$0xff]
        %v608 = vld [vmem:[%s422 + $0x50] sm:$0xff]
        %v609 = vld [vmem:[%s422 + $0x58] sm:$0xff]
        %v610 = vld [vmem:[%s422 + $0x60] sm:$0xff]
        %v611 = vld [vmem:[%s422 + $0x68] sm:$0xf]
        %v612 = vld [vmem:[%s422 + $0x6c] sm:$0xff]
        %v613 = vld [vmem:[%s422 + $0x74] sm:$0xff]
        %v614 = vld [vmem:[%s422 + $0x7c] sm:$0xff]
        %v615 = vld [vmem:[%s422 + $0x84] sm:$0xff]
        %v616 = vld [vmem:[%s422 + $0x8c] sm:$0xf]
        %v617 = vld [vmem:[%s422 + $0x90] sm:$0x33]
        %v618 = vld [vmem:[%s422 + $0x98] sm:$0x33]
        %v619 = vld [vmem:[%s422 + $0xa0] sm:$0x33]
        %v620 = vld [vmem:[%s422 + $0xa8] sm:$0x33]
        %v621 = vld [vmem:[%s422 + $0xb0] sm:$0x3]
        %v647 = vunpack.c.l.b16 %v597
        %v648 = vunpack.c.h.b16 %v597
        %v649 = vunpack.c.l.b16 %v598
        %v650 = vunpack.c.h.b16 %v598
        %v651 = vunpack.c.l.b16 %v599
        %v652 = vunpack.c.h.b16 %v599
        %v653 = vunpack.c.l.b16 %v600
        %v654 = vunpack.c.h.b16 %v600
        %v655 = vunpack.c.l.b16 %v601
        %v656 = vunpack.c.l.b16 %v602
        %v657 = vunpack.c.h.b16 %v602
        %v658 = vunpack.c.l.b16 %v603
        %v659 = vunpack.c.h.b16 %v603
        %v660 = vunpack.c.l.b16 %v604
        %v661 = vunpack.c.h.b16 %v604
        %v662 = vunpack.c.l.b16 %v605
        %v663 = vunpack.c.h.b16 %v605
        %v664 = vunpack.c.l.b16 %v606
        %v665 = vunpack.c.l.b16 %v607
        %v666 = vunpack.c.h.b16 %v607
        %v667 = vunpack.c.l.b16 %v608
        %v668 = vunpack.c.h.b16 %v608
        %v669 = vunpack.c.l.b16 %v609
        %v670 = vunpack.c.h.b16 %v609
        %v671 = vunpack.c.l.b16 %v610
        %v672 = vunpack.c.h.b16 %v610
        %v673 = vunpack.c.l.b16 %v611
        %v674 = vunpack.c.l.b16 %v612
        %v675 = vunpack.c.h.b16 %v612
        %v676 = vunpack.c.l.b16 %v613
        %v677 = vunpack.c.h.b16 %v613
        %v678 = vunpack.c.l.b16 %v614
        %v679 = vunpack.c.h.b16 %v614
        %v680 = vunpack.c.l.b16 %v615
        %v681 = vunpack.c.h.b16 %v615
        %v682 = vunpack.c.l.b16 %v616
        %v683 = vunpack.c.l.b16 %v617
        %v684 = vunpack.c.h.b16 %v617
        %v685 = vunpack.c.l.b16 %v618
        %v686 = vunpack.c.h.b16 %v618
        %v687 = vunpack.c.l.b16 %v619
        %v688 = vunpack.c.h.b16 %v619
        %v689 = vunpack.c.l.b16 %v620
        %v690 = vunpack.c.h.b16 %v620
        %v691 = vunpack.c.l.b16 %v621
        %v692 = vpack.c.b16 %v656, %v647
        %v693 = vpack.c.b16 %v657, %v648
        %v694 = vpack.c.b16 %v658, %v649
        %v695 = vpack.c.b16 %v659, %v650
        %v696 = vpack.c.b16 %v660, %v651
        %v697 = vpack.c.b16 %v661, %v652
        %v698 = vpack.c.b16 %v662, %v653
        %v699 = vpack.c.b16 %v663, %v654
        %v700 = vpack.c.b16 %v664, %v655
        %v701 = vpack.c.b16 %v674, %v665
        %v702 = vpack.c.b16 %v675, %v666
        %v703 = vpack.c.b16 %v676, %v667
        %v704 = vpack.c.b16 %v677, %v668
        %v705 = vpack.c.b16 %v678, %v669
        %v706 = vpack.c.b16 %v679, %v670
        %v707 = vpack.c.b16 %v680, %v671
        %v708 = vpack.c.b16 %v681, %v672
        %v709 = vpack.c.b16 %v682, %v673
        %v710 = vpack.c.b16 %v683, %v683
        %v711 = vpack.c.b16 %v684, %v684
        %v712 = vpack.c.b16 %v685, %v685
        %v713 = vpack.c.b16 %v686, %v686
        %v714 = vpack.c.b16 %v687, %v687
        %v715 = vpack.c.b16 %v688, %v688
        %v716 = vpack.c.b16 %v689, %v689
        %v717 = vpack.c.b16 %v690, %v690
        %v718 = vpack.c.b16 %v691, %v691
        %v890 = vunpack.c.l.b16 %v453
        %v891 = vunpack.c.h.b16 %v453
        %v892 = vunpack.c.l.b16 %v454
        %v893 = vunpack.c.h.b16 %v454
        %v894 = vunpack.c.l.b16 %v455
        %v895 = vunpack.c.h.b16 %v455
        %v896 = vunpack.c.l.b16 %v456
        %v897 = vunpack.c.h.b16 %v456
        %v898 = vunpack.c.l.b16 %v457
        %v899 = vunpack.c.h.b16 %v457
        %v900 = vunpack.c.l.b16 %v458
        %v901 = vunpack.c.h.b16 %v458
        %v902 = vunpack.c.l.b16 %v459
        %v903 = vunpack.c.h.b16 %v459
        %v904 = vunpack.c.l.b16 %v460
        %v905 = vunpack.c.h.b16 %v460
        %v906 = vunpack.c.l.b16 %v461
        %v907 = vunpack.c.h.b16 %v461
        %v908 = vunpack.c.l.b16 %v462
        %v909 = vunpack.c.h.b16 %v462
        %v910 = vunpack.c.l.b16 %v463
        %v911 = vunpack.c.h.b16 %v463
        %v912 = vunpack.c.l.b16 %v464
        %v913 = vunpack.c.h.b16 %v464
        %v914 = vunpack.c.l.b16 %v465
        %v915 = vunpack.c.h.b16 %v465
        %v916 = vunpack.c.l.b16 %v466
        %v917 = vunpack.c.h.b16 %v466
        %v918 = vunpack.c.l.b16 %v467
        %v919 = vunpack.c.h.b16 %v467
        %v920 = vunpack.c.l.b16 %v468
        %v921 = vunpack.c.h.b16 %v468
        %v922 = vunpack.c.l.b16 %v469
        %v923 = vunpack.c.h.b16 %v469
        %v924 = vunpack.c.l.b16 %v470
        %v925 = vunpack.c.h.b16 %v470
        %v926 = vunpack.c.l.b16 %v471
        %v927 = vunpack.c.h.b16 %v471
        %v928 = vunpack.c.l.b16 %v472
        %v929 = vunpack.c.h.b16 %v472
        %v930 = vunpack.c.l.b16 %v473
        %v931 = vunpack.c.h.b16 %v473
        %v932 = vunpack.c.l.b16 %v474
        %v933 = vunpack.c.h.b16 %v474
        %v934 = vunpack.c.l.b16 %v475
        %v935 = vunpack.c.h.b16 %v475
        %v936 = vunpack.c.l.b16 %v476
        %v937 = vunpack.c.h.b16 %v476
        %v938 = vunpack.c.l.b16 %v477
        %v939 = vunpack.c.h.b16 %v477
        %v940 = vunpack.c.l.b16 %v478
        %v941 = vunpack.c.h.b16 %v478
        %v942 = vunpack.c.l.b16 %v479
        %v943 = vunpack.c.h.b16 %v479
        %v944 = vunpack.c.l.b16 %v480
        %v945 = vunpack.c.h.b16 %v480
        %v946 = vunpack.c.l.b16 %v481
        %v947 = vunpack.c.h.b16 %v481
        %v948 = vunpack.c.l.b16 %v482
        %v949 = vunpack.c.h.b16 %v482
        %v950 = vunpack.c.l.b16 %v483
        %v951 = vunpack.c.h.b16 %v483
        %v952 = vunpack.c.l.b16 %v484
        %v953 = vunpack.c.h.b16 %v484
        %v954 = vunpack.c.l.b16 %v485
        %v955 = vunpack.c.h.b16 %v485
        %v956 = vunpack.c.l.b16 %v486
        %v957 = vunpack.c.h.b16 %v486
        %v958 = vunpack.c.l.b16 %v487
        %v959 = vunpack.c.h.b16 %v487
        %v960 = vunpack.c.l.b16 %v488
        %v961 = vunpack.c.h.b16 %v488
        %v962 = vunpack.c.l.b16 %v489
        %v963 = vunpack.c.h.b16 %v489
        %v964 = vunpack.c.l.b16 %v490
        %v965 = vunpack.c.h.b16 %v490
        %v966 = vunpack.c.l.b16 %v491
        %v967 = vunpack.c.h.b16 %v491
        %v968 = vunpack.c.l.b16 %v492
        %v969 = vunpack.c.h.b16 %v492
        %v970 = vunpack.c.l.b16 %v493
        %v971 = vunpack.c.h.b16 %v493
        %v972 = vunpack.c.l.b16 %v494
        %v973 = vunpack.c.h.b16 %v494
        %v974 = vunpack.c.l.b16 %v495
        %v975 = vunpack.c.h.b16 %v495
        %v976 = vunpack.c.l.b16 %v496
        %v977 = vunpack.c.h.b16 %v496
        %v978 = vunpack.c.l.b16 %v497
        %v979 = vunpack.c.h.b16 %v497
        %v980 = vunpack.c.l.b16 %v498
        %v981 = vunpack.c.h.b16 %v498
        %v982 = vunpack.c.l.b16 %v499
        %v983 = vunpack.c.h.b16 %v499
        %v984 = vunpack.c.l.b16 %v500
        %v985 = vunpack.c.h.b16 %v500
        %v986 = vunpack.c.l.b16 %v501
        %v987 = vunpack.c.h.b16 %v501
        %v988 = vunpack.c.l.b16 %v502
        %v989 = vunpack.c.h.b16 %v502
        %v990 = vunpack.c.l.b16 %v503
        %v991 = vunpack.c.h.b16 %v503
        %v992 = vunpack.c.l.b16 %v504
        %v993 = vunpack.c.h.b16 %v504
        %v994 = vunpack.c.l.b16 %v505
        %v995 = vunpack.c.h.b16 %v505
        %v996 = vunpack.c.l.b16 %v506
        %v997 = vunpack.c.h.b16 %v506
        %v998 = vunpack.c.l.b16 %v507
        %v999 = vunpack.c.h.b16 %v507
        %v1000 = vunpack.c.l.b16 %v508
        %v1001 = vunpack.c.h.b16 %v508
        %v1002 = vunpack.c.l.b16 %v509
        %v1003 = vunpack.c.h.b16 %v509
        %v1004 = vunpack.c.l.b16 %v510
        %v1005 = vunpack.c.h.b16 %v510
        %v1006 = vunpack.c.l.b16 %v511
        %v1007 = vunpack.c.h.b16 %v511
        %v1008 = vunpack.c.l.b16 %v512
        %v1009 = vunpack.c.h.b16 %v512
        %v1010 = vunpack.c.l.b16 %v513
        %v1011 = vunpack.c.h.b16 %v513
        %v1012 = vunpack.c.l.b16 %v514
        %v1013 = vunpack.c.h.b16 %v514
        %v1014 = vunpack.c.l.b16 %v515
        %v1015 = vunpack.c.h.b16 %v515
        %v1016 = vunpack.c.l.b16 %v516
        %v1017 = vunpack.c.h.b16 %v516
        %v1018 = vunpack.c.l.b16 %v517
        %v1019 = vunpack.c.h.b16 %v517
        %v1020 = vunpack.c.l.b16 %v518
        %v1021 = vunpack.c.h.b16 %v518
        %v1022 = vunpack.c.l.b16 %v519
        %v1023 = vunpack.c.h.b16 %v519
        %v1024 = vunpack.c.l.b16 %v520
        %v1025 = vunpack.c.h.b16 %v520
        %v1026 = vunpack.c.l.b16 %v521
        %v1027 = vunpack.c.h.b16 %v521
        %v1028 = vunpack.c.l.b16 %v522
        %v1029 = vunpack.c.h.b16 %v522
        %v1030 = vunpack.c.l.b16 %v523
        %v1031 = vunpack.c.h.b16 %v523
        %v1032 = vunpack.c.l.b16 %v524
        %v1033 = vunpack.c.h.b16 %v524
        %v1034 = vunpack.c.l.b16 %v525
        %v1035 = vunpack.c.h.b16 %v525
        %v1036 = vunpack.c.l.b16 %v526
        %v1037 = vunpack.c.h.b16 %v526
        %v1038 = vunpack.c.l.b16 %v527
        %v1039 = vunpack.c.h.b16 %v527
        %v1040 = vunpack.c.l.b16 %v528
        %v1041 = vunpack.c.h.b16 %v528
        %v1042 = vunpack.c.l.b16 %v529
        %v1043 = vunpack.c.h.b16 %v529
        %v1044 = vunpack.c.l.b16 %v530
        %v1045 = vunpack.c.h.b16 %v530
        %v1046 = vunpack.c.l.b16 %v531
        %v1047 = vunpack.c.h.b16 %v531
        %v1048 = vunpack.c.l.b16 %v532
        %v1049 = vunpack.c.h.b16 %v532
        %v1050 = vunpack.c.l.b16 %v533
        %v1051 = vunpack.c.h.b16 %v533
        %v1052 = vunpack.c.l.b16 %v534
        %v1053 = vunpack.c.h.b16 %v534
        %v1054 = vunpack.c.l.b16 %v535
        %v1055 = vunpack.c.h.b16 %v535
        %v1056 = vunpack.c.l.b16 %v536
        %v1057 = vunpack.c.h.b16 %v536
        %v1058 = vunpack.c.l.b16 %v537
        %v1059 = vunpack.c.h.b16 %v537
        %v1060 = vunpack.c.l.b16 %v538
        %v1061 = vunpack.c.h.b16 %v538
        %v1062 = vunpack.c.l.b16 %v539
        %v1063 = vunpack.c.h.b16 %v539
        %v1064 = vunpack.c.l.b16 %v540
        %v1065 = vunpack.c.h.b16 %v540
        %v1066 = vunpack.c.l.b16 %v541
        %v1067 = vunpack.c.h.b16 %v541
        %v1068 = vunpack.c.l.b16 %v542
        %v1069 = vunpack.c.h.b16 %v542
        %v1070 = vunpack.c.l.b16 %v543
        %v1071 = vunpack.c.h.b16 %v543
        %v1072 = vunpack.c.l.b16 %v544
        %v1073 = vunpack.c.h.b16 %v544
        %v1074 = vunpack.c.l.b16 %v545
        %v1075 = vunpack.c.h.b16 %v545
        %v1076 = vunpack.c.l.b16 %v546
        %v1077 = vunpack.c.h.b16 %v546
        %v1078 = vunpack.c.l.b16 %v547
        %v1079 = vunpack.c.h.b16 %v547
        %v1080 = vunpack.c.l.b16 %v548
        %v1081 = vunpack.c.h.b16 %v548
        %v1082 = vunpack.c.l.b16 %v549
        %v1083 = vunpack.c.h.b16 %v549
        %v1084 = vunpack.c.l.b16 %v550
        %v1085 = vunpack.c.h.b16 %v550
        %v1086 = vunpack.c.l.b16 %v551
        %v1087 = vunpack.c.h.b16 %v551
        %v1088 = vunpack.c.l.b16 %v552
        %v1089 = vunpack.c.h.b16 %v552
        %v1090 = vunpack.c.l.b16 %v553
        %v1091 = vunpack.c.h.b16 %v553
        %v1092 = vunpack.c.l.b16 %v554
        %v1093 = vunpack.c.h.b16 %v554
        %v1094 = vunpack.c.l.b16 %v555
        %v1095 = vunpack.c.h.b16 %v555
        %v1096 = vunpack.c.l.b16 %v556
        %v1097 = vunpack.c.h.b16 %v556
        %v1098 = vunpack.c.l.b16 %v557
        %v1099 = vunpack.c.h.b16 %v557
        %v1100 = vunpack.c.l.b16 %v558
        %v1101 = vunpack.c.h.b16 %v558
        %v1102 = vunpack.c.l.b16 %v559
        %v1103 = vunpack.c.h.b16 %v559
        %v1104 = vunpack.c.l.b16 %v560
        %v1105 = vunpack.c.h.b16 %v560
        %v1106 = vunpack.c.l.b16 %v561
        %v1107 = vunpack.c.h.b16 %v561
        %v1108 = vunpack.c.l.b16 %v562
        %v1109 = vunpack.c.h.b16 %v562
        %v1110 = vunpack.c.l.b16 %v563
        %v1111 = vunpack.c.h.b16 %v563
        %v1112 = vunpack.c.l.b16 %v564
        %v1113 = vunpack.c.h.b16 %v564
        %v1114 = vunpack.c.l.b16 %v565
        %v1115 = vunpack.c.h.b16 %v565
        %v1116 = vunpack.c.l.b16 %v566
        %v1117 = vunpack.c.h.b16 %v566
        %v1118 = vunpack.c.l.b16 %v567
        %v1119 = vunpack.c.h.b16 %v567
        %v1120 = vunpack.c.l.b16 %v568
        %v1121 = vunpack.c.h.b16 %v568
        %v1122 = vunpack.c.l.b16 %v569
        %v1123 = vunpack.c.h.b16 %v569
        %v1124 = vunpack.c.l.b16 %v570
        %v1125 = vunpack.c.h.b16 %v570
        %v1126 = vunpack.c.l.b16 %v571
        %v1127 = vunpack.c.h.b16 %v571
        %v1128 = vunpack.c.l.b16 %v572
        %v1129 = vunpack.c.h.b16 %v572
        %v1130 = vunpack.c.l.b16 %v573
        %v1131 = vunpack.c.h.b16 %v573
        %v1132 = vunpack.c.l.b16 %v574
        %v1133 = vunpack.c.h.b16 %v574
        %v1134 = vunpack.c.l.b16 %v575
        %v1135 = vunpack.c.h.b16 %v575
        %v1136 = vunpack.c.l.b16 %v576
        %v1137 = vunpack.c.h.b16 %v576
        %v1138 = vunpack.c.l.b16 %v577
        %v1139 = vunpack.c.h.b16 %v577
        %v1140 = vunpack.c.l.b16 %v578
        %v1141 = vunpack.c.h.b16 %v578
        %v1142 = vunpack.c.l.b16 %v579
        %v1143 = vunpack.c.h.b16 %v579
        %v1144 = vunpack.c.l.b16 %v580
        %v1145 = vunpack.c.h.b16 %v580
        %v1146 = vunpack.c.l.b16 %v581
        %v1147 = vunpack.c.h.b16 %v581
        %v1148 = vunpack.c.l.b16 %v582
        %v1149 = vunpack.c.h.b16 %v582
        %v1150 = vunpack.c.l.b16 %v583
        %v1151 = vunpack.c.h.b16 %v583
        %v1152 = vunpack.c.l.b16 %v584
        %v1153 = vunpack.c.h.b16 %v584
        %v1154 = vunpack.c.l.b16 %v585
        %v1155 = vunpack.c.h.b16 %v585
        %v1156 = vunpack.c.l.b16 %v586
        %v1157 = vunpack.c.h.b16 %v586
        %v1158 = vunpack.c.l.b16 %v587
        %v1159 = vunpack.c.h.b16 %v587
        %v1160 = vunpack.c.l.b16 %v588
        %v1161 = vunpack.c.h.b16 %v588
        %v1162 = vunpack.c.l.b16 %v589
        %v1163 = vunpack.c.h.b16 %v589
        %v1164 = vunpack.c.l.b16 %v590
        %v1165 = vunpack.c.h.b16 %v590
        %v1166 = vunpack.c.l.b16 %v591
        %v1167 = vunpack.c.h.b16 %v591
        %v1168 = vunpack.c.l.b16 %v592
        %v1169 = vunpack.c.h.b16 %v592
        %v1170 = vunpack.c.l.b16 %v593
        %v1171 = vunpack.c.h.b16 %v593
        %v1172 = vunpack.c.l.b16 %v594
        %v1173 = vunpack.c.h.b16 %v594
        %v1174 = vunpack.c.l.b16 %v595
        %v1175 = vunpack.c.h.b16 %v595
        %v1176 = vunpack.c.l.b16 %v596
        %v1177 = vunpack.c.h.b16 %v596
        %v1178 = vpack.c.b16 %v892, %v890
        %v1179 = vpack.c.b16 %v893, %v891
        %v1180 = vpack.c.b16 %v896, %v894
        %v1181 = vpack.c.b16 %v897, %v895
        %v1182 = vpack.c.b16 %v900, %v898
        %v1183 = vpack.c.b16 %v901, %v899
        %v1184 = vpack.c.b16 %v904, %v902
        %v1185 = vpack.c.b16 %v905, %v903
        %v1186 = vpack.c.b16 %v908, %v906
        %v1187 = vpack.c.b16 %v909, %v907
        %v1188 = vpack.c.b16 %v912, %v910
        %v1189 = vpack.c.b16 %v913, %v911
        %v1190 = vpack.c.b16 %v916, %v914
        %v1191 = vpack.c.b16 %v917, %v915
        %v1192 = vpack.c.b16 %v920, %v918
        %v1193 = vpack.c.b16 %v921, %v919
        %v1194 = vpack.c.b16 %v924, %v922
        %v1195 = vpack.c.b16 %v925, %v923
        %v1196 = vpack.c.b16 %v928, %v926
        %v1197 = vpack.c.b16 %v929, %v927
        %v1198 = vpack.c.b16 %v932, %v930
        %v1199 = vpack.c.b16 %v933, %v931
        %v1200 = vpack.c.b16 %v936, %v934
        %v1201 = vpack.c.b16 %v937, %v935
        %v1202 = vpack.c.b16 %v940, %v938
        %v1203 = vpack.c.b16 %v941, %v939
        %v1204 = vpack.c.b16 %v944, %v942
        %v1205 = vpack.c.b16 %v945, %v943
        %v1206 = vpack.c.b16 %v948, %v946
        %v1207 = vpack.c.b16 %v949, %v947
        %v1208 = vpack.c.b16 %v952, %v950
        %v1209 = vpack.c.b16 %v953, %v951
        %v1210 = vpack.c.b16 %v956, %v954
        %v1211 = vpack.c.b16 %v957, %v955
        %v1212 = vpack.c.b16 %v960, %v958
        %v1213 = vpack.c.b16 %v961, %v959
        %v1214 = vpack.c.b16 %v964, %v962
        %v1215 = vpack.c.b16 %v965, %v963
        %v1216 = vpack.c.b16 %v968, %v966
        %v1217 = vpack.c.b16 %v969, %v967
        %v1218 = vpack.c.b16 %v972, %v970
        %v1219 = vpack.c.b16 %v973, %v971
        %v1220 = vpack.c.b16 %v976, %v974
        %v1221 = vpack.c.b16 %v977, %v975
        %v1222 = vpack.c.b16 %v980, %v978
        %v1223 = vpack.c.b16 %v981, %v979
        %v1224 = vpack.c.b16 %v984, %v982
        %v1225 = vpack.c.b16 %v985, %v983
        %v1226 = vpack.c.b16 %v988, %v986
        %v1227 = vpack.c.b16 %v989, %v987
        %v1228 = vpack.c.b16 %v992, %v990
        %v1229 = vpack.c.b16 %v993, %v991
        %v1230 = vpack.c.b16 %v996, %v994
        %v1231 = vpack.c.b16 %v997, %v995
        %v1232 = vpack.c.b16 %v1000, %v998
        %v1233 = vpack.c.b16 %v1001, %v999
        %v1234 = vpack.c.b16 %v1004, %v1002
        %v1235 = vpack.c.b16 %v1005, %v1003
        %v1236 = vpack.c.b16 %v1008, %v1006
        %v1237 = vpack.c.b16 %v1009, %v1007
        %v1238 = vpack.c.b16 %v1012, %v1010
        %v1239 = vpack.c.b16 %v1013, %v1011
        %v1240 = vpack.c.b16 %v1016, %v1014
        %v1241 = vpack.c.b16 %v1017, %v1015
        %v1242 = vpack.c.b16 %v1020, %v1018
        %v1243 = vpack.c.b16 %v1021, %v1019
        %v1244 = vpack.c.b16 %v1024, %v1022
        %v1245 = vpack.c.b16 %v1025, %v1023
        %v1246 = vpack.c.b16 %v1028, %v1026
        %v1247 = vpack.c.b16 %v1029, %v1027
        %v1248 = vpack.c.b16 %v1032, %v1030
        %v1249 = vpack.c.b16 %v1033, %v1031
        %v1250 = vpack.c.b16 %v1036, %v1034
        %v1251 = vpack.c.b16 %v1037, %v1035
        %v1252 = vpack.c.b16 %v1040, %v1038
        %v1253 = vpack.c.b16 %v1041, %v1039
        %v1254 = vpack.c.b16 %v1044, %v1042
        %v1255 = vpack.c.b16 %v1045, %v1043
        %v1256 = vpack.c.b16 %v1048, %v1046
        %v1257 = vpack.c.b16 %v1049, %v1047
        %v1258 = vpack.c.b16 %v1052, %v1050
        %v1259 = vpack.c.b16 %v1053, %v1051
        %v1260 = vpack.c.b16 %v1056, %v1054
        %v1261 = vpack.c.b16 %v1057, %v1055
        %v1262 = vpack.c.b16 %v1060, %v1058
        %v1263 = vpack.c.b16 %v1061, %v1059
        %v1264 = vpack.c.b16 %v1064, %v1062
        %v1265 = vpack.c.b16 %v1065, %v1063
        %v1266 = vpack.c.b16 %v1068, %v1066
        %v1267 = vpack.c.b16 %v1069, %v1067
        %v1268 = vpack.c.b16 %v1072, %v1070
        %v1269 = vpack.c.b16 %v1073, %v1071
        %v1270 = vpack.c.b16 %v1076, %v1074
        %v1271 = vpack.c.b16 %v1077, %v1075
        %v1272 = vpack.c.b16 %v1080, %v1078
        %v1273 = vpack.c.b16 %v1081, %v1079
        %v1274 = vpack.c.b16 %v1084, %v1082
        %v1275 = vpack.c.b16 %v1085, %v1083
        %v1276 = vpack.c.b16 %v1088, %v1086
        %v1277 = vpack.c.b16 %v1089, %v1087
        %v1278 = vpack.c.b16 %v1092, %v1090
        %v1279 = vpack.c.b16 %v1093, %v1091
        %v1280 = vpack.c.b16 %v1096, %v1094
        %v1281 = vpack.c.b16 %v1097, %v1095
        %v1282 = vpack.c.b16 %v1100, %v1098
        %v1283 = vpack.c.b16 %v1101, %v1099
        %v1284 = vpack.c.b16 %v1104, %v1102
        %v1285 = vpack.c.b16 %v1105, %v1103
        %v1286 = vpack.c.b16 %v1108, %v1106
        %v1287 = vpack.c.b16 %v1109, %v1107
        %v1288 = vpack.c.b16 %v1112, %v1110
        %v1289 = vpack.c.b16 %v1113, %v1111
        %v1290 = vpack.c.b16 %v1116, %v1114
        %v1291 = vpack.c.b16 %v1117, %v1115
        %v1292 = vpack.c.b16 %v1120, %v1118
        %v1293 = vpack.c.b16 %v1121, %v1119
        %v1294 = vpack.c.b16 %v1124, %v1122
        %v1295 = vpack.c.b16 %v1125, %v1123
        %v1296 = vpack.c.b16 %v1128, %v1126
        %v1297 = vpack.c.b16 %v1129, %v1127
        %v1298 = vpack.c.b16 %v1132, %v1130
        %v1299 = vpack.c.b16 %v1133, %v1131
        %v1300 = vpack.c.b16 %v1136, %v1134
        %v1301 = vpack.c.b16 %v1137, %v1135
        %v1302 = vpack.c.b16 %v1140, %v1138
        %v1303 = vpack.c.b16 %v1141, %v1139
        %v1304 = vpack.c.b16 %v1144, %v1142
        %v1305 = vpack.c.b16 %v1145, %v1143
        %v1306 = vpack.c.b16 %v1148, %v1146
        %v1307 = vpack.c.b16 %v1149, %v1147
        %v1308 = vpack.c.b16 %v1152, %v1150
        %v1309 = vpack.c.b16 %v1153, %v1151
        %v1310 = vpack.c.b16 %v1156, %v1154
        %v1311 = vpack.c.b16 %v1157, %v1155
        %v1312 = vpack.c.b16 %v1160, %v1158
        %v1313 = vpack.c.b16 %v1161, %v1159
        %v1314 = vpack.c.b16 %v1164, %v1162
        %v1315 = vpack.c.b16 %v1165, %v1163
        %v1316 = vpack.c.b16 %v1168, %v1166
        %v1317 = vpack.c.b16 %v1169, %v1167
        %v1318 = vpack.c.b16 %v1172, %v1170
        %v1319 = vpack.c.b16 %v1173, %v1171
        %v1320 = vpack.c.b16 %v1176, %v1174
        %v1321 = vpack.c.b16 %v1177, %v1175
        %1466 = vmatprep.subr.bf16.mxu0 %v1179
        %1467 = vmatpush1.bf16.msra.mxu0 %v1178
        %1468 = vmatprep.subr.bf16.mxu0 %v1181
        %1469 = vmatpush1.bf16.msra.mxu0 %v1180
        %1470 = vmatprep.subr.bf16.mxu0 %v1183
        %1471 = vmatpush1.bf16.msra.mxu0 %v1182
        %1472 = vmatprep.subr.bf16.mxu0 %v1185
        %1473 = vmatpush1.bf16.msra.mxu0 %v1184
        %1474 = vmatprep.subr.bf16.mxu0 %v1187
        %1475 = vmatpush1.bf16.msra.mxu0 %v1186
        %1476 = vmatprep.subr.bf16.mxu0 %v1189
        %1477 = vmatpush1.bf16.msra.mxu0 %v1188
        %1478 = vmatprep.subr.bf16.mxu0 %v1191
        %1479 = vmatpush1.bf16.msra.mxu0 %v1190
        %1480 = vmatprep.subr.bf16.mxu0 %v1193
        %1481 = vmatpush1.bf16.msra.mxu0 %v1192
        %1482 = vmatprep.subr.bf16.mxu0 %v1195
        %1483 = vmatpush1.bf16.msra.mxu0 %v1194
        %1484 = vmatprep.subr.bf16.mxu0 %v1197
        %1485 = vmatpush1.bf16.msra.mxu0 %v1196
        %1486 = vmatprep.subr.bf16.mxu0 %v1199
        %1487 = vmatpush1.bf16.msra.mxu0 %v1198
        %1488 = vmatprep.subr.bf16.mxu0 %v1201
        %1489 = vmatpush1.bf16.msra.mxu0 %v1200
        %1490 = vmatprep.subr.bf16.mxu0 %v1203
        %1491 = vmatpush1.bf16.msra.mxu0 %v1202
        %1492 = vmatprep.subr.bf16.mxu0 %v1205
        %1493 = vmatpush1.bf16.msra.mxu0 %v1204
        %1494 = vmatprep.subr.bf16.mxu0 %v1207
        %1495 = vmatpush1.bf16.msra.mxu0 %v1206
        %1496 = vmatprep.subr.bf16.mxu0 %v1209
        %1497 = vmatpush1.bf16.msra.mxu0 %v1208
        %1498 = vmatprep.mubr.bf16.mxu0 %v693
        %1499 = vmatmul.mubr.bf16.gmra.mrb[0].mxu0 %v692
        %v1500 = vpop.f32.mrb[0].mxu0
        %v1501 = vadd.f32 0.0, %v1500
        %v1502 = vpop.f32.mrb[0].mxu0
        %v1503 = vadd.f32 0.0, %v1502
        %v1504 = vpop.f32.mrb[0].mxu0
        %v1505 = vadd.f32 0.0, %v1504
        %v1506 = vpop.f32.mrb[0].mxu0
        %v1507 = vadd.f32 0.0, %v1506
        %1508 = vmatprep.mubr.bf16.mxu0 %v702
        %1509 = vmatmul.mubr.bf16.gmra.mrb[0].mxu0 %v701
        %v1510 = vpop.f32.mrb[0].mxu0
        %v1511 = vadd.f32 0.0, %v1510
        %v1512 = vpop.f32.mrb[0].mxu0
        %v1513 = vadd.f32 0.0, %v1512
        %v1514 = vpop.f32.mrb[0].mxu0
        %v1515 = vadd.f32 0.0, %v1514
        %v1516 = vpop.f32.mrb[0].mxu0
        %v1517 = vadd.f32 0.0, %v1516
        %1518 = vmatprep.mubr.bf16.mxu0 %v711
        %1519 = vmatmul.mubr.bf16.gmra.mrb[0].mxu0 %v710
        %v1520 = vpop.f32.mrb[0].mxu0
        %v1521 = vadd.f32 0.0, %v1520
        %v1522 = vpop.f32.mrb[0].mxu0
        %v1523 = vadd.f32 0.0, %v1522
        %v1524 = vpop.f32.mrb[0].mxu0
        %v1525 = vpop.f32.mrb[0].mxu0
        %1526 = vdwg.mxu0
        %1527 = vmatprep.subr.bf16.mxu0 %v1211
        %1528 = vmatpush1.bf16.msra.mxu0 %v1210
        %1529 = vmatprep.subr.bf16.mxu0 %v1213
        %1530 = vmatpush1.bf16.msra.mxu0 %v1212
        %1531 = vmatprep.subr.bf16.mxu0 %v1215
        %1532 = vmatpush1.bf16.msra.mxu0 %v1214
        %1533 = vmatprep.subr.bf16.mxu0 %v1217
        %1534 = vmatpush1.bf16.msra.mxu0 %v1216
        %1535 = vmatprep.subr.bf16.mxu0 %v1219
        %1536 = vmatpush1.bf16.msra.mxu0 %v1218
        %1537 = vmatprep.subr.bf16.mxu0 %v1221
        %1538 = vmatpush1.bf16.msra.mxu0 %v1220
        %1539 = vmatprep.subr.bf16.mxu0 %v1223
        %1540 = vmatpush1.bf16.msra.mxu0 %v1222
        %1541 = vmatprep.subr.bf16.mxu0 %v1225
        %1542 = vmatpush1.bf16.msra.mxu0 %v1224
        %1543 = vmatprep.subr.bf16.mxu0 %v1227
        %1544 = vmatpush1.bf16.msra.mxu0 %v1226
        %1545 = vmatprep.subr.bf16.mxu0 %v1229
        %1546 = vmatpush1.bf16.msra.mxu0 %v1228
        %1547 = vmatprep.subr.bf16.mxu0 %v1231
        %1548 = vmatpush1.bf16.msra.mxu0 %v1230
        %1549 = vmatprep.subr.bf16.mxu0 %v1233
        %1550 = vmatpush1.bf16.msra.mxu0 %v1232
        %1551 = vmatprep.subr.bf16.mxu0 %v1235
        %1552 = vmatpush1.bf16.msra.mxu0 %v1234
        %1553 = vmatprep.subr.bf16.mxu0 %v1237
        %1554 = vmatpush1.bf16.msra.mxu0 %v1236
        %1555 = vmatprep.subr.bf16.mxu0 %v1239
        %1556 = vmatpush1.bf16.msra.mxu0 %v1238
        %1557 = vmatprep.subr.bf16.mxu0 %v1241
        %1558 = vmatpush1.bf16.msra.mxu0 %v1240
        %1559 = vmatprep.mubr.bf16.mxu0 %v695
        %1560 = vmatmul.mubr.bf16.gmra.mrb[0].mxu0 %v694
        %v1561 = vpop.f32.mrb[0].mxu0
        %v1562 = vadd.f32 %v1501, %v1561
        %v1563 = vpop.f32.mrb[0].mxu0
        %v1564 = vadd.f32 %v1503, %v1563
        %v1565 = vpop.f32.mrb[0].mxu0
        %v1566 = vadd.f32 %v1505, %v1565
        %v1567 = vpop.f32.mrb[0].mxu0
        %v1568 = vadd.f32 %v1507, %v1567
        %1569 = vmatprep.mubr.bf16.mxu0 %v704
        %1570 = vmatmul.mubr.bf16.gmra.mrb[0].mxu0 %v703
        %v1571 = vpop.f32.mrb[0].mxu0
        %v1572 = vadd.f32 %v1511, %v1571
        %v1573 = vpop.f32.mrb[0].mxu0
        %v1574 = vadd.f32 %v1513, %v1573
        %v1575 = vpop.f32.mrb[0].mxu0
        %v1576 = vadd.f32 %v1515, %v1575
        %v1577 = vpop.f32.mrb[0].mxu0
        %v1578 = vadd.f32 %v1517, %v1577
        %1579 = vmatprep.mubr.bf16.mxu0 %v713
        %1580 = vmatmul.mubr.bf16.gmra.mrb[0].mxu0 %v712
        %v1581 = vpop.f32.mrb[0].mxu0
        %v1582 = vadd.f32 %v1521, %v1581
        %v1583 = vpop.f32.mrb[0].mxu0
        %v1584 = vadd.f32 %v1523, %v1583
        %v1585 = vpop.f32.mrb[0].mxu0
        %v1586 = vpop.f32.mrb[0].mxu0
        %1587 = vdwg.mxu0
        %1588 = vmatprep.subr.bf16.mxu0 %v1243
        %1589 = vmatpush1.bf16.msra.mxu0 %v1242
        %1590 = vmatprep.subr.bf16.mxu0 %v1245
        %1591 = vmatpush1.bf16.msra.mxu0 %v1244
        %1592 = vmatprep.subr.bf16.mxu0 %v1247
        %1593 = vmatpush1.bf16.msra.mxu0 %v1246
        %1594 = vmatprep.subr.bf16.mxu0 %v1249
        %1595 = vmatpush1.bf16.msra.mxu0 %v1248
        %1596 = vmatprep.subr.bf16.mxu0 %v1251
        %1597 = vmatpush1.bf16.msra.mxu0 %v1250
        %1598 = vmatprep.subr.bf16.mxu0 %v1253
        %1599 = vmatpush1.bf16.msra.mxu0 %v1252
        %1600 = vmatprep.subr.bf16.mxu0 %v1255
        %1601 = vmatpush1.bf16.msra.mxu0 %v1254
        %1602 = vmatprep.subr.bf16.mxu0 %v1257
        %1603 = vmatpush1.bf16.msra.mxu0 %v1256
        %1604 = vmatprep.subr.bf16.mxu0 %v1259
        %1605 = vmatpush1.bf16.msra.mxu0 %v1258
        %1606 = vmatprep.subr.bf16.mxu0 %v1261
        %1607 = vmatpush1.bf16.msra.mxu0 %v1260
        %1608 = vmatprep.subr.bf16.mxu0 %v1263
        %1609 = vmatpush1.bf16.msra.mxu0 %v1262
        %1610 = vmatprep.subr.bf16.mxu0 %v1265
        %1611 = vmatpush1.bf16.msra.mxu0 %v1264
        %1612 = vmatprep.subr.bf16.mxu0 %v1267
        %1613 = vmatpush1.bf16.msra.mxu0 %v1266
        %1614 = vmatprep.subr.bf16.mxu0 %v1269
        %1615 = vmatpush1.bf16.msra.mxu0 %v1268
        %1616 = vmatprep.subr.bf16.mxu0 %v1271
        %1617 = vmatpush1.bf16.msra.mxu0 %v1270
        %1618 = vmatprep.subr.bf16.mxu0 %v1273
        %1619 = vmatpush1.bf16.msra.mxu0 %v1272
        %1620 = vmatprep.mubr.bf16.mxu0 %v697
        %1621 = vmatmul.mubr.bf16.gmra.mrb[0].mxu0 %v696
        %v1622 = vpop.f32.mrb[0].mxu0
        %v1623 = vadd.f32 %v1562, %v1622
        %v1624 = vpop.f32.mrb[0].mxu0
        %v1625 = vadd.f32 %v1564, %v1624
        %v1626 = vpop.f32.mrb[0].mxu0
        %v1627 = vadd.f32 %v1566, %v1626
        %v1628 = vpop.f32.mrb[0].mxu0
        %v1629 = vadd.f32 %v1568, %v1628
        %1630 = vmatprep.mubr.bf16.mxu0 %v706
        %1631 = vmatmul.mubr.bf16.gmra.mrb[0].mxu0 %v705
        %v1632 = vpop.f32.mrb[0].mxu0
        %v1633 = vadd.f32 %v1572, %v1632
        %v1634 = vpop.f32.mrb[0].mxu0
        %v1635 = vadd.f32 %v1574, %v1634
        %v1636 = vpop.f32.mrb[0].mxu0
        %v1637 = vadd.f32 %v1576, %v1636
        %v1638 = vpop.f32.mrb[0].mxu0
        %v1639 = vadd.f32 %v1578, %v1638
        %1640 = vmatprep.mubr.bf16.mxu0 %v715
        %1641 = vmatmul.mubr.bf16.gmra.mrb[0].mxu0 %v714
        %v1642 = vpop.f32.mrb[0].mxu0
        %v1643 = vadd.f32 %v1582, %v1642
        %v1644 = vpop.f32.mrb[0].mxu0
        %v1645 = vadd.f32 %v1584, %v1644
        %v1646 = vpop.f32.mrb[0].mxu0
        %v1647 = vpop.f32.mrb[0].mxu0
        %1648 = vdwg.mxu0
        %1649 = vmatprep.subr.bf16.mxu0 %v1275
        %1650 = vmatpush1.bf16.msra.mxu0 %v1274
        %1651 = vmatprep.subr.bf16.mxu0 %v1277
        %1652 = vmatpush1.bf16.msra.mxu0 %v1276
        %1653 = vmatprep.subr.bf16.mxu0 %v1279
        %1654 = vmatpush1.bf16.msra.mxu0 %v1278
        %1655 = vmatprep.subr.bf16.mxu0 %v1281
        %1656 = vmatpush1.bf16.msra.mxu0 %v1280
        %1657 = vmatprep.subr.bf16.mxu0 %v1283
        %1658 = vmatpush1.bf16.msra.mxu0 %v1282
        %1659 = vmatprep.subr.bf16.mxu0 %v1285
        %1660 = vmatpush1.bf16.msra.mxu0 %v1284
        %1661 = vmatprep.subr.bf16.mxu0 %v1287
        %1662 = vmatpush1.bf16.msra.mxu0 %v1286
        %1663 = vmatprep.subr.bf16.mxu0 %v1289
        %1664 = vmatpush1.bf16.msra.mxu0 %v1288
        %1665 = vmatprep.subr.bf16.mxu0 %v1291
        %1666 = vmatpush1.bf16.msra.mxu0 %v1290
        %1667 = vmatprep.subr.bf16.mxu0 %v1293
        %1668 = vmatpush1.bf16.msra.mxu0 %v1292
        %1669 = vmatprep.subr.bf16.mxu0 %v1295
        %1670 = vmatpush1.bf16.msra.mxu0 %v1294
        %1671 = vmatprep.subr.bf16.mxu0 %v1297
        %1672 = vmatpush1.bf16.msra.mxu0 %v1296
        %1673 = vmatprep.subr.bf16.mxu0 %v1299
        %1674 = vmatpush1.bf16.msra.mxu0 %v1298
        %1675 = vmatprep.subr.bf16.mxu0 %v1301
        %1676 = vmatpush1.bf16.msra.mxu0 %v1300
        %1677 = vmatprep.subr.bf16.mxu0 %v1303
        %1678 = vmatpush1.bf16.msra.mxu0 %v1302
        %1679 = vmatprep.subr.bf16.mxu0 %v1305
        %1680 = vmatpush1.bf16.msra.mxu0 %v1304
        %1681 = vmatprep.mubr.bf16.mxu0 %v699
        %1682 = vmatmul.mubr.bf16.gmra.mrb[0].mxu0 %v698
        %v1683 = vpop.f32.mrb[0].mxu0
        %v1684 = vadd.f32 %v1623, %v1683
        %v1685 = vpop.f32.mrb[0].mxu0
        %v1686 = vadd.f32 %v1625, %v1685
        %v1687 = vpop.f32.mrb[0].mxu0
        %v1688 = vadd.f32 %v1627, %v1687
        %v1689 = vpop.f32.mrb[0].mxu0
        %v1690 = vadd.f32 %v1629, %v1689
        %1691 = vmatprep.mubr.bf16.mxu0 %v708
        %1692 = vmatmul.mubr.bf16.gmra.mrb[0].mxu0 %v707
        %v1693 = vpop.f32.mrb[0].mxu0
        %v1694 = vadd.f32 %v1633, %v1693
        %v1695 = vpop.f32.mrb[0].mxu0
        %v1696 = vadd.f32 %v1635, %v1695
        %v1697 = vpop.f32.mrb[0].mxu0
        %v1698 = vadd.f32 %v1637, %v1697
        %v1699 = vpop.f32.mrb[0].mxu0
        %v1700 = vadd.f32 %v1639, %v1699
        %1701 = vmatprep.mubr.bf16.mxu0 %v717
        %1702 = vmatmul.mubr.bf16.gmra.mrb[0].mxu0 %v716
        %v1703 = vpop.f32.mrb[0].mxu0
        %v1704 = vadd.f32 %v1643, %v1703
        %v1705 = vpop.f32.mrb[0].mxu0
        %v1706 = vadd.f32 %v1645, %v1705
        %v1707 = vpop.f32.mrb[0].mxu0
        %v1708 = vpop.f32.mrb[0].mxu0
        %1709 = vdwg.mxu0
        %1710 = vmatprep.subr.bf16.mxu0 %v1307
        %1711 = vmatpush1.bf16.msra.mxu0 %v1306
        %1712 = vmatprep.subr.bf16.mxu0 %v1309
        %1713 = vmatpush1.bf16.msra.mxu0 %v1308
        %1714 = vmatprep.subr.bf16.mxu0 %v1311
        %1715 = vmatpush1.bf16.msra.mxu0 %v1310
        %1716 = vmatprep.subr.bf16.mxu0 %v1313
        %1717 = vmatpush1.bf16.msra.mxu0 %v1312
        %1718 = vmatprep.subr.bf16.mxu0 %v1315
        %1719 = vmatpush1.bf16.msra.mxu0 %v1314
        %1720 = vmatprep.subr.bf16.mxu0 %v1317
        %1721 = vmatpush1.bf16.msra.mxu0 %v1316
        %1722 = vmatprep.subr.bf16.mxu0 %v1319
        %1723 = vmatpush1.bf16.msra.mxu0 %v1318
        %1724 = vmatprep.subr.bf16.mxu0 %v1321
        %1725 = vmatpush1.bf16.msra.mxu0 %v1320
        %1726 = vmatprep.subr.bf16.mxu0 0
        %1727 = vmatpush1.bf16.msra.mxu0 0
        %1728 = vmatprep.subr.bf16.mxu0 0
        %1729 = vmatpush1.bf16.msra.mxu0 0
        %1730 = vmatprep.subr.bf16.mxu0 0
        %1731 = vmatpush1.bf16.msra.mxu0 0
        %1732 = vmatprep.subr.bf16.mxu0 0
        %1733 = vmatpush1.bf16.msra.mxu0 0
        %1734 = vmatprep.subr.bf16.mxu0 0
        %1735 = vmatpush1.bf16.msra.mxu0 0
        %1736 = vmatprep.subr.bf16.mxu0 0
        %1737 = vmatpush1.bf16.msra.mxu0 0
        %1738 = vmatprep.subr.bf16.mxu0 0
        %1739 = vmatpush1.bf16.msra.mxu0 0
        %1740 = vmatprep.subr.bf16.mxu0 0
        %1741 = vmatpush1.bf16.msra.mxu0 0
        %1742 = vmatprep.mubr.bf16.mxu0 0
        %1743 = vmatmul.mubr.bf16.gmra.mrb[0].mxu0 %v700
        %v1744 = vpop.f32.mrb[0].mxu0
        %v1745 = vadd.f32 %v1684, %v1744
        %v1746 = vpop.f32.mrb[0].mxu0
        %v1747 = vadd.f32 %v1686, %v1746
        %v1748 = vpop.f32.mrb[0].mxu0
        %v1749 = vadd.f32 %v1688, %v1748
        %v1750 = vpop.f32.mrb[0].mxu0
        %v1751 = vadd.f32 %v1690, %v1750
        %1752 = vmatprep.mubr.bf16.mxu0 0
        %1753 = vmatmul.mubr.bf16.gmra.mrb[0].mxu0 %v709
        %v1754 = vpop.f32.mrb[0].mxu0
        %v1755 = vadd.f32 %v1694, %v1754
        %v1756 = vpop.f32.mrb[0].mxu0
        %v1757 = vadd.f32 %v1696, %v1756
        %v1758 = vpop.f32.mrb[0].mxu0
        %v1759 = vadd.f32 %v1698, %v1758
        %v1760 = vpop.f32.mrb[0].mxu0
        %v1761 = vadd.f32 %v1700, %v1760
        %1762 = vmatprep.mubr.bf16.mxu0 0
        %1763 = vmatmul.mubr.bf16.gmra.mrb[0].mxu0 %v718
        %v1764 = vpop.f32.mrb[0].mxu0
        %v1765 = vadd.f32 %v1704, %v1764
        %v1766 = vpop.f32.mrb[0].mxu0
        %v1767 = vadd.f32 %v1706, %v1766
        %v1768 = vpop.f32.mrb[0].mxu0
        %v1769 = vpop.f32.mrb[0].mxu0
        %1770 = vdwg.mxu0
        %s1771 = scalar_lea.vmem %s422, 180 [#allocation2]
        %v1772 = vld [vmem:[%s1771] sm:$0xff]
        %v1773 = vld [vmem:[%s1771 + $0x8] sm:$0xff]
        %v1774 = vld [vmem:[%s1771 + $0x10] sm:$0xff]
        %v1775 = vld [vmem:[%s1771 + $0x18] sm:$0xff]
        %v1776 = vld [vmem:[%s1771 + $0x20] sm:$0xf]
        %v1777 = vld [vmem:[%s1771 + $0x24] sm:$0xff]
        %v1778 = vld [vmem:[%s1771 + $0x2c] sm:$0xff]
        %v1779 = vld [vmem:[%s1771 + $0x34] sm:$0xff]
        %v1780 = vld [vmem:[%s1771 + $0x3c] sm:$0xff]
        %v1781 = vld [vmem:[%s1771 + $0x44] sm:$0xf]
        %v1782 = vld [vmem:[%s1771 + $0x48] sm:$0xff]
        %v1783 = vld [vmem:[%s1771 + $0x50] sm:$0xff]
        %v1784 = vld [vmem:[%s1771 + $0x58] sm:$0xff]
        %v1785 = vld [vmem:[%s1771 + $0x60] sm:$0xff]
        %v1786 = vld [vmem:[%s1771 + $0x68] sm:$0xf]
        %v1787 = vld [vmem:[%s1771 + $0x6c] sm:$0xff]
        %v1788 = vld [vmem:[%s1771 + $0x74] sm:$0xff]
        %v1789 = vld [vmem:[%s1771 + $0x7c] sm:$0xff]
        %v1790 = vld [vmem:[%s1771 + $0x84] sm:$0xff]
        %v1791 = vld [vmem:[%s1771 + $0x8c] sm:$0xf]
        %v1792 = vld [vmem:[%s1771 + $0x90] sm:$0x33]
        %v1793 = vld [vmem:[%s1771 + $0x98] sm:$0x33]
        %v1794 = vld [vmem:[%s1771 + $0xa0] sm:$0x33]
        %v1795 = vld [vmem:[%s1771 + $0xa8] sm:$0x33]
        %v1796 = vld [vmem:[%s1771 + $0xb0] sm:$0x3]
        %v1822 = vunpack.c.l.b16 %v1772
        %v1823 = vunpack.c.h.b16 %v1772
        %v1824 = vunpack.c.l.b16 %v1773
        %v1825 = vunpack.c.h.b16 %v1773
        %v1826 = vunpack.c.l.b16 %v1774
        %v1827 = vunpack.c.h.b16 %v1774
        %v1828 = vunpack.c.l.b16 %v1775
        %v1829 = vunpack.c.h.b16 %v1775
        %v1830 = vunpack.c.l.b16 %v1776
        %v1831 = vunpack.c.l.b16 %v1777
        %v1832 = vunpack.c.h.b16 %v1777
        %v1833 = vunpack.c.l.b16 %v1778
        %v1834 = vunpack.c.h.b16 %v1778
        %v1835 = vunpack.c.l.b16 %v1779
        %v1836 = vunpack.c.h.b16 %v1779
        %v1837 = vunpack.c.l.b16 %v1780
        %v1838 = vunpack.c.h.b16 %v1780
        %v1839 = vunpack.c.l.b16 %v1781
        %v1840 = vunpack.c.l.b16 %v1782
        %v1841 = vunpack.c.h.b16 %v1782
        %v1842 = vunpack.c.l.b16 %v1783
        %v1843 = vunpack.c.h.b16 %v1783
        %v1844 = vunpack.c.l.b16 %v1784
        %v1845 = vunpack.c.h.b16 %v1784
        %v1846 = vunpack.c.l.b16 %v1785
        %v1847 = vunpack.c.h.b16 %v1785
        %v1848 = vunpack.c.l.b16 %v1786
        %v1849 = vunpack.c.l.b16 %v1787
        %v1850 = vunpack.c.h.b16 %v1787
        %v1851 = vunpack.c.l.b16 %v1788
        %v1852 = vunpack.c.h.b16 %v1788
        %v1853 = vunpack.c.l.b16 %v1789
        %v1854 = vunpack.c.h.b16 %v1789
        %v1855 = vunpack.c.l.b16 %v1790
        %v1856 = vunpack.c.h.b16 %v1790
        %v1857 = vunpack.c.l.b16 %v1791
        %v1858 = vunpack.c.l.b16 %v1792
        %v1859 = vunpack.c.h.b16 %v1792
        %v1860 = vunpack.c.l.b16 %v1793
        %v1861 = vunpack.c.h.b16 %v1793
        %v1862 = vunpack.c.l.b16 %v1794
        %v1863 = vunpack.c.h.b16 %v1794
        %v1864 = vunpack.c.l.b16 %v1795
        %v1865 = vunpack.c.h.b16 %v1795
        %v1866 = vunpack.c.l.b16 %v1796
        %v1867 = vpack.c.b16 %v1831, %v1822
        %v1868 = vpack.c.b16 %v1832, %v1823
        %v1869 = vpack.c.b16 %v1833, %v1824
        %v1870 = vpack.c.b16 %v1834, %v1825
        %v1871 = vpack.c.b16 %v1835, %v1826
        %v1872 = vpack.c.b16 %v1836, %v1827
        %v1873 = vpack.c.b16 %v1837, %v1828
        %v1874 = vpack.c.b16 %v1838, %v1829
        %v1875 = vpack.c.b16 %v1839, %v1830
        %v1876 = vpack.c.b16 %v1849, %v1840
        %v1877 = vpack.c.b16 %v1850, %v1841
        %v1878 = vpack.c.b16 %v1851, %v1842
        %v1879 = vpack.c.b16 %v1852, %v1843
        %v1880 = vpack.c.b16 %v1853, %v1844
        %v1881 = vpack.c.b16 %v1854, %v1845
        %v1882 = vpack.c.b16 %v1855, %v1846
        %v1883 = vpack.c.b16 %v1856, %v1847
        %v1884 = vpack.c.b16 %v1857, %v1848
        %v1885 = vpack.c.b16 %v1858, %v1858
        %v1886 = vpack.c.b16 %v1859, %v1859
        %v1887 = vpack.c.b16 %v1860, %v1860
        %v1888 = vpack.c.b16 %v1861, %v1861
        %v1889 = vpack.c.b16 %v1862, %v1862
        %v1890 = vpack.c.b16 %v1863, %v1863
        %v1891 = vpack.c.b16 %v1864, %v1864
        %v1892 = vpack.c.b16 %v1865, %v1865
        %v1893 = vpack.c.b16 %v1866, %v1866
        %1921 = vmatprep.subr.bf16.mxu0 %v1179
        %1922 = vmatpush1.bf16.msra.mxu0 %v1178
        %1923 = vmatprep.subr.bf16.mxu0 %v1181
        %1924 = vmatpush1.bf16.msra.mxu0 %v1180
        %1925 = vmatprep.subr.bf16.mxu0 %v1183
        %1926 = vmatpush1.bf16.msra.mxu0 %v1182
        %1927 = vmatprep.subr.bf16.mxu0 %v1185
        %1928 = vmatpush1.bf16.msra.mxu0 %v1184
        %1929 = vmatprep.subr.bf16.mxu0 %v1187
        %1930 = vmatpush1.bf16.msra.mxu0 %v1186
        %1931 = vmatprep.subr.bf16.mxu0 %v1189
        %1932 = vmatpush1.bf16.msra.mxu0 %v1188
        %1933 = vmatprep.subr.bf16.mxu0 %v1191
        %1934 = vmatpush1.bf16.msra.mxu0 %v1190
        %1935 = vmatprep.subr.bf16.mxu0 %v1193
        %1936 = vmatpush1.bf16.msra.mxu0 %v1192
        %1937 = vmatprep.subr.bf16.mxu0 %v1195
        %1938 = vmatpush1.bf16.msra.mxu0 %v1194
        %1939 = vmatprep.subr.bf16.mxu0 %v1197
        %1940 = vmatpush1.bf16.msra.mxu0 %v1196
        %1941 = vmatprep.subr.bf16.mxu0 %v1199
        %1942 = vmatpush1.bf16.msra.mxu0 %v1198
        %1943 = vmatprep.subr.bf16.mxu0 %v1201
        %1944 = vmatpush1.bf16.msra.mxu0 %v1200
        %1945 = vmatprep.subr.bf16.mxu0 %v1203
        %1946 = vmatpush1.bf16.msra.mxu0 %v1202
        %1947 = vmatprep.subr.bf16.mxu0 %v1205
        %1948 = vmatpush1.bf16.msra.mxu0 %v1204
        %1949 = vmatprep.subr.bf16.mxu0 %v1207
        %1950 = vmatpush1.bf16.msra.mxu0 %v1206
        %1951 = vmatprep.subr.bf16.mxu0 %v1209
        %1952 = vmatpush1.bf16.msra.mxu0 %v1208
        %1953 = vmatprep.mubr.bf16.mxu0 %v1868
        %1954 = vmatmul.mubr.bf16.gmra.mrb[0].mxu0 %v1867
        %v1955 = vpop.f32.mrb[0].mxu0
        %v1956 = vadd.f32 0.0, %v1955
        %v1957 = vpop.f32.mrb[0].mxu0
        %v1958 = vadd.f32 0.0, %v1957
        %v1959 = vpop.f32.mrb[0].mxu0
        %v1960 = vadd.f32 0.0, %v1959
        %v1961 = vpop.f32.mrb[0].mxu0
        %v1962 = vadd.f32 0.0, %v1961
        %1963 = vmatprep.mubr.bf16.mxu0 %v1877
        %1964 = vmatmul.mubr.bf16.gmra.mrb[0].mxu0 %v1876
        %v1965 = vpop.f32.mrb[0].mxu0
        %v1966 = vadd.f32 0.0, %v1965
        %v1967 = vpop.f32.mrb[0].mxu0
        %v1968 = vadd.f32 0.0, %v1967
        %v1969 = vpop.f32.mrb[0].mxu0
        %v1970 = vadd.f32 0.0, %v1969
        %v1971 = vpop.f32.mrb[0].mxu0
        %v1972 = vadd.f32 0.0, %v1971
        %1973 = vmatprep.mubr.bf16.mxu0 %v1886
        %1974 = vmatmul.mubr.bf16.gmra.mrb[0].mxu0 %v1885
        %v1975 = vpop.f32.mrb[0].mxu0
        %v1976 = vadd.f32 0.0, %v1975
        %v1977 = vpop.f32.mrb[0].mxu0
        %v1978 = vadd.f32 0.0, %v1977
        %v1979 = vpop.f32.mrb[0].mxu0
        %v1980 = vpop.f32.mrb[0].mxu0
        %1981 = vdwg.mxu0
        %1982 = vmatprep.subr.bf16.mxu0 %v1211
        %1983 = vmatpush1.bf16.msra.mxu0 %v1210
        %1984 = vmatprep.subr.bf16.mxu0 %v1213
        %1985 = vmatpush1.bf16.msra.mxu0 %v1212
        %1986 = vmatprep.subr.bf16.mxu0 %v1215
        %1987 = vmatpush1.bf16.msra.mxu0 %v1214
        %1988 = vmatprep.subr.bf16.mxu0 %v1217
        %1989 = vmatpush1.bf16.msra.mxu0 %v1216
        %1990 = vmatprep.subr.bf16.mxu0 %v1219
        %1991 = vmatpush1.bf16.msra.mxu0 %v1218
        %1992 = vmatprep.subr.bf16.mxu0 %v1221
        %1993 = vmatpush1.bf16.msra.mxu0 %v1220
        %1994 = vmatprep.subr.bf16.mxu0 %v1223
        %1995 = vmatpush1.bf16.msra.mxu0 %v1222
        %1996 = vmatprep.subr.bf16.mxu0 %v1225
        %1997 = vmatpush1.bf16.msra.mxu0 %v1224
        %1998 = vmatprep.subr.bf16.mxu0 %v1227
        %1999 = vmatpush1.bf16.msra.mxu0 %v1226
        %2000 = vmatprep.subr.bf16.mxu0 %v1229
        %2001 = vmatpush1.bf16.msra.mxu0 %v1228
        %2002 = vmatprep.subr.bf16.mxu0 %v1231
        %2003 = vmatpush1.bf16.msra.mxu0 %v1230
        %2004 = vmatprep.subr.bf16.mxu0 %v1233
        %2005 = vmatpush1.bf16.msra.mxu0 %v1232
        %2006 = vmatprep.subr.bf16.mxu0 %v1235
        %2007 = vmatpush1.bf16.msra.mxu0 %v1234
        %2008 = vmatprep.subr.bf16.mxu0 %v1237
        %2009 = vmatpush1.bf16.msra.mxu0 %v1236
        %2010 = vmatprep.subr.bf16.mxu0 %v1239
        %2011 = vmatpush1.bf16.msra.mxu0 %v1238
        %2012 = vmatprep.subr.bf16.mxu0 %v1241
        %2013 = vmatpush1.bf16.msra.mxu0 %v1240
        %2014 = vmatprep.mubr.bf16.mxu0 %v1870
        %2015 = vmatmul.mubr.bf16.gmra.mrb[0].mxu0 %v1869
        %v2016 = vpop.f32.mrb[0].mxu0
        %v2017 = vadd.f32 %v1956, %v2016
        %v2018 = vpop.f32.mrb[0].mxu0
        %v2019 = vadd.f32 %v1958, %v2018
        %v2020 = vpop.f32.mrb[0].mxu0
        %v2021 = vadd.f32 %v1960, %v2020
        %v2022 = vpop.f32.mrb[0].mxu0
        %v2023 = vadd.f32 %v1962, %v2022
        %2024 = vmatprep.mubr.bf16.mxu0 %v1879
        %2025 = vmatmul.mubr.bf16.gmra.mrb[0].mxu0 %v1878
        %v2026 = vpop.f32.mrb[0].mxu0
        %v2027 = vadd.f32 %v1966, %v2026
        %v2028 = vpop.f32.mrb[0].mxu0
        %v2029 = vadd.f32 %v1968, %v2028
        %v2030 = vpop.f32.mrb[0].mxu0
        %v2031 = vadd.f32 %v1970, %v2030
        %v2032 = vpop.f32.mrb[0].mxu0
        %v2033 = vadd.f32 %v1972, %v2032
        %2034 = vmatprep.mubr.bf16.mxu0 %v1888
        %2035 = vmatmul.mubr.bf16.gmra.mrb[0].mxu0 %v1887
        %v2036 = vpop.f32.mrb[0].mxu0
        %v2037 = vadd.f32 %v1976, %v2036
        %v2038 = vpop.f32.mrb[0].mxu0
        %v2039 = vadd.f32 %v1978, %v2038
        %v2040 = vpop.f32.mrb[0].mxu0
        %v2041 = vpop.f32.mrb[0].mxu0
        %2042 = vdwg.mxu0
        %2043 = vmatprep.subr.bf16.mxu0 %v1243
        %2044 = vmatpush1.bf16.msra.mxu0 %v1242
        %2045 = vmatprep.subr.bf16.mxu0 %v1245
        %2046 = vmatpush1.bf16.msra.mxu0 %v1244
        %2047 = vmatprep.subr.bf16.mxu0 %v1247
        %2048 = vmatpush1.bf16.msra.mxu0 %v1246
        %2049 = vmatprep.subr.bf16.mxu0 %v1249
        %2050 = vmatpush1.bf16.msra.mxu0 %v1248
        %2051 = vmatprep.subr.bf16.mxu0 %v1251
        %2052 = vmatpush1.bf16.msra.mxu0 %v1250
        %2053 = vmatprep.subr.bf16.mxu0 %v1253
        %2054 = vmatpush1.bf16.msra.mxu0 %v1252
        %2055 = vmatprep.subr.bf16.mxu0 %v1255
        %2056 = vmatpush1.bf16.msra.mxu0 %v1254
        %2057 = vmatprep.subr.bf16.mxu0 %v1257
        %2058 = vmatpush1.bf16.msra.mxu0 %v1256
        %2059 = vmatprep.subr.bf16.mxu0 %v1259
        %2060 = vmatpush1.bf16.msra.mxu0 %v1258
        %2061 = vmatprep.subr.bf16.mxu0 %v1261
        %2062 = vmatpush1.bf16.msra.mxu0 %v1260
        %2063 = vmatprep.subr.bf16.mxu0 %v1263
        %2064 = vmatpush1.bf16.msra.mxu0 %v1262
        %2065 = vmatprep.subr.bf16.mxu0 %v1265
        %2066 = vmatpush1.bf16.msra.mxu0 %v1264
        %2067 = vmatprep.subr.bf16.mxu0 %v1267
        %2068 = vmatpush1.bf16.msra.mxu0 %v1266
        %2069 = vmatprep.subr.bf16.mxu0 %v1269
        %2070 = vmatpush1.bf16.msra.mxu0 %v1268
        %2071 = vmatprep.subr.bf16.mxu0 %v1271
        %2072 = vmatpush1.bf16.msra.mxu0 %v1270
        %2073 = vmatprep.subr.bf16.mxu0 %v1273
        %2074 = vmatpush1.bf16.msra.mxu0 %v1272
        %2075 = vmatprep.mubr.bf16.mxu0 %v1872
        %2076 = vmatmul.mubr.bf16.gmra.mrb[0].mxu0 %v1871
        %v2077 = vpop.f32.mrb[0].mxu0
        %v2078 = vadd.f32 %v2017, %v2077
        %v2079 = vpop.f32.mrb[0].mxu0
        %v2080 = vadd.f32 %v2019, %v2079
        %v2081 = vpop.f32.mrb[0].mxu0
        %v2082 = vadd.f32 %v2021, %v2081
        %v2083 = vpop.f32.mrb[0].mxu0
        %v2084 = vadd.f32 %v2023, %v2083
        %2085 = vmatprep.mubr.bf16.mxu0 %v1881
        %2086 = vmatmul.mubr.bf16.gmra.mrb[0].mxu0 %v1880
        %v2087 = vpop.f32.mrb[0].mxu0
        %v2088 = vadd.f32 %v2027, %v2087
        %v2089 = vpop.f32.mrb[0].mxu0
        %v2090 = vadd.f32 %v2029, %v2089
        %v2091 = vpop.f32.mrb[0].mxu0
        %v2092 = vadd.f32 %v2031, %v2091
        %v2093 = vpop.f32.mrb[0].mxu0
        %v2094 = vadd.f32 %v2033, %v2093
        %2095 = vmatprep.mubr.bf16.mxu0 %v1890
        %2096 = vmatmul.mubr.bf16.gmra.mrb[0].mxu0 %v1889
        %v2097 = vpop.f32.mrb[0].mxu0
        %v2098 = vadd.f32 %v2037, %v2097
        %v2099 = vpop.f32.mrb[0].mxu0
        %v2100 = vadd.f32 %v2039, %v2099
        %v2101 = vpop.f32.mrb[0].mxu0
        %v2102 = vpop.f32.mrb[0].mxu0
        %2103 = vdwg.mxu0
        %2104 = vmatprep.subr.bf16.mxu0 %v1275
        %2105 = vmatpush1.bf16.msra.mxu0 %v1274
        %2106 = vmatprep.subr.bf16.mxu0 %v1277
        %2107 = vmatpush1.bf16.msra.mxu0 %v1276
        %2108 = vmatprep.subr.bf16.mxu0 %v1279
        %2109 = vmatpush1.bf16.msra.mxu0 %v1278
        %2110 = vmatprep.subr.bf16.mxu0 %v1281
        %2111 = vmatpush1.bf16.msra.mxu0 %v1280
        %2112 = vmatprep.subr.bf16.mxu0 %v1283
        %2113 = vmatpush1.bf16.msra.mxu0 %v1282
        %2114 = vmatprep.subr.bf16.mxu0 %v1285
        %2115 = vmatpush1.bf16.msra.mxu0 %v1284
        %2116 = vmatprep.subr.bf16.mxu0 %v1287
        %2117 = vmatpush1.bf16.msra.mxu0 %v1286
        %2118 = vmatprep.subr.bf16.mxu0 %v1289
        %2119 = vmatpush1.bf16.msra.mxu0 %v1288
        %2120 = vmatprep.subr.bf16.mxu0 %v1291
        %2121 = vmatpush1.bf16.msra.mxu0 %v1290
        %2122 = vmatprep.subr.bf16.mxu0 %v1293
        %2123 = vmatpush1.bf16.msra.mxu0 %v1292
        %2124 = vmatprep.subr.bf16.mxu0 %v1295
        %2125 = vmatpush1.bf16.msra.mxu0 %v1294
        %2126 = vmatprep.subr.bf16.mxu0 %v1297
        %2127 = vmatpush1.bf16.msra.mxu0 %v1296
        %2128 = vmatprep.subr.bf16.mxu0 %v1299
        %2129 = vmatpush1.bf16.msra.mxu0 %v1298
        %2130 = vmatprep.subr.bf16.mxu0 %v1301
        %2131 = vmatpush1.bf16.msra.mxu0 %v1300
        %2132 = vmatprep.subr.bf16.mxu0 %v1303
        %2133 = vmatpush1.bf16.msra.mxu0 %v1302
        %2134 = vmatprep.subr.bf16.mxu0 %v1305
        %2135 = vmatpush1.bf16.msra.mxu0 %v1304
        %2136 = vmatprep.mubr.bf16.mxu0 %v1874
        %2137 = vmatmul.mubr.bf16.gmra.mrb[0].mxu0 %v1873
        %v2138 = vpop.f32.mrb[0].mxu0
        %v2139 = vadd.f32 %v2078, %v2138
        %v2140 = vpop.f32.mrb[0].mxu0
        %v2141 = vadd.f32 %v2080, %v2140
        %v2142 = vpop.f32.mrb[0].mxu0
        %v2143 = vadd.f32 %v2082, %v2142
        %v2144 = vpop.f32.mrb[0].mxu0
        %v2145 = vadd.f32 %v2084, %v2144
        %2146 = vmatprep.mubr.bf16.mxu0 %v1883
        %2147 = vmatmul.mubr.bf16.gmra.mrb[0].mxu0 %v1882
        %v2148 = vpop.f32.mrb[0].mxu0
        %v2149 = vadd.f32 %v2088, %v2148
        %v2150 = vpop.f32.mrb[0].mxu0
        %v2151 = vadd.f32 %v2090, %v2150
        %v2152 = vpop.f32.mrb[0].mxu0
        %v2153 = vadd.f32 %v2092, %v2152
        %v2154 = vpop.f32.mrb[0].mxu0
        %v2155 = vadd.f32 %v2094, %v2154
        %2156 = vmatprep.mubr.bf16.mxu0 %v1892
        %2157 = vmatmul.mubr.bf16.gmra.mrb[0].mxu0 %v1891
        %v2158 = vpop.f32.mrb[0].mxu0
        %v2159 = vadd.f32 %v2098, %v2158
        %v2160 = vpop.f32.mrb[0].mxu0
        %v2161 = vadd.f32 %v2100, %v2160
        %v2162 = vpop.f32.mrb[0].mxu0
        %v2163 = vpop.f32.mrb[0].mxu0
        %2164 = vdwg.mxu0
        %2165 = vmatprep.subr.bf16.mxu0 %v1307
        %2166 = vmatpush1.bf16.msra.mxu0 %v1306
        %2167 = vmatprep.subr.bf16.mxu0 %v1309
        %2168 = vmatpush1.bf16.msra.mxu0 %v1308
        %2169 = vmatprep.subr.bf16.mxu0 %v1311
        %2170 = vmatpush1.bf16.msra.mxu0 %v1310
        %2171 = vmatprep.subr.bf16.mxu0 %v1313
        %2172 = vmatpush1.bf16.msra.mxu0 %v1312
        %2173 = vmatprep.subr.bf16.mxu0 %v1315
        %2174 = vmatpush1.bf16.msra.mxu0 %v1314
        %2175 = vmatprep.subr.bf16.mxu0 %v1317
        %2176 = vmatpush1.bf16.msra.mxu0 %v1316
        %2177 = vmatprep.subr.bf16.mxu0 %v1319
        %2178 = vmatpush1.bf16.msra.mxu0 %v1318
        %2179 = vmatprep.subr.bf16.mxu0 %v1321
        %2180 = vmatpush1.bf16.msra.mxu0 %v1320
        %2181 = vmatprep.subr.bf16.mxu0 0
        %2182 = vmatpush1.bf16.msra.mxu0 0
        %2183 = vmatprep.subr.bf16.mxu0 0
        %2184 = vmatpush1.bf16.msra.mxu0 0
        %2185 = vmatprep.subr.bf16.mxu0 0
        %2186 = vmatpush1.bf16.msra.mxu0 0
        %2187 = vmatprep.subr.bf16.mxu0 0
        %2188 = vmatpush1.bf16.msra.mxu0 0
        %2189 = vmatprep.subr.bf16.mxu0 0
        %2190 = vmatpush1.bf16.msra.mxu0 0
        %2191 = vmatprep.subr.bf16.mxu0 0
        %2192 = vmatpush1.bf16.msra.mxu0 0
        %2193 = vmatprep.subr.bf16.mxu0 0
        %2194 = vmatpush1.bf16.msra.mxu0 0
        %2195 = vmatprep.subr.bf16.mxu0 0
        %2196 = vmatpush1.bf16.msra.mxu0 0
        %2197 = vmatprep.mubr.bf16.mxu0 0
        %2198 = vmatmul.mubr.bf16.gmra.mrb[0].mxu0 %v1875
        %v2199 = vpop.f32.mrb[0].mxu0
        %v2200 = vadd.f32 %v2139, %v2199
        %v2201 = vpop.f32.mrb[0].mxu0
        %v2202 = vadd.f32 %v2141, %v2201
        %v2203 = vpop.f32.mrb[0].mxu0
        %v2204 = vadd.f32 %v2143, %v2203
        %v2205 = vpop.f32.mrb[0].mxu0
        %v2206 = vadd.f32 %v2145, %v2205
        %2207 = vmatprep.mubr.bf16.mxu0 0
        %2208 = vmatmul.mubr.bf16.gmra.mrb[0].mxu0 %v1884
        %v2209 = vpop.f32.mrb[0].mxu0
        %v2210 = vadd.f32 %v2149, %v2209
        %v2211 = vpop.f32.mrb[0].mxu0
        %v2212 = vadd.f32 %v2151, %v2211
        %v2213 = vpop.f32.mrb[0].mxu0
        %v2214 = vadd.f32 %v2153, %v2213
        %v2215 = vpop.f32.mrb[0].mxu0
        %v2216 = vadd.f32 %v2155, %v2215
        %2217 = vmatprep.mubr.bf16.mxu0 0
        %2218 = vmatmul.mubr.bf16.gmra.mrb[0].mxu0 %v1893
        %v2219 = vpop.f32.mrb[0].mxu0
        %v2220 = vadd.f32 %v2159, %v2219
        %v2221 = vpop.f32.mrb[0].mxu0
        %v2222 = vadd.f32 %v2161, %v2221
        %v2223 = vpop.f32.mrb[0].mxu0
        %v2224 = vpop.f32.mrb[0].mxu0
        %2225 = vdwg.mxu0
        %v2226 = vmax.f32 %v1745, %v2200
        %v2227 = vmax.f32 %v1747, %v2202
        %v2228 = vmax.f32 %v1749, %v2204
        %v2229 = vmax.f32 %v1751, %v2206
        %v2230 = vmax.f32 %v1755, %v2210
        %v2231 = vmax.f32 %v1757, %v2212
        %v2232 = vmax.f32 %v1759, %v2214
        %v2233 = vmax.f32 %v1761, %v2216
        %v2234 = vmax.f32 %v1765, %v2220
        %v2235 = vmax.f32 %v1767, %v2222
        %s2236 = scalar_lea.vmem %s422, 360 [#allocation2]
        %v2237 = vld [vmem:[%s2236] sm:$0xff]
        %v2238 = vld [vmem:[%s2236 + $0x8] sm:$0xff]
        %v2239 = vld [vmem:[%s2236 + $0x10] sm:$0xff]
        %v2240 = vld [vmem:[%s2236 + $0x18] sm:$0xff]
        %v2241 = vld [vmem:[%s2236 + $0x20] sm:$0xf]
        %v2242 = vld [vmem:[%s2236 + $0x24] sm:$0xff]
        %v2243 = vld [vmem:[%s2236 + $0x2c] sm:$0xff]
        %v2244 = vld [vmem:[%s2236 + $0x34] sm:$0xff]
        %v2245 = vld [vmem:[%s2236 + $0x3c] sm:$0xff]
        %v2246 = vld [vmem:[%s2236 + $0x44] sm:$0xf]
        %v2247 = vld [vmem:[%s2236 + $0x48] sm:$0xff]
        %v2248 = vld [vmem:[%s2236 + $0x50] sm:$0xff]
        %v2249 = vld [vmem:[%s2236 + $0x58] sm:$0xff]
        %v2250 = vld [vmem:[%s2236 + $0x60] sm:$0xff]
        %v2251 = vld [vmem:[%s2236 + $0x68] sm:$0xf]
        %v2252 = vld [vmem:[%s2236 + $0x6c] sm:$0xff]
        %v2253 = vld [vmem:[%s2236 + $0x74] sm:$0xff]
        %v2254 = vld [vmem:[%s2236 + $0x7c] sm:$0xff]
        %v2255 = vld [vmem:[%s2236 + $0x84] sm:$0xff]
        %v2256 = vld [vmem:[%s2236 + $0x8c] sm:$0xf]
        %v2257 = vld [vmem:[%s2236 + $0x90] sm:$0x33]
        %v2258 = vld [vmem:[%s2236 + $0x98] sm:$0x33]
        %v2259 = vld [vmem:[%s2236 + $0xa0] sm:$0x33]
        %v2260 = vld [vmem:[%s2236 + $0xa8] sm:$0x33]
        %v2261 = vld [vmem:[%s2236 + $0xb0] sm:$0x3]
        %v2287 = vunpack.c.l.b16 %v2237
        %v2288 = vunpack.c.h.b16 %v2237
        %v2289 = vunpack.c.l.b16 %v2238
        %v2290 = vunpack.c.h.b16 %v2238
        %v2291 = vunpack.c.l.b16 %v2239
        %v2292 = vunpack.c.h.b16 %v2239
        %v2293 = vunpack.c.l.b16 %v2240
        %v2294 = vunpack.c.h.b16 %v2240
        %v2295 = vunpack.c.l.b16 %v2241
        %v2296 = vunpack.c.l.b16 %v2242
        %v2297 = vunpack.c.h.b16 %v2242
        %v2298 = vunpack.c.l.b16 %v2243
        %v2299 = vunpack.c.h.b16 %v2243
        %v2300 = vunpack.c.l.b16 %v2244
        %v2301 = vunpack.c.h.b16 %v2244
        %v2302 = vunpack.c.l.b16 %v2245
        %v2303 = vunpack.c.h.b16 %v2245
        %v2304 = vunpack.c.l.b16 %v2246
        %v2305 = vunpack.c.l.b16 %v2247
        %v2306 = vunpack.c.h.b16 %v2247
        %v2307 = vunpack.c.l.b16 %v2248
        %v2308 = vunpack.c.h.b16 %v2248
        %v2309 = vunpack.c.l.b16 %v2249
        %v2310 = vunpack.c.h.b16 %v2249
        %v2311 = vunpack.c.l.b16 %v2250
        %v2312 = vunpack.c.h.b16 %v2250
        %v2313 = vunpack.c.l.b16 %v2251
        %v2314 = vunpack.c.l.b16 %v2252
        %v2315 = vunpack.c.h.b16 %v2252
        %v2316 = vunpack.c.l.b16 %v2253
        %v2317 = vunpack.c.h.b16 %v2253
        %v2318 = vunpack.c.l.b16 %v2254
        %v2319 = vunpack.c.h.b16 %v2254
        %v2320 = vunpack.c.l.b16 %v2255
        %v2321 = vunpack.c.h.b16 %v2255
        %v2322 = vunpack.c.l.b16 %v2256
        %v2323 = vunpack.c.l.b16 %v2257
        %v2324 = vunpack.c.h.b16 %v2257
        %v2325 = vunpack.c.l.b16 %v2258
        %v2326 = vunpack.c.h.b16 %v2258
        %v2327 = vunpack.c.l.b16 %v2259
        %v2328 = vunpack.c.h.b16 %v2259
        %v2329 = vunpack.c.l.b16 %v2260
        %v2330 = vunpack.c.h.b16 %v2260
        %v2331 = vunpack.c.l.b16 %v2261
        %v2332 = vpack.c.b16 %v2296, %v2287
        %v2333 = vpack.c.b16 %v2297, %v2288
        %v2334 = vpack.c.b16 %v2298, %v2289
        %v2335 = vpack.c.b16 %v2299, %v2290
        %v2336 = vpack.c.b16 %v2300, %v2291
        %v2337 = vpack.c.b16 %v2301, %v2292
        %v2338 = vpack.c.b16 %v2302, %v2293
        %v2339 = vpack.c.b16 %v2303, %v2294
        %v2340 = vpack.c.b16 %v2304, %v2295
        %v2341 = vpack.c.b16 %v2314, %v2305
        %v2342 = vpack.c.b16 %v2315, %v2306
        %v2343 = vpack.c.b16 %v2316, %v2307
        %v2344 = vpack.c.b16 %v2317, %v2308
        %v2345 = vpack.c.b16 %v2318, %v2309
        %v2346 = vpack.c.b16 %v2319, %v2310
        %v2347 = vpack.c.b16 %v2320, %v2311
        %v2348 = vpack.c.b16 %v2321, %v2312
        %v2349 = vpack.c.b16 %v2322, %v2313
        %v2350 = vpack.c.b16 %v2323, %v2323
        %v2351 = vpack.c.b16 %v2324, %v2324
        %v2352 = vpack.c.b16 %v2325, %v2325
        %v2353 = vpack.c.b16 %v2326, %v2326
        %v2354 = vpack.c.b16 %v2327, %v2327
        %v2355 = vpack.c.b16 %v2328, %v2328
        %v2356 = vpack.c.b16 %v2329, %v2329
        %v2357 = vpack.c.b16 %v2330, %v2330
        %v2358 = vpack.c.b16 %v2331, %v2331
        %2386 = vmatprep.subr.bf16.mxu0 %v1179
        %2387 = vmatpush1.bf16.msra.mxu0 %v1178
        %2388 = vmatprep.subr.bf16.mxu0 %v1181
        %2389 = vmatpush1.bf16.msra.mxu0 %v1180
        %2390 = vmatprep.subr.bf16.mxu0 %v1183
        %2391 = vmatpush1.bf16.msra.mxu0 %v1182
        %2392 = vmatprep.subr.bf16.mxu0 %v1185
        %2393 = vmatpush1.bf16.msra.mxu0 %v1184
        %2394 = vmatprep.subr.bf16.mxu0 %v1187
        %2395 = vmatpush1.bf16.msra.mxu0 %v1186
        %2396 = vmatprep.subr.bf16.mxu0 %v1189
        %2397 = vmatpush1.bf16.msra.mxu0 %v1188
        %2398 = vmatprep.subr.bf16.mxu0 %v1191
        %2399 = vmatpush1.bf16.msra.mxu0 %v1190
        %2400 = vmatprep.subr.bf16.mxu0 %v1193
        %2401 = vmatpush1.bf16.msra.mxu0 %v1192
        %2402 = vmatprep.subr.bf16.mxu0 %v1195
        %2403 = vmatpush1.bf16.msra.mxu0 %v1194
        %2404 = vmatprep.subr.bf16.mxu0 %v1197
        %2405 = vmatpush1.bf16.msra.mxu0 %v1196
        %2406 = vmatprep.subr.bf16.mxu0 %v1199
        %2407 = vmatpush1.bf16.msra.mxu0 %v1198
        %2408 = vmatprep.subr.bf16.mxu0 %v1201
        %2409 = vmatpush1.bf16.msra.mxu0 %v1200
        %2410 = vmatprep.subr.bf16.mxu0 %v1203
        %2411 = vmatpush1.bf16.msra.mxu0 %v1202
        %2412 = vmatprep.subr.bf16.mxu0 %v1205
        %2413 = vmatpush1.bf16.msra.mxu0 %v1204
        %2414 = vmatprep.subr.bf16.mxu0 %v1207
        %2415 = vmatpush1.bf16.msra.mxu0 %v1206
        %2416 = vmatprep.subr.bf16.mxu0 %v1209
        %2417 = vmatpush1.bf16.msra.mxu0 %v1208
        %2418 = vmatprep.mubr.bf16.mxu0 %v2333
        %2419 = vmatmul.mubr.bf16.gmra.mrb[0].mxu0 %v2332
        %v2420 = vpop.f32.mrb[0].mxu0
        %v2421 = vadd.f32 0.0, %v2420
        %v2422 = vpop.f32.mrb[0].mxu0
        %v2423 = vadd.f32 0.0, %v2422
        %v2424 = vpop.f32.mrb[0].mxu0
        %v2425 = vadd.f32 0.0, %v2424
        %v2426 = vpop.f32.mrb[0].mxu0
        %v2427 = vadd.f32 0.0, %v2426
        %2428 = vmatprep.mubr.bf16.mxu0 %v2342
        %2429 = vmatmul.mubr.bf16.gmra.mrb[0].mxu0 %v2341
        %v2430 = vpop.f32.mrb[0].mxu0
        %v2431 = vadd.f32 0.0, %v2430
        %v2432 = vpop.f32.mrb[0].mxu0
        %v2433 = vadd.f32 0.0, %v2432
        %v2434 = vpop.f32.mrb[0].mxu0
        %v2435 = vadd.f32 0.0, %v2434
        %v2436 = vpop.f32.mrb[0].mxu0
        %v2437 = vadd.f32 0.0, %v2436
        %2438 = vmatprep.mubr.bf16.mxu0 %v2351
        %2439 = vmatmul.mubr.bf16.gmra.mrb[0].mxu0 %v2350
        %v2440 = vpop.f32.mrb[0].mxu0
        %v2441 = vadd.f32 0.0, %v2440
        %v2442 = vpop.f32.mrb[0].mxu0
        %v2443 = vadd.f32 0.0, %v2442
        %v2444 = vpop.f32.mrb[0].mxu0
        %v2445 = vpop.f32.mrb[0].mxu0
        %2446 = vdwg.mxu0
        %2447 = vmatprep.subr.bf16.mxu0 %v1211
        %2448 = vmatpush1.bf16.msra.mxu0 %v1210
        %2449 = vmatprep.subr.bf16.mxu0 %v1213
        %2450 = vmatpush1.bf16.msra.mxu0 %v1212
        %2451 = vmatprep.subr.bf16.mxu0 %v1215
        %2452 = vmatpush1.bf16.msra.mxu0 %v1214
        %2453 = vmatprep.subr.bf16.mxu0 %v1217
        %2454 = vmatpush1.bf16.msra.mxu0 %v1216
        %2455 = vmatprep.subr.bf16.mxu0 %v1219
        %2456 = vmatpush1.bf16.msra.mxu0 %v1218
        %2457 = vmatprep.subr.bf16.mxu0 %v1221
        %2458 = vmatpush1.bf16.msra.mxu0 %v1220
        %2459 = vmatprep.subr.bf16.mxu0 %v1223
        %2460 = vmatpush1.bf16.msra.mxu0 %v1222
        %2461 = vmatprep.subr.bf16.mxu0 %v1225
        %2462 = vmatpush1.bf16.msra.mxu0 %v1224
        %2463 = vmatprep.subr.bf16.mxu0 %v1227
        %2464 = vmatpush1.bf16.msra.mxu0 %v1226
        %2465 = vmatprep.subr.bf16.mxu0 %v1229
        %2466 = vmatpush1.bf16.msra.mxu0 %v1228
        %2467 = vmatprep.subr.bf16.mxu0 %v1231
        %2468 = vmatpush1.bf16.msra.mxu0 %v1230
        %2469 = vmatprep.subr.bf16.mxu0 %v1233
        %2470 = vmatpush1.bf16.msra.mxu0 %v1232
        %2471 = vmatprep.subr.bf16.mxu0 %v1235
        %2472 = vmatpush1.bf16.msra.mxu0 %v1234
        %2473 = vmatprep.subr.bf16.mxu0 %v1237
        %2474 = vmatpush1.bf16.msra.mxu0 %v1236
        %2475 = vmatprep.subr.bf16.mxu0 %v1239
        %2476 = vmatpush1.bf16.msra.mxu0 %v1238
        %2477 = vmatprep.subr.bf16.mxu0 %v1241
        %2478 = vmatpush1.bf16.msra.mxu0 %v1240
        %2479 = vmatprep.mubr.bf16.mxu0 %v2335
        %2480 = vmatmul.mubr.bf16.gmra.mrb[0].mxu0 %v2334
        %v2481 = vpop.f32.mrb[0].mxu0
        %v2482 = vadd.f32 %v2421, %v2481
        %v2483 = vpop.f32.mrb[0].mxu0
        %v2484 = vadd.f32 %v2423, %v2483
        %v2485 = vpop.f32.mrb[0].mxu0
        %v2486 = vadd.f32 %v2425, %v2485
        %v2487 = vpop.f32.mrb[0].mxu0
        %v2488 = vadd.f32 %v2427, %v2487
        %2489 = vmatprep.mubr.bf16.mxu0 %v2344
        %2490 = vmatmul.mubr.bf16.gmra.mrb[0].mxu0 %v2343
        %v2491 = vpop.f32.mrb[0].mxu0
        %v2492 = vadd.f32 %v2431, %v2491
        %v2493 = vpop.f32.mrb[0].mxu0
        %v2494 = vadd.f32 %v2433, %v2493
        %v2495 = vpop.f32.mrb[0].mxu0
        %v2496 = vadd.f32 %v2435, %v2495
        %v2497 = vpop.f32.mrb[0].mxu0
        %v2498 = vadd.f32 %v2437, %v2497
        %2499 = vmatprep.mubr.bf16.mxu0 %v2353
        %2500 = vmatmul.mubr.bf16.gmra.mrb[0].mxu0 %v2352
        %v2501 = vpop.f32.mrb[0].mxu0
        %v2502 = vadd.f32 %v2441, %v2501
        %v2503 = vpop.f32.mrb[0].mxu0
        %v2504 = vadd.f32 %v2443, %v2503
        %v2505 = vpop.f32.mrb[0].mxu0
        %v2506 = vpop.f32.mrb[0].mxu0
        %2507 = vdwg.mxu0
        %2508 = vmatprep.subr.bf16.mxu0 %v1243
        %2509 = vmatpush1.bf16.msra.mxu0 %v1242
        %2510 = vmatprep.subr.bf16.mxu0 %v1245
        %2511 = vmatpush1.bf16.msra.mxu0 %v1244
        %2512 = vmatprep.subr.bf16.mxu0 %v1247
        %2513 = vmatpush1.bf16.msra.mxu0 %v1246
        %2514 = vmatprep.subr.bf16.mxu0 %v1249
        %2515 = vmatpush1.bf16.msra.mxu0 %v1248
        %2516 = vmatprep.subr.bf16.mxu0 %v1251
        %2517 = vmatpush1.bf16.msra.mxu0 %v1250
        %2518 = vmatprep.subr.bf16.mxu0 %v1253
        %2519 = vmatpush1.bf16.msra.mxu0 %v1252
        %2520 = vmatprep.subr.bf16.mxu0 %v1255
        %2521 = vmatpush1.bf16.msra.mxu0 %v1254
        %2522 = vmatprep.subr.bf16.mxu0 %v1257
        %2523 = vmatpush1.bf16.msra.mxu0 %v1256
        %2524 = vmatprep.subr.bf16.mxu0 %v1259
        %2525 = vmatpush1.bf16.msra.mxu0 %v1258
        %2526 = vmatprep.subr.bf16.mxu0 %v1261
        %2527 = vmatpush1.bf16.msra.mxu0 %v1260
        %2528 = vmatprep.subr.bf16.mxu0 %v1263
        %2529 = vmatpush1.bf16.msra.mxu0 %v1262
        %2530 = vmatprep.subr.bf16.mxu0 %v1265
        %2531 = vmatpush1.bf16.msra.mxu0 %v1264
        %2532 = vmatprep.subr.bf16.mxu0 %v1267
        %2533 = vmatpush1.bf16.msra.mxu0 %v1266
        %2534 = vmatprep.subr.bf16.mxu0 %v1269
        %2535 = vmatpush1.bf16.msra.mxu0 %v1268
        %2536 = vmatprep.subr.bf16.mxu0 %v1271
        %2537 = vmatpush1.bf16.msra.mxu0 %v1270
        %2538 = vmatprep.subr.bf16.mxu0 %v1273
        %2539 = vmatpush1.bf16.msra.mxu0 %v1272
        %2540 = vmatprep.mubr.bf16.mxu0 %v2337
        %2541 = vmatmul.mubr.bf16.gmra.mrb[0].mxu0 %v2336
        %v2542 = vpop.f32.mrb[0].mxu0
        %v2543 = vadd.f32 %v2482, %v2542
        %v2544 = vpop.f32.mrb[0].mxu0
        %v2545 = vadd.f32 %v2484, %v2544
        %v2546 = vpop.f32.mrb[0].mxu0
        %v2547 = vadd.f32 %v2486, %v2546
        %v2548 = vpop.f32.mrb[0].mxu0
        %v2549 = vadd.f32 %v2488, %v2548
        %2550 = vmatprep.mubr.bf16.mxu0 %v2346
        %2551 = vmatmul.mubr.bf16.gmra.mrb[0].mxu0 %v2345
        %v2552 = vpop.f32.mrb[0].mxu0
        %v2553 = vadd.f32 %v2492, %v2552
        %v2554 = vpop.f32.mrb[0].mxu0
        %v2555 = vadd.f32 %v2494, %v2554
        %v2556 = vpop.f32.mrb[0].mxu0
        %v2557 = vadd.f32 %v2496, %v2556
        %v2558 = vpop.f32.mrb[0].mxu0
        %v2559 = vadd.f32 %v2498, %v2558
        %2560 = vmatprep.mubr.bf16.mxu0 %v2355
        %2561 = vmatmul.mubr.bf16.gmra.mrb[0].mxu0 %v2354
        %v2562 = vpop.f32.mrb[0].mxu0
        %v2563 = vadd.f32 %v2502, %v2562
        %v2564 = vpop.f32.mrb[0].mxu0
        %v2565 = vadd.f32 %v2504, %v2564
        %v2566 = vpop.f32.mrb[0].mxu0
        %v2567 = vpop.f32.mrb[0].mxu0
        %2568 = vdwg.mxu0
        %2569 = vmatprep.subr.bf16.mxu0 %v1275
        %2570 = vmatpush1.bf16.msra.mxu0 %v1274
        %2571 = vmatprep.subr.bf16.mxu0 %v1277
        %2572 = vmatpush1.bf16.msra.mxu0 %v1276
        %2573 = vmatprep.subr.bf16.mxu0 %v1279
        %2574 = vmatpush1.bf16.msra.mxu0 %v1278
        %2575 = vmatprep.subr.bf16.mxu0 %v1281
        %2576 = vmatpush1.bf16.msra.mxu0 %v1280
        %2577 = vmatprep.subr.bf16.mxu0 %v1283
        %2578 = vmatpush1.bf16.msra.mxu0 %v1282
        %2579 = vmatprep.subr.bf16.mxu0 %v1285
        %2580 = vmatpush1.bf16.msra.mxu0 %v1284
        %2581 = vmatprep.subr.bf16.mxu0 %v1287
        %2582 = vmatpush1.bf16.msra.mxu0 %v1286
        %2583 = vmatprep.subr.bf16.mxu0 %v1289
        %2584 = vmatpush1.bf16.msra.mxu0 %v1288
        %2585 = vmatprep.subr.bf16.mxu0 %v1291
        %2586 = vmatpush1.bf16.msra.mxu0 %v1290
        %2587 = vmatprep.subr.bf16.mxu0 %v1293
        %2588 = vmatpush1.bf16.msra.mxu0 %v1292
        %2589 = vmatprep.subr.bf16.mxu0 %v1295
        %2590 = vmatpush1.bf16.msra.mxu0 %v1294
        %2591 = vmatprep.subr.bf16.mxu0 %v1297
        %2592 = vmatpush1.bf16.msra.mxu0 %v1296
        %2593 = vmatprep.subr.bf16.mxu0 %v1299
        %2594 = vmatpush1.bf16.msra.mxu0 %v1298
        %2595 = vmatprep.subr.bf16.mxu0 %v1301
        %2596 = vmatpush1.bf16.msra.mxu0 %v1300
        %2597 = vmatprep.subr.bf16.mxu0 %v1303
        %2598 = vmatpush1.bf16.msra.mxu0 %v1302
        %2599 = vmatprep.subr.bf16.mxu0 %v1305
        %2600 = vmatpush1.bf16.msra.mxu0 %v1304
        %2601 = vmatprep.mubr.bf16.mxu0 %v2339
        %2602 = vmatmul.mubr.bf16.gmra.mrb[0].mxu0 %v2338
        %v2603 = vpop.f32.mrb[0].mxu0
        %v2604 = vadd.f32 %v2543, %v2603
        %v2605 = vpop.f32.mrb[0].mxu0
        %v2606 = vadd.f32 %v2545, %v2605
        %v2607 = vpop.f32.mrb[0].mxu0
        %v2608 = vadd.f32 %v2547, %v2607
        %v2609 = vpop.f32.mrb[0].mxu0
        %v2610 = vadd.f32 %v2549, %v2609
        %2611 = vmatprep.mubr.bf16.mxu0 %v2348
        %2612 = vmatmul.mubr.bf16.gmra.mrb[0].mxu0 %v2347
        %v2613 = vpop.f32.mrb[0].mxu0
        %v2614 = vadd.f32 %v2553, %v2613
        %v2615 = vpop.f32.mrb[0].mxu0
        %v2616 = vadd.f32 %v2555, %v2615
        %v2617 = vpop.f32.mrb[0].mxu0
        %v2618 = vadd.f32 %v2557, %v2617
        %v2619 = vpop.f32.mrb[0].mxu0
        %v2620 = vadd.f32 %v2559, %v2619
        %2621 = vmatprep.mubr.bf16.mxu0 %v2357
        %2622 = vmatmul.mubr.bf16.gmra.mrb[0].mxu0 %v2356
        %v2623 = vpop.f32.mrb[0].mxu0
        %v2624 = vadd.f32 %v2563, %v2623
        %v2625 = vpop.f32.mrb[0].mxu0
        %v2626 = vadd.f32 %v2565, %v2625
        %v2627 = vpop.f32.mrb[0].mxu0
        %v2628 = vpop.f32.mrb[0].mxu0
        %2629 = vdwg.mxu0
        %2630 = vmatprep.subr.bf16.mxu0 %v1307
        %2631 = vmatpush1.bf16.msra.mxu0 %v1306
        %2632 = vmatprep.subr.bf16.mxu0 %v1309
        %2633 = vmatpush1.bf16.msra.mxu0 %v1308
        %2634 = vmatprep.subr.bf16.mxu0 %v1311
        %2635 = vmatpush1.bf16.msra.mxu0 %v1310
        %2636 = vmatprep.subr.bf16.mxu0 %v1313
        %2637 = vmatpush1.bf16.msra.mxu0 %v1312
        %2638 = vmatprep.subr.bf16.mxu0 %v1315
        %2639 = vmatpush1.bf16.msra.mxu0 %v1314
        %2640 = vmatprep.subr.bf16.mxu0 %v1317
        %2641 = vmatpush1.bf16.msra.mxu0 %v1316
        %2642 = vmatprep.subr.bf16.mxu0 %v1319
        %2643 = vmatpush1.bf16.msra.mxu0 %v1318
        %2644 = vmatprep.subr.bf16.mxu0 %v1321
        %2645 = vmatpush1.bf16.msra.mxu0 %v1320
        %2646 = vmatprep.subr.bf16.mxu0 0
        %2647 = vmatpush1.bf16.msra.mxu0 0
        %2648 = vmatprep.subr.bf16.mxu0 0
        %2649 = vmatpush1.bf16.msra.mxu0 0
        %2650 = vmatprep.subr.bf16.mxu0 0
        %2651 = vmatpush1.bf16.msra.mxu0 0
        %2652 = vmatprep.subr.bf16.mxu0 0
        %2653 = vmatpush1.bf16.msra.mxu0 0
        %2654 = vmatprep.subr.bf16.mxu0 0
        %2655 = vmatpush1.bf16.msra.mxu0 0
        %2656 = vmatprep.subr.bf16.mxu0 0
        %2657 = vmatpush1.bf16.msra.mxu0 0
        %2658 = vmatprep.subr.bf16.mxu0 0
        %2659 = vmatpush1.bf16.msra.mxu0 0
        %2660 = vmatprep.subr.bf16.mxu0 0
        %2661 = vmatpush1.bf16.msra.mxu0 0
        %2662 = vmatprep.mubr.bf16.mxu0 0
        %2663 = vmatmul.mubr.bf16.gmra.mrb[0].mxu0 %v2340
        %v2664 = vpop.f32.mrb[0].mxu0
        %v2665 = vadd.f32 %v2604, %v2664
        %v2666 = vpop.f32.mrb[0].mxu0
        %v2667 = vadd.f32 %v2606, %v2666
        %v2668 = vpop.f32.mrb[0].mxu0
        %v2669 = vadd.f32 %v2608, %v2668
        %v2670 = vpop.f32.mrb[0].mxu0
        %v2671 = vadd.f32 %v2610, %v2670
        %2672 = vmatprep.mubr.bf16.mxu0 0
        %2673 = vmatmul.mubr.bf16.gmra.mrb[0].mxu0 %v2349
        %v2674 = vpop.f32.mrb[0].mxu0
        %v2675 = vadd.f32 %v2614, %v2674
        %v2676 = vpop.f32.mrb[0].mxu0
        %v2677 = vadd.f32 %v2616, %v2676
        %v2678 = vpop.f32.mrb[0].mxu0
        %v2679 = vadd.f32 %v2618, %v2678
        %v2680 = vpop.f32.mrb[0].mxu0
        %v2681 = vadd.f32 %v2620, %v2680
        %2682 = vmatprep.mubr.bf16.mxu0 0
        %2683 = vmatmul.mubr.bf16.gmra.mrb[0].mxu0 %v2358
        %v2684 = vpop.f32.mrb[0].mxu0
        %v2685 = vadd.f32 %v2624, %v2684
        %v2686 = vpop.f32.mrb[0].mxu0
        %v2687 = vadd.f32 %v2626, %v2686
        %v2688 = vpop.f32.mrb[0].mxu0
        %v2689 = vpop.f32.mrb[0].mxu0
        %2690 = vdwg.mxu0
        %v2691 = vmax.f32 %v2226, %v2665
        %v2692 = vmax.f32 %v2227, %v2667
        %v2693 = vmax.f32 %v2228, %v2669
        %v2694 = vmax.f32 %v2229, %v2671
        %v2695 = vmax.f32 %v2230, %v2675
        %v2696 = vmax.f32 %v2231, %v2677
        %v2697 = vmax.f32 %v2232, %v2679
        %v2698 = vmax.f32 %v2233, %v2681
        %v2699 = vmax.f32 %v2234, %v2685
        %v2700 = vmax.f32 %v2235, %v2687
        %s2701 = scalar_lea.vmem %s422, 540 [#allocation2]
        %v2702 = vld [vmem:[%s2701] sm:$0xff]
        %v2703 = vld [vmem:[%s2701 + $0x8] sm:$0xff]
        %v2704 = vld [vmem:[%s2701 + $0x10] sm:$0xff]
        %v2705 = vld [vmem:[%s2701 + $0x18] sm:$0xff]
        %v2706 = vld [vmem:[%s2701 + $0x20] sm:$0xf]
        %v2707 = vld [vmem:[%s2701 + $0x24] sm:$0xff]
        %v2708 = vld [vmem:[%s2701 + $0x2c] sm:$0xff]
        %v2709 = vld [vmem:[%s2701 + $0x34] sm:$0xff]
        %v2710 = vld [vmem:[%s2701 + $0x3c] sm:$0xff]
        %v2711 = vld [vmem:[%s2701 + $0x44] sm:$0xf]
        %v2712 = vld [vmem:[%s2701 + $0x48] sm:$0xff]
        %v2713 = vld [vmem:[%s2701 + $0x50] sm:$0xff]
        %v2714 = vld [vmem:[%s2701 + $0x58] sm:$0xff]
        %v2715 = vld [vmem:[%s2701 + $0x60] sm:$0xff]
        %v2716 = vld [vmem:[%s2701 + $0x68] sm:$0xf]
        %v2717 = vld [vmem:[%s2701 + $0x6c] sm:$0xff]
        %v2718 = vld [vmem:[%s2701 + $0x74] sm:$0xff]
        %v2719 = vld [vmem:[%s2701 + $0x7c] sm:$0xff]
        %v2720 = vld [vmem:[%s2701 + $0x84] sm:$0xff]
        %v2721 = vld [vmem:[%s2701 + $0x8c] sm:$0xf]
        %v2722 = vld [vmem:[%s2701 + $0x90] sm:$0x33]
        %v2723 = vld [vmem:[%s2701 + $0x98] sm:$0x33]
        %v2724 = vld [vmem:[%s2701 + $0xa0] sm:$0x33]
        %v2725 = vld [vmem:[%s2701 + $0xa8] sm:$0x33]
        %v2726 = vld [vmem:[%s2701 + $0xb0] sm:$0x3]
        %v2752 = vunpack.c.l.b16 %v2702
        %v2753 = vunpack.c.h.b16 %v2702
        %v2754 = vunpack.c.l.b16 %v2703
        %v2755 = vunpack.c.h.b16 %v2703
        %v2756 = vunpack.c.l.b16 %v2704
        %v2757 = vunpack.c.h.b16 %v2704
        %v2758 = vunpack.c.l.b16 %v2705
        %v2759 = vunpack.c.h.b16 %v2705
        %v2760 = vunpack.c.l.b16 %v2706
        %v2761 = vunpack.c.l.b16 %v2707
        %v2762 = vunpack.c.h.b16 %v2707
        %v2763 = vunpack.c.l.b16 %v2708
        %v2764 = vunpack.c.h.b16 %v2708
        %v2765 = vunpack.c.l.b16 %v2709
        %v2766 = vunpack.c.h.b16 %v2709
        %v2767 = vunpack.c.l.b16 %v2710
        %v2768 = vunpack.c.h.b16 %v2710
        %v2769 = vunpack.c.l.b16 %v2711
        %v2770 = vunpack.c.l.b16 %v2712
        %v2771 = vunpack.c.h.b16 %v2712
        %v2772 = vunpack.c.l.b16 %v2713
        %v2773 = vunpack.c.h.b16 %v2713
        %v2774 = vunpack.c.l.b16 %v2714
        %v2775 = vunpack.c.h.b16 %v2714
        %v2776 = vunpack.c.l.b16 %v2715
        %v2777 = vunpack.c.h.b16 %v2715
        %v2778 = vunpack.c.l.b16 %v2716
        %v2779 = vunpack.c.l.b16 %v2717
        %v2780 = vunpack.c.h.b16 %v2717
        %v2781 = vunpack.c.l.b16 %v2718
        %v2782 = vunpack.c.h.b16 %v2718
        %v2783 = vunpack.c.l.b16 %v2719
        %v2784 = vunpack.c.h.b16 %v2719
        %v2785 = vunpack.c.l.b16 %v2720
        %v2786 = vunpack.c.h.b16 %v2720
        %v2787 = vunpack.c.l.b16 %v2721
        %v2788 = vunpack.c.l.b16 %v2722
        %v2789 = vunpack.c.h.b16 %v2722
        %v2790 = vunpack.c.l.b16 %v2723
        %v2791 = vunpack.c.h.b16 %v2723
        %v2792 = vunpack.c.l.b16 %v2724
        %v2793 = vunpack.c.h.b16 %v2724
        %v2794 = vunpack.c.l.b16 %v2725
        %v2795 = vunpack.c.h.b16 %v2725
        %v2796 = vunpack.c.l.b16 %v2726
        %v2797 = vpack.c.b16 %v2761, %v2752
        %v2798 = vpack.c.b16 %v2762, %v2753
        %v2799 = vpack.c.b16 %v2763, %v2754
        %v2800 = vpack.c.b16 %v2764, %v2755
        %v2801 = vpack.c.b16 %v2765, %v2756
        %v2802 = vpack.c.b16 %v2766, %v2757
        %v2803 = vpack.c.b16 %v2767, %v2758
        %v2804 = vpack.c.b16 %v2768, %v2759
        %v2805 = vpack.c.b16 %v2769, %v2760
        %v2806 = vpack.c.b16 %v2779, %v2770
        %v2807 = vpack.c.b16 %v2780, %v2771
        %v2808 = vpack.c.b16 %v2781, %v2772
        %v2809 = vpack.c.b16 %v2782, %v2773
        %v2810 = vpack.c.b16 %v2783, %v2774
        %v2811 = vpack.c.b16 %v2784, %v2775
        %v2812 = vpack.c.b16 %v2785, %v2776
        %v2813 = vpack.c.b16 %v2786, %v2777
        %v2814 = vpack.c.b16 %v2787, %v2778
        %v2815 = vpack.c.b16 %v2788, %v2788
        %v2816 = vpack.c.b16 %v2789, %v2789
        %v2817 = vpack.c.b16 %v2790, %v2790
        %v2818 = vpack.c.b16 %v2791, %v2791
        %v2819 = vpack.c.b16 %v2792, %v2792
        %v2820 = vpack.c.b16 %v2793, %v2793
        %v2821 = vpack.c.b16 %v2794, %v2794
        %v2822 = vpack.c.b16 %v2795, %v2795
        %v2823 = vpack.c.b16 %v2796, %v2796
        %2851 = vmatprep.subr.bf16.mxu0 %v1179
        %2852 = vmatpush1.bf16.msra.mxu0 %v1178
        %2853 = vmatprep.subr.bf16.mxu0 %v1181
        %2854 = vmatpush1.bf16.msra.mxu0 %v1180
        %2855 = vmatprep.subr.bf16.mxu0 %v1183
        %2856 = vmatpush1.bf16.msra.mxu0 %v1182
        %2857 = vmatprep.subr.bf16.mxu0 %v1185
        %2858 = vmatpush1.bf16.msra.mxu0 %v1184
        %2859 = vmatprep.subr.bf16.mxu0 %v1187
        %2860 = vmatpush1.bf16.msra.mxu0 %v1186
        %2861 = vmatprep.subr.bf16.mxu0 %v1189
        %2862 = vmatpush1.bf16.msra.mxu0 %v1188
        %2863 = vmatprep.subr.bf16.mxu0 %v1191
        %2864 = vmatpush1.bf16.msra.mxu0 %v1190
        %2865 = vmatprep.subr.bf16.mxu0 %v1193
        %2866 = vmatpush1.bf16.msra.mxu0 %v1192
        %2867 = vmatprep.subr.bf16.mxu0 %v1195
        %2868 = vmatpush1.bf16.msra.mxu0 %v1194
        %2869 = vmatprep.subr.bf16.mxu0 %v1197
        %2870 = vmatpush1.bf16.msra.mxu0 %v1196
        %2871 = vmatprep.subr.bf16.mxu0 %v1199
        %2872 = vmatpush1.bf16.msra.mxu0 %v1198
        %2873 = vmatprep.subr.bf16.mxu0 %v1201
        %2874 = vmatpush1.bf16.msra.mxu0 %v1200
        %2875 = vmatprep.subr.bf16.mxu0 %v1203
        %2876 = vmatpush1.bf16.msra.mxu0 %v1202
        %2877 = vmatprep.subr.bf16.mxu0 %v1205
        %2878 = vmatpush1.bf16.msra.mxu0 %v1204
        %2879 = vmatprep.subr.bf16.mxu0 %v1207
        %2880 = vmatpush1.bf16.msra.mxu0 %v1206
        %2881 = vmatprep.subr.bf16.mxu0 %v1209
        %2882 = vmatpush1.bf16.msra.mxu0 %v1208
        %2883 = vmatprep.mubr.bf16.mxu0 %v2798
        %2884 = vmatmul.mubr.bf16.gmra.mrb[0].mxu0 %v2797
        %v2885 = vpop.f32.mrb[0].mxu0
        %v2886 = vadd.f32 0.0, %v2885
        %v2887 = vpop.f32.mrb[0].mxu0
        %v2888 = vadd.f32 0.0, %v2887
        %v2889 = vpop.f32.mrb[0].mxu0
        %v2890 = vadd.f32 0.0, %v2889
        %v2891 = vpop.f32.mrb[0].mxu0
        %v2892 = vadd.f32 0.0, %v2891
        %2893 = vmatprep.mubr.bf16.mxu0 %v2807
        %2894 = vmatmul.mubr.bf16.gmra.mrb[0].mxu0 %v2806
        %v2895 = vpop.f32.mrb[0].mxu0
        %v2896 = vadd.f32 0.0, %v2895
        %v2897 = vpop.f32.mrb[0].mxu0
        %v2898 = vadd.f32 0.0, %v2897
        %v2899 = vpop.f32.mrb[0].mxu0
        %v2900 = vadd.f32 0.0, %v2899
        %v2901 = vpop.f32.mrb[0].mxu0
        %v2902 = vadd.f32 0.0, %v2901
        %2903 = vmatprep.mubr.bf16.mxu0 %v2816
        %2904 = vmatmul.mubr.bf16.gmra.mrb[0].mxu0 %v2815
        %v2905 = vpop.f32.mrb[0].mxu0
        %v2906 = vadd.f32 0.0, %v2905
        %v2907 = vpop.f32.mrb[0].mxu0
        %v2908 = vadd.f32 0.0, %v2907
        %v2909 = vpop.f32.mrb[0].mxu0
        %v2910 = vpop.f32.mrb[0].mxu0
        %2911 = vdwg.mxu0
        %2912 = vmatprep.subr.bf16.mxu0 %v1211
        %2913 = vmatpush1.bf16.msra.mxu0 %v1210
        %2914 = vmatprep.subr.bf16.mxu0 %v1213
        %2915 = vmatpush1.bf16.msra.mxu0 %v1212
        %2916 = vmatprep.subr.bf16.mxu0 %v1215
        %2917 = vmatpush1.bf16.msra.mxu0 %v1214
        %2918 = vmatprep.subr.bf16.mxu0 %v1217
        %2919 = vmatpush1.bf16.msra.mxu0 %v1216
        %2920 = vmatprep.subr.bf16.mxu0 %v1219
        %2921 = vmatpush1.bf16.msra.mxu0 %v1218
        %2922 = vmatprep.subr.bf16.mxu0 %v1221
        %2923 = vmatpush1.bf16.msra.mxu0 %v1220
        %2924 = vmatprep.subr.bf16.mxu0 %v1223
        %2925 = vmatpush1.bf16.msra.mxu0 %v1222
        %2926 = vmatprep.subr.bf16.mxu0 %v1225
        %2927 = vmatpush1.bf16.msra.mxu0 %v1224
        %2928 = vmatprep.subr.bf16.mxu0 %v1227
        %2929 = vmatpush1.bf16.msra.mxu0 %v1226
        %2930 = vmatprep.subr.bf16.mxu0 %v1229
        %2931 = vmatpush1.bf16.msra.mxu0 %v1228
        %2932 = vmatprep.subr.bf16.mxu0 %v1231
        %2933 = vmatpush1.bf16.msra.mxu0 %v1230
        %2934 = vmatprep.subr.bf16.mxu0 %v1233
        %2935 = vmatpush1.bf16.msra.mxu0 %v1232
        %2936 = vmatprep.subr.bf16.mxu0 %v1235
        %2937 = vmatpush1.bf16.msra.mxu0 %v1234
        %2938 = vmatprep.subr.bf16.mxu0 %v1237
        %2939 = vmatpush1.bf16.msra.mxu0 %v1236
        %2940 = vmatprep.subr.bf16.mxu0 %v1239
        %2941 = vmatpush1.bf16.msra.mxu0 %v1238
        %2942 = vmatprep.subr.bf16.mxu0 %v1241
        %2943 = vmatpush1.bf16.msra.mxu0 %v1240
        %2944 = vmatprep.mubr.bf16.mxu0 %v2800
        %2945 = vmatmul.mubr.bf16.gmra.mrb[0].mxu0 %v2799
        %v2946 = vpop.f32.mrb[0].mxu0
        %v2947 = vadd.f32 %v2886, %v2946
        %v2948 = vpop.f32.mrb[0].mxu0
        %v2949 = vadd.f32 %v2888, %v2948
        %v2950 = vpop.f32.mrb[0].mxu0
        %v2951 = vadd.f32 %v2890, %v2950
        %v2952 = vpop.f32.mrb[0].mxu0
        %v2953 = vadd.f32 %v2892, %v2952
        %2954 = vmatprep.mubr.bf16.mxu0 %v2809
        %2955 = vmatmul.mubr.bf16.gmra.mrb[0].mxu0 %v2808
        %v2956 = vpop.f32.mrb[0].mxu0
        %v2957 = vadd.f32 %v2896, %v2956
        %v2958 = vpop.f32.mrb[0].mxu0
        %v2959 = vadd.f32 %v2898, %v2958
        %v2960 = vpop.f32.mrb[0].mxu0
        %v2961 = vadd.f32 %v2900, %v2960
        %v2962 = vpop.f32.mrb[0].mxu0
        %v2963 = vadd.f32 %v2902, %v2962
        %2964 = vmatprep.mubr.bf16.mxu0 %v2818
        %2965 = vmatmul.mubr.bf16.gmra.mrb[0].mxu0 %v2817
        %v2966 = vpop.f32.mrb[0].mxu0
        %v2967 = vadd.f32 %v2906, %v2966
        %v2968 = vpop.f32.mrb[0].mxu0
        %v2969 = vadd.f32 %v2908, %v2968
        %v2970 = vpop.f32.mrb[0].mxu0
        %v2971 = vpop.f32.mrb[0].mxu0
        %2972 = vdwg.mxu0
        %2973 = vmatprep.subr.bf16.mxu0 %v1243
        %2974 = vmatpush1.bf16.msra.mxu0 %v1242
        %2975 = vmatprep.subr.bf16.mxu0 %v1245
        %2976 = vmatpush1.bf16.msra.mxu0 %v1244
        %2977 = vmatprep.subr.bf16.mxu0 %v1247
        %2978 = vmatpush1.bf16.msra.mxu0 %v1246
        %2979 = vmatprep.subr.bf16.mxu0 %v1249
        %2980 = vmatpush1.bf16.msra.mxu0 %v1248
        %2981 = vmatprep.subr.bf16.mxu0 %v1251
        %2982 = vmatpush1.bf16.msra.mxu0 %v1250
        %2983 = vmatprep.subr.bf16.mxu0 %v1253
        %2984 = vmatpush1.bf16.msra.mxu0 %v1252
        %2985 = vmatprep.subr.bf16.mxu0 %v1255
        %2986 = vmatpush1.bf16.msra.mxu0 %v1254
        %2987 = vmatprep.subr.bf16.mxu0 %v1257
        %2988 = vmatpush1.bf16.msra.mxu0 %v1256
        %2989 = vmatprep.subr.bf16.mxu0 %v1259
        %2990 = vmatpush1.bf16.msra.mxu0 %v1258
        %2991 = vmatprep.subr.bf16.mxu0 %v1261
        %2992 = vmatpush1.bf16.msra.mxu0 %v1260
        %2993 = vmatprep.subr.bf16.mxu0 %v1263
        %2994 = vmatpush1.bf16.msra.mxu0 %v1262
        %2995 = vmatprep.subr.bf16.mxu0 %v1265
        %2996 = vmatpush1.bf16.msra.mxu0 %v1264
        %2997 = vmatprep.subr.bf16.mxu0 %v1267
        %2998 = vmatpush1.bf16.msra.mxu0 %v1266
        %2999 = vmatprep.subr.bf16.mxu0 %v1269
        %3000 = vmatpush1.bf16.msra.mxu0 %v1268
        %3001 = vmatprep.subr.bf16.mxu0 %v1271
        %3002 = vmatpush1.bf16.msra.mxu0 %v1270
        %3003 = vmatprep.subr.bf16.mxu0 %v1273
        %3004 = vmatpush1.bf16.msra.mxu0 %v1272
        %3005 = vmatprep.mubr.bf16.mxu0 %v2802
        %3006 = vmatmul.mubr.bf16.gmra.mrb[0].mxu0 %v2801
        %v3007 = vpop.f32.mrb[0].mxu0
        %v3008 = vadd.f32 %v2947, %v3007
        %v3009 = vpop.f32.mrb[0].mxu0
        %v3010 = vadd.f32 %v2949, %v3009
        %v3011 = vpop.f32.mrb[0].mxu0
        %v3012 = vadd.f32 %v2951, %v3011
        %v3013 = vpop.f32.mrb[0].mxu0
        %v3014 = vadd.f32 %v2953, %v3013
        %3015 = vmatprep.mubr.bf16.mxu0 %v2811
        %3016 = vmatmul.mubr.bf16.gmra.mrb[0].mxu0 %v2810
        %v3017 = vpop.f32.mrb[0].mxu0
        %v3018 = vadd.f32 %v2957, %v3017
        %v3019 = vpop.f32.mrb[0].mxu0
        %v3020 = vadd.f32 %v2959, %v3019
        %v3021 = vpop.f32.mrb[0].mxu0
        %v3022 = vadd.f32 %v2961, %v3021
        %v3023 = vpop.f32.mrb[0].mxu0
        %v3024 = vadd.f32 %v2963, %v3023
        %3025 = vmatprep.mubr.bf16.mxu0 %v2820
        %3026 = vmatmul.mubr.bf16.gmra.mrb[0].mxu0 %v2819
        %v3027 = vpop.f32.mrb[0].mxu0
        %v3028 = vadd.f32 %v2967, %v3027
        %v3029 = vpop.f32.mrb[0].mxu0
        %v3030 = vadd.f32 %v2969, %v3029
        %v3031 = vpop.f32.mrb[0].mxu0
        %v3032 = vpop.f32.mrb[0].mxu0
        %3033 = vdwg.mxu0
        %3034 = vmatprep.subr.bf16.mxu0 %v1275
        %3035 = vmatpush1.bf16.msra.mxu0 %v1274
        %3036 = vmatprep.subr.bf16.mxu0 %v1277
        %3037 = vmatpush1.bf16.msra.mxu0 %v1276
        %3038 = vmatprep.subr.bf16.mxu0 %v1279
        %3039 = vmatpush1.bf16.msra.mxu0 %v1278
        %3040 = vmatprep.subr.bf16.mxu0 %v1281
        %3041 = vmatpush1.bf16.msra.mxu0 %v1280
        %3042 = vmatprep.subr.bf16.mxu0 %v1283
        %3043 = vmatpush1.bf16.msra.mxu0 %v1282
        %3044 = vmatprep.subr.bf16.mxu0 %v1285
        %3045 = vmatpush1.bf16.msra.mxu0 %v1284
        %3046 = vmatprep.subr.bf16.mxu0 %v1287
        %3047 = vmatpush1.bf16.msra.mxu0 %v1286
        %3048 = vmatprep.subr.bf16.mxu0 %v1289
        %3049 = vmatpush1.bf16.msra.mxu0 %v1288
        %3050 = vmatprep.subr.bf16.mxu0 %v1291
        %3051 = vmatpush1.bf16.msra.mxu0 %v1290
        %3052 = vmatprep.subr.bf16.mxu0 %v1293
        %3053 = vmatpush1.bf16.msra.mxu0 %v1292
        %3054 = vmatprep.subr.bf16.mxu0 %v1295
        %3055 = vmatpush1.bf16.msra.mxu0 %v1294
        %3056 = vmatprep.subr.bf16.mxu0 %v1297
        %3057 = vmatpush1.bf16.msra.mxu0 %v1296
        %3058 = vmatprep.subr.bf16.mxu0 %v1299
        %3059 = vmatpush1.bf16.msra.mxu0 %v1298
        %3060 = vmatprep.subr.bf16.mxu0 %v1301
        %3061 = vmatpush1.bf16.msra.mxu0 %v1300
        %3062 = vmatprep.subr.bf16.mxu0 %v1303
        %3063 = vmatpush1.bf16.msra.mxu0 %v1302
        %3064 = vmatprep.subr.bf16.mxu0 %v1305
        %3065 = vmatpush1.bf16.msra.mxu0 %v1304
        %3066 = vmatprep.mubr.bf16.mxu0 %v2804
        %3067 = vmatmul.mubr.bf16.gmra.mrb[0].mxu0 %v2803
        %v3068 = vpop.f32.mrb[0].mxu0
        %v3069 = vadd.f32 %v3008, %v3068
        %v3070 = vpop.f32.mrb[0].mxu0
        %v3071 = vadd.f32 %v3010, %v3070
        %v3072 = vpop.f32.mrb[0].mxu0
        %v3073 = vadd.f32 %v3012, %v3072
        %v3074 = vpop.f32.mrb[0].mxu0
        %v3075 = vadd.f32 %v3014, %v3074
        %3076 = vmatprep.mubr.bf16.mxu0 %v2813
        %3077 = vmatmul.mubr.bf16.gmra.mrb[0].mxu0 %v2812
        %v3078 = vpop.f32.mrb[0].mxu0
        %v3079 = vadd.f32 %v3018, %v3078
        %v3080 = vpop.f32.mrb[0].mxu0
        %v3081 = vadd.f32 %v3020, %v3080
        %v3082 = vpop.f32.mrb[0].mxu0
        %v3083 = vadd.f32 %v3022, %v3082
        %v3084 = vpop.f32.mrb[0].mxu0
        %v3085 = vadd.f32 %v3024, %v3084
        %3086 = vmatprep.mubr.bf16.mxu0 %v2822
        %3087 = vmatmul.mubr.bf16.gmra.mrb[0].mxu0 %v2821
        %v3088 = vpop.f32.mrb[0].mxu0
        %v3089 = vadd.f32 %v3028, %v3088
        %v3090 = vpop.f32.mrb[0].mxu0
        %v3091 = vadd.f32 %v3030, %v3090
        %v3092 = vpop.f32.mrb[0].mxu0
        %v3093 = vpop.f32.mrb[0].mxu0
        %3094 = vdwg.mxu0
        %3095 = vmatprep.subr.bf16.mxu0 %v1307
        %3096 = vmatpush1.bf16.msra.mxu0 %v1306
        %3097 = vmatprep.subr.bf16.mxu0 %v1309
        %3098 = vmatpush1.bf16.msra.mxu0 %v1308
        %3099 = vmatprep.subr.bf16.mxu0 %v1311
        %3100 = vmatpush1.bf16.msra.mxu0 %v1310
        %3101 = vmatprep.subr.bf16.mxu0 %v1313
        %3102 = vmatpush1.bf16.msra.mxu0 %v1312
        %3103 = vmatprep.subr.bf16.mxu0 %v1315
        %3104 = vmatpush1.bf16.msra.mxu0 %v1314
        %3105 = vmatprep.subr.bf16.mxu0 %v1317
        %3106 = vmatpush1.bf16.msra.mxu0 %v1316
        %3107 = vmatprep.subr.bf16.mxu0 %v1319
        %3108 = vmatpush1.bf16.msra.mxu0 %v1318
        %3109 = vmatprep.subr.bf16.mxu0 %v1321
        %3110 = vmatpush1.bf16.msra.mxu0 %v1320
        %3111 = vmatprep.subr.bf16.mxu0 0
        %3112 = vmatpush1.bf16.msra.mxu0 0
        %3113 = vmatprep.subr.bf16.mxu0 0
        %3114 = vmatpush1.bf16.msra.mxu0 0
        %3115 = vmatprep.subr.bf16.mxu0 0
        %3116 = vmatpush1.bf16.msra.mxu0 0
        %3117 = vmatprep.subr.bf16.mxu0 0
        %3118 = vmatpush1.bf16.msra.mxu0 0
        %3119 = vmatprep.subr.bf16.mxu0 0
        %3120 = vmatpush1.bf16.msra.mxu0 0
        %3121 = vmatprep.subr.bf16.mxu0 0
        %3122 = vmatpush1.bf16.msra.mxu0 0
        %3123 = vmatprep.subr.bf16.mxu0 0
        %3124 = vmatpush1.bf16.msra.mxu0 0
        %3125 = vmatprep.subr.bf16.mxu0 0
        %3126 = vmatpush1.bf16.msra.mxu0 0
        %3127 = vmatprep.mubr.bf16.mxu0 0
        %3128 = vmatmul.mubr.bf16.gmra.mrb[0].mxu0 %v2805
        %v3129 = vpop.f32.mrb[0].mxu0
        %v3130 = vadd.f32 %v3069, %v3129
        %v3131 = vpop.f32.mrb[0].mxu0
        %v3132 = vadd.f32 %v3071, %v3131
        %v3133 = vpop.f32.mrb[0].mxu0
        %v3134 = vadd.f32 %v3073, %v3133
        %v3135 = vpop.f32.mrb[0].mxu0
        %v3136 = vadd.f32 %v3075, %v3135
        %3137 = vmatprep.mubr.bf16.mxu0 0
        %3138 = vmatmul.mubr.bf16.gmra.mrb[0].mxu0 %v2814
        %v3139 = vpop.f32.mrb[0].mxu0
        %v3140 = vadd.f32 %v3079, %v3139
        %v3141 = vpop.f32.mrb[0].mxu0
        %v3142 = vadd.f32 %v3081, %v3141
        %v3143 = vpop.f32.mrb[0].mxu0
        %v3144 = vadd.f32 %v3083, %v3143
        %v3145 = vpop.f32.mrb[0].mxu0
        %v3146 = vadd.f32 %v3085, %v3145
        %3147 = vmatprep.mubr.bf16.mxu0 0
        %3148 = vmatmul.mubr.bf16.gmra.mrb[0].mxu0 %v2823
        %v3149 = vpop.f32.mrb[0].mxu0
        %v3150 = vadd.f32 %v3089, %v3149
        %v3151 = vpop.f32.mrb[0].mxu0
        %v3152 = vadd.f32 %v3091, %v3151
        %v3153 = vpop.f32.mrb[0].mxu0
        %v3154 = vpop.f32.mrb[0].mxu0
        %3155 = vdwg.mxu0
        %v3156 = vmax.f32 %v2691, %v3130
        %v3157 = vmax.f32 %v2692, %v3132
        %v3158 = vmax.f32 %v2693, %v3134
        %v3159 = vmax.f32 %v2694, %v3136
        %v3160 = vmax.f32 %v2695, %v3140
        %v3161 = vmax.f32 %v2696, %v3142
        %v3162 = vmax.f32 %v2697, %v3144
        %v3163 = vmax.f32 %v2698, %v3146
        %v3164 = vmax.f32 %v2699, %v3150
        %v3165 = vmax.f32 %v2700, %v3152
        %v3166 = vld [vmem:[%s2] sm:$0x3]
        %v3168 = vlaneseq
        %v3169 = vshrl.u32 %v3168, 7
        %v3170 = vsub.s32 0, %v3169
        %v3171 = vrot.slane %v3166, %v3170
        %v3172 = vlaneseq
        %v3173 = vshrl.u32 %v3172, 7
        %v3174 = vsub.s32 1, %v3173
        %v3175 = vrot.slane %v3166, %v3174
        %v3178 = vadd.f32 %v3156, %v3171
        %v3179 = vadd.f32 %v3157, %v3175
        %v3180 = vadd.f32 %v3158, %v3171
        %v3181 = vadd.f32 %v3159, %v3175
        %v3182 = vadd.f32 %v3160, %v3171
        %v3183 = vadd.f32 %v3161, %v3175
        %v3184 = vadd.f32 %v3162, %v3171
        %v3185 = vadd.f32 %v3163, %v3175
        %v3186 = vadd.f32 %v3164, %v3171
        %v3187 = vadd.f32 %v3165, %v3175
        %vm3188 = vcmp.gt.f32.partialorder %v3178, 0.0
        %vm3189 = vcmp.gt.f32.partialorder %v3179, 0.0
        %vm3190 = vcmp.gt.f32.partialorder %v3180, 0.0
        %vm3191 = vcmp.gt.f32.partialorder %v3181, 0.0
        %vm3192 = vcmp.gt.f32.partialorder %v3182, 0.0
        %vm3193 = vcmp.gt.f32.partialorder %v3183, 0.0
        %vm3194 = vcmp.gt.f32.partialorder %v3184, 0.0
        %vm3195 = vcmp.gt.f32.partialorder %v3185, 0.0
        %vm3196 = vcmp.gt.f32.partialorder %v3186, 0.0
        %vm3197 = vcmp.gt.f32.partialorder %v3187, 0.0
        %v3198 = vmin.f32 %v3178, 0.0
        %v3199 = vmin.f32 %v3179, 0.0
        %v3200 = vmin.f32 %v3180, 0.0
        %v3201 = vmin.f32 %v3181, 0.0
        %v3202 = vmin.f32 %v3182, 0.0
        %v3203 = vmin.f32 %v3183, 0.0
        %v3204 = vmin.f32 %v3184, 0.0
        %v3205 = vmin.f32 %v3185, 0.0
        %v3206 = vmin.f32 %v3186, 0.0
        %v3207 = vmin.f32 %v3187, 0.0
        %v3208 = vmul.f32 %v3198, 1.442695
        %v3209 = vpow.pop %v3208
        %v3210 = vmul.f32 %v3199, 1.442695
        %v3211 = vpow.pop %v3210
        %v3212 = vmul.f32 %v3200, 1.442695
        %v3213 = vpow.pop %v3212
        %v3214 = vmul.f32 %v3201, 1.442695
        %v3215 = vpow.pop %v3214
        %v3216 = vmul.f32 %v3202, 1.442695
        %v3217 = vpow.pop %v3216
        %v3218 = vmul.f32 %v3203, 1.442695
        %v3219 = vpow.pop %v3218
        %v3220 = vmul.f32 %v3204, 1.442695
        %v3221 = vpow.pop %v3220
        %v3222 = vmul.f32 %v3205, 1.442695
        %v3223 = vpow.pop %v3222
        %v3224 = vmul.f32 %v3206, 1.442695
        %v3225 = vpow.pop %v3224
        %v3226 = vmul.f32 %v3207, 1.442695
        %v3227 = vpow.pop %v3226
        %v3228 = vsub.f32 %v3209, 1.0
        %v3229 = vsub.f32 %v3211, 1.0
        %v3230 = vsub.f32 %v3213, 1.0
        %v3231 = vsub.f32 %v3215, 1.0
        %v3232 = vsub.f32 %v3217, 1.0
        %v3233 = vsub.f32 %v3219, 1.0
        %v3234 = vsub.f32 %v3221, 1.0
        %v3235 = vsub.f32 %v3223, 1.0
        %v3236 = vsub.f32 %v3225, 1.0
        %v3237 = vsub.f32 %v3227, 1.0
        %v3238 = vsel %vm3188, %v3178, %v3228
        %v3239 = vsel %vm3189, %v3179, %v3229
        %v3240 = vsel %vm3190, %v3180, %v3230
        %v3241 = vsel %vm3191, %v3181, %v3231
        %v3242 = vsel %vm3192, %v3182, %v3232
        %v3243 = vsel %vm3193, %v3183, %v3233
        %v3244 = vsel %vm3194, %v3184, %v3234
        %v3245 = vsel %vm3195, %v3185, %v3235
        %v3246 = vsel %vm3196, %v3186, %v3236
        %v3247 = vsel %vm3197, %v3187, %v3237
        %v3248 = vld [vmem:[%s3] sm:$0x3]
        %v3250 = vlaneseq
        %v3251 = vshrl.u32 %v3250, 7
        %v3252 = vsub.s32 0, %v3251
        %v3253 = vrot.slane %v3248, %v3252
        %v3254 = vlaneseq
        %v3255 = vshrl.u32 %v3254, 7
        %v3256 = vsub.s32 1, %v3255
        %v3257 = vrot.slane %v3248, %v3256
        %v3260 = vmul.f32 %v3238, %v3253
        %v3261 = vmul.f32 %v3239, %v3257
        %v3262 = vmul.f32 %v3240, %v3253
        %v3263 = vmul.f32 %v3241, %v3257
        %v3264 = vmul.f32 %v3242, %v3253
        %v3265 = vmul.f32 %v3243, %v3257
        %v3266 = vmul.f32 %v3244, %v3253
        %v3267 = vmul.f32 %v3245, %v3257
        %v3268 = vmul.f32 %v3246, %v3253
        %v3269 = vmul.f32 %v3247, %v3257
        %v3270 = vld [vmem:[%s4] sm:$0x3]
        %v3272 = vlaneseq
        %v3273 = vshrl.u32 %v3272, 7
        %v3274 = vsub.s32 0, %v3273
        %v3275 = vrot.slane %v3270, %v3274
        %v3276 = vlaneseq
        %v3277 = vshrl.u32 %v3276, 7
        %v3278 = vsub.s32 1, %v3277
        %v3279 = vrot.slane %v3270, %v3278
        %v3282 = vadd.f32 %v3260, %v3275
        %v3283 = vadd.f32 %v3261, %v3279
        %v3284 = vadd.f32 %v3262, %v3275
        %v3285 = vadd.f32 %v3263, %v3279
        %v3286 = vadd.f32 %v3264, %v3275
        %v3287 = vadd.f32 %v3265, %v3279
        %v3288 = vadd.f32 %v3266, %v3275
        %v3289 = vadd.f32 %v3267, %v3279
        %v3290 = vadd.f32 %v3268, %v3275
        %v3291 = vadd.f32 %v3269, %v3279
        %v3292 = vpack.c.bf16 %v3284, %v3282
        %v3293 = vpack.c.bf16 %v3285, %v3283
        %v3294 = vpack.c.bf16 %v3288, %v3286
        %v3295 = vpack.c.bf16 %v3289, %v3287
        %v3296 = vpack.c.bf16 %v3290, %v3290
        %v3297 = vpack.c.bf16 %v3291, %v3291
        %v3304 = vunpack.c.l.b16 %v3292
        %v3305 = vunpack.c.l.b16 %v3293
        %v3306 = vunpack.c.h.b16 %v3292
        %v3307 = vunpack.c.h.b16 %v3293
        %v3308 = vunpack.c.l.b16 %v3294
        %v3309 = vunpack.c.l.b16 %v3295
        %v3310 = vunpack.c.h.b16 %v3294
        %v3311 = vunpack.c.h.b16 %v3295
        %v3312 = vunpack.c.l.b16 %v3296
        %v3313 = vunpack.c.l.b16 %v3297
        %v3314 = vpack.c.b16 %v3305, %v3304
        %v3315 = vpack.c.b16 %v3307, %v3306
        %v3316 = vpack.c.b16 %v3309, %v3308
        %v3317 = vpack.c.b16 %v3311, %v3310
        %v3318 = vpack.c.b16 %v3313, %v3312
        %3324 = vst [vmem:[%s451] sm:$0xff] %v3314
        %3325 = vst [vmem:[%s451 + $0x8] sm:$0xff] %v3315
        %3326 = vst [vmem:[%s451 + $0x10] sm:$0xff] %v3316
        %3327 = vst [vmem:[%s451 + $0x18] sm:$0xff] %v3317
        %3328 = vst [vmem:[%s451 + $0x20] sm:$0x33] %v3318
        %p3329 = scmp.lt.s32.totalorder %s16, 1
        %s3330 = scalar_select %p3329, %s16, 1
        %s3331 = smul.addr %s3330, 10
        %s3332 = smul.addr %s3331, 4
        %s3333 = scalar_lea.vmem %s5, %s3332
        // Predicated region
        $region67: #{gtsrb_forward.5} parent=61 // pred_check
          %p3334 = pneg %p144
        $region68: #{gtsrb_forward.5} parent=61 // pred_check_branch
          %3336 = sbr.rel (%p3334) target = $region70
        $region69: #{gtsrb_forward.5} parent=61 // pred_region
          _
        $region70: #{gtsrb_forward.5} parent=61 // pred_fallthru
          _
      $region62: #{gtsrb_forward.5} parent=5 // pred_fallthru
        _
      %p3337 = scmp.le.s32.totalorder 2, %s11
      // Predicated region
      $region71: #{gtsrb_forward.5} parent=5 // pred_check
        %p3338 = pneg %p3337
      $region72: #{gtsrb_forward.5} parent=5 // pred_check_branch
        %3340 = sbr.rel (%p3338) target = $region74
      $region73: #{gtsrb_forward.5} parent=5 // pred_region
        %s3341 = ssub.s32 %s11, 2
        // Predicated region
        $region75: #{gtsrb_forward.5} parent=73 // pred_check
          %p3342 = pneg %p150
        $region76: #{gtsrb_forward.5} parent=73 // pred_check_branch
          %3344 = sbr.rel (%p3342) target = $region78
        $region77: #{gtsrb_forward.5} parent=73 // pred_region
          %p3345 = scmp.lt.s32.totalorder %s17, 1
          %s3346 = scalar_select %p3345, %s17, 1
          %s3347 = smul.addr %s3346, 10
          %s3348 = smul.addr %s3347, 4
          %s3349 = scalar_lea.vmem %s5, %s3348
        $region78: #{gtsrb_forward.5} parent=73 // pred_fallthru
          _
      $region74: #{gtsrb_forward.5} parent=5 // pred_fallthru
        _
    $region6: #{gtsrb_forward.5} parent=1 // loop_footer
      %s15 = sadd.s32 1, %s11
    $region7: #{gtsrb_forward.5} parent=1 // loop_footer_branch
      %10 = sbr.rel target = $region3
    $region8: #{gtsrb_forward.5} parent=1 // loop_exit
      _

// kernel: gtsrb_forward.7
$region0: #{gtsrb_forward.7}
  #allocation0 [shape = 'u32[]', space=smem, size = 0x4, offset = 0x4, fixed_abs, tag = 'smem constant byte address 0x4 - core index']
  #allocation1 [shape = 'u32[144,128]{1,0:T(1,128)}', space=vmem, size = 0x12000, scoped, tag = 'internal scratch']
  %s0 = inlined_call_operand.vmem [shape: bf16[2,2304], index: 0, kind: input, shape index: {}]
  %s1 = inlined_call_operand.vmem [shape: bf16[2304,384], index: 1, kind: input, shape index: {}]
  %s2 = inlined_call_operand.vmem [shape: f32[1,384], index: 2, kind: input, shape index: {}]
  %s3 = inlined_call_operand.vmem [shape: f32[1,384], index: 3, kind: input, shape index: {}]
  %s4 = inlined_call_operand.vmem [shape: f32[1,384], index: 4, kind: input, shape index: {}]
  %s5 = inlined_call_operand.vmem [shape: bf16[384,128], index: 5, kind: input, shape index: {}]
  %s6 = inlined_call_operand.vmem [shape: f32[1,128], index: 6, kind: input, shape index: {}]
  %s7 = inlined_call_operand.hbm [shape: f32[2,128], index: 7, kind: output, shape index: {}]
  %s8 = sld [smem:[#allocation0]]
  $region38: #{gtsrb_forward.7} parent=0
    _
  %s10 = ssub.s32 1, %s8
  %s11 = scalar_select 0, %s10, %s8
  $region1: #{gtsrb_forward.7} parent=0
    #allocation2 [shape = 'u8[1024]{0}', space=vmem, size = 0x400, scoped, tag = 'output window, operand 0, single buffered']
    #allocation3 [shape = 's32[1]{0}', space=sflag, size = 0x4, scoped, tag = 'scoped memory for gtsrb_forward.7']
    %12 = vsyncpa [#allocation3], 0
    // Predicated region
    $region2: #{gtsrb_forward.7} parent=1 // pred_check
      _
    $region3: #{gtsrb_forward.7} parent=1 // pred_check_branch
      %14 = sbr.rel (0) target = $region5
    $region4: #{gtsrb_forward.7} parent=1 // pred_region
      _
    $region5: #{gtsrb_forward.7} parent=1 // pred_fallthru
      _
    // Predicated region
    $region6: #{gtsrb_forward.7} parent=1 // pred_check
      _
    $region7: #{gtsrb_forward.7} parent=1 // pred_check_branch
      %16 = sbr.rel (0) target = $region9
    $region8: #{gtsrb_forward.7} parent=1 // pred_region
      _
    $region9: #{gtsrb_forward.7} parent=1 // pred_fallthru
      _
    // Predicated region
    $region10: #{gtsrb_forward.7} parent=1 // pred_check
      _
    $region11: #{gtsrb_forward.7} parent=1 // pred_check_branch
      %18 = sbr.rel (0) target = $region13
    $region12: #{gtsrb_forward.7} parent=1 // pred_region
      _
    $region13: #{gtsrb_forward.7} parent=1 // pred_fallthru
      _
    // Predicated region
    $region14: #{gtsrb_forward.7} parent=1 // pred_check
      _
    $region15: #{gtsrb_forward.7} parent=1 // pred_check_branch
      %20 = sbr.rel (0) target = $region17
    $region16: #{gtsrb_forward.7} parent=1 // pred_region
      _
    $region17: #{gtsrb_forward.7} parent=1 // pred_fallthru
      _
    // Predicated region
    $region18: #{gtsrb_forward.7} parent=1 // pred_check
      _
    $region19: #{gtsrb_forward.7} parent=1 // pred_check_branch
      %22 = sbr.rel (0) target = $region21
    $region20: #{gtsrb_forward.7} parent=1 // pred_region
      _
    $region21: #{gtsrb_forward.7} parent=1 // pred_fallthru
      _
    // Predicated region
    $region22: #{gtsrb_forward.7} parent=1 // pred_check
      _
    $region23: #{gtsrb_forward.7} parent=1 // pred_check_branch
      %24 = sbr.rel (0) target = $region25
    $region24: #{gtsrb_forward.7} parent=1 // pred_region
      _
    $region25: #{gtsrb_forward.7} parent=1 // pred_fallthru
      _
    // Predicated region
    $region26: #{gtsrb_forward.7} parent=1 // pred_check
      _
    $region27: #{gtsrb_forward.7} parent=1 // pred_check_branch
      %26 = sbr.rel (0) target = $region29
    $region28: #{gtsrb_forward.7} parent=1 // pred_region
      _
    $region29: #{gtsrb_forward.7} parent=1 // pred_fallthru
      _
    %v28 = vld [vmem:[%s0] sm:$0xff]
    %v29 = vld [vmem:[%s0 + $0x8] sm:$0xff]
    %v30 = vld [vmem:[%s0 + $0x10] sm:$0x3]
    %v31 = vld [vmem:[%s1] sm:$0xff]
    %v32 = vld [vmem:[%s1 + $0x8] sm:$0xf]
    %v33 = vld [vmem:[%s1 + $0xc] sm:$0xff]
    %v34 = vld [vmem:[%s1 + $0x14] sm:$0xf]
    %v35 = vld [vmem:[%s1 + $0x18] sm:$0xff]
    %v36 = vld [vmem:[%s1 + $0x20] sm:$0xf]
    %v37 = vld [vmem:[%s1 + $0x24] sm:$0xff]
    %v38 = vld [vmem:[%s1 + $0x2c] sm:$0xf]
    %v39 = vld [vmem:[%s1 + $0x30] sm:$0xff]
    %v40 = vld [vmem:[%s1 + $0x38] sm:$0xf]
    %v41 = vld [vmem:[%s1 + $0x3c] sm:$0xff]
    %v42 = vld [vmem:[%s1 + $0x44] sm:$0xf]
    %v43 = vld [vmem:[%s1 + $0x48] sm:$0xff]
    %v44 = vld [vmem:[%s1 + $0x50] sm:$0xf]
    %v45 = vld [vmem:[%s1 + $0x54] sm:$0xff]
    %v46 = vld [vmem:[%s1 + $0x5c] sm:$0xf]
    %v47 = vld [vmem:[%s1 + $0x60] sm:$0xff]
    %v48 = vld [vmem:[%s1 + $0x68] sm:$0xf]
    %v49 = vld [vmem:[%s1 + $0x6c] sm:$0xff]
    %v50 = vld [vmem:[%s1 + $0x74] sm:$0xf]
    %v51 = vld [vmem:[%s1 + $0x78] sm:$0xff]
    %v52 = vld [vmem:[%s1 + $0x80] sm:$0xf]
    %v53 = vld [vmem:[%s1 + $0x84] sm:$0xff]
    %v54 = vld [vmem:[%s1 + $0x8c] sm:$0xf]
    %v55 = vld [vmem:[%s1 + $0x90] sm:$0xff]
    %v56 = vld [vmem:[%s1 + $0x98] sm:$0xf]
    %v57 = vld [vmem:[%s1 + $0x9c] sm:$0xff]
    %v58 = vld [vmem:[%s1 + $0xa4] sm:$0xf]
    %v59 = vld [vmem:[%s1 + $0xa8] sm:$0xff]
    %v60 = vld [vmem:[%s1 + $0xb0] sm:$0xf]
    %v61 = vld [vmem:[%s1 + $0xb4] sm:$0xff]
    %v62 = vld [vmem:[%s1 + $0xbc] sm:$0xf]
    %v63 = vld [vmem:[%s1 + $0xc0] sm:$0xff]
    %v64 = vld [vmem:[%s1 + $0xc8] sm:$0xf]
    %v65 = vld [vmem:[%s1 + $0xcc] sm:$0xff]
    %v66 = vld [vmem:[%s1 + $0xd4] sm:$0xf]
    %v67 = vld [vmem:[%s1 + $0xd8] sm:$0xff]
    %v68 = vld [vmem:[%s1 + $0xe0] sm:$0xf]
    %v69 = vld [vmem:[%s1 + $0xe4] sm:$0xff]
    %v70 = vld [vmem:[%s1 + $0xec] sm:$0xf]
    %v71 = vld [vmem:[%s1 + $0xf0] sm:$0xff]
    %v72 = vld [vmem:[%s1 + $0xf8] sm:$0xf]
    %v73 = vld [vmem:[%s1 + $0xfc] sm:$0xff]
    %v74 = vld [vmem:[%s1 + $0x104] sm:$0xf]
    %v75 = vld [vmem:[%s1 + $0x108] sm:$0xff]
    %v76 = vld [vmem:[%s1 + $0x110] sm:$0xf]
    %v77 = vld [vmem:[%s1 + $0x114] sm:$0xff]
    %v78 = vld [vmem:[%s1 + $0x11c] sm:$0xf]
    %v79 = vld [vmem:[%s1 + $0x120] sm:$0xff]
    %v80 = vld [vmem:[%s1 + $0x128] sm:$0xf]
    %v81 = vld [vmem:[%s1 + $0x12c] sm:$0xff]
    %v82 = vld [vmem:[%s1 + $0x134] sm:$0xf]
    %v83 = vld [vmem:[%s1 + $0x138] sm:$0xff]
    %v84 = vld [vmem:[%s1 + $0x140] sm:$0xf]
    %v85 = vld [vmem:[%s1 + $0x144] sm:$0xff]
    %v86 = vld [vmem:[%s1 + $0x14c] sm:$0xf]
    %v87 = vld [vmem:[%s1 + $0x150] sm:$0xff]
    %v88 = vld [vmem:[%s1 + $0x158] sm:$0xf]
    %v89 = vld [vmem:[%s1 + $0x15c] sm:$0xff]
    %v90 = vld [vmem:[%s1 + $0x164] sm:$0xf]
    %v91 = vld [vmem:[%s1 + $0x168] sm:$0xff]
    %v92 = vld [vmem:[%s1 + $0x170] sm:$0xf]
    %v93 = vld [vmem:[%s1 + $0x174] sm:$0xff]
    %v94 = vld [vmem:[%s1 + $0x17c] sm:$0xf]
    %v95 = vld [vmem:[%s1 + $0x180] sm:$0xff]
    %v96 = vld [vmem:[%s1 + $0x188] sm:$0xf]
    %v97 = vld [vmem:[%s1 + $0x18c] sm:$0xff]
    %v98 = vld [vmem:[%s1 + $0x194] sm:$0xf]
    %v99 = vld [vmem:[%s1 + $0x198] sm:$0xff]
    %v100 = vld [vmem:[%s1 + $0x1a0] sm:$0xf]
    %v101 = vld [vmem:[%s1 + $0x1a4] sm:$0xff]
    %v102 = vld [vmem:[%s1 + $0x1ac] sm:$0xf]
    %v103 = vld [vmem:[%s1 + $0x1b0] sm:$0xff]
    %v104 = vld [vmem:[%s1 + $0x1b8] sm:$0xf]
    %v105 = vld [vmem:[%s1 + $0x1bc] sm:$0xff]
    %v106 = vld [vmem:[%s1 + $0x1c4] sm:$0xf]
    %v107 = vld [vmem:[%s1 + $0x1c8] sm:$0xff]
    %v108 = vld [vmem:[%s1 + $0x1d0] sm:$0xf]
    %v109 = vld [vmem:[%s1 + $0x1d4] sm:$0xff]
    %v110 = vld [vmem:[%s1 + $0x1dc] sm:$0xf]
    %v111 = vld [vmem:[%s1 + $0x1e0] sm:$0xff]
    %v112 = vld [vmem:[%s1 + $0x1e8] sm:$0xf]
    %v113 = vld [vmem:[%s1 + $0x1ec] sm:$0xff]
    %v114 = vld [vmem:[%s1 + $0x1f4] sm:$0xf]
    %v115 = vld [vmem:[%s1 + $0x1f8] sm:$0xff]
    %v116 = vld [vmem:[%s1 + $0x200] sm:$0xf]
    %v117 = vld [vmem:[%s1 + $0x204] sm:$0xff]
    %v118 = vld [vmem:[%s1 + $0x20c] sm:$0xf]
    %v119 = vld [vmem:[%s1 + $0x210] sm:$0xff]
    %v120 = vld [vmem:[%s1 + $0x218] sm:$0xf]
    %v121 = vld [vmem:[%s1 + $0x21c] sm:$0xff]
    %v122 = vld [vmem:[%s1 + $0x224] sm:$0xf]
    %v123 = vld [vmem:[%s1 + $0x228] sm:$0xff]
    %v124 = vld [vmem:[%s1 + $0x230] sm:$0xf]
    %v125 = vld [vmem:[%s1 + $0x234] sm:$0xff]
    %v126 = vld [vmem:[%s1 + $0x23c] sm:$0xf]
    %v127 = vld [vmem:[%s1 + $0x240] sm:$0xff]
    %v128 = vld [vmem:[%s1 + $0x248] sm:$0xf]
    %v129 = vld [vmem:[%s1 + $0x24c] sm:$0xff]
    %v130 = vld [vmem:[%s1 + $0x254] sm:$0xf]
    %v131 = vld [vmem:[%s1 + $0x258] sm:$0xff]
    %v132 = vld [vmem:[%s1 + $0x260] sm:$0xf]
    %v133 = vld [vmem:[%s1 + $0x264] sm:$0xff]
    %v134 = vld [vmem:[%s1 + $0x26c] sm:$0xf]
    %v135 = vld [vmem:[%s1 + $0x270] sm:$0xff]
    %v136 = vld [vmem:[%s1 + $0x278] sm:$0xf]
    %v137 = vld [vmem:[%s1 + $0x27c] sm:$0xff]
    %v138 = vld [vmem:[%s1 + $0x284] sm:$0xf]
    %v139 = vld [vmem:[%s1 + $0x288] sm:$0xff]
    %v140 = vld [vmem:[%s1 + $0x290] sm:$0xf]
    %v141 = vld [vmem:[%s1 + $0x294] sm:$0xff]
    %v142 = vld [vmem:[%s1 + $0x29c] sm:$0xf]
    %v143 = vld [vmem:[%s1 + $0x2a0] sm:$0xff]
    %v144 = vld [vmem:[%s1 + $0x2a8] sm:$0xf]
    %v145 = vld [vmem:[%s1 + $0x2ac] sm:$0xff]
    %v146 = vld [vmem:[%s1 + $0x2b4] sm:$0xf]
    %v147 = vld [vmem:[%s1 + $0x2b8] sm:$0xff]
    %v148 = vld [vmem:[%s1 + $0x2c0] sm:$0xf]
    %v149 = vld [vmem:[%s1 + $0x2c4] sm:$0xff]
    %v150 = vld [vmem:[%s1 + $0x2cc] sm:$0xf]
    %v151 = vld [vmem:[%s1 + $0x2d0] sm:$0xff]
    %v152 = vld [vmem:[%s1 + $0x2d8] sm:$0xf]
    %v153 = vld [vmem:[%s1 + $0x2dc] sm:$0xff]
    %v154 = vld [vmem:[%s1 + $0x2e4] sm:$0xf]
    %v155 = vld [vmem:[%s1 + $0x2e8] sm:$0xff]
    %v156 = vld [vmem:[%s1 + $0x2f0] sm:$0xf]
    %v157 = vld [vmem:[%s1 + $0x2f4] sm:$0xff]
    %v158 = vld [vmem:[%s1 + $0x2fc] sm:$0xf]
    %v159 = vld [vmem:[%s1 + $0x300] sm:$0xff]
    %v160 = vld [vmem:[%s1 + $0x308] sm:$0xf]
    %v161 = vld [vmem:[%s1 + $0x30c] sm:$0xff]
    %v162 = vld [vmem:[%s1 + $0x314] sm:$0xf]
    %v163 = vld [vmem:[%s1 + $0x318] sm:$0xff]
    %v164 = vld [vmem:[%s1 + $0x320] sm:$0xf]
    %v165 = vld [vmem:[%s1 + $0x324] sm:$0xff]
    %v166 = vld [vmem:[%s1 + $0x32c] sm:$0xf]
    %v167 = vld [vmem:[%s1 + $0x330] sm:$0xff]
    %v168 = vld [vmem:[%s1 + $0x338] sm:$0xf]
    %v169 = vld [vmem:[%s1 + $0x33c] sm:$0xff]
    %v170 = vld [vmem:[%s1 + $0x344] sm:$0xf]
    %v171 = vld [vmem:[%s1 + $0x348] sm:$0xff]
    %v172 = vld [vmem:[%s1 + $0x350] sm:$0xf]
    %v173 = vld [vmem:[%s1 + $0x354] sm:$0xff]
    %v174 = vld [vmem:[%s1 + $0x35c] sm:$0xf]
    %v175 = vld [vmem:[%s1 + $0x360] sm:$0xff]
    %v176 = vld [vmem:[%s1 + $0x368] sm:$0xf]
    %v177 = vld [vmem:[%s1 + $0x36c] sm:$0xff]
    %v178 = vld [vmem:[%s1 + $0x374] sm:$0xf]
    %v179 = vld [vmem:[%s1 + $0x378] sm:$0xff]
    %v180 = vld [vmem:[%s1 + $0x380] sm:$0xf]
    %v181 = vld [vmem:[%s1 + $0x384] sm:$0xff]
    %v182 = vld [vmem:[%s1 + $0x38c] sm:$0xf]
    %v183 = vld [vmem:[%s1 + $0x390] sm:$0xff]
    %v184 = vld [vmem:[%s1 + $0x398] sm:$0xf]
    %v185 = vld [vmem:[%s1 + $0x39c] sm:$0xff]
    %v186 = vld [vmem:[%s1 + $0x3a4] sm:$0xf]
    %v187 = vld [vmem:[%s1 + $0x3a8] sm:$0xff]
    %v188 = vld [vmem:[%s1 + $0x3b0] sm:$0xf]
    %v189 = vld [vmem:[%s1 + $0x3b4] sm:$0xff]
    %v190 = vld [vmem:[%s1 + $0x3bc] sm:$0xf]
    %v191 = vld [vmem:[%s1 + $0x3c0] sm:$0xff]
    %v192 = vld [vmem:[%s1 + $0x3c8] sm:$0xf]
    %v193 = vld [vmem:[%s1 + $0x3cc] sm:$0xff]
    %v194 = vld [vmem:[%s1 + $0x3d4] sm:$0xf]
    %v195 = vld [vmem:[%s1 + $0x3d8] sm:$0xff]
    %v196 = vld [vmem:[%s1 + $0x3e0] sm:$0xf]
    %v197 = vld [vmem:[%s1 + $0x3e4] sm:$0xff]
    %v198 = vld [vmem:[%s1 + $0x3ec] sm:$0xf]
    %v199 = vld [vmem:[%s1 + $0x3f0] sm:$0xff]
    %v200 = vld [vmem:[%s1 + $0x3f8] sm:$0xf]
    %v201 = vld [vmem:[%s1 + $0x3fc] sm:$0xff]
    %v202 = vld [vmem:[%s1 + $0x404] sm:$0xf]
    %v203 = vld [vmem:[%s1 + $0x408] sm:$0xff]
    %v204 = vld [vmem:[%s1 + $0x410] sm:$0xf]
    %v205 = vld [vmem:[%s1 + $0x414] sm:$0xff]
    %v206 = vld [vmem:[%s1 + $0x41c] sm:$0xf]
    %v207 = vld [vmem:[%s1 + $0x420] sm:$0xff]
    %v208 = vld [vmem:[%s1 + $0x428] sm:$0xf]
    %v209 = vld [vmem:[%s1 + $0x42c] sm:$0xff]
    %v210 = vld [vmem:[%s1 + $0x434] sm:$0xf]
    %v211 = vld [vmem:[%s1 + $0x438] sm:$0xff]
    %v212 = vld [vmem:[%s1 + $0x440] sm:$0xf]
    %v213 = vld [vmem:[%s1 + $0x444] sm:$0xff]
    %v214 = vld [vmem:[%s1 + $0x44c] sm:$0xf]
    %v215 = vld [vmem:[%s1 + $0x450] sm:$0xff]
    %v216 = vld [vmem:[%s1 + $0x458] sm:$0xf]
    %v217 = vld [vmem:[%s1 + $0x45c] sm:$0xff]
    %v218 = vld [vmem:[%s1 + $0x464] sm:$0xf]
    %v219 = vld [vmem:[%s1 + $0x468] sm:$0xff]
    %v220 = vld [vmem:[%s1 + $0x470] sm:$0xf]
    %v221 = vld [vmem:[%s1 + $0x474] sm:$0xff]
    %v222 = vld [vmem:[%s1 + $0x47c] sm:$0xf]
    %v223 = vld [vmem:[%s1 + $0x480] sm:$0xff]
    %v224 = vld [vmem:[%s1 + $0x488] sm:$0xf]
    %v225 = vld [vmem:[%s1 + $0x48c] sm:$0xff]
    %v226 = vld [vmem:[%s1 + $0x494] sm:$0xf]
    %v227 = vld [vmem:[%s1 + $0x498] sm:$0xff]
    %v228 = vld [vmem:[%s1 + $0x4a0] sm:$0xf]
    %v229 = vld [vmem:[%s1 + $0x4a4] sm:$0xff]
    %v230 = vld [vmem:[%s1 + $0x4ac] sm:$0xf]
    %v231 = vld [vmem:[%s1 + $0x4b0] sm:$0xff]
    %v232 = vld [vmem:[%s1 + $0x4b8] sm:$0xf]
    %v233 = vld [vmem:[%s1 + $0x4bc] sm:$0xff]
    %v234 = vld [vmem:[%s1 + $0x4c4] sm:$0xf]
    %v235 = vld [vmem:[%s1 + $0x4c8] sm:$0xff]
    %v236 = vld [vmem:[%s1 + $0x4d0] sm:$0xf]
    %v237 = vld [vmem:[%s1 + $0x4d4] sm:$0xff]
    %v238 = vld [vmem:[%s1 + $0x4dc] sm:$0xf]
    %v239 = vld [vmem:[%s1 + $0x4e0] sm:$0xff]
    %v240 = vld [vmem:[%s1 + $0x4e8] sm:$0xf]
    %v241 = vld [vmem:[%s1 + $0x4ec] sm:$0xff]
    %v242 = vld [vmem:[%s1 + $0x4f4] sm:$0xf]
    %v243 = vld [vmem:[%s1 + $0x4f8] sm:$0xff]
    %v244 = vld [vmem:[%s1 + $0x500] sm:$0xf]
    %v245 = vld [vmem:[%s1 + $0x504] sm:$0xff]
    %v246 = vld [vmem:[%s1 + $0x50c] sm:$0xf]
    %v247 = vld [vmem:[%s1 + $0x510] sm:$0xff]
    %v248 = vld [vmem:[%s1 + $0x518] sm:$0xf]
    %v249 = vld [vmem:[%s1 + $0x51c] sm:$0xff]
    %v250 = vld [vmem:[%s1 + $0x524] sm:$0xf]
    %v251 = vld [vmem:[%s1 + $0x528] sm:$0xff]
    %v252 = vld [vmem:[%s1 + $0x530] sm:$0xf]
    %v253 = vld [vmem:[%s1 + $0x534] sm:$0xff]
    %v254 = vld [vmem:[%s1 + $0x53c] sm:$0xf]
    %v255 = vld [vmem:[%s1 + $0x540] sm:$0xff]
    %v256 = vld [vmem:[%s1 + $0x548] sm:$0xf]
    %v257 = vld [vmem:[%s1 + $0x54c] sm:$0xff]
    %v258 = vld [vmem:[%s1 + $0x554] sm:$0xf]
    %v259 = vld [vmem:[%s1 + $0x558] sm:$0xff]
    %v260 = vld [vmem:[%s1 + $0x560] sm:$0xf]
    %v261 = vld [vmem:[%s1 + $0x564] sm:$0xff]
    %v262 = vld [vmem:[%s1 + $0x56c] sm:$0xf]
    %v263 = vld [vmem:[%s1 + $0x570] sm:$0xff]
    %v264 = vld [vmem:[%s1 + $0x578] sm:$0xf]
    %v265 = vld [vmem:[%s1 + $0x57c] sm:$0xff]
    %v266 = vld [vmem:[%s1 + $0x584] sm:$0xf]
    %v267 = vld [vmem:[%s1 + $0x588] sm:$0xff]
    %v268 = vld [vmem:[%s1 + $0x590] sm:$0xf]
    %v269 = vld [vmem:[%s1 + $0x594] sm:$0xff]
    %v270 = vld [vmem:[%s1 + $0x59c] sm:$0xf]
    %v271 = vld [vmem:[%s1 + $0x5a0] sm:$0xff]
    %v272 = vld [vmem:[%s1 + $0x5a8] sm:$0xf]
    %v273 = vld [vmem:[%s1 + $0x5ac] sm:$0xff]
    %v274 = vld [vmem:[%s1 + $0x5b4] sm:$0xf]
    %v275 = vld [vmem:[%s1 + $0x5b8] sm:$0xff]
    %v276 = vld [vmem:[%s1 + $0x5c0] sm:$0xf]
    %v277 = vld [vmem:[%s1 + $0x5c4] sm:$0xff]
    %v278 = vld [vmem:[%s1 + $0x5cc] sm:$0xf]
    %v279 = vld [vmem:[%s1 + $0x5d0] sm:$0xff]
    %v280 = vld [vmem:[%s1 + $0x5d8] sm:$0xf]
    %v281 = vld [vmem:[%s1 + $0x5dc] sm:$0xff]
    %v282 = vld [vmem:[%s1 + $0x5e4] sm:$0xf]
    %v283 = vld [vmem:[%s1 + $0x5e8] sm:$0xff]
    %v284 = vld [vmem:[%s1 + $0x5f0] sm:$0xf]
    %v285 = vld [vmem:[%s1 + $0x5f4] sm:$0xff]
    %v286 = vld [vmem:[%s1 + $0x5fc] sm:$0xf]
    %v287 = vld [vmem:[%s1 + $0x600] sm:$0xff]
    %v288 = vld [vmem:[%s1 + $0x608] sm:$0xf]
    %v289 = vld [vmem:[%s1 + $0x60c] sm:$0xff]
    %v290 = vld [vmem:[%s1 + $0x614] sm:$0xf]
    %v291 = vld [vmem:[%s1 + $0x618] sm:$0xff]
    %v292 = vld [vmem:[%s1 + $0x620] sm:$0xf]
    %v293 = vld [vmem:[%s1 + $0x624] sm:$0xff]
    %v294 = vld [vmem:[%s1 + $0x62c] sm:$0xf]
    %v295 = vld [vmem:[%s1 + $0x630] sm:$0xff]
    %v296 = vld [vmem:[%s1 + $0x638] sm:$0xf]
    %v297 = vld [vmem:[%s1 + $0x63c] sm:$0xff]
    %v298 = vld [vmem:[%s1 + $0x644] sm:$0xf]
    %v299 = vld [vmem:[%s1 + $0x648] sm:$0xff]
    %v300 = vld [vmem:[%s1 + $0x650] sm:$0xf]
    %v301 = vld [vmem:[%s1 + $0x654] sm:$0xff]
    %v302 = vld [vmem:[%s1 + $0x65c] sm:$0xf]
    %v303 = vld [vmem:[%s1 + $0x660] sm:$0xff]
    %v304 = vld [vmem:[%s1 + $0x668] sm:$0xf]
    %v305 = vld [vmem:[%s1 + $0x66c] sm:$0xff]
    %v306 = vld [vmem:[%s1 + $0x674] sm:$0xf]
    %v307 = vld [vmem:[%s1 + $0x678] sm:$0xff]
    %v308 = vld [vmem:[%s1 + $0x680] sm:$0xf]
    %v309 = vld [vmem:[%s1 + $0x684] sm:$0xff]
    %v310 = vld [vmem:[%s1 + $0x68c] sm:$0xf]
    %v311 = vld [vmem:[%s1 + $0x690] sm:$0xff]
    %v312 = vld [vmem:[%s1 + $0x698] sm:$0xf]
    %v313 = vld [vmem:[%s1 + $0x69c] sm:$0xff]
    %v314 = vld [vmem:[%s1 + $0x6a4] sm:$0xf]
    %v315 = vld [vmem:[%s1 + $0x6a8] sm:$0xff]
    %v316 = vld [vmem:[%s1 + $0x6b0] sm:$0xf]
    %v317 = vld [vmem:[%s1 + $0x6b4] sm:$0xff]
    %v318 = vld [vmem:[%s1 + $0x6bc] sm:$0xf]
    %v319 = vld [vmem:[%s1 + $0x6c0] sm:$0xff]
    %v320 = vld [vmem:[%s1 + $0x6c8] sm:$0xf]
    %v321 = vld [vmem:[%s1 + $0x6cc] sm:$0xff]
    %v322 = vld [vmem:[%s1 + $0x6d4] sm:$0xf]
    %v323 = vld [vmem:[%s1 + $0x6d8] sm:$0xff]
    %v324 = vld [vmem:[%s1 + $0x6e0] sm:$0xf]
    %v325 = vld [vmem:[%s1 + $0x6e4] sm:$0xff]
    %v326 = vld [vmem:[%s1 + $0x6ec] sm:$0xf]
    %v327 = vld [vmem:[%s1 + $0x6f0] sm:$0xff]
    %v328 = vld [vmem:[%s1 + $0x6f8] sm:$0xf]
    %v329 = vld [vmem:[%s1 + $0x6fc] sm:$0xff]
    %v330 = vld [vmem:[%s1 + $0x704] sm:$0xf]
    %v331 = vld [vmem:[%s1 + $0x708] sm:$0xff]
    %v332 = vld [vmem:[%s1 + $0x710] sm:$0xf]
    %v333 = vld [vmem:[%s1 + $0x714] sm:$0xff]
    %v334 = vld [vmem:[%s1 + $0x71c] sm:$0xf]
    %v335 = vld [vmem:[%s1 + $0x720] sm:$0xff]
    %v336 = vld [vmem:[%s1 + $0x728] sm:$0xf]
    %v337 = vld [vmem:[%s1 + $0x72c] sm:$0xff]
    %v338 = vld [vmem:[%s1 + $0x734] sm:$0xf]
    %v339 = vld [vmem:[%s1 + $0x738] sm:$0xff]
    %v340 = vld [vmem:[%s1 + $0x740] sm:$0xf]
    %v341 = vld [vmem:[%s1 + $0x744] sm:$0xff]
    %v342 = vld [vmem:[%s1 + $0x74c] sm:$0xf]
    %v343 = vld [vmem:[%s1 + $0x750] sm:$0xff]
    %v344 = vld [vmem:[%s1 + $0x758] sm:$0xf]
    %v345 = vld [vmem:[%s1 + $0x75c] sm:$0xff]
    %v346 = vld [vmem:[%s1 + $0x764] sm:$0xf]
    %v347 = vld [vmem:[%s1 + $0x768] sm:$0xff]
    %v348 = vld [vmem:[%s1 + $0x770] sm:$0xf]
    %v349 = vld [vmem:[%s1 + $0x774] sm:$0xff]
    %v350 = vld [vmem:[%s1 + $0x77c] sm:$0xf]
    %v351 = vld [vmem:[%s1 + $0x780] sm:$0xff]
    %v352 = vld [vmem:[%s1 + $0x788] sm:$0xf]
    %v353 = vld [vmem:[%s1 + $0x78c] sm:$0xff]
    %v354 = vld [vmem:[%s1 + $0x794] sm:$0xf]
    %v355 = vld [vmem:[%s1 + $0x798] sm:$0xff]
    %v356 = vld [vmem:[%s1 + $0x7a0] sm:$0xf]
    %v357 = vld [vmem:[%s1 + $0x7a4] sm:$0xff]
    %v358 = vld [vmem:[%s1 + $0x7ac] sm:$0xf]
    %v359 = vld [vmem:[%s1 + $0x7b0] sm:$0xff]
    %v360 = vld [vmem:[%s1 + $0x7b8] sm:$0xf]
    %v361 = vld [vmem:[%s1 + $0x7bc] sm:$0xff]
    %v362 = vld [vmem:[%s1 + $0x7c4] sm:$0xf]
    %v363 = vld [vmem:[%s1 + $0x7c8] sm:$0xff]
    %v364 = vld [vmem:[%s1 + $0x7d0] sm:$0xf]
    %v365 = vld [vmem:[%s1 + $0x7d4] sm:$0xff]
    %v366 = vld [vmem:[%s1 + $0x7dc] sm:$0xf]
    %v367 = vld [vmem:[%s1 + $0x7e0] sm:$0xff]
    %v368 = vld [vmem:[%s1 + $0x7e8] sm:$0xf]
    %v369 = vld [vmem:[%s1 + $0x7ec] sm:$0xff]
    %v370 = vld [vmem:[%s1 + $0x7f4] sm:$0xf]
    %v371 = vld [vmem:[%s1 + $0x7f8] sm:$0xff]
    %v372 = vld [vmem:[%s1 + $0x800] sm:$0xf]
    %v373 = vld [vmem:[%s1 + $0x804] sm:$0xff]
    %v374 = vld [vmem:[%s1 + $0x80c] sm:$0xf]
    %v375 = vld [vmem:[%s1 + $0x810] sm:$0xff]
    %v376 = vld [vmem:[%s1 + $0x818] sm:$0xf]
    %v377 = vld [vmem:[%s1 + $0x81c] sm:$0xff]
    %v378 = vld [vmem:[%s1 + $0x824] sm:$0xf]
    %v379 = vld [vmem:[%s1 + $0x828] sm:$0xff]
    %v380 = vld [vmem:[%s1 + $0x830] sm:$0xf]
    %v381 = vld [vmem:[%s1 + $0x834] sm:$0xff]
    %v382 = vld [vmem:[%s1 + $0x83c] sm:$0xf]
    %v383 = vld [vmem:[%s1 + $0x840] sm:$0xff]
    %v384 = vld [vmem:[%s1 + $0x848] sm:$0xf]
    %v385 = vld [vmem:[%s1 + $0x84c] sm:$0xff]
    %v386 = vld [vmem:[%s1 + $0x854] sm:$0xf]
    %v387 = vld [vmem:[%s1 + $0x858] sm:$0xff]
    %v388 = vld [vmem:[%s1 + $0x860] sm:$0xf]
    %v389 = vld [vmem:[%s1 + $0x864] sm:$0xff]
    %v390 = vld [vmem:[%s1 + $0x86c] sm:$0xf]
    %v391 = vld [vmem:[%s1 + $0x870] sm:$0xff]
    %v392 = vld [vmem:[%s1 + $0x878] sm:$0xf]
    %v393 = vld [vmem:[%s1 + $0x87c] sm:$0xff]
    %v394 = vld [vmem:[%s1 + $0x884] sm:$0xf]
    %v395 = vld [vmem:[%s1 + $0x888] sm:$0xff]
    %v396 = vld [vmem:[%s1 + $0x890] sm:$0xf]
    %v397 = vld [vmem:[%s1 + $0x894] sm:$0xff]
    %v398 = vld [vmem:[%s1 + $0x89c] sm:$0xf]
    %v399 = vld [vmem:[%s1 + $0x8a0] sm:$0xff]
    %v400 = vld [vmem:[%s1 + $0x8a8] sm:$0xf]
    %v401 = vld [vmem:[%s1 + $0x8ac] sm:$0xff]
    %v402 = vld [vmem:[%s1 + $0x8b4] sm:$0xf]
    %v403 = vld [vmem:[%s1 + $0x8b8] sm:$0xff]
    %v404 = vld [vmem:[%s1 + $0x8c0] sm:$0xf]
    %v405 = vld [vmem:[%s1 + $0x8c4] sm:$0xff]
    %v406 = vld [vmem:[%s1 + $0x8cc] sm:$0xf]
    %v407 = vld [vmem:[%s1 + $0x8d0] sm:$0xff]
    %v408 = vld [vmem:[%s1 + $0x8d8] sm:$0xf]
    %v409 = vld [vmem:[%s1 + $0x8dc] sm:$0xff]
    %v410 = vld [vmem:[%s1 + $0x8e4] sm:$0xf]
    %v411 = vld [vmem:[%s1 + $0x8e8] sm:$0xff]
    %v412 = vld [vmem:[%s1 + $0x8f0] sm:$0xf]
    %v413 = vld [vmem:[%s1 + $0x8f4] sm:$0xff]
    %v414 = vld [vmem:[%s1 + $0x8fc] sm:$0xf]
    %v415 = vld [vmem:[%s1 + $0x900] sm:$0xff]
    %v416 = vld [vmem:[%s1 + $0x908] sm:$0xf]
    %v417 = vld [vmem:[%s1 + $0x90c] sm:$0xff]
    %v418 = vld [vmem:[%s1 + $0x914] sm:$0xf]
    %v419 = vld [vmem:[%s1 + $0x918] sm:$0xff]
    %v420 = vld [vmem:[%s1 + $0x920] sm:$0xf]
    %v421 = vld [vmem:[%s1 + $0x924] sm:$0xff]
    %v422 = vld [vmem:[%s1 + $0x92c] sm:$0xf]
    %v423 = vld [vmem:[%s1 + $0x930] sm:$0xff]
    %v424 = vld [vmem:[%s1 + $0x938] sm:$0xf]
    %v425 = vld [vmem:[%s1 + $0x93c] sm:$0xff]
    %v426 = vld [vmem:[%s1 + $0x944] sm:$0xf]
    %v427 = vld [vmem:[%s1 + $0x948] sm:$0xff]
    %v428 = vld [vmem:[%s1 + $0x950] sm:$0xf]
    %v429 = vld [vmem:[%s1 + $0x954] sm:$0xff]
    %v430 = vld [vmem:[%s1 + $0x95c] sm:$0xf]
    %v431 = vld [vmem:[%s1 + $0x960] sm:$0xff]
    %v432 = vld [vmem:[%s1 + $0x968] sm:$0xf]
    %v433 = vld [vmem:[%s1 + $0x96c] sm:$0xff]
    %v434 = vld [vmem:[%s1 + $0x974] sm:$0xf]
    %v435 = vld [vmem:[%s1 + $0x978] sm:$0xff]
    %v436 = vld [vmem:[%s1 + $0x980] sm:$0xf]
    %v437 = vld [vmem:[%s1 + $0x984] sm:$0xff]
    %v438 = vld [vmem:[%s1 + $0x98c] sm:$0xf]
    %v439 = vld [vmem:[%s1 + $0x990] sm:$0xff]
    %v440 = vld [vmem:[%s1 + $0x998] sm:$0xf]
    %v441 = vld [vmem:[%s1 + $0x99c] sm:$0xff]
    %v442 = vld [vmem:[%s1 + $0x9a4] sm:$0xf]
    %v443 = vld [vmem:[%s1 + $0x9a8] sm:$0xff]
    %v444 = vld [vmem:[%s1 + $0x9b0] sm:$0xf]
    %v445 = vld [vmem:[%s1 + $0x9b4] sm:$0xff]
    %v446 = vld [vmem:[%s1 + $0x9bc] sm:$0xf]
    %v447 = vld [vmem:[%s1 + $0x9c0] sm:$0xff]
    %v448 = vld [vmem:[%s1 + $0x9c8] sm:$0xf]
    %v449 = vld [vmem:[%s1 + $0x9cc] sm:$0xff]
    %v450 = vld [vmem:[%s1 + $0x9d4] sm:$0xf]
    %v451 = vld [vmem:[%s1 + $0x9d8] sm:$0xff]
    %v452 = vld [vmem:[%s1 + $0x9e0] sm:$0xf]
    %v453 = vld [vmem:[%s1 + $0x9e4] sm:$0xff]
    %v454 = vld [vmem:[%s1 + $0x9ec] sm:$0xf]
    %v455 = vld [vmem:[%s1 + $0x9f0] sm:$0xff]
    %v456 = vld [vmem:[%s1 + $0x9f8] sm:$0xf]
    %v457 = vld [vmem:[%s1 + $0x9fc] sm:$0xff]
    %v458 = vld [vmem:[%s1 + $0xa04] sm:$0xf]
    %v459 = vld [vmem:[%s1 + $0xa08] sm:$0xff]
    %v460 = vld [vmem:[%s1 + $0xa10] sm:$0xf]
    %v461 = vld [vmem:[%s1 + $0xa14] sm:$0xff]
    %v462 = vld [vmem:[%s1 + $0xa1c] sm:$0xf]
    %v463 = vld [vmem:[%s1 + $0xa20] sm:$0xff]
    %v464 = vld [vmem:[%s1 + $0xa28] sm:$0xf]
    %v465 = vld [vmem:[%s1 + $0xa2c] sm:$0xff]
    %v466 = vld [vmem:[%s1 + $0xa34] sm:$0xf]
    %v467 = vld [vmem:[%s1 + $0xa38] sm:$0xff]
    %v468 = vld [vmem:[%s1 + $0xa40] sm:$0xf]
    %v469 = vld [vmem:[%s1 + $0xa44] sm:$0xff]
    %v470 = vld [vmem:[%s1 + $0xa4c] sm:$0xf]
    %v471 = vld [vmem:[%s1 + $0xa50] sm:$0xff]
    %v472 = vld [vmem:[%s1 + $0xa58] sm:$0xf]
    %v473 = vld [vmem:[%s1 + $0xa5c] sm:$0xff]
    %v474 = vld [vmem:[%s1 + $0xa64] sm:$0xf]
    %v475 = vld [vmem:[%s1 + $0xa68] sm:$0xff]
    %v476 = vld [vmem:[%s1 + $0xa70] sm:$0xf]
    %v477 = vld [vmem:[%s1 + $0xa74] sm:$0xff]
    %v478 = vld [vmem:[%s1 + $0xa7c] sm:$0xf]
    %v479 = vld [vmem:[%s1 + $0xa80] sm:$0xff]
    %v480 = vld [vmem:[%s1 + $0xa88] sm:$0xf]
    %v481 = vld [vmem:[%s1 + $0xa8c] sm:$0xff]
    %v482 = vld [vmem:[%s1 + $0xa94] sm:$0xf]
    %v483 = vld [vmem:[%s1 + $0xa98] sm:$0xff]
    %v484 = vld [vmem:[%s1 + $0xaa0] sm:$0xf]
    %v485 = vld [vmem:[%s1 + $0xaa4] sm:$0xff]
    %v486 = vld [vmem:[%s1 + $0xaac] sm:$0xf]
    %v487 = vld [vmem:[%s1 + $0xab0] sm:$0xff]
    %v488 = vld [vmem:[%s1 + $0xab8] sm:$0xf]
    %v489 = vld [vmem:[%s1 + $0xabc] sm:$0xff]
    %v490 = vld [vmem:[%s1 + $0xac4] sm:$0xf]
    %v491 = vld [vmem:[%s1 + $0xac8] sm:$0xff]
    %v492 = vld [vmem:[%s1 + $0xad0] sm:$0xf]
    %v493 = vld [vmem:[%s1 + $0xad4] sm:$0xff]
    %v494 = vld [vmem:[%s1 + $0xadc] sm:$0xf]
    %v495 = vld [vmem:[%s1 + $0xae0] sm:$0xff]
    %v496 = vld [vmem:[%s1 + $0xae8] sm:$0xf]
    %v497 = vld [vmem:[%s1 + $0xaec] sm:$0xff]
    %v498 = vld [vmem:[%s1 + $0xaf4] sm:$0xf]
    %v499 = vld [vmem:[%s1 + $0xaf8] sm:$0xff]
    %v500 = vld [vmem:[%s1 + $0xb00] sm:$0xf]
    %v501 = vld [vmem:[%s1 + $0xb04] sm:$0xff]
    %v502 = vld [vmem:[%s1 + $0xb0c] sm:$0xf]
    %v503 = vld [vmem:[%s1 + $0xb10] sm:$0xff]
    %v504 = vld [vmem:[%s1 + $0xb18] sm:$0xf]
    %v505 = vld [vmem:[%s1 + $0xb1c] sm:$0xff]
    %v506 = vld [vmem:[%s1 + $0xb24] sm:$0xf]
    %v507 = vld [vmem:[%s1 + $0xb28] sm:$0xff]
    %v508 = vld [vmem:[%s1 + $0xb30] sm:$0xf]
    %v509 = vld [vmem:[%s1 + $0xb34] sm:$0xff]
    %v510 = vld [vmem:[%s1 + $0xb3c] sm:$0xf]
    %v511 = vld [vmem:[%s1 + $0xb40] sm:$0xff]
    %v512 = vld [vmem:[%s1 + $0xb48] sm:$0xf]
    %v513 = vld [vmem:[%s1 + $0xb4c] sm:$0xff]
    %v514 = vld [vmem:[%s1 + $0xb54] sm:$0xf]
    %v515 = vld [vmem:[%s1 + $0xb58] sm:$0xff]
    %v516 = vld [vmem:[%s1 + $0xb60] sm:$0xf]
    %v517 = vld [vmem:[%s1 + $0xb64] sm:$0xff]
    %v518 = vld [vmem:[%s1 + $0xb6c] sm:$0xf]
    %v519 = vld [vmem:[%s1 + $0xb70] sm:$0xff]
    %v520 = vld [vmem:[%s1 + $0xb78] sm:$0xf]
    %v521 = vld [vmem:[%s1 + $0xb7c] sm:$0xff]
    %v522 = vld [vmem:[%s1 + $0xb84] sm:$0xf]
    %v523 = vld [vmem:[%s1 + $0xb88] sm:$0xff]
    %v524 = vld [vmem:[%s1 + $0xb90] sm:$0xf]
    %v525 = vld [vmem:[%s1 + $0xb94] sm:$0xff]
    %v526 = vld [vmem:[%s1 + $0xb9c] sm:$0xf]
    %v527 = vld [vmem:[%s1 + $0xba0] sm:$0xff]
    %v528 = vld [vmem:[%s1 + $0xba8] sm:$0xf]
    %v529 = vld [vmem:[%s1 + $0xbac] sm:$0xff]
    %v530 = vld [vmem:[%s1 + $0xbb4] sm:$0xf]
    %v531 = vld [vmem:[%s1 + $0xbb8] sm:$0xff]
    %v532 = vld [vmem:[%s1 + $0xbc0] sm:$0xf]
    %v533 = vld [vmem:[%s1 + $0xbc4] sm:$0xff]
    %v534 = vld [vmem:[%s1 + $0xbcc] sm:$0xf]
    %v535 = vld [vmem:[%s1 + $0xbd0] sm:$0xff]
    %v536 = vld [vmem:[%s1 + $0xbd8] sm:$0xf]
    %v537 = vld [vmem:[%s1 + $0xbdc] sm:$0xff]
    %v538 = vld [vmem:[%s1 + $0xbe4] sm:$0xf]
    %v539 = vld [vmem:[%s1 + $0xbe8] sm:$0xff]
    %v540 = vld [vmem:[%s1 + $0xbf0] sm:$0xf]
    %v541 = vld [vmem:[%s1 + $0xbf4] sm:$0xff]
    %v542 = vld [vmem:[%s1 + $0xbfc] sm:$0xf]
    %v543 = vld [vmem:[%s1 + $0xc00] sm:$0xff]
    %v544 = vld [vmem:[%s1 + $0xc08] sm:$0xf]
    %v545 = vld [vmem:[%s1 + $0xc0c] sm:$0xff]
    %v546 = vld [vmem:[%s1 + $0xc14] sm:$0xf]
    %v547 = vld [vmem:[%s1 + $0xc18] sm:$0xff]
    %v548 = vld [vmem:[%s1 + $0xc20] sm:$0xf]
    %v549 = vld [vmem:[%s1 + $0xc24] sm:$0xff]
    %v550 = vld [vmem:[%s1 + $0xc2c] sm:$0xf]
    %v551 = vld [vmem:[%s1 + $0xc30] sm:$0xff]
    %v552 = vld [vmem:[%s1 + $0xc38] sm:$0xf]
    %v553 = vld [vmem:[%s1 + $0xc3c] sm:$0xff]
    %v554 = vld [vmem:[%s1 + $0xc44] sm:$0xf]
    %v555 = vld [vmem:[%s1 + $0xc48] sm:$0xff]
    %v556 = vld [vmem:[%s1 + $0xc50] sm:$0xf]
    %v557 = vld [vmem:[%s1 + $0xc54] sm:$0xff]
    %v558 = vld [vmem:[%s1 + $0xc5c] sm:$0xf]
    %v559 = vld [vmem:[%s1 + $0xc60] sm:$0xff]
    %v560 = vld [vmem:[%s1 + $0xc68] sm:$0xf]
    %v561 = vld [vmem:[%s1 + $0xc6c] sm:$0xff]
    %v562 = vld [vmem:[%s1 + $0xc74] sm:$0xf]
    %v563 = vld [vmem:[%s1 + $0xc78] sm:$0xff]
    %v564 = vld [vmem:[%s1 + $0xc80] sm:$0xf]
    %v565 = vld [vmem:[%s1 + $0xc84] sm:$0xff]
    %v566 = vld [vmem:[%s1 + $0xc8c] sm:$0xf]
    %v567 = vld [vmem:[%s1 + $0xc90] sm:$0xff]
    %v568 = vld [vmem:[%s1 + $0xc98] sm:$0xf]
    %v569 = vld [vmem:[%s1 + $0xc9c] sm:$0xff]
    %v570 = vld [vmem:[%s1 + $0xca4] sm:$0xf]
    %v571 = vld [vmem:[%s1 + $0xca8] sm:$0xff]
    %v572 = vld [vmem:[%s1 + $0xcb0] sm:$0xf]
    %v573 = vld [vmem:[%s1 + $0xcb4] sm:$0xff]
    %v574 = vld [vmem:[%s1 + $0xcbc] sm:$0xf]
    %v575 = vld [vmem:[%s1 + $0xcc0] sm:$0xff]
    %v576 = vld [vmem:[%s1 + $0xcc8] sm:$0xf]
    %v577 = vld [vmem:[%s1 + $0xccc] sm:$0xff]
    %v578 = vld [vmem:[%s1 + $0xcd4] sm:$0xf]
    %v579 = vld [vmem:[%s1 + $0xcd8] sm:$0xff]
    %v580 = vld [vmem:[%s1 + $0xce0] sm:$0xf]
    %v581 = vld [vmem:[%s1 + $0xce4] sm:$0xff]
    %v582 = vld [vmem:[%s1 + $0xcec] sm:$0xf]
    %v583 = vld [vmem:[%s1 + $0xcf0] sm:$0xff]
    %v584 = vld [vmem:[%s1 + $0xcf8] sm:$0xf]
    %v585 = vld [vmem:[%s1 + $0xcfc] sm:$0xff]
    %v586 = vld [vmem:[%s1 + $0xd04] sm:$0xf]
    %v587 = vld [vmem:[%s1 + $0xd08] sm:$0xff]
    %v588 = vld [vmem:[%s1 + $0xd10] sm:$0xf]
    %v589 = vld [vmem:[%s1 + $0xd14] sm:$0xff]
    %v590 = vld [vmem:[%s1 + $0xd1c] sm:$0xf]
    %v591 = vld [vmem:[%s1 + $0xd20] sm:$0xff]
    %v592 = vld [vmem:[%s1 + $0xd28] sm:$0xf]
    %v593 = vld [vmem:[%s1 + $0xd2c] sm:$0xff]
    %v594 = vld [vmem:[%s1 + $0xd34] sm:$0xf]
    %v595 = vld [vmem:[%s1 + $0xd38] sm:$0xff]
    %v596 = vld [vmem:[%s1 + $0xd40] sm:$0xf]
    %v597 = vld [vmem:[%s1 + $0xd44] sm:$0xff]
    %v598 = vld [vmem:[%s1 + $0xd4c] sm:$0xf]
    %v599 = vld [vmem:[%s1 + $0xd50] sm:$0xff]
    %v600 = vld [vmem:[%s1 + $0xd58] sm:$0xf]
    %v601 = vld [vmem:[%s1 + $0xd5c] sm:$0xff]
    %v602 = vld [vmem:[%s1 + $0xd64] sm:$0xf]
    %v603 = vld [vmem:[%s1 + $0xd68] sm:$0xff]
    %v604 = vld [vmem:[%s1 + $0xd70] sm:$0xf]
    %v605 = vld [vmem:[%s1 + $0xd74] sm:$0xff]
    %v606 = vld [vmem:[%s1 + $0xd7c] sm:$0xf]
    %v607 = vld [vmem:[%s2] sm:$0x7]
    %v609 = vlaneseq
    %v610 = vshrl.u32 %v609, 7
    %v611 = vsub.s32 0, %v610
    %v612 = vrot.slane %v607, %v611
    %v613 = vlaneseq
    %v614 = vshrl.u32 %v613, 7
    %v615 = vsub.s32 1, %v614
    %v616 = vrot.slane %v607, %v615
    %v617 = vlaneseq
    %v618 = vshrl.u32 %v617, 7
    %v619 = vsub.s32 2, %v618
    %v620 = vrot.slane %v607, %v619
    %v627 = vcombine.high %v28, %v28
    %v629 = vunpack.c.l.s4 1966171168
    %v630 = vunpack.c.0.s8 %v629
    %v631 = vlaneseq
    %v632 = vshrl.u32 %v631, 7
    %v633 = vsub.s32 %v630, %v632
    %v634 = vrot.slane %v28, %v633
    %v636 = vunpack.c.l.s4 1966171168
    %v637 = vunpack.c.0.s8 %v636
    %v638 = vlaneseq
    %v639 = vshrl.u32 %v638, 7
    %v640 = vsub.s32 %v637, %v639
    %v641 = vrot.slane %v627, %v640
    %v642 = vcombine.high %v634, %v634
    %v643 = vcombine.high %v641, %v641
    %v645 = vunpack.c.l.s4 1966171168
    %v646 = vunpack.c.0.s8 %v645
    %v647 = vlaneseq
    %v648 = vshrl.u32 %v647, 7
    %v649 = vsub.s32 %v646, %v648
    %v650 = vrot.slane %v634, %v649
    %v652 = vunpack.c.l.s4 1966171168
    %v653 = vunpack.c.0.s8 %v652
    %v654 = vlaneseq
    %v655 = vshrl.u32 %v654, 7
    %v656 = vsub.s32 %v653, %v655
    %v657 = vrot.slane %v641, %v656
    %v659 = vunpack.c.l.s4 1966171168
    %v660 = vunpack.c.0.s8 %v659
    %v661 = vlaneseq
    %v662 = vshrl.u32 %v661, 7
    %v663 = vsub.s32 %v660, %v662
    %v664 = vrot.slane %v642, %v663
    %v666 = vunpack.c.l.s4 1966171168
    %v667 = vunpack.c.0.s8 %v666
    %v668 = vlaneseq
    %v669 = vshrl.u32 %v668, 7
    %v670 = vsub.s32 %v667, %v669
    %v671 = vrot.slane %v643, %v670
    %v672 = vcombine.high %v650, %v650
    %v673 = vcombine.high %v657, %v657
    %v674 = vcombine.high %v664, %v664
    %v675 = vcombine.high %v671, %v671
    %v676 = vcombine.high %v29, %v29
    %v678 = vunpack.c.l.s4 1966171168
    %v679 = vunpack.c.0.s8 %v678
    %v680 = vlaneseq
    %v681 = vshrl.u32 %v680, 7
    %v682 = vsub.s32 %v679, %v681
    %v683 = vrot.slane %v29, %v682
    %v685 = vunpack.c.l.s4 1966171168
    %v686 = vunpack.c.0.s8 %v685
    %v687 = vlaneseq
    %v688 = vshrl.u32 %v687, 7
    %v689 = vsub.s32 %v686, %v688
    %v690 = vrot.slane %v676, %v689
    %v691 = vcombine.high %v683, %v683
    %v692 = vcombine.high %v690, %v690
    %v694 = vunpack.c.l.s4 1966171168
    %v695 = vunpack.c.0.s8 %v694
    %v696 = vlaneseq
    %v697 = vshrl.u32 %v696, 7
    %v698 = vsub.s32 %v695, %v697
    %v699 = vrot.slane %v683, %v698
    %v701 = vunpack.c.l.s4 1966171168
    %v702 = vunpack.c.0.s8 %v701
    %v703 = vlaneseq
    %v704 = vshrl.u32 %v703, 7
    %v705 = vsub.s32 %v702, %v704
    %v706 = vrot.slane %v690, %v705
    %v708 = vunpack.c.l.s4 1966171168
    %v709 = vunpack.c.0.s8 %v708
    %v710 = vlaneseq
    %v711 = vshrl.u32 %v710, 7
    %v712 = vsub.s32 %v709, %v711
    %v713 = vrot.slane %v691, %v712
    %v715 = vunpack.c.l.s4 1966171168
    %v716 = vunpack.c.0.s8 %v715
    %v717 = vlaneseq
    %v718 = vshrl.u32 %v717, 7
    %v719 = vsub.s32 %v716, %v718
    %v720 = vrot.slane %v692, %v719
    %v721 = vcombine.high %v699, %v699
    %v722 = vcombine.high %v706, %v706
    %v723 = vcombine.high %v713, %v713
    %v724 = vcombine.high %v720, %v720
    %v726 = vunpack.c.l.s4 1966171168
    %v727 = vunpack.c.0.s8 %v726
    %v728 = vlaneseq
    %v729 = vshrl.u32 %v728, 7
    %v730 = vsub.s32 %v727, %v729
    %v731 = vrot.slane %v30, %v730
    %v732 = vcombine.high %v731, %v731
    %v734 = vunpack.c.l.s4 1966171168
    %v735 = vunpack.c.0.s8 %v734
    %v736 = vlaneseq
    %v737 = vshrl.u32 %v736, 7
    %v738 = vsub.s32 %v735, %v737
    %v739 = vrot.slane %v731, %v738
    %v741 = vunpack.c.l.s4 1966171168
    %v742 = vunpack.c.0.s8 %v741
    %v743 = vlaneseq
    %v744 = vshrl.u32 %v743, 7
    %v745 = vsub.s32 %v742, %v744
    %v746 = vrot.slane %v732, %v745
    %v1341 = vunpack.c.l.b16 %v31
    %v1342 = vunpack.c.h.b16 %v31
    %v1343 = vunpack.c.l.b16 %v32
    %v1344 = vunpack.c.l.b16 %v33
    %v1345 = vunpack.c.h.b16 %v33
    %v1346 = vunpack.c.l.b16 %v34
    %v1347 = vunpack.c.l.b16 %v35
    %v1348 = vunpack.c.h.b16 %v35
    %v1349 = vunpack.c.l.b16 %v36
    %v1350 = vunpack.c.l.b16 %v37
    %v1351 = vunpack.c.h.b16 %v37
    %v1352 = vunpack.c.l.b16 %v38
    %v1353 = vunpack.c.l.b16 %v39
    %v1354 = vunpack.c.h.b16 %v39
    %v1355 = vunpack.c.l.b16 %v40
    %v1356 = vunpack.c.l.b16 %v41
    %v1357 = vunpack.c.h.b16 %v41
    %v1358 = vunpack.c.l.b16 %v42
    %v1359 = vunpack.c.l.b16 %v43
    %v1360 = vunpack.c.h.b16 %v43
    %v1361 = vunpack.c.l.b16 %v44
    %v1362 = vunpack.c.l.b16 %v45
    %v1363 = vunpack.c.h.b16 %v45
    %v1364 = vunpack.c.l.b16 %v46
    %v1365 = vunpack.c.l.b16 %v47
    %v1366 = vunpack.c.h.b16 %v47
    %v1367 = vunpack.c.l.b16 %v48
    %v1368 = vunpack.c.l.b16 %v49
    %v1369 = vunpack.c.h.b16 %v49
    %v1370 = vunpack.c.l.b16 %v50
    %v1371 = vunpack.c.l.b16 %v51
    %v1372 = vunpack.c.h.b16 %v51
    %v1373 = vunpack.c.l.b16 %v52
    %v1374 = vunpack.c.l.b16 %v53
    %v1375 = vunpack.c.h.b16 %v53
    %v1376 = vunpack.c.l.b16 %v54
    %v1377 = vunpack.c.l.b16 %v55
    %v1378 = vunpack.c.h.b16 %v55
    %v1379 = vunpack.c.l.b16 %v56
    %v1380 = vunpack.c.l.b16 %v57
    %v1381 = vunpack.c.h.b16 %v57
    %v1382 = vunpack.c.l.b16 %v58
    %v1383 = vunpack.c.l.b16 %v59
    %v1384 = vunpack.c.h.b16 %v59
    %v1385 = vunpack.c.l.b16 %v60
    %v1386 = vunpack.c.l.b16 %v61
    %v1387 = vunpack.c.h.b16 %v61
    %v1388 = vunpack.c.l.b16 %v62
    %v1389 = vunpack.c.l.b16 %v63
    %v1390 = vunpack.c.h.b16 %v63
    %v1391 = vunpack.c.l.b16 %v64
    %v1392 = vunpack.c.l.b16 %v65
    %v1393 = vunpack.c.h.b16 %v65
    %v1394 = vunpack.c.l.b16 %v66
    %v1395 = vunpack.c.l.b16 %v67
    %v1396 = vunpack.c.h.b16 %v67
    %v1397 = vunpack.c.l.b16 %v68
    %v1398 = vunpack.c.l.b16 %v69
    %v1399 = vunpack.c.h.b16 %v69
    %v1400 = vunpack.c.l.b16 %v70
    %v1401 = vunpack.c.l.b16 %v71
    %v1402 = vunpack.c.h.b16 %v71
    %v1403 = vunpack.c.l.b16 %v72
    %v1404 = vunpack.c.l.b16 %v73
    %v1405 = vunpack.c.h.b16 %v73
    %v1406 = vunpack.c.l.b16 %v74
    %v1407 = vunpack.c.l.b16 %v75
    %v1408 = vunpack.c.h.b16 %v75
    %v1409 = vunpack.c.l.b16 %v76
    %v1410 = vunpack.c.l.b16 %v77
    %v1411 = vunpack.c.h.b16 %v77
    %v1412 = vunpack.c.l.b16 %v78
    %v1413 = vunpack.c.l.b16 %v79
    %v1414 = vunpack.c.h.b16 %v79
    %v1415 = vunpack.c.l.b16 %v80
    %v1416 = vunpack.c.l.b16 %v81
    %v1417 = vunpack.c.h.b16 %v81
    %v1418 = vunpack.c.l.b16 %v82
    %v1419 = vunpack.c.l.b16 %v83
    %v1420 = vunpack.c.h.b16 %v83
    %v1421 = vunpack.c.l.b16 %v84
    %v1422 = vunpack.c.l.b16 %v85
    %v1423 = vunpack.c.h.b16 %v85
    %v1424 = vunpack.c.l.b16 %v86
    %v1425 = vunpack.c.l.b16 %v87
    %v1426 = vunpack.c.h.b16 %v87
    %v1427 = vunpack.c.l.b16 %v88
    %v1428 = vunpack.c.l.b16 %v89
    %v1429 = vunpack.c.h.b16 %v89
    %v1430 = vunpack.c.l.b16 %v90
    %v1431 = vunpack.c.l.b16 %v91
    %v1432 = vunpack.c.h.b16 %v91
    %v1433 = vunpack.c.l.b16 %v92
    %v1434 = vunpack.c.l.b16 %v93
    %v1435 = vunpack.c.h.b16 %v93
    %v1436 = vunpack.c.l.b16 %v94
    %v1437 = vunpack.c.l.b16 %v95
    %v1438 = vunpack.c.h.b16 %v95
    %v1439 = vunpack.c.l.b16 %v96
    %v1440 = vunpack.c.l.b16 %v97
    %v1441 = vunpack.c.h.b16 %v97
    %v1442 = vunpack.c.l.b16 %v98
    %v1443 = vunpack.c.l.b16 %v99
    %v1444 = vunpack.c.h.b16 %v99
    %v1445 = vunpack.c.l.b16 %v100
    %v1446 = vunpack.c.l.b16 %v101
    %v1447 = vunpack.c.h.b16 %v101
    %v1448 = vunpack.c.l.b16 %v102
    %v1449 = vunpack.c.l.b16 %v103
    %v1450 = vunpack.c.h.b16 %v103
    %v1451 = vunpack.c.l.b16 %v104
    %v1452 = vunpack.c.l.b16 %v105
    %v1453 = vunpack.c.h.b16 %v105
    %v1454 = vunpack.c.l.b16 %v106
    %v1455 = vunpack.c.l.b16 %v107
    %v1456 = vunpack.c.h.b16 %v107
    %v1457 = vunpack.c.l.b16 %v108
    %v1458 = vunpack.c.l.b16 %v109
    %v1459 = vunpack.c.h.b16 %v109
    %v1460 = vunpack.c.l.b16 %v110
    %v1461 = vunpack.c.l.b16 %v111
    %v1462 = vunpack.c.h.b16 %v111
    %v1463 = vunpack.c.l.b16 %v112
    %v1464 = vunpack.c.l.b16 %v113
    %v1465 = vunpack.c.h.b16 %v113
    %v1466 = vunpack.c.l.b16 %v114
    %v1467 = vunpack.c.l.b16 %v115
    %v1468 = vunpack.c.h.b16 %v115
    %v1469 = vunpack.c.l.b16 %v116
    %v1470 = vunpack.c.l.b16 %v117
    %v1471 = vunpack.c.h.b16 %v117
    %v1472 = vunpack.c.l.b16 %v118
    %v1473 = vunpack.c.l.b16 %v119
    %v1474 = vunpack.c.h.b16 %v119
    %v1475 = vunpack.c.l.b16 %v120
    %v1476 = vunpack.c.l.b16 %v121
    %v1477 = vunpack.c.h.b16 %v121
    %v1478 = vunpack.c.l.b16 %v122
    %v1479 = vunpack.c.l.b16 %v123
    %v1480 = vunpack.c.h.b16 %v123
    %v1481 = vunpack.c.l.b16 %v124
    %v1482 = vunpack.c.l.b16 %v125
    %v1483 = vunpack.c.h.b16 %v125
    %v1484 = vunpack.c.l.b16 %v126
    %v1485 = vunpack.c.l.b16 %v127
    %v1486 = vunpack.c.h.b16 %v127
    %v1487 = vunpack.c.l.b16 %v128
    %v1488 = vunpack.c.l.b16 %v129
    %v1489 = vunpack.c.h.b16 %v129
    %v1490 = vunpack.c.l.b16 %v130
    %v1491 = vunpack.c.l.b16 %v131
    %v1492 = vunpack.c.h.b16 %v131
    %v1493 = vunpack.c.l.b16 %v132
    %v1494 = vunpack.c.l.b16 %v133
    %v1495 = vunpack.c.h.b16 %v133
    %v1496 = vunpack.c.l.b16 %v134
    %v1497 = vunpack.c.l.b16 %v135
    %v1498 = vunpack.c.h.b16 %v135
    %v1499 = vunpack.c.l.b16 %v136
    %v1500 = vunpack.c.l.b16 %v137
    %v1501 = vunpack.c.h.b16 %v137
    %v1502 = vunpack.c.l.b16 %v138
    %v1503 = vunpack.c.l.b16 %v139
    %v1504 = vunpack.c.h.b16 %v139
    %v1505 = vunpack.c.l.b16 %v140
    %v1506 = vunpack.c.l.b16 %v141
    %v1507 = vunpack.c.h.b16 %v141
    %v1508 = vunpack.c.l.b16 %v142
    %v1509 = vunpack.c.l.b16 %v143
    %v1510 = vunpack.c.h.b16 %v143
    %v1511 = vunpack.c.l.b16 %v144
    %v1512 = vunpack.c.l.b16 %v145
    %v1513 = vunpack.c.h.b16 %v145
    %v1514 = vunpack.c.l.b16 %v146
    %v1515 = vunpack.c.l.b16 %v147
    %v1516 = vunpack.c.h.b16 %v147
    %v1517 = vunpack.c.l.b16 %v148
    %v1518 = vunpack.c.l.b16 %v149
    %v1519 = vunpack.c.h.b16 %v149
    %v1520 = vunpack.c.l.b16 %v150
    %v1521 = vunpack.c.l.b16 %v151
    %v1522 = vunpack.c.h.b16 %v151
    %v1523 = vunpack.c.l.b16 %v152
    %v1524 = vunpack.c.l.b16 %v153
    %v1525 = vunpack.c.h.b16 %v153
    %v1526 = vunpack.c.l.b16 %v154
    %v1527 = vunpack.c.l.b16 %v155
    %v1528 = vunpack.c.h.b16 %v155
    %v1529 = vunpack.c.l.b16 %v156
    %v1530 = vunpack.c.l.b16 %v157
    %v1531 = vunpack.c.h.b16 %v157
    %v1532 = vunpack.c.l.b16 %v158
    %v1533 = vunpack.c.l.b16 %v159
    %v1534 = vunpack.c.h.b16 %v159
    %v1535 = vunpack.c.l.b16 %v160
    %v1536 = vunpack.c.l.b16 %v161
    %v1537 = vunpack.c.h.b16 %v161
    %v1538 = vunpack.c.l.b16 %v162
    %v1539 = vunpack.c.l.b16 %v163
    %v1540 = vunpack.c.h.b16 %v163
    %v1541 = vunpack.c.l.b16 %v164
    %v1542 = vunpack.c.l.b16 %v165
    %v1543 = vunpack.c.h.b16 %v165
    %v1544 = vunpack.c.l.b16 %v166
    %v1545 = vunpack.c.l.b16 %v167
    %v1546 = vunpack.c.h.b16 %v167
    %v1547 = vunpack.c.l.b16 %v168
    %v1548 = vunpack.c.l.b16 %v169
    %v1549 = vunpack.c.h.b16 %v169
    %v1550 = vunpack.c.l.b16 %v170
    %v1551 = vunpack.c.l.b16 %v171
    %v1552 = vunpack.c.h.b16 %v171
    %v1553 = vunpack.c.l.b16 %v172
    %v1554 = vunpack.c.l.b16 %v173
    %v1555 = vunpack.c.h.b16 %v173
    %v1556 = vunpack.c.l.b16 %v174
    %v1557 = vunpack.c.l.b16 %v175
    %v1558 = vunpack.c.h.b16 %v175
    %v1559 = vunpack.c.l.b16 %v176
    %v1560 = vunpack.c.l.b16 %v177
    %v1561 = vunpack.c.h.b16 %v177
    %v1562 = vunpack.c.l.b16 %v178
    %v1563 = vunpack.c.l.b16 %v179
    %v1564 = vunpack.c.h.b16 %v179
    %v1565 = vunpack.c.l.b16 %v180
    %v1566 = vunpack.c.l.b16 %v181
    %v1567 = vunpack.c.h.b16 %v181
    %v1568 = vunpack.c.l.b16 %v182
    %v1569 = vunpack.c.l.b16 %v183
    %v1570 = vunpack.c.h.b16 %v183
    %v1571 = vunpack.c.l.b16 %v184
    %v1572 = vunpack.c.l.b16 %v185
    %v1573 = vunpack.c.h.b16 %v185
    %v1574 = vunpack.c.l.b16 %v186
    %v1575 = vunpack.c.l.b16 %v187
    %v1576 = vunpack.c.h.b16 %v187
    %v1577 = vunpack.c.l.b16 %v188
    %v1578 = vunpack.c.l.b16 %v189
    %v1579 = vunpack.c.h.b16 %v189
    %v1580 = vunpack.c.l.b16 %v190
    %v1581 = vunpack.c.l.b16 %v191
    %v1582 = vunpack.c.h.b16 %v191
    %v1583 = vunpack.c.l.b16 %v192
    %v1584 = vunpack.c.l.b16 %v193
    %v1585 = vunpack.c.h.b16 %v193
    %v1586 = vunpack.c.l.b16 %v194
    %v1587 = vunpack.c.l.b16 %v195
    %v1588 = vunpack.c.h.b16 %v195
    %v1589 = vunpack.c.l.b16 %v196
    %v1590 = vunpack.c.l.b16 %v197
    %v1591 = vunpack.c.h.b16 %v197
    %v1592 = vunpack.c.l.b16 %v198
    %v1593 = vunpack.c.l.b16 %v199
    %v1594 = vunpack.c.h.b16 %v199
    %v1595 = vunpack.c.l.b16 %v200
    %v1596 = vunpack.c.l.b16 %v201
    %v1597 = vunpack.c.h.b16 %v201
    %v1598 = vunpack.c.l.b16 %v202
    %v1599 = vunpack.c.l.b16 %v203
    %v1600 = vunpack.c.h.b16 %v203
    %v1601 = vunpack.c.l.b16 %v204
    %v1602 = vunpack.c.l.b16 %v205
    %v1603 = vunpack.c.h.b16 %v205
    %v1604 = vunpack.c.l.b16 %v206
    %v1605 = vunpack.c.l.b16 %v207
    %v1606 = vunpack.c.h.b16 %v207
    %v1607 = vunpack.c.l.b16 %v208
    %v1608 = vunpack.c.l.b16 %v209
    %v1609 = vunpack.c.h.b16 %v209
    %v1610 = vunpack.c.l.b16 %v210
    %v1611 = vunpack.c.l.b16 %v211
    %v1612 = vunpack.c.h.b16 %v211
    %v1613 = vunpack.c.l.b16 %v212
    %v1614 = vunpack.c.l.b16 %v213
    %v1615 = vunpack.c.h.b16 %v213
    %v1616 = vunpack.c.l.b16 %v214
    %v1617 = vunpack.c.l.b16 %v215
    %v1618 = vunpack.c.h.b16 %v215
    %v1619 = vunpack.c.l.b16 %v216
    %v1620 = vunpack.c.l.b16 %v217
    %v1621 = vunpack.c.h.b16 %v217
    %v1622 = vunpack.c.l.b16 %v218
    %v1623 = vunpack.c.l.b16 %v219
    %v1624 = vunpack.c.h.b16 %v219
    %v1625 = vunpack.c.l.b16 %v220
    %v1626 = vunpack.c.l.b16 %v221
    %v1627 = vunpack.c.h.b16 %v221
    %v1628 = vunpack.c.l.b16 %v222
    %v1629 = vunpack.c.l.b16 %v223
    %v1630 = vunpack.c.h.b16 %v223
    %v1631 = vunpack.c.l.b16 %v224
    %v1632 = vunpack.c.l.b16 %v225
    %v1633 = vunpack.c.h.b16 %v225
    %v1634 = vunpack.c.l.b16 %v226
    %v1635 = vunpack.c.l.b16 %v227
    %v1636 = vunpack.c.h.b16 %v227
    %v1637 = vunpack.c.l.b16 %v228
    %v1638 = vunpack.c.l.b16 %v229
    %v1639 = vunpack.c.h.b16 %v229
    %v1640 = vunpack.c.l.b16 %v230
    %v1641 = vunpack.c.l.b16 %v231
    %v1642 = vunpack.c.h.b16 %v231
    %v1643 = vunpack.c.l.b16 %v232
    %v1644 = vunpack.c.l.b16 %v233
    %v1645 = vunpack.c.h.b16 %v233
    %v1646 = vunpack.c.l.b16 %v234
    %v1647 = vunpack.c.l.b16 %v235
    %v1648 = vunpack.c.h.b16 %v235
    %v1649 = vunpack.c.l.b16 %v236
    %v1650 = vunpack.c.l.b16 %v237
    %v1651 = vunpack.c.h.b16 %v237
    %v1652 = vunpack.c.l.b16 %v238
    %v1653 = vunpack.c.l.b16 %v239
    %v1654 = vunpack.c.h.b16 %v239
    %v1655 = vunpack.c.l.b16 %v240
    %v1656 = vunpack.c.l.b16 %v241
    %v1657 = vunpack.c.h.b16 %v241
    %v1658 = vunpack.c.l.b16 %v242
    %v1659 = vunpack.c.l.b16 %v243
    %v1660 = vunpack.c.h.b16 %v243
    %v1661 = vunpack.c.l.b16 %v244
    %v1662 = vunpack.c.l.b16 %v245
    %v1663 = vunpack.c.h.b16 %v245
    %v1664 = vunpack.c.l.b16 %v246
    %v1665 = vunpack.c.l.b16 %v247
    %v1666 = vunpack.c.h.b16 %v247
    %v1667 = vunpack.c.l.b16 %v248
    %v1668 = vunpack.c.l.b16 %v249
    %v1669 = vunpack.c.h.b16 %v249
    %v1670 = vunpack.c.l.b16 %v250
    %v1671 = vunpack.c.l.b16 %v251
    %v1672 = vunpack.c.h.b16 %v251
    %v1673 = vunpack.c.l.b16 %v252
    %v1674 = vunpack.c.l.b16 %v253
    %v1675 = vunpack.c.h.b16 %v253
    %v1676 = vunpack.c.l.b16 %v254
    %v1677 = vunpack.c.l.b16 %v255
    %v1678 = vunpack.c.h.b16 %v255
    %v1679 = vunpack.c.l.b16 %v256
    %v1680 = vunpack.c.l.b16 %v257
    %v1681 = vunpack.c.h.b16 %v257
    %v1682 = vunpack.c.l.b16 %v258
    %v1683 = vunpack.c.l.b16 %v259
    %v1684 = vunpack.c.h.b16 %v259
    %v1685 = vunpack.c.l.b16 %v260
    %v1686 = vunpack.c.l.b16 %v261
    %v1687 = vunpack.c.h.b16 %v261
    %v1688 = vunpack.c.l.b16 %v262
    %v1689 = vunpack.c.l.b16 %v263
    %v1690 = vunpack.c.h.b16 %v263
    %v1691 = vunpack.c.l.b16 %v264
    %v1692 = vunpack.c.l.b16 %v265
    %v1693 = vunpack.c.h.b16 %v265
    %v1694 = vunpack.c.l.b16 %v266
    %v1695 = vunpack.c.l.b16 %v267
    %v1696 = vunpack.c.h.b16 %v267
    %v1697 = vunpack.c.l.b16 %v268
    %v1698 = vunpack.c.l.b16 %v269
    %v1699 = vunpack.c.h.b16 %v269
    %v1700 = vunpack.c.l.b16 %v270
    %v1701 = vunpack.c.l.b16 %v271
    %v1702 = vunpack.c.h.b16 %v271
    %v1703 = vunpack.c.l.b16 %v272
    %v1704 = vunpack.c.l.b16 %v273
    %v1705 = vunpack.c.h.b16 %v273
    %v1706 = vunpack.c.l.b16 %v274
    %v1707 = vunpack.c.l.b16 %v275
    %v1708 = vunpack.c.h.b16 %v275
    %v1709 = vunpack.c.l.b16 %v276
    %v1710 = vunpack.c.l.b16 %v277
    %v1711 = vunpack.c.h.b16 %v277
    %v1712 = vunpack.c.l.b16 %v278
    %v1713 = vunpack.c.l.b16 %v279
    %v1714 = vunpack.c.h.b16 %v279
    %v1715 = vunpack.c.l.b16 %v280
    %v1716 = vunpack.c.l.b16 %v281
    %v1717 = vunpack.c.h.b16 %v281
    %v1718 = vunpack.c.l.b16 %v282
    %v1719 = vunpack.c.l.b16 %v283
    %v1720 = vunpack.c.h.b16 %v283
    %v1721 = vunpack.c.l.b16 %v284
    %v1722 = vunpack.c.l.b16 %v285
    %v1723 = vunpack.c.h.b16 %v285
    %v1724 = vunpack.c.l.b16 %v286
    %v1725 = vunpack.c.l.b16 %v287
    %v1726 = vunpack.c.h.b16 %v287
    %v1727 = vunpack.c.l.b16 %v288
    %v1728 = vunpack.c.l.b16 %v289
    %v1729 = vunpack.c.h.b16 %v289
    %v1730 = vunpack.c.l.b16 %v290
    %v1731 = vunpack.c.l.b16 %v291
    %v1732 = vunpack.c.h.b16 %v291
    %v1733 = vunpack.c.l.b16 %v292
    %v1734 = vunpack.c.l.b16 %v293
    %v1735 = vunpack.c.h.b16 %v293
    %v1736 = vunpack.c.l.b16 %v294
    %v1737 = vunpack.c.l.b16 %v295
    %v1738 = vunpack.c.h.b16 %v295
    %v1739 = vunpack.c.l.b16 %v296
    %v1740 = vunpack.c.l.b16 %v297
    %v1741 = vunpack.c.h.b16 %v297
    %v1742 = vunpack.c.l.b16 %v298
    %v1743 = vunpack.c.l.b16 %v299
    %v1744 = vunpack.c.h.b16 %v299
    %v1745 = vunpack.c.l.b16 %v300
    %v1746 = vunpack.c.l.b16 %v301
    %v1747 = vunpack.c.h.b16 %v301
    %v1748 = vunpack.c.l.b16 %v302
    %v1749 = vunpack.c.l.b16 %v303
    %v1750 = vunpack.c.h.b16 %v303
    %v1751 = vunpack.c.l.b16 %v304
    %v1752 = vunpack.c.l.b16 %v305
    %v1753 = vunpack.c.h.b16 %v305
    %v1754 = vunpack.c.l.b16 %v306
    %v1755 = vunpack.c.l.b16 %v307
    %v1756 = vunpack.c.h.b16 %v307
    %v1757 = vunpack.c.l.b16 %v308
    %v1758 = vunpack.c.l.b16 %v309
    %v1759 = vunpack.c.h.b16 %v309
    %v1760 = vunpack.c.l.b16 %v310
    %v1761 = vunpack.c.l.b16 %v311
    %v1762 = vunpack.c.h.b16 %v311
    %v1763 = vunpack.c.l.b16 %v312
    %v1764 = vunpack.c.l.b16 %v313
    %v1765 = vunpack.c.h.b16 %v313
    %v1766 = vunpack.c.l.b16 %v314
    %v1767 = vunpack.c.l.b16 %v315
    %v1768 = vunpack.c.h.b16 %v315
    %v1769 = vunpack.c.l.b16 %v316
    %v1770 = vunpack.c.l.b16 %v317
    %v1771 = vunpack.c.h.b16 %v317
    %v1772 = vunpack.c.l.b16 %v318
    %v1773 = vunpack.c.l.b16 %v319
    %v1774 = vunpack.c.h.b16 %v319
    %v1775 = vunpack.c.l.b16 %v320
    %v1776 = vunpack.c.l.b16 %v321
    %v1777 = vunpack.c.h.b16 %v321
    %v1778 = vunpack.c.l.b16 %v322
    %v1779 = vunpack.c.l.b16 %v323
    %v1780 = vunpack.c.h.b16 %v323
    %v1781 = vunpack.c.l.b16 %v324
    %v1782 = vunpack.c.l.b16 %v325
    %v1783 = vunpack.c.h.b16 %v325
    %v1784 = vunpack.c.l.b16 %v326
    %v1785 = vunpack.c.l.b16 %v327
    %v1786 = vunpack.c.h.b16 %v327
    %v1787 = vunpack.c.l.b16 %v328
    %v1788 = vunpack.c.l.b16 %v329
    %v1789 = vunpack.c.h.b16 %v329
    %v1790 = vunpack.c.l.b16 %v330
    %v1791 = vunpack.c.l.b16 %v331
    %v1792 = vunpack.c.h.b16 %v331
    %v1793 = vunpack.c.l.b16 %v332
    %v1794 = vunpack.c.l.b16 %v333
    %v1795 = vunpack.c.h.b16 %v333
    %v1796 = vunpack.c.l.b16 %v334
    %v1797 = vunpack.c.l.b16 %v335
    %v1798 = vunpack.c.h.b16 %v335
    %v1799 = vunpack.c.l.b16 %v336
    %v1800 = vunpack.c.l.b16 %v337
    %v1801 = vunpack.c.h.b16 %v337
    %v1802 = vunpack.c.l.b16 %v338
    %v1803 = vunpack.c.l.b16 %v339
    %v1804 = vunpack.c.h.b16 %v339
    %v1805 = vunpack.c.l.b16 %v340
    %v1806 = vunpack.c.l.b16 %v341
    %v1807 = vunpack.c.h.b16 %v341
    %v1808 = vunpack.c.l.b16 %v342
    %v1809 = vunpack.c.l.b16 %v343
    %v1810 = vunpack.c.h.b16 %v343
    %v1811 = vunpack.c.l.b16 %v344
    %v1812 = vunpack.c.l.b16 %v345
    %v1813 = vunpack.c.h.b16 %v345
    %v1814 = vunpack.c.l.b16 %v346
    %v1815 = vunpack.c.l.b16 %v347
    %v1816 = vunpack.c.h.b16 %v347
    %v1817 = vunpack.c.l.b16 %v348
    %v1818 = vunpack.c.l.b16 %v349
    %v1819 = vunpack.c.h.b16 %v349
    %v1820 = vunpack.c.l.b16 %v350
    %v1821 = vunpack.c.l.b16 %v351
    %v1822 = vunpack.c.h.b16 %v351
    %v1823 = vunpack.c.l.b16 %v352
    %v1824 = vunpack.c.l.b16 %v353
    %v1825 = vunpack.c.h.b16 %v353
    %v1826 = vunpack.c.l.b16 %v354
    %v1827 = vunpack.c.l.b16 %v355
    %v1828 = vunpack.c.h.b16 %v355
    %v1829 = vunpack.c.l.b16 %v356
    %v1830 = vunpack.c.l.b16 %v357
    %v1831 = vunpack.c.h.b16 %v357
    %v1832 = vunpack.c.l.b16 %v358
    %v1833 = vunpack.c.l.b16 %v359
    %v1834 = vunpack.c.h.b16 %v359
    %v1835 = vunpack.c.l.b16 %v360
    %v1836 = vunpack.c.l.b16 %v361
    %v1837 = vunpack.c.h.b16 %v361
    %v1838 = vunpack.c.l.b16 %v362
    %v1839 = vunpack.c.l.b16 %v363
    %v1840 = vunpack.c.h.b16 %v363
    %v1841 = vunpack.c.l.b16 %v364
    %v1842 = vunpack.c.l.b16 %v365
    %v1843 = vunpack.c.h.b16 %v365
    %v1844 = vunpack.c.l.b16 %v366
    %v1845 = vunpack.c.l.b16 %v367
    %v1846 = vunpack.c.h.b16 %v367
    %v1847 = vunpack.c.l.b16 %v368
    %v1848 = vunpack.c.l.b16 %v369
    %v1849 = vunpack.c.h.b16 %v369
    %v1850 = vunpack.c.l.b16 %v370
    %v1851 = vunpack.c.l.b16 %v371
    %v1852 = vunpack.c.h.b16 %v371
    %v1853 = vunpack.c.l.b16 %v372
    %v1854 = vunpack.c.l.b16 %v373
    %v1855 = vunpack.c.h.b16 %v373
    %v1856 = vunpack.c.l.b16 %v374
    %v1857 = vunpack.c.l.b16 %v375
    %v1858 = vunpack.c.h.b16 %v375
    %v1859 = vunpack.c.l.b16 %v376
    %v1860 = vunpack.c.l.b16 %v377
    %v1861 = vunpack.c.h.b16 %v377
    %v1862 = vunpack.c.l.b16 %v378
    %v1863 = vunpack.c.l.b16 %v379
    %v1864 = vunpack.c.h.b16 %v379
    %v1865 = vunpack.c.l.b16 %v380
    %v1866 = vunpack.c.l.b16 %v381
    %v1867 = vunpack.c.h.b16 %v381
    %v1868 = vunpack.c.l.b16 %v382
    %v1869 = vunpack.c.l.b16 %v383
    %v1870 = vunpack.c.h.b16 %v383
    %v1871 = vunpack.c.l.b16 %v384
    %v1872 = vunpack.c.l.b16 %v385
    %v1873 = vunpack.c.h.b16 %v385
    %v1874 = vunpack.c.l.b16 %v386
    %v1875 = vunpack.c.l.b16 %v387
    %v1876 = vunpack.c.h.b16 %v387
    %v1877 = vunpack.c.l.b16 %v388
    %v1878 = vunpack.c.l.b16 %v389
    %v1879 = vunpack.c.h.b16 %v389
    %v1880 = vunpack.c.l.b16 %v390
    %v1881 = vunpack.c.l.b16 %v391
    %v1882 = vunpack.c.h.b16 %v391
    %v1883 = vunpack.c.l.b16 %v392
    %v1884 = vunpack.c.l.b16 %v393
    %v1885 = vunpack.c.h.b16 %v393
    %v1886 = vunpack.c.l.b16 %v394
    %v1887 = vunpack.c.l.b16 %v395
    %v1888 = vunpack.c.h.b16 %v395
    %v1889 = vunpack.c.l.b16 %v396
    %v1890 = vunpack.c.l.b16 %v397
    %v1891 = vunpack.c.h.b16 %v397
    %v1892 = vunpack.c.l.b16 %v398
    %v1893 = vunpack.c.l.b16 %v399
    %v1894 = vunpack.c.h.b16 %v399
    %v1895 = vunpack.c.l.b16 %v400
    %v1896 = vunpack.c.l.b16 %v401
    %v1897 = vunpack.c.h.b16 %v401
    %v1898 = vunpack.c.l.b16 %v402
    %v1899 = vunpack.c.l.b16 %v403
    %v1900 = vunpack.c.h.b16 %v403
    %v1901 = vunpack.c.l.b16 %v404
    %v1902 = vunpack.c.l.b16 %v405
    %v1903 = vunpack.c.h.b16 %v405
    %v1904 = vunpack.c.l.b16 %v406
    %v1905 = vunpack.c.l.b16 %v407
    %v1906 = vunpack.c.h.b16 %v407
    %v1907 = vunpack.c.l.b16 %v408
    %v1908 = vunpack.c.l.b16 %v409
    %v1909 = vunpack.c.h.b16 %v409
    %v1910 = vunpack.c.l.b16 %v410
    %v1911 = vunpack.c.l.b16 %v411
    %v1912 = vunpack.c.h.b16 %v411
    %v1913 = vunpack.c.l.b16 %v412
    %v1914 = vunpack.c.l.b16 %v413
    %v1915 = vunpack.c.h.b16 %v413
    %v1916 = vunpack.c.l.b16 %v414
    %v1917 = vunpack.c.l.b16 %v415
    %v1918 = vunpack.c.h.b16 %v415
    %v1919 = vunpack.c.l.b16 %v416
    %v1920 = vunpack.c.l.b16 %v417
    %v1921 = vunpack.c.h.b16 %v417
    %v1922 = vunpack.c.l.b16 %v418
    %v1923 = vunpack.c.l.b16 %v419
    %v1924 = vunpack.c.h.b16 %v419
    %v1925 = vunpack.c.l.b16 %v420
    %v1926 = vunpack.c.l.b16 %v421
    %v1927 = vunpack.c.h.b16 %v421
    %v1928 = vunpack.c.l.b16 %v422
    %v1929 = vunpack.c.l.b16 %v423
    %v1930 = vunpack.c.h.b16 %v423
    %v1931 = vunpack.c.l.b16 %v424
    %v1932 = vunpack.c.l.b16 %v425
    %v1933 = vunpack.c.h.b16 %v425
    %v1934 = vunpack.c.l.b16 %v426
    %v1935 = vunpack.c.l.b16 %v427
    %v1936 = vunpack.c.h.b16 %v427
    %v1937 = vunpack.c.l.b16 %v428
    %v1938 = vunpack.c.l.b16 %v429
    %v1939 = vunpack.c.h.b16 %v429
    %v1940 = vunpack.c.l.b16 %v430
    %v1941 = vunpack.c.l.b16 %v431
    %v1942 = vunpack.c.h.b16 %v431
    %v1943 = vunpack.c.l.b16 %v432
    %v1944 = vunpack.c.l.b16 %v433
    %v1945 = vunpack.c.h.b16 %v433
    %v1946 = vunpack.c.l.b16 %v434
    %v1947 = vunpack.c.l.b16 %v435
    %v1948 = vunpack.c.h.b16 %v435
    %v1949 = vunpack.c.l.b16 %v436
    %v1950 = vunpack.c.l.b16 %v437
    %v1951 = vunpack.c.h.b16 %v437
    %v1952 = vunpack.c.l.b16 %v438
    %v1953 = vunpack.c.l.b16 %v439
    %v1954 = vunpack.c.h.b16 %v439
    %v1955 = vunpack.c.l.b16 %v440
    %v1956 = vunpack.c.l.b16 %v441
    %v1957 = vunpack.c.h.b16 %v441
    %v1958 = vunpack.c.l.b16 %v442
    %v1959 = vunpack.c.l.b16 %v443
    %v1960 = vunpack.c.h.b16 %v443
    %v1961 = vunpack.c.l.b16 %v444
    %v1962 = vunpack.c.l.b16 %v445
    %v1963 = vunpack.c.h.b16 %v445
    %v1964 = vunpack.c.l.b16 %v446
    %v1965 = vunpack.c.l.b16 %v447
    %v1966 = vunpack.c.h.b16 %v447
    %v1967 = vunpack.c.l.b16 %v448
    %v1968 = vunpack.c.l.b16 %v449
    %v1969 = vunpack.c.h.b16 %v449
    %v1970 = vunpack.c.l.b16 %v450
    %v1971 = vunpack.c.l.b16 %v451
    %v1972 = vunpack.c.h.b16 %v451
    %v1973 = vunpack.c.l.b16 %v452
    %v1974 = vunpack.c.l.b16 %v453
    %v1975 = vunpack.c.h.b16 %v453
    %v1976 = vunpack.c.l.b16 %v454
    %v1977 = vunpack.c.l.b16 %v455
    %v1978 = vunpack.c.h.b16 %v455
    %v1979 = vunpack.c.l.b16 %v456
    %v1980 = vunpack.c.l.b16 %v457
    %v1981 = vunpack.c.h.b16 %v457
    %v1982 = vunpack.c.l.b16 %v458
    %v1983 = vunpack.c.l.b16 %v459
    %v1984 = vunpack.c.h.b16 %v459
    %v1985 = vunpack.c.l.b16 %v460
    %v1986 = vunpack.c.l.b16 %v461
    %v1987 = vunpack.c.h.b16 %v461
    %v1988 = vunpack.c.l.b16 %v462
    %v1989 = vunpack.c.l.b16 %v463
    %v1990 = vunpack.c.h.b16 %v463
    %v1991 = vunpack.c.l.b16 %v464
    %v1992 = vunpack.c.l.b16 %v465
    %v1993 = vunpack.c.h.b16 %v465
    %v1994 = vunpack.c.l.b16 %v466
    %v1995 = vunpack.c.l.b16 %v467
    %v1996 = vunpack.c.h.b16 %v467
    %v1997 = vunpack.c.l.b16 %v468
    %v1998 = vunpack.c.l.b16 %v469
    %v1999 = vunpack.c.h.b16 %v469
    %v2000 = vunpack.c.l.b16 %v470
    %v2001 = vunpack.c.l.b16 %v471
    %v2002 = vunpack.c.h.b16 %v471
    %v2003 = vunpack.c.l.b16 %v472
    %v2004 = vunpack.c.l.b16 %v473
    %v2005 = vunpack.c.h.b16 %v473
    %v2006 = vunpack.c.l.b16 %v474
    %v2007 = vunpack.c.l.b16 %v475
    %v2008 = vunpack.c.h.b16 %v475
    %v2009 = vunpack.c.l.b16 %v476
    %v2010 = vunpack.c.l.b16 %v477
    %v2011 = vunpack.c.h.b16 %v477
    %v2012 = vunpack.c.l.b16 %v478
    %v2013 = vunpack.c.l.b16 %v479
    %v2014 = vunpack.c.h.b16 %v479
    %v2015 = vunpack.c.l.b16 %v480
    %v2016 = vunpack.c.l.b16 %v481
    %v2017 = vunpack.c.h.b16 %v481
    %v2018 = vunpack.c.l.b16 %v482
    %v2019 = vunpack.c.l.b16 %v483
    %v2020 = vunpack.c.h.b16 %v483
    %v2021 = vunpack.c.l.b16 %v484
    %v2022 = vunpack.c.l.b16 %v485
    %v2023 = vunpack.c.h.b16 %v485
    %v2024 = vunpack.c.l.b16 %v486
    %v2025 = vunpack.c.l.b16 %v487
    %v2026 = vunpack.c.h.b16 %v487
    %v2027 = vunpack.c.l.b16 %v488
    %v2028 = vunpack.c.l.b16 %v489
    %v2029 = vunpack.c.h.b16 %v489
    %v2030 = vunpack.c.l.b16 %v490
    %v2031 = vunpack.c.l.b16 %v491
    %v2032 = vunpack.c.h.b16 %v491
    %v2033 = vunpack.c.l.b16 %v492
    %v2034 = vunpack.c.l.b16 %v493
    %v2035 = vunpack.c.h.b16 %v493
    %v2036 = vunpack.c.l.b16 %v494
    %v2037 = vunpack.c.l.b16 %v495
    %v2038 = vunpack.c.h.b16 %v495
    %v2039 = vunpack.c.l.b16 %v496
    %v2040 = vunpack.c.l.b16 %v497
    %v2041 = vunpack.c.h.b16 %v497
    %v2042 = vunpack.c.l.b16 %v498
    %v2043 = vunpack.c.l.b16 %v499
    %v2044 = vunpack.c.h.b16 %v499
    %v2045 = vunpack.c.l.b16 %v500
    %v2046 = vunpack.c.l.b16 %v501
    %v2047 = vunpack.c.h.b16 %v501
    %v2048 = vunpack.c.l.b16 %v502
    %v2049 = vunpack.c.l.b16 %v503
    %v2050 = vunpack.c.h.b16 %v503
    %v2051 = vunpack.c.l.b16 %v504
    %v2052 = vunpack.c.l.b16 %v505
    %v2053 = vunpack.c.h.b16 %v505
    %v2054 = vunpack.c.l.b16 %v506
    %v2055 = vunpack.c.l.b16 %v507
    %v2056 = vunpack.c.h.b16 %v507
    %v2057 = vunpack.c.l.b16 %v508
    %v2058 = vunpack.c.l.b16 %v509
    %v2059 = vunpack.c.h.b16 %v509
    %v2060 = vunpack.c.l.b16 %v510
    %v2061 = vunpack.c.l.b16 %v511
    %v2062 = vunpack.c.h.b16 %v511
    %v2063 = vunpack.c.l.b16 %v512
    %v2064 = vunpack.c.l.b16 %v513
    %v2065 = vunpack.c.h.b16 %v513
    %v2066 = vunpack.c.l.b16 %v514
    %v2067 = vunpack.c.l.b16 %v515
    %v2068 = vunpack.c.h.b16 %v515
    %v2069 = vunpack.c.l.b16 %v516
    %v2070 = vunpack.c.l.b16 %v517
    %v2071 = vunpack.c.h.b16 %v517
    %v2072 = vunpack.c.l.b16 %v518
    %v2073 = vunpack.c.l.b16 %v519
    %v2074 = vunpack.c.h.b16 %v519
    %v2075 = vunpack.c.l.b16 %v520
    %v2076 = vunpack.c.l.b16 %v521
    %v2077 = vunpack.c.h.b16 %v521
    %v2078 = vunpack.c.l.b16 %v522
    %v2079 = vunpack.c.l.b16 %v523
    %v2080 = vunpack.c.h.b16 %v523
    %v2081 = vunpack.c.l.b16 %v524
    %v2082 = vunpack.c.l.b16 %v525
    %v2083 = vunpack.c.h.b16 %v525
    %v2084 = vunpack.c.l.b16 %v526
    %v2085 = vunpack.c.l.b16 %v527
    %v2086 = vunpack.c.h.b16 %v527
    %v2087 = vunpack.c.l.b16 %v528
    %v2088 = vunpack.c.l.b16 %v529
    %v2089 = vunpack.c.h.b16 %v529
    %v2090 = vunpack.c.l.b16 %v530
    %v2091 = vunpack.c.l.b16 %v531
    %v2092 = vunpack.c.h.b16 %v531
    %v2093 = vunpack.c.l.b16 %v532
    %v2094 = vunpack.c.l.b16 %v533
    %v2095 = vunpack.c.h.b16 %v533
    %v2096 = vunpack.c.l.b16 %v534
    %v2097 = vunpack.c.l.b16 %v535
    %v2098 = vunpack.c.h.b16 %v535
    %v2099 = vunpack.c.l.b16 %v536
    %v2100 = vunpack.c.l.b16 %v537
    %v2101 = vunpack.c.h.b16 %v537
    %v2102 = vunpack.c.l.b16 %v538
    %v2103 = vunpack.c.l.b16 %v539
    %v2104 = vunpack.c.h.b16 %v539
    %v2105 = vunpack.c.l.b16 %v540
    %v2106 = vunpack.c.l.b16 %v541
    %v2107 = vunpack.c.h.b16 %v541
    %v2108 = vunpack.c.l.b16 %v542
    %v2109 = vunpack.c.l.b16 %v543
    %v2110 = vunpack.c.h.b16 %v543
    %v2111 = vunpack.c.l.b16 %v544
    %v2112 = vunpack.c.l.b16 %v545
    %v2113 = vunpack.c.h.b16 %v545
    %v2114 = vunpack.c.l.b16 %v546
    %v2115 = vunpack.c.l.b16 %v547
    %v2116 = vunpack.c.h.b16 %v547
    %v2117 = vunpack.c.l.b16 %v548
    %v2118 = vunpack.c.l.b16 %v549
    %v2119 = vunpack.c.h.b16 %v549
    %v2120 = vunpack.c.l.b16 %v550
    %v2121 = vunpack.c.l.b16 %v551
    %v2122 = vunpack.c.h.b16 %v551
    %v2123 = vunpack.c.l.b16 %v552
    %v2124 = vunpack.c.l.b16 %v553
    %v2125 = vunpack.c.h.b16 %v553
    %v2126 = vunpack.c.l.b16 %v554
    %v2127 = vunpack.c.l.b16 %v555
    %v2128 = vunpack.c.h.b16 %v555
    %v2129 = vunpack.c.l.b16 %v556
    %v2130 = vunpack.c.l.b16 %v557
    %v2131 = vunpack.c.h.b16 %v557
    %v2132 = vunpack.c.l.b16 %v558
    %v2133 = vunpack.c.l.b16 %v559
    %v2134 = vunpack.c.h.b16 %v559
    %v2135 = vunpack.c.l.b16 %v560
    %v2136 = vunpack.c.l.b16 %v561
    %v2137 = vunpack.c.h.b16 %v561
    %v2138 = vunpack.c.l.b16 %v562
    %v2139 = vunpack.c.l.b16 %v563
    %v2140 = vunpack.c.h.b16 %v563
    %v2141 = vunpack.c.l.b16 %v564
    %v2142 = vunpack.c.l.b16 %v565
    %v2143 = vunpack.c.h.b16 %v565
    %v2144 = vunpack.c.l.b16 %v566
    %v2145 = vunpack.c.l.b16 %v567
    %v2146 = vunpack.c.h.b16 %v567
    %v2147 = vunpack.c.l.b16 %v568
    %v2148 = vunpack.c.l.b16 %v569
    %v2149 = vunpack.c.h.b16 %v569
    %v2150 = vunpack.c.l.b16 %v570
    %v2151 = vunpack.c.l.b16 %v571
    %v2152 = vunpack.c.h.b16 %v571
    %v2153 = vunpack.c.l.b16 %v572
    %v2154 = vunpack.c.l.b16 %v573
    %v2155 = vunpack.c.h.b16 %v573
    %v2156 = vunpack.c.l.b16 %v574
    %v2157 = vunpack.c.l.b16 %v575
    %v2158 = vunpack.c.h.b16 %v575
    %v2159 = vunpack.c.l.b16 %v576
    %v2160 = vunpack.c.l.b16 %v577
    %v2161 = vunpack.c.h.b16 %v577
    %v2162 = vunpack.c.l.b16 %v578
    %v2163 = vunpack.c.l.b16 %v579
    %v2164 = vunpack.c.h.b16 %v579
    %v2165 = vunpack.c.l.b16 %v580
    %v2166 = vunpack.c.l.b16 %v581
    %v2167 = vunpack.c.h.b16 %v581
    %v2168 = vunpack.c.l.b16 %v582
    %v2169 = vunpack.c.l.b16 %v583
    %v2170 = vunpack.c.h.b16 %v583
    %v2171 = vunpack.c.l.b16 %v584
    %v2172 = vunpack.c.l.b16 %v585
    %v2173 = vunpack.c.h.b16 %v585
    %v2174 = vunpack.c.l.b16 %v586
    %v2175 = vunpack.c.l.b16 %v587
    %v2176 = vunpack.c.h.b16 %v587
    %v2177 = vunpack.c.l.b16 %v588
    %v2178 = vunpack.c.l.b16 %v589
    %v2179 = vunpack.c.h.b16 %v589
    %v2180 = vunpack.c.l.b16 %v590
    %v2181 = vunpack.c.l.b16 %v591
    %v2182 = vunpack.c.h.b16 %v591
    %v2183 = vunpack.c.l.b16 %v592
    %v2184 = vunpack.c.l.b16 %v593
    %v2185 = vunpack.c.h.b16 %v593
    %v2186 = vunpack.c.l.b16 %v594
    %v2187 = vunpack.c.l.b16 %v595
    %v2188 = vunpack.c.h.b16 %v595
    %v2189 = vunpack.c.l.b16 %v596
    %v2190 = vunpack.c.l.b16 %v597
    %v2191 = vunpack.c.h.b16 %v597
    %v2192 = vunpack.c.l.b16 %v598
    %v2193 = vunpack.c.l.b16 %v599
    %v2194 = vunpack.c.h.b16 %v599
    %v2195 = vunpack.c.l.b16 %v600
    %v2196 = vunpack.c.l.b16 %v601
    %v2197 = vunpack.c.h.b16 %v601
    %v2198 = vunpack.c.l.b16 %v602
    %v2199 = vunpack.c.l.b16 %v603
    %v2200 = vunpack.c.h.b16 %v603
    %v2201 = vunpack.c.l.b16 %v604
    %v2202 = vunpack.c.l.b16 %v605
    %v2203 = vunpack.c.h.b16 %v605
    %v2204 = vunpack.c.l.b16 %v606
    %v2205 = vpack.c.b16 %v1344, %v1341
    %v2206 = vpack.c.b16 %v1345, %v1342
    %v2207 = vpack.c.b16 %v1346, %v1343
    %v2208 = vpack.c.b16 %v1350, %v1347
    %v2209 = vpack.c.b16 %v1351, %v1348
    %v2210 = vpack.c.b16 %v1352, %v1349
    %v2211 = vpack.c.b16 %v1356, %v1353
    %v2212 = vpack.c.b16 %v1357, %v1354
    %v2213 = vpack.c.b16 %v1358, %v1355
    %v2214 = vpack.c.b16 %v1362, %v1359
    %v2215 = vpack.c.b16 %v1363, %v1360
    %v2216 = vpack.c.b16 %v1364, %v1361
    %v2217 = vpack.c.b16 %v1368, %v1365
    %v2218 = vpack.c.b16 %v1369, %v1366
    %v2219 = vpack.c.b16 %v1370, %v1367
    %v2220 = vpack.c.b16 %v1374, %v1371
    %v2221 = vpack.c.b16 %v1375, %v1372
    %v2222 = vpack.c.b16 %v1376, %v1373
    %v2223 = vpack.c.b16 %v1380, %v1377
    %v2224 = vpack.c.b16 %v1381, %v1378
    %v2225 = vpack.c.b16 %v1382, %v1379
    %v2226 = vpack.c.b16 %v1386, %v1383
    %v2227 = vpack.c.b16 %v1387, %v1384
    %v2228 = vpack.c.b16 %v1388, %v1385
    %v2229 = vpack.c.b16 %v1392, %v1389
    %v2230 = vpack.c.b16 %v1393, %v1390
    %v2231 = vpack.c.b16 %v1394, %v1391
    %v2232 = vpack.c.b16 %v1398, %v1395
    %v2233 = vpack.c.b16 %v1399, %v1396
    %v2234 = vpack.c.b16 %v1400, %v1397
    %v2235 = vpack.c.b16 %v1404, %v1401
    %v2236 = vpack.c.b16 %v1405, %v1402
    %v2237 = vpack.c.b16 %v1406, %v1403
    %v2238 = vpack.c.b16 %v1410, %v1407
    %v2239 = vpack.c.b16 %v1411, %v1408
    %v2240 = vpack.c.b16 %v1412, %v1409
    %v2241 = vpack.c.b16 %v1416, %v1413
    %v2242 = vpack.c.b16 %v1417, %v1414
    %v2243 = vpack.c.b16 %v1418, %v1415
    %v2244 = vpack.c.b16 %v1422, %v1419
    %v2245 = vpack.c.b16 %v1423, %v1420
    %v2246 = vpack.c.b16 %v1424, %v1421
    %v2247 = vpack.c.b16 %v1428, %v1425
    %v2248 = vpack.c.b16 %v1429, %v1426
    %v2249 = vpack.c.b16 %v1430, %v1427
    %v2250 = vpack.c.b16 %v1434, %v1431
    %v2251 = vpack.c.b16 %v1435, %v1432
    %v2252 = vpack.c.b16 %v1436, %v1433
    %v2253 = vpack.c.b16 %v1440, %v1437
    %v2254 = vpack.c.b16 %v1441, %v1438
    %v2255 = vpack.c.b16 %v1442, %v1439
    %v2256 = vpack.c.b16 %v1446, %v1443
    %v2257 = vpack.c.b16 %v1447, %v1444
    %v2258 = vpack.c.b16 %v1448, %v1445
    %v2259 = vpack.c.b16 %v1452, %v1449
    %v2260 = vpack.c.b16 %v1453, %v1450
    %v2261 = vpack.c.b16 %v1454, %v1451
    %v2262 = vpack.c.b16 %v1458, %v1455
    %v2263 = vpack.c.b16 %v1459, %v1456
    %v2264 = vpack.c.b16 %v1460, %v1457
    %v2265 = vpack.c.b16 %v1464, %v1461
    %v2266 = vpack.c.b16 %v1465, %v1462
    %v2267 = vpack.c.b16 %v1466, %v1463
    %v2268 = vpack.c.b16 %v1470, %v1467
    %v2269 = vpack.c.b16 %v1471, %v1468
    %v2270 = vpack.c.b16 %v1472, %v1469
    %v2271 = vpack.c.b16 %v1476, %v1473
    %v2272 = vpack.c.b16 %v1477, %v1474
    %v2273 = vpack.c.b16 %v1478, %v1475
    %v2274 = vpack.c.b16 %v1482, %v1479
    %v2275 = vpack.c.b16 %v1483, %v1480
    %v2276 = vpack.c.b16 %v1484, %v1481
    %v2277 = vpack.c.b16 %v1488, %v1485
    %v2278 = vpack.c.b16 %v1489, %v1486
    %v2279 = vpack.c.b16 %v1490, %v1487
    %v2280 = vpack.c.b16 %v1494, %v1491
    %v2281 = vpack.c.b16 %v1495, %v1492
    %v2282 = vpack.c.b16 %v1496, %v1493
    %v2283 = vpack.c.b16 %v1500, %v1497
    %v2284 = vpack.c.b16 %v1501, %v1498
    %v2285 = vpack.c.b16 %v1502, %v1499
    %v2286 = vpack.c.b16 %v1506, %v1503
    %v2287 = vpack.c.b16 %v1507, %v1504
    %v2288 = vpack.c.b16 %v1508, %v1505
    %v2289 = vpack.c.b16 %v1512, %v1509
    %v2290 = vpack.c.b16 %v1513, %v1510
    %v2291 = vpack.c.b16 %v1514, %v1511
    %v2292 = vpack.c.b16 %v1518, %v1515
    %v2293 = vpack.c.b16 %v1519, %v1516
    %v2294 = vpack.c.b16 %v1520, %v1517
    %v2295 = vpack.c.b16 %v1524, %v1521
    %v2296 = vpack.c.b16 %v1525, %v1522
    %v2297 = vpack.c.b16 %v1526, %v1523
    %v2298 = vpack.c.b16 %v1530, %v1527
    %v2299 = vpack.c.b16 %v1531, %v1528
    %v2300 = vpack.c.b16 %v1532, %v1529
    %v2301 = vpack.c.b16 %v1536, %v1533
    %v2302 = vpack.c.b16 %v1537, %v1534
    %v2303 = vpack.c.b16 %v1538, %v1535
    %v2304 = vpack.c.b16 %v1542, %v1539
    %v2305 = vpack.c.b16 %v1543, %v1540
    %v2306 = vpack.c.b16 %v1544, %v1541
    %v2307 = vpack.c.b16 %v1548, %v1545
    %v2308 = vpack.c.b16 %v1549, %v1546
    %v2309 = vpack.c.b16 %v1550, %v1547
    %v2310 = vpack.c.b16 %v1554, %v1551
    %v2311 = vpack.c.b16 %v1555, %v1552
    %v2312 = vpack.c.b16 %v1556, %v1553
    %v2313 = vpack.c.b16 %v1560, %v1557
    %v2314 = vpack.c.b16 %v1561, %v1558
    %v2315 = vpack.c.b16 %v1562, %v1559
    %v2316 = vpack.c.b16 %v1566, %v1563
    %v2317 = vpack.c.b16 %v1567, %v1564
    %v2318 = vpack.c.b16 %v1568, %v1565
    %v2319 = vpack.c.b16 %v1572, %v1569
    %v2320 = vpack.c.b16 %v1573, %v1570
    %v2321 = vpack.c.b16 %v1574, %v1571
    %v2322 = vpack.c.b16 %v1578, %v1575
    %v2323 = vpack.c.b16 %v1579, %v1576
    %v2324 = vpack.c.b16 %v1580, %v1577
    %v2325 = vpack.c.b16 %v1584, %v1581
    %v2326 = vpack.c.b16 %v1585, %v1582
    %v2327 = vpack.c.b16 %v1586, %v1583
    %v2328 = vpack.c.b16 %v1590, %v1587
    %v2329 = vpack.c.b16 %v1591, %v1588
    %v2330 = vpack.c.b16 %v1592, %v1589
    %v2331 = vpack.c.b16 %v1596, %v1593
    %v2332 = vpack.c.b16 %v1597, %v1594
    %v2333 = vpack.c.b16 %v1598, %v1595
    %v2334 = vpack.c.b16 %v1602, %v1599
    %v2335 = vpack.c.b16 %v1603, %v1600
    %v2336 = vpack.c.b16 %v1604, %v1601
    %v2337 = vpack.c.b16 %v1608, %v1605
    %v2338 = vpack.c.b16 %v1609, %v1606
    %v2339 = vpack.c.b16 %v1610, %v1607
    %v2340 = vpack.c.b16 %v1614, %v1611
    %v2341 = vpack.c.b16 %v1615, %v1612
    %v2342 = vpack.c.b16 %v1616, %v1613
    %v2343 = vpack.c.b16 %v1620, %v1617
    %v2344 = vpack.c.b16 %v1621, %v1618
    %v2345 = vpack.c.b16 %v1622, %v1619
    %v2346 = vpack.c.b16 %v1626, %v1623
    %v2347 = vpack.c.b16 %v1627, %v1624
    %v2348 = vpack.c.b16 %v1628, %v1625
    %v2349 = vpack.c.b16 %v1632, %v1629
    %v2350 = vpack.c.b16 %v1633, %v1630
    %v2351 = vpack.c.b16 %v1634, %v1631
    %v2352 = vpack.c.b16 %v1638, %v1635
    %v2353 = vpack.c.b16 %v1639, %v1636
    %v2354 = vpack.c.b16 %v1640, %v1637
    %v2355 = vpack.c.b16 %v1644, %v1641
    %v2356 = vpack.c.b16 %v1645, %v1642
    %v2357 = vpack.c.b16 %v1646, %v1643
    %v2358 = vpack.c.b16 %v1650, %v1647
    %v2359 = vpack.c.b16 %v1651, %v1648
    %v2360 = vpack.c.b16 %v1652, %v1649
    %v2361 = vpack.c.b16 %v1656, %v1653
    %v2362 = vpack.c.b16 %v1657, %v1654
    %v2363 = vpack.c.b16 %v1658, %v1655
    %v2364 = vpack.c.b16 %v1662, %v1659
    %v2365 = vpack.c.b16 %v1663, %v1660
    %v2366 = vpack.c.b16 %v1664, %v1661
    %v2367 = vpack.c.b16 %v1668, %v1665
    %v2368 = vpack.c.b16 %v1669, %v1666
    %v2369 = vpack.c.b16 %v1670, %v1667
    %v2370 = vpack.c.b16 %v1674, %v1671
    %v2371 = vpack.c.b16 %v1675, %v1672
    %v2372 = vpack.c.b16 %v1676, %v1673
    %v2373 = vpack.c.b16 %v1680, %v1677
    %v2374 = vpack.c.b16 %v1681, %v1678
    %v2375 = vpack.c.b16 %v1682, %v1679
    %v2376 = vpack.c.b16 %v1686, %v1683
    %v2377 = vpack.c.b16 %v1687, %v1684
    %v2378 = vpack.c.b16 %v1688, %v1685
    %v2379 = vpack.c.b16 %v1692, %v1689
    %v2380 = vpack.c.b16 %v1693, %v1690
    %v2381 = vpack.c.b16 %v1694, %v1691
    %v2382 = vpack.c.b16 %v1698, %v1695
    %v2383 = vpack.c.b16 %v1699, %v1696
    %v2384 = vpack.c.b16 %v1700, %v1697
    %v2385 = vpack.c.b16 %v1704, %v1701
    %v2386 = vpack.c.b16 %v1705, %v1702
    %v2387 = vpack.c.b16 %v1706, %v1703
    %v2388 = vpack.c.b16 %v1710, %v1707
    %v2389 = vpack.c.b16 %v1711, %v1708
    %v2390 = vpack.c.b16 %v1712, %v1709
    %v2391 = vpack.c.b16 %v1716, %v1713
    %v2392 = vpack.c.b16 %v1717, %v1714
    %v2393 = vpack.c.b16 %v1718, %v1715
    %v2394 = vpack.c.b16 %v1722, %v1719
    %v2395 = vpack.c.b16 %v1723, %v1720
    %v2396 = vpack.c.b16 %v1724, %v1721
    %v2397 = vpack.c.b16 %v1728, %v1725
    %v2398 = vpack.c.b16 %v1729, %v1726
    %v2399 = vpack.c.b16 %v1730, %v1727
    %v2400 = vpack.c.b16 %v1734, %v1731
    %v2401 = vpack.c.b16 %v1735, %v1732
    %v2402 = vpack.c.b16 %v1736, %v1733
    %v2403 = vpack.c.b16 %v1740, %v1737
    %v2404 = vpack.c.b16 %v1741, %v1738
    %v2405 = vpack.c.b16 %v1742, %v1739
    %v2406 = vpack.c.b16 %v1746, %v1743
    %v2407 = vpack.c.b16 %v1747, %v1744
    %v2408 = vpack.c.b16 %v1748, %v1745
    %v2409 = vpack.c.b16 %v1752, %v1749
    %v2410 = vpack.c.b16 %v1753, %v1750
    %v2411 = vpack.c.b16 %v1754, %v1751
    %v2412 = vpack.c.b16 %v1758, %v1755
    %v2413 = vpack.c.b16 %v1759, %v1756
    %v2414 = vpack.c.b16 %v1760, %v1757
    %v2415 = vpack.c.b16 %v1764, %v1761
    %v2416 = vpack.c.b16 %v1765, %v1762
    %v2417 = vpack.c.b16 %v1766, %v1763
    %v2418 = vpack.c.b16 %v1770, %v1767
    %v2419 = vpack.c.b16 %v1771, %v1768
    %v2420 = vpack.c.b16 %v1772, %v1769
    %v2421 = vpack.c.b16 %v1776, %v1773
    %v2422 = vpack.c.b16 %v1777, %v1774
    %v2423 = vpack.c.b16 %v1778, %v1775
    %v2424 = vpack.c.b16 %v1782, %v1779
    %v2425 = vpack.c.b16 %v1783, %v1780
    %v2426 = vpack.c.b16 %v1784, %v1781
    %v2427 = vpack.c.b16 %v1788, %v1785
    %v2428 = vpack.c.b16 %v1789, %v1786
    %v2429 = vpack.c.b16 %v1790, %v1787
    %v2430 = vpack.c.b16 %v1794, %v1791
    %v2431 = vpack.c.b16 %v1795, %v1792
    %v2432 = vpack.c.b16 %v1796, %v1793
    %v2433 = vpack.c.b16 %v1800, %v1797
    %v2434 = vpack.c.b16 %v1801, %v1798
    %v2435 = vpack.c.b16 %v1802, %v1799
    %v2436 = vpack.c.b16 %v1806, %v1803
    %v2437 = vpack.c.b16 %v1807, %v1804
    %v2438 = vpack.c.b16 %v1808, %v1805
    %v2439 = vpack.c.b16 %v1812, %v1809
    %v2440 = vpack.c.b16 %v1813, %v1810
    %v2441 = vpack.c.b16 %v1814, %v1811
    %v2442 = vpack.c.b16 %v1818, %v1815
    %v2443 = vpack.c.b16 %v1819, %v1816
    %v2444 = vpack.c.b16 %v1820, %v1817
    %v2445 = vpack.c.b16 %v1824, %v1821
    %v2446 = vpack.c.b16 %v1825, %v1822
    %v2447 = vpack.c.b16 %v1826, %v1823
    %v2448 = vpack.c.b16 %v1830, %v1827
    %v2449 = vpack.c.b16 %v1831, %v1828
    %v2450 = vpack.c.b16 %v1832, %v1829
    %v2451 = vpack.c.b16 %v1836, %v1833
    %v2452 = vpack.c.b16 %v1837, %v1834
    %v2453 = vpack.c.b16 %v1838, %v1835
    %v2454 = vpack.c.b16 %v1842, %v1839
    %v2455 = vpack.c.b16 %v1843, %v1840
    %v2456 = vpack.c.b16 %v1844, %v1841
    %v2457 = vpack.c.b16 %v1848, %v1845
    %v2458 = vpack.c.b16 %v1849, %v1846
    %v2459 = vpack.c.b16 %v1850, %v1847
    %v2460 = vpack.c.b16 %v1854, %v1851
    %v2461 = vpack.c.b16 %v1855, %v1852
    %v2462 = vpack.c.b16 %v1856, %v1853
    %v2463 = vpack.c.b16 %v1860, %v1857
    %v2464 = vpack.c.b16 %v1861, %v1858
    %v2465 = vpack.c.b16 %v1862, %v1859
    %v2466 = vpack.c.b16 %v1866, %v1863
    %v2467 = vpack.c.b16 %v1867, %v1864
    %v2468 = vpack.c.b16 %v1868, %v1865
    %v2469 = vpack.c.b16 %v1872, %v1869
    %v2470 = vpack.c.b16 %v1873, %v1870
    %v2471 = vpack.c.b16 %v1874, %v1871
    %v2472 = vpack.c.b16 %v1878, %v1875
    %v2473 = vpack.c.b16 %v1879, %v1876
    %v2474 = vpack.c.b16 %v1880, %v1877
    %v2475 = vpack.c.b16 %v1884, %v1881
    %v2476 = vpack.c.b16 %v1885, %v1882
    %v2477 = vpack.c.b16 %v1886, %v1883
    %v2478 = vpack.c.b16 %v1890, %v1887
    %v2479 = vpack.c.b16 %v1891, %v1888
    %v2480 = vpack.c.b16 %v1892, %v1889
    %v2481 = vpack.c.b16 %v1896, %v1893
    %v2482 = vpack.c.b16 %v1897, %v1894
    %v2483 = vpack.c.b16 %v1898, %v1895
    %v2484 = vpack.c.b16 %v1902, %v1899
    %v2485 = vpack.c.b16 %v1903, %v1900
    %v2486 = vpack.c.b16 %v1904, %v1901
    %v2487 = vpack.c.b16 %v1908, %v1905
    %v2488 = vpack.c.b16 %v1909, %v1906
    %v2489 = vpack.c.b16 %v1910, %v1907
    %v2490 = vpack.c.b16 %v1914, %v1911
    %v2491 = vpack.c.b16 %v1915, %v1912
    %v2492 = vpack.c.b16 %v1916, %v1913
    %v2493 = vpack.c.b16 %v1920, %v1917
    %v2494 = vpack.c.b16 %v1921, %v1918
    %v2495 = vpack.c.b16 %v1922, %v1919
    %v2496 = vpack.c.b16 %v1926, %v1923
    %v2497 = vpack.c.b16 %v1927, %v1924
    %v2498 = vpack.c.b16 %v1928, %v1925
    %v2499 = vpack.c.b16 %v1932, %v1929
    %v2500 = vpack.c.b16 %v1933, %v1930
    %v2501 = vpack.c.b16 %v1934, %v1931
    %v2502 = vpack.c.b16 %v1938, %v1935
    %v2503 = vpack.c.b16 %v1939, %v1936
    %v2504 = vpack.c.b16 %v1940, %v1937
    %v2505 = vpack.c.b16 %v1944, %v1941
    %v2506 = vpack.c.b16 %v1945, %v1942
    %v2507 = vpack.c.b16 %v1946, %v1943
    %v2508 = vpack.c.b16 %v1950, %v1947
    %v2509 = vpack.c.b16 %v1951, %v1948
    %v2510 = vpack.c.b16 %v1952, %v1949
    %v2511 = vpack.c.b16 %v1956, %v1953
    %v2512 = vpack.c.b16 %v1957, %v1954
    %v2513 = vpack.c.b16 %v1958, %v1955
    %v2514 = vpack.c.b16 %v1962, %v1959
    %v2515 = vpack.c.b16 %v1963, %v1960
    %v2516 = vpack.c.b16 %v1964, %v1961
    %v2517 = vpack.c.b16 %v1968, %v1965
    %v2518 = vpack.c.b16 %v1969, %v1966
    %v2519 = vpack.c.b16 %v1970, %v1967
    %v2520 = vpack.c.b16 %v1974, %v1971
    %v2521 = vpack.c.b16 %v1975, %v1972
    %v2522 = vpack.c.b16 %v1976, %v1973
    %v2523 = vpack.c.b16 %v1980, %v1977
    %v2524 = vpack.c.b16 %v1981, %v1978
    %v2525 = vpack.c.b16 %v1982, %v1979
    %v2526 = vpack.c.b16 %v1986, %v1983
    %v2527 = vpack.c.b16 %v1987, %v1984
    %v2528 = vpack.c.b16 %v1988, %v1985
    %v2529 = vpack.c.b16 %v1992, %v1989
    %v2530 = vpack.c.b16 %v1993, %v1990
    %v2531 = vpack.c.b16 %v1994, %v1991
    %v2532 = vpack.c.b16 %v1998, %v1995
    %v2533 = vpack.c.b16 %v1999, %v1996
    %v2534 = vpack.c.b16 %v2000, %v1997
    %v2535 = vpack.c.b16 %v2004, %v2001
    %v2536 = vpack.c.b16 %v2005, %v2002
    %v2537 = vpack.c.b16 %v2006, %v2003
    %v2538 = vpack.c.b16 %v2010, %v2007
    %v2539 = vpack.c.b16 %v2011, %v2008
    %v2540 = vpack.c.b16 %v2012, %v2009
    %v2541 = vpack.c.b16 %v2016, %v2013
    %v2542 = vpack.c.b16 %v2017, %v2014
    %v2543 = vpack.c.b16 %v2018, %v2015
    %v2544 = vpack.c.b16 %v2022, %v2019
    %v2545 = vpack.c.b16 %v2023, %v2020
    %v2546 = vpack.c.b16 %v2024, %v2021
    %v2547 = vpack.c.b16 %v2028, %v2025
    %v2548 = vpack.c.b16 %v2029, %v2026
    %v2549 = vpack.c.b16 %v2030, %v2027
    %v2550 = vpack.c.b16 %v2034, %v2031
    %v2551 = vpack.c.b16 %v2035, %v2032
    %v2552 = vpack.c.b16 %v2036, %v2033
    %v2553 = vpack.c.b16 %v2040, %v2037
    %v2554 = vpack.c.b16 %v2041, %v2038
    %v2555 = vpack.c.b16 %v2042, %v2039
    %v2556 = vpack.c.b16 %v2046, %v2043
    %v2557 = vpack.c.b16 %v2047, %v2044
    %v2558 = vpack.c.b16 %v2048, %v2045
    %v2559 = vpack.c.b16 %v2052, %v2049
    %v2560 = vpack.c.b16 %v2053, %v2050
    %v2561 = vpack.c.b16 %v2054, %v2051
    %v2562 = vpack.c.b16 %v2058, %v2055
    %v2563 = vpack.c.b16 %v2059, %v2056
    %v2564 = vpack.c.b16 %v2060, %v2057
    %v2565 = vpack.c.b16 %v2064, %v2061
    %v2566 = vpack.c.b16 %v2065, %v2062
    %v2567 = vpack.c.b16 %v2066, %v2063
    %v2568 = vpack.c.b16 %v2070, %v2067
    %v2569 = vpack.c.b16 %v2071, %v2068
    %v2570 = vpack.c.b16 %v2072, %v2069
    %v2571 = vpack.c.b16 %v2076, %v2073
    %v2572 = vpack.c.b16 %v2077, %v2074
    %v2573 = vpack.c.b16 %v2078, %v2075
    %v2574 = vpack.c.b16 %v2082, %v2079
    %v2575 = vpack.c.b16 %v2083, %v2080
    %v2576 = vpack.c.b16 %v2084, %v2081
    %v2577 = vpack.c.b16 %v2088, %v2085
    %v2578 = vpack.c.b16 %v2089, %v2086
    %v2579 = vpack.c.b16 %v2090, %v2087
    %v2580 = vpack.c.b16 %v2094, %v2091
    %v2581 = vpack.c.b16 %v2095, %v2092
    %v2582 = vpack.c.b16 %v2096, %v2093
    %v2583 = vpack.c.b16 %v2100, %v2097
    %v2584 = vpack.c.b16 %v2101, %v2098
    %v2585 = vpack.c.b16 %v2102, %v2099
    %v2586 = vpack.c.b16 %v2106, %v2103
    %v2587 = vpack.c.b16 %v2107, %v2104
    %v2588 = vpack.c.b16 %v2108, %v2105
    %v2589 = vpack.c.b16 %v2112, %v2109
    %v2590 = vpack.c.b16 %v2113, %v2110
    %v2591 = vpack.c.b16 %v2114, %v2111
    %v2592 = vpack.c.b16 %v2118, %v2115
    %v2593 = vpack.c.b16 %v2119, %v2116
    %v2594 = vpack.c.b16 %v2120, %v2117
    %v2595 = vpack.c.b16 %v2124, %v2121
    %v2596 = vpack.c.b16 %v2125, %v2122
    %v2597 = vpack.c.b16 %v2126, %v2123
    %v2598 = vpack.c.b16 %v2130, %v2127
    %v2599 = vpack.c.b16 %v2131, %v2128
    %v2600 = vpack.c.b16 %v2132, %v2129
    %v2601 = vpack.c.b16 %v2136, %v2133
    %v2602 = vpack.c.b16 %v2137, %v2134
    %v2603 = vpack.c.b16 %v2138, %v2135
    %v2604 = vpack.c.b16 %v2142, %v2139
    %v2605 = vpack.c.b16 %v2143, %v2140
    %v2606 = vpack.c.b16 %v2144, %v2141
    %v2607 = vpack.c.b16 %v2148, %v2145
    %v2608 = vpack.c.b16 %v2149, %v2146
    %v2609 = vpack.c.b16 %v2150, %v2147
    %v2610 = vpack.c.b16 %v2154, %v2151
    %v2611 = vpack.c.b16 %v2155, %v2152
    %v2612 = vpack.c.b16 %v2156, %v2153
    %v2613 = vpack.c.b16 %v2160, %v2157
    %v2614 = vpack.c.b16 %v2161, %v2158
    %v2615 = vpack.c.b16 %v2162, %v2159
    %v2616 = vpack.c.b16 %v2166, %v2163
    %v2617 = vpack.c.b16 %v2167, %v2164
    %v2618 = vpack.c.b16 %v2168, %v2165
    %v2619 = vpack.c.b16 %v2172, %v2169
    %v2620 = vpack.c.b16 %v2173, %v2170
    %v2621 = vpack.c.b16 %v2174, %v2171
    %v2622 = vpack.c.b16 %v2178, %v2175
    %v2623 = vpack.c.b16 %v2179, %v2176
    %v2624 = vpack.c.b16 %v2180, %v2177
    %v2625 = vpack.c.b16 %v2184, %v2181
    %v2626 = vpack.c.b16 %v2185, %v2182
    %v2627 = vpack.c.b16 %v2186, %v2183
    %v2628 = vpack.c.b16 %v2190, %v2187
    %v2629 = vpack.c.b16 %v2191, %v2188
    %v2630 = vpack.c.b16 %v2192, %v2189
    %v2631 = vpack.c.b16 %v2196, %v2193
    %v2632 = vpack.c.b16 %v2197, %v2194
    %v2633 = vpack.c.b16 %v2198, %v2195
    %v2634 = vpack.c.b16 %v2202, %v2199
    %v2635 = vpack.c.b16 %v2203, %v2200
    %v2636 = vpack.c.b16 %v2204, %v2201
    %3069 = vmatprep.subr.bf16.mxu0 %v2206
    %3070 = vmatpush1.bf16.msra.mxu0 %v2205
    %3071 = vmatprep.subr.bf16.mxu0 %v2209
    %3072 = vmatpush1.bf16.msra.mxu0 %v2208
    %3073 = vmatprep.subr.bf16.mxu0 %v2212
    %3074 = vmatpush1.bf16.msra.mxu0 %v2211
    %3075 = vmatprep.subr.bf16.mxu0 %v2215
    %3076 = vmatpush1.bf16.msra.mxu0 %v2214
    %3077 = vmatprep.subr.bf16.mxu0 %v2218
    %3078 = vmatpush1.bf16.msra.mxu0 %v2217
    %3079 = vmatprep.subr.bf16.mxu0 %v2221
    %3080 = vmatpush1.bf16.msra.mxu0 %v2220
    %3081 = vmatprep.subr.bf16.mxu0 %v2224
    %3082 = vmatpush1.bf16.msra.mxu0 %v2223
    %3083 = vmatprep.subr.bf16.mxu0 %v2227
    %3084 = vmatpush1.bf16.msra.mxu0 %v2226
    %3085 = vmatprep.subr.bf16.mxu0 %v2230
    %3086 = vmatpush1.bf16.msra.mxu0 %v2229
    %3087 = vmatprep.subr.bf16.mxu0 %v2233
    %3088 = vmatpush1.bf16.msra.mxu0 %v2232
    %3089 = vmatprep.subr.bf16.mxu0 %v2236
    %3090 = vmatpush1.bf16.msra.mxu0 %v2235
    %3091 = vmatprep.subr.bf16.mxu0 %v2239
    %3092 = vmatpush1.bf16.msra.mxu0 %v2238
    %3093 = vmatprep.subr.bf16.mxu0 %v2242
    %3094 = vmatpush1.bf16.msra.mxu0 %v2241
    %3095 = vmatprep.subr.bf16.mxu0 %v2245
    %3096 = vmatpush1.bf16.msra.mxu0 %v2244
    %3097 = vmatprep.subr.bf16.mxu0 %v2248
    %3098 = vmatpush1.bf16.msra.mxu0 %v2247
    %3099 = vmatprep.subr.bf16.mxu0 %v2251
    %3100 = vmatpush1.bf16.msra.mxu0 %v2250
    %3101 = vmatprep.mubr.bf16.mxu0 %v664
    %3102 = vmatmul.mubr.bf16.gmra.mrb[0].mxu0 %v650
    %v3103 = vpop.f32.mrb[0].mxu0
    %v3104 = vadd.f32 %v612, %v3103
    %v3105 = vpop.f32.mrb[0].mxu0
    %v3106 = vadd.f32 %v616, %v3105
    %v3107 = vpop.f32.mrb[0].mxu0
    %v3108 = vpop.f32.mrb[0].mxu0
    %3109 = vdwg.mxu0
    %3110 = vmatprep.subr.bf16.mxu0 %v2254
    %3111 = vmatpush1.bf16.msra.mxu0 %v2253
    %3112 = vmatprep.subr.bf16.mxu0 %v2257
    %3113 = vmatpush1.bf16.msra.mxu0 %v2256
    %3114 = vmatprep.subr.bf16.mxu0 %v2260
    %3115 = vmatpush1.bf16.msra.mxu0 %v2259
    %3116 = vmatprep.subr.bf16.mxu0 %v2263
    %3117 = vmatpush1.bf16.msra.mxu0 %v2262
    %3118 = vmatprep.subr.bf16.mxu0 %v2266
    %3119 = vmatpush1.bf16.msra.mxu0 %v2265
    %3120 = vmatprep.subr.bf16.mxu0 %v2269
    %3121 = vmatpush1.bf16.msra.mxu0 %v2268
    %3122 = vmatprep.subr.bf16.mxu0 %v2272
    %3123 = vmatpush1.bf16.msra.mxu0 %v2271
    %3124 = vmatprep.subr.bf16.mxu0 %v2275
    %3125 = vmatpush1.bf16.msra.mxu0 %v2274
    %3126 = vmatprep.subr.bf16.mxu0 %v2278
    %3127 = vmatpush1.bf16.msra.mxu0 %v2277
    %3128 = vmatprep.subr.bf16.mxu0 %v2281
    %3129 = vmatpush1.bf16.msra.mxu0 %v2280
    %3130 = vmatprep.subr.bf16.mxu0 %v2284
    %3131 = vmatpush1.bf16.msra.mxu0 %v2283
    %3132 = vmatprep.subr.bf16.mxu0 %v2287
    %3133 = vmatpush1.bf16.msra.mxu0 %v2286
    %3134 = vmatprep.subr.bf16.mxu0 %v2290
    %3135 = vmatpush1.bf16.msra.mxu0 %v2289
    %3136 = vmatprep.subr.bf16.mxu0 %v2293
    %3137 = vmatpush1.bf16.msra.mxu0 %v2292
    %3138 = vmatprep.subr.bf16.mxu0 %v2296
    %3139 = vmatpush1.bf16.msra.mxu0 %v2295
    %3140 = vmatprep.subr.bf16.mxu0 %v2299
    %3141 = vmatpush1.bf16.msra.mxu0 %v2298
    %3142 = vmatprep.mubr.bf16.mxu0 %v674
    %3143 = vmatmul.mubr.bf16.gmra.mrb[0].mxu0 %v672
    %v3144 = vpop.f32.mrb[0].mxu0
    %v3145 = vadd.f32 %v3104, %v3144
    %v3146 = vpop.f32.mrb[0].mxu0
    %v3147 = vadd.f32 %v3106, %v3146
    %v3148 = vpop.f32.mrb[0].mxu0
    %v3149 = vpop.f32.mrb[0].mxu0
    %3150 = vdwg.mxu0
    %3151 = vmatprep.subr.bf16.mxu0 %v2302
    %3152 = vmatpush1.bf16.msra.mxu0 %v2301
    %3153 = vmatprep.subr.bf16.mxu0 %v2305
    %3154 = vmatpush1.bf16.msra.mxu0 %v2304
    %3155 = vmatprep.subr.bf16.mxu0 %v2308
    %3156 = vmatpush1.bf16.msra.mxu0 %v2307
    %3157 = vmatprep.subr.bf16.mxu0 %v2311
    %3158 = vmatpush1.bf16.msra.mxu0 %v2310
    %3159 = vmatprep.subr.bf16.mxu0 %v2314
    %3160 = vmatpush1.bf16.msra.mxu0 %v2313
    %3161 = vmatprep.subr.bf16.mxu0 %v2317
    %3162 = vmatpush1.bf16.msra.mxu0 %v2316
    %3163 = vmatprep.subr.bf16.mxu0 %v2320
    %3164 = vmatpush1.bf16.msra.mxu0 %v2319
    %3165 = vmatprep.subr.bf16.mxu0 %v2323
    %3166 = vmatpush1.bf16.msra.mxu0 %v2322
    %3167 = vmatprep.subr.bf16.mxu0 %v2326
    %3168 = vmatpush1.bf16.msra.mxu0 %v2325
    %3169 = vmatprep.subr.bf16.mxu0 %v2329
    %3170 = vmatpush1.bf16.msra.mxu0 %v2328
    %3171 = vmatprep.subr.bf16.mxu0 %v2332
    %3172 = vmatpush1.bf16.msra.mxu0 %v2331
    %3173 = vmatprep.subr.bf16.mxu0 %v2335
    %3174 = vmatpush1.bf16.msra.mxu0 %v2334
    %3175 = vmatprep.subr.bf16.mxu0 %v2338
    %3176 = vmatpush1.bf16.msra.mxu0 %v2337
    %3177 = vmatprep.subr.bf16.mxu0 %v2341
    %3178 = vmatpush1.bf16.msra.mxu0 %v2340
    %3179 = vmatprep.subr.bf16.mxu0 %v2344
    %3180 = vmatpush1.bf16.msra.mxu0 %v2343
    %3181 = vmatprep.subr.bf16.mxu0 %v2347
    %3182 = vmatpush1.bf16.msra.mxu0 %v2346
    %3183 = vmatprep.mubr.bf16.mxu0 %v671
    %3184 = vmatmul.mubr.bf16.gmra.mrb[0].mxu0 %v657
    %v3185 = vpop.f32.mrb[0].mxu0
    %v3186 = vadd.f32 %v3145, %v3185
    %v3187 = vpop.f32.mrb[0].mxu0
    %v3188 = vadd.f32 %v3147, %v3187
    %v3189 = vpop.f32.mrb[0].mxu0
    %v3190 = vpop.f32.mrb[0].mxu0
    %3191 = vdwg.mxu0
    %3192 = vmatprep.subr.bf16.mxu0 %v2350
    %3193 = vmatpush1.bf16.msra.mxu0 %v2349
    %3194 = vmatprep.subr.bf16.mxu0 %v2353
    %3195 = vmatpush1.bf16.msra.mxu0 %v2352
    %3196 = vmatprep.subr.bf16.mxu0 %v2356
    %3197 = vmatpush1.bf16.msra.mxu0 %v2355
    %3198 = vmatprep.subr.bf16.mxu0 %v2359
    %3199 = vmatpush1.bf16.msra.mxu0 %v2358
    %3200 = vmatprep.subr.bf16.mxu0 %v2362
    %3201 = vmatpush1.bf16.msra.mxu0 %v2361
    %3202 = vmatprep.subr.bf16.mxu0 %v2365
    %3203 = vmatpush1.bf16.msra.mxu0 %v2364
    %3204 = vmatprep.subr.bf16.mxu0 %v2368
    %3205 = vmatpush1.bf16.msra.mxu0 %v2367
    %3206 = vmatprep.subr.bf16.mxu0 %v2371
    %3207 = vmatpush1.bf16.msra.mxu0 %v2370
    %3208 = vmatprep.subr.bf16.mxu0 %v2374
    %3209 = vmatpush1.bf16.msra.mxu0 %v2373
    %3210 = vmatprep.subr.bf16.mxu0 %v2377
    %3211 = vmatpush1.bf16.msra.mxu0 %v2376
    %3212 = vmatprep.subr.bf16.mxu0 %v2380
    %3213 = vmatpush1.bf16.msra.mxu0 %v2379
    %3214 = vmatprep.subr.bf16.mxu0 %v2383
    %3215 = vmatpush1.bf16.msra.mxu0 %v2382
    %3216 = vmatprep.subr.bf16.mxu0 %v2386
    %3217 = vmatpush1.bf16.msra.mxu0 %v2385
    %3218 = vmatprep.subr.bf16.mxu0 %v2389
    %3219 = vmatpush1.bf16.msra.mxu0 %v2388
    %3220 = vmatprep.subr.bf16.mxu0 %v2392
    %3221 = vmatpush1.bf16.msra.mxu0 %v2391
    %3222 = vmatprep.subr.bf16.mxu0 %v2395
    %3223 = vmatpush1.bf16.msra.mxu0 %v2394
    %3224 = vmatprep.mubr.bf16.mxu0 %v675
    %3225 = vmatmul.mubr.bf16.gmra.mrb[0].mxu0 %v673
    %v3226 = vpop.f32.mrb[0].mxu0
    %v3227 = vadd.f32 %v3186, %v3226
    %v3228 = vpop.f32.mrb[0].mxu0
    %v3229 = vadd.f32 %v3188, %v3228
    %v3230 = vpop.f32.mrb[0].mxu0
    %v3231 = vpop.f32.mrb[0].mxu0
    %3232 = vdwg.mxu0
    %3233 = vmatprep.subr.bf16.mxu0 %v2398
    %3234 = vmatpush1.bf16.msra.mxu0 %v2397
    %3235 = vmatprep.subr.bf16.mxu0 %v2401
    %3236 = vmatpush1.bf16.msra.mxu0 %v2400
    %3237 = vmatprep.subr.bf16.mxu0 %v2404
    %3238 = vmatpush1.bf16.msra.mxu0 %v2403
    %3239 = vmatprep.subr.bf16.mxu0 %v2407
    %3240 = vmatpush1.bf16.msra.mxu0 %v2406
    %3241 = vmatprep.subr.bf16.mxu0 %v2410
    %3242 = vmatpush1.bf16.msra.mxu0 %v2409
    %3243 = vmatprep.subr.bf16.mxu0 %v2413
    %3244 = vmatpush1.bf16.msra.mxu0 %v2412
    %3245 = vmatprep.subr.bf16.mxu0 %v2416
    %3246 = vmatpush1.bf16.msra.mxu0 %v2415
    %3247 = vmatprep.subr.bf16.mxu0 %v2419
    %3248 = vmatpush1.bf16.msra.mxu0 %v2418
    %3249 = vmatprep.subr.bf16.mxu0 %v2422
    %3250 = vmatpush1.bf16.msra.mxu0 %v2421
    %3251 = vmatprep.subr.bf16.mxu0 %v2425
    %3252 = vmatpush1.bf16.msra.mxu0 %v2424
    %3253 = vmatprep.subr.bf16.mxu0 %v2428
    %3254 = vmatpush1.bf16.msra.mxu0 %v2427
    %3255 = vmatprep.subr.bf16.mxu0 %v2431
    %3256 = vmatpush1.bf16.msra.mxu0 %v2430
    %3257 = vmatprep.subr.bf16.mxu0 %v2434
    %3258 = vmatpush1.bf16.msra.mxu0 %v2433
    %3259 = vmatprep.subr.bf16.mxu0 %v2437
    %3260 = vmatpush1.bf16.msra.mxu0 %v2436
    %3261 = vmatprep.subr.bf16.mxu0 %v2440
    %3262 = vmatpush1.bf16.msra.mxu0 %v2439
    %3263 = vmatprep.subr.bf16.mxu0 %v2443
    %3264 = vmatpush1.bf16.msra.mxu0 %v2442
    %3265 = vmatprep.mubr.bf16.mxu0 %v713
    %3266 = vmatmul.mubr.bf16.gmra.mrb[0].mxu0 %v699
    %v3267 = vpop.f32.mrb[0].mxu0
    %v3268 = vadd.f32 %v3227, %v3267
    %v3269 = vpop.f32.mrb[0].mxu0
    %v3270 = vadd.f32 %v3229, %v3269
    %v3271 = vpop.f32.mrb[0].mxu0
    %v3272 = vpop.f32.mrb[0].mxu0
    %3273 = vdwg.mxu0
    %3274 = vmatprep.subr.bf16.mxu0 %v2446
    %3275 = vmatpush1.bf16.msra.mxu0 %v2445
    %3276 = vmatprep.subr.bf16.mxu0 %v2449
    %3277 = vmatpush1.bf16.msra.mxu0 %v2448
    %3278 = vmatprep.subr.bf16.mxu0 %v2452
    %3279 = vmatpush1.bf16.msra.mxu0 %v2451
    %3280 = vmatprep.subr.bf16.mxu0 %v2455
    %3281 = vmatpush1.bf16.msra.mxu0 %v2454
    %3282 = vmatprep.subr.bf16.mxu0 %v2458
    %3283 = vmatpush1.bf16.msra.mxu0 %v2457
    %3284 = vmatprep.subr.bf16.mxu0 %v2461
    %3285 = vmatpush1.bf16.msra.mxu0 %v2460
    %3286 = vmatprep.subr.bf16.mxu0 %v2464
    %3287 = vmatpush1.bf16.msra.mxu0 %v2463
    %3288 = vmatprep.subr.bf16.mxu0 %v2467
    %3289 = vmatpush1.bf16.msra.mxu0 %v2466
    %3290 = vmatprep.subr.bf16.mxu0 %v2470
    %3291 = vmatpush1.bf16.msra.mxu0 %v2469
    %3292 = vmatprep.subr.bf16.mxu0 %v2473
    %3293 = vmatpush1.bf16.msra.mxu0 %v2472
    %3294 = vmatprep.subr.bf16.mxu0 %v2476
    %3295 = vmatpush1.bf16.msra.mxu0 %v2475
    %3296 = vmatprep.subr.bf16.mxu0 %v2479
    %3297 = vmatpush1.bf16.msra.mxu0 %v2478
    %3298 = vmatprep.subr.bf16.mxu0 %v2482
    %3299 = vmatpush1.bf16.msra.mxu0 %v2481
    %3300 = vmatprep.subr.bf16.mxu0 %v2485
    %3301 = vmatpush1.bf16.msra.mxu0 %v2484
    %3302 = vmatprep.subr.bf16.mxu0 %v2488
    %3303 = vmatpush1.bf16.msra.mxu0 %v2487
    %3304 = vmatprep.subr.bf16.mxu0 %v2491
    %3305 = vmatpush1.bf16.msra.mxu0 %v2490
    %3306 = vmatprep.mubr.bf16.mxu0 %v723
    %3307 = vmatmul.mubr.bf16.gmra.mrb[0].mxu0 %v721
    %v3308 = vpop.f32.mrb[0].mxu0
    %v3309 = vadd.f32 %v3268, %v3308
    %v3310 = vpop.f32.mrb[0].mxu0
    %v3311 = vadd.f32 %v3270, %v3310
    %v3312 = vpop.f32.mrb[0].mxu0
    %v3313 = vpop.f32.mrb[0].mxu0
    %3314 = vdwg.mxu0
    %3315 = vmatprep.subr.bf16.mxu0 %v2494
    %3316 = vmatpush1.bf16.msra.mxu0 %v2493
    %3317 = vmatprep.subr.bf16.mxu0 %v2497
    %3318 = vmatpush1.bf16.msra.mxu0 %v2496
    %3319 = vmatprep.subr.bf16.mxu0 %v2500
    %3320 = vmatpush1.bf16.msra.mxu0 %v2499
    %3321 = vmatprep.subr.bf16.mxu0 %v2503
    %3322 = vmatpush1.bf16.msra.mxu0 %v2502
    %3323 = vmatprep.subr.bf16.mxu0 %v2506
    %3324 = vmatpush1.bf16.msra.mxu0 %v2505
    %3325 = vmatprep.subr.bf16.mxu0 %v2509
    %3326 = vmatpush1.bf16.msra.mxu0 %v2508
    %3327 = vmatprep.subr.bf16.mxu0 %v2512
    %3328 = vmatpush1.bf16.msra.mxu0 %v2511
    %3329 = vmatprep.subr.bf16.mxu0 %v2515
    %3330 = vmatpush1.bf16.msra.mxu0 %v2514
    %3331 = vmatprep.subr.bf16.mxu0 %v2518
    %3332 = vmatpush1.bf16.msra.mxu0 %v2517
    %3333 = vmatprep.subr.bf16.mxu0 %v2521
    %3334 = vmatpush1.bf16.msra.mxu0 %v2520
    %3335 = vmatprep.subr.bf16.mxu0 %v2524
    %3336 = vmatpush1.bf16.msra.mxu0 %v2523
    %3337 = vmatprep.subr.bf16.mxu0 %v2527
    %3338 = vmatpush1.bf16.msra.mxu0 %v2526
    %3339 = vmatprep.subr.bf16.mxu0 %v2530
    %3340 = vmatpush1.bf16.msra.mxu0 %v2529
    %3341 = vmatprep.subr.bf16.mxu0 %v2533
    %3342 = vmatpush1.bf16.msra.mxu0 %v2532
    %3343 = vmatprep.subr.bf16.mxu0 %v2536
    %3344 = vmatpush1.bf16.msra.mxu0 %v2535
    %3345 = vmatprep.subr.bf16.mxu0 %v2539
    %3346 = vmatpush1.bf16.msra.mxu0 %v2538
    %3347 = vmatprep.mubr.bf16.mxu0 %v720
    %3348 = vmatmul.mubr.bf16.gmra.mrb[0].mxu0 %v706
    %v3349 = vpop.f32.mrb[0].mxu0
    %v3350 = vadd.f32 %v3309, %v3349
    %v3351 = vpop.f32.mrb[0].mxu0
    %v3352 = vadd.f32 %v3311, %v3351
    %v3353 = vpop.f32.mrb[0].mxu0
    %v3354 = vpop.f32.mrb[0].mxu0
    %3355 = vdwg.mxu0
    %3356 = vmatprep.subr.bf16.mxu0 %v2542
    %3357 = vmatpush1.bf16.msra.mxu0 %v2541
    %3358 = vmatprep.subr.bf16.mxu0 %v2545
    %3359 = vmatpush1.bf16.msra.mxu0 %v2544
    %3360 = vmatprep.subr.bf16.mxu0 %v2548
    %3361 = vmatpush1.bf16.msra.mxu0 %v2547
    %3362 = vmatprep.subr.bf16.mxu0 %v2551
    %3363 = vmatpush1.bf16.msra.mxu0 %v2550
    %3364 = vmatprep.subr.bf16.mxu0 %v2554
    %3365 = vmatpush1.bf16.msra.mxu0 %v2553
    %3366 = vmatprep.subr.bf16.mxu0 %v2557
    %3367 = vmatpush1.bf16.msra.mxu0 %v2556
    %3368 = vmatprep.subr.bf16.mxu0 %v2560
    %3369 = vmatpush1.bf16.msra.mxu0 %v2559
    %3370 = vmatprep.subr.bf16.mxu0 %v2563
    %3371 = vmatpush1.bf16.msra.mxu0 %v2562
    %3372 = vmatprep.subr.bf16.mxu0 %v2566
    %3373 = vmatpush1.bf16.msra.mxu0 %v2565
    %3374 = vmatprep.subr.bf16.mxu0 %v2569
    %3375 = vmatpush1.bf16.msra.mxu0 %v2568
    %3376 = vmatprep.subr.bf16.mxu0 %v2572
    %3377 = vmatpush1.bf16.msra.mxu0 %v2571
    %3378 = vmatprep.subr.bf16.mxu0 %v2575
    %3379 = vmatpush1.bf16.msra.mxu0 %v2574
    %3380 = vmatprep.subr.bf16.mxu0 %v2578
    %3381 = vmatpush1.bf16.msra.mxu0 %v2577
    %3382 = vmatprep.subr.bf16.mxu0 %v2581
    %3383 = vmatpush1.bf16.msra.mxu0 %v2580
    %3384 = vmatprep.subr.bf16.mxu0 %v2584
    %3385 = vmatpush1.bf16.msra.mxu0 %v2583
    %3386 = vmatprep.subr.bf16.mxu0 %v2587
    %3387 = vmatpush1.bf16.msra.mxu0 %v2586
    %3388 = vmatprep.mubr.bf16.mxu0 %v724
    %3389 = vmatmul.mubr.bf16.gmra.mrb[0].mxu0 %v722
    %v3390 = vpop.f32.mrb[0].mxu0
    %v3391 = vadd.f32 %v3350, %v3390
    %v3392 = vpop.f32.mrb[0].mxu0
    %v3393 = vadd.f32 %v3352, %v3392
    %v3394 = vpop.f32.mrb[0].mxu0
    %v3395 = vpop.f32.mrb[0].mxu0
    %3396 = vdwg.mxu0
    %3397 = vmatprep.subr.bf16.mxu0 %v2590
    %3398 = vmatpush1.bf16.msra.mxu0 %v2589
    %3399 = vmatprep.subr.bf16.mxu0 %v2593
    %3400 = vmatpush1.bf16.msra.mxu0 %v2592
    %3401 = vmatprep.subr.bf16.mxu0 %v2596
    %3402 = vmatpush1.bf16.msra.mxu0 %v2595
    %3403 = vmatprep.subr.bf16.mxu0 %v2599
    %3404 = vmatpush1.bf16.msra.mxu0 %v2598
    %3405 = vmatprep.subr.bf16.mxu0 %v2602
    %3406 = vmatpush1.bf16.msra.mxu0 %v2601
    %3407 = vmatprep.subr.bf16.mxu0 %v2605
    %3408 = vmatpush1.bf16.msra.mxu0 %v2604
    %3409 = vmatprep.subr.bf16.mxu0 %v2608
    %3410 = vmatpush1.bf16.msra.mxu0 %v2607
    %3411 = vmatprep.subr.bf16.mxu0 %v2611
    %3412 = vmatpush1.bf16.msra.mxu0 %v2610
    %3413 = vmatprep.subr.bf16.mxu0 %v2614
    %3414 = vmatpush1.bf16.msra.mxu0 %v2613
    %3415 = vmatprep.subr.bf16.mxu0 %v2617
    %3416 = vmatpush1.bf16.msra.mxu0 %v2616
    %3417 = vmatprep.subr.bf16.mxu0 %v2620
    %3418 = vmatpush1.bf16.msra.mxu0 %v2619
    %3419 = vmatprep.subr.bf16.mxu0 %v2623
    %3420 = vmatpush1.bf16.msra.mxu0 %v2622
    %3421 = vmatprep.subr.bf16.mxu0 %v2626
    %3422 = vmatpush1.bf16.msra.mxu0 %v2625
    %3423 = vmatprep.subr.bf16.mxu0 %v2629
    %3424 = vmatpush1.bf16.msra.mxu0 %v2628
    %3425 = vmatprep.subr.bf16.mxu0 %v2632
    %3426 = vmatpush1.bf16.msra.mxu0 %v2631
    %3427 = vmatprep.subr.bf16.mxu0 %v2635
    %3428 = vmatpush1.bf16.msra.mxu0 %v2634
    %3429 = vmatprep.mubr.bf16.mxu0 %v746
    %3430 = vmatmul.mubr.bf16.gmra.mrb[0].mxu0 %v739
    %v3431 = vpop.f32.mrb[0].mxu0
    %v3432 = vadd.f32 %v3391, %v3431
    %v3433 = vpop.f32.mrb[0].mxu0
    %v3434 = vadd.f32 %v3393, %v3433
    %v3435 = vpop.f32.mrb[0].mxu0
    %v3436 = vpop.f32.mrb[0].mxu0
    %3437 = vdwg.mxu0
    %3438 = vmatprep.subr.bf16.mxu0 0
    %3439 = vmatpush1.bf16.msra.mxu0 %v2207
    %3440 = vmatprep.subr.bf16.mxu0 0
    %3441 = vmatpush1.bf16.msra.mxu0 %v2210
    %3442 = vmatprep.subr.bf16.mxu0 0
    %3443 = vmatpush1.bf16.msra.mxu0 %v2213
    %3444 = vmatprep.subr.bf16.mxu0 0
    %3445 = vmatpush1.bf16.msra.mxu0 %v2216
    %3446 = vmatprep.subr.bf16.mxu0 0
    %3447 = vmatpush1.bf16.msra.mxu0 %v2219
    %3448 = vmatprep.subr.bf16.mxu0 0
    %3449 = vmatpush1.bf16.msra.mxu0 %v2222
    %3450 = vmatprep.subr.bf16.mxu0 0
    %3451 = vmatpush1.bf16.msra.mxu0 %v2225
    %3452 = vmatprep.subr.bf16.mxu0 0
    %3453 = vmatpush1.bf16.msra.mxu0 %v2228
    %3454 = vmatprep.subr.bf16.mxu0 0
    %3455 = vmatpush1.bf16.msra.mxu0 %v2231
    %3456 = vmatprep.subr.bf16.mxu0 0
    %3457 = vmatpush1.bf16.msra.mxu0 %v2234
    %3458 = vmatprep.subr.bf16.mxu0 0
    %3459 = vmatpush1.bf16.msra.mxu0 %v2237
    %3460 = vmatprep.subr.bf16.mxu0 0
    %3461 = vmatpush1.bf16.msra.mxu0 %v2240
    %3462 = vmatprep.subr.bf16.mxu0 0
    %3463 = vmatpush1.bf16.msra.mxu0 %v2243
    %3464 = vmatprep.subr.bf16.mxu0 0
    %3465 = vmatpush1.bf16.msra.mxu0 %v2246
    %3466 = vmatprep.subr.bf16.mxu0 0
    %3467 = vmatpush1.bf16.msra.mxu0 %v2249
    %3468 = vmatprep.subr.bf16.mxu0 0
    %3469 = vmatpush1.bf16.msra.mxu0 %v2252
    %3470 = vmatprep.mubr.bf16.mxu0 %v664
    %3471 = vmatmul.mubr.bf16.gmra.mrb[0].mxu0 %v650
    %v3472 = vpop.f32.mrb[0].mxu0
    %v3473 = vadd.f32 %v620, %v3472
    %v3474 = vpop.f32.mrb[0].mxu0
    %v3475 = vpop.f32.mrb[0].mxu0
    %v3476 = vpop.f32.mrb[0].mxu0
    %3477 = vdwg.mxu0
    %3478 = vmatprep.subr.bf16.mxu0 0
    %3479 = vmatpush1.bf16.msra.mxu0 %v2255
    %3480 = vmatprep.subr.bf16.mxu0 0
    %3481 = vmatpush1.bf16.msra.mxu0 %v2258
    %3482 = vmatprep.subr.bf16.mxu0 0
    %3483 = vmatpush1.bf16.msra.mxu0 %v2261
    %3484 = vmatprep.subr.bf16.mxu0 0
    %3485 = vmatpush1.bf16.msra.mxu0 %v2264
    %3486 = vmatprep.subr.bf16.mxu0 0
    %3487 = vmatpush1.bf16.msra.mxu0 %v2267
    %3488 = vmatprep.subr.bf16.mxu0 0
    %3489 = vmatpush1.bf16.msra.mxu0 %v2270
    %3490 = vmatprep.subr.bf16.mxu0 0
    %3491 = vmatpush1.bf16.msra.mxu0 %v2273
    %3492 = vmatprep.subr.bf16.mxu0 0
    %3493 = vmatpush1.bf16.msra.mxu0 %v2276
    %3494 = vmatprep.subr.bf16.mxu0 0
    %3495 = vmatpush1.bf16.msra.mxu0 %v2279
    %3496 = vmatprep.subr.bf16.mxu0 0
    %3497 = vmatpush1.bf16.msra.mxu0 %v2282
    %3498 = vmatprep.subr.bf16.mxu0 0
    %3499 = vmatpush1.bf16.msra.mxu0 %v2285
    %3500 = vmatprep.subr.bf16.mxu0 0
    %3501 = vmatpush1.bf16.msra.mxu0 %v2288
    %3502 = vmatprep.subr.bf16.mxu0 0
    %3503 = vmatpush1.bf16.msra.mxu0 %v2291
    %3504 = vmatprep.subr.bf16.mxu0 0
    %3505 = vmatpush1.bf16.msra.mxu0 %v2294
    %3506 = vmatprep.subr.bf16.mxu0 0
    %3507 = vmatpush1.bf16.msra.mxu0 %v2297
    %3508 = vmatprep.subr.bf16.mxu0 0
    %3509 = vmatpush1.bf16.msra.mxu0 %v2300
    %3510 = vmatprep.mubr.bf16.mxu0 %v674
    %3511 = vmatmul.mubr.bf16.gmra.mrb[0].mxu0 %v672
    %v3512 = vpop.f32.mrb[0].mxu0
    %v3513 = vadd.f32 %v3473, %v3512
    %v3514 = vpop.f32.mrb[0].mxu0
    %v3515 = vpop.f32.mrb[0].mxu0
    %v3516 = vpop.f32.mrb[0].mxu0
    %3517 = vdwg.mxu0
    %3518 = vmatprep.subr.bf16.mxu0 0
    %3519 = vmatpush1.bf16.msra.mxu0 %v2303
    %3520 = vmatprep.subr.bf16.mxu0 0
    %3521 = vmatpush1.bf16.msra.mxu0 %v2306
    %3522 = vmatprep.subr.bf16.mxu0 0
    %3523 = vmatpush1.bf16.msra.mxu0 %v2309
    %3524 = vmatprep.subr.bf16.mxu0 0
    %3525 = vmatpush1.bf16.msra.mxu0 %v2312
    %3526 = vmatprep.subr.bf16.mxu0 0
    %3527 = vmatpush1.bf16.msra.mxu0 %v2315
    %3528 = vmatprep.subr.bf16.mxu0 0
    %3529 = vmatpush1.bf16.msra.mxu0 %v2318
    %3530 = vmatprep.subr.bf16.mxu0 0
    %3531 = vmatpush1.bf16.msra.mxu0 %v2321
    %3532 = vmatprep.subr.bf16.mxu0 0
    %3533 = vmatpush1.bf16.msra.mxu0 %v2324
    %3534 = vmatprep.subr.bf16.mxu0 0
    %3535 = vmatpush1.bf16.msra.mxu0 %v2327
    %3536 = vmatprep.subr.bf16.mxu0 0
    %3537 = vmatpush1.bf16.msra.mxu0 %v2330
    %3538 = vmatprep.subr.bf16.mxu0 0
    %3539 = vmatpush1.bf16.msra.mxu0 %v2333
    %3540 = vmatprep.subr.bf16.mxu0 0
    %3541 = vmatpush1.bf16.msra.mxu0 %v2336
    %3542 = vmatprep.subr.bf16.mxu0 0
    %3543 = vmatpush1.bf16.msra.mxu0 %v2339
    %3544 = vmatprep.subr.bf16.mxu0 0
    %3545 = vmatpush1.bf16.msra.mxu0 %v2342
    %3546 = vmatprep.subr.bf16.mxu0 0
    %3547 = vmatpush1.bf16.msra.mxu0 %v2345
    %3548 = vmatprep.subr.bf16.mxu0 0
    %3549 = vmatpush1.bf16.msra.mxu0 %v2348
    %3550 = vmatprep.mubr.bf16.mxu0 %v671
    %3551 = vmatmul.mubr.bf16.gmra.mrb[0].mxu0 %v657
    %v3552 = vpop.f32.mrb[0].mxu0
    %v3553 = vadd.f32 %v3513, %v3552
    %v3554 = vpop.f32.mrb[0].mxu0
    %v3555 = vpop.f32.mrb[0].mxu0
    %v3556 = vpop.f32.mrb[0].mxu0
    %3557 = vdwg.mxu0
    %3558 = vmatprep.subr.bf16.mxu0 0
    %3559 = vmatpush1.bf16.msra.mxu0 %v2351
    %3560 = vmatprep.subr.bf16.mxu0 0
    %3561 = vmatpush1.bf16.msra.mxu0 %v2354
    %3562 = vmatprep.subr.bf16.mxu0 0
    %3563 = vmatpush1.bf16.msra.mxu0 %v2357
    %3564 = vmatprep.subr.bf16.mxu0 0
    %3565 = vmatpush1.bf16.msra.mxu0 %v2360
    %3566 = vmatprep.subr.bf16.mxu0 0
    %3567 = vmatpush1.bf16.msra.mxu0 %v2363
    %3568 = vmatprep.subr.bf16.mxu0 0
    %3569 = vmatpush1.bf16.msra.mxu0 %v2366
    %3570 = vmatprep.subr.bf16.mxu0 0
    %3571 = vmatpush1.bf16.msra.mxu0 %v2369
    %3572 = vmatprep.subr.bf16.mxu0 0
    %3573 = vmatpush1.bf16.msra.mxu0 %v2372
    %3574 = vmatprep.subr.bf16.mxu0 0
    %3575 = vmatpush1.bf16.msra.mxu0 %v2375
    %3576 = vmatprep.subr.bf16.mxu0 0
    %3577 = vmatpush1.bf16.msra.mxu0 %v2378
    %3578 = vmatprep.subr.bf16.mxu0 0
    %3579 = vmatpush1.bf16.msra.mxu0 %v2381
    %3580 = vmatprep.subr.bf16.mxu0 0
    %3581 = vmatpush1.bf16.msra.mxu0 %v2384
    %3582 = vmatprep.subr.bf16.mxu0 0
    %3583 = vmatpush1.bf16.msra.mxu0 %v2387
    %3584 = vmatprep.subr.bf16.mxu0 0
    %3585 = vmatpush1.bf16.msra.mxu0 %v2390
    %3586 = vmatprep.subr.bf16.mxu0 0
    %3587 = vmatpush1.bf16.msra.mxu0 %v2393
    %3588 = vmatprep.subr.bf16.mxu0 0
    %3589 = vmatpush1.bf16.msra.mxu0 %v2396
    %3590 = vmatprep.mubr.bf16.mxu0 %v675
    %3591 = vmatmul.mubr.bf16.gmra.mrb[0].mxu0 %v673
    %v3592 = vpop.f32.mrb[0].mxu0
    %v3593 = vadd.f32 %v3553, %v3592
    %v3594 = vpop.f32.mrb[0].mxu0
    %v3595 = vpop.f32.mrb[0].mxu0
    %v3596 = vpop.f32.mrb[0].mxu0
    %3597 = vdwg.mxu0
    %3598 = vmatprep.subr.bf16.mxu0 0
    %3599 = vmatpush1.bf16.msra.mxu0 %v2399
    %3600 = vmatprep.subr.bf16.mxu0 0
    %3601 = vmatpush1.bf16.msra.mxu0 %v2402
    %3602 = vmatprep.subr.bf16.mxu0 0
    %3603 = vmatpush1.bf16.msra.mxu0 %v2405
    %3604 = vmatprep.subr.bf16.mxu0 0
    %3605 = vmatpush1.bf16.msra.mxu0 %v2408
    %3606 = vmatprep.subr.bf16.mxu0 0
    %3607 = vmatpush1.bf16.msra.mxu0 %v2411
    %3608 = vmatprep.subr.bf16.mxu0 0
    %3609 = vmatpush1.bf16.msra.mxu0 %v2414
    %3610 = vmatprep.subr.bf16.mxu0 0
    %3611 = vmatpush1.bf16.msra.mxu0 %v2417
    %3612 = vmatprep.subr.bf16.mxu0 0
    %3613 = vmatpush1.bf16.msra.mxu0 %v2420
    %3614 = vmatprep.subr.bf16.mxu0 0
    %3615 = vmatpush1.bf16.msra.mxu0 %v2423
    %3616 = vmatprep.subr.bf16.mxu0 0
    %3617 = vmatpush1.bf16.msra.mxu0 %v2426
    %3618 = vmatprep.subr.bf16.mxu0 0
    %3619 = vmatpush1.bf16.msra.mxu0 %v2429
    %3620 = vmatprep.subr.bf16.mxu0 0
    %3621 = vmatpush1.bf16.msra.mxu0 %v2432
    %3622 = vmatprep.subr.bf16.mxu0 0
    %3623 = vmatpush1.bf16.msra.mxu0 %v2435
    %3624 = vmatprep.subr.bf16.mxu0 0
    %3625 = vmatpush1.bf16.msra.mxu0 %v2438
    %3626 = vmatprep.subr.bf16.mxu0 0
    %3627 = vmatpush1.bf16.msra.mxu0 %v2441
    %3628 = vmatprep.subr.bf16.mxu0 0
    %3629 = vmatpush1.bf16.msra.mxu0 %v2444
    %3630 = vmatprep.mubr.bf16.mxu0 %v713
    %3631 = vmatmul.mubr.bf16.gmra.mrb[0].mxu0 %v699
    %v3632 = vpop.f32.mrb[0].mxu0
    %v3633 = vadd.f32 %v3593, %v3632
    %v3634 = vpop.f32.mrb[0].mxu0
    %v3635 = vpop.f32.mrb[0].mxu0
    %v3636 = vpop.f32.mrb[0].mxu0
    %3637 = vdwg.mxu0
    %3638 = vmatprep.subr.bf16.mxu0 0
    %3639 = vmatpush1.bf16.msra.mxu0 %v2447
    %3640 = vmatprep.subr.bf16.mxu0 0
    %3641 = vmatpush1.bf16.msra.mxu0 %v2450
    %3642 = vmatprep.subr.bf16.mxu0 0
    %3643 = vmatpush1.bf16.msra.mxu0 %v2453
    %3644 = vmatprep.subr.bf16.mxu0 0
    %3645 = vmatpush1.bf16.msra.mxu0 %v2456
    %3646 = vmatprep.subr.bf16.mxu0 0
    %3647 = vmatpush1.bf16.msra.mxu0 %v2459
    %3648 = vmatprep.subr.bf16.mxu0 0
    %3649 = vmatpush1.bf16.msra.mxu0 %v2462
    %3650 = vmatprep.subr.bf16.mxu0 0
    %3651 = vmatpush1.bf16.msra.mxu0 %v2465
    %3652 = vmatprep.subr.bf16.mxu0 0
    %3653 = vmatpush1.bf16.msra.mxu0 %v2468
    %3654 = vmatprep.subr.bf16.mxu0 0
    %3655 = vmatpush1.bf16.msra.mxu0 %v2471
    %3656 = vmatprep.subr.bf16.mxu0 0
    %3657 = vmatpush1.bf16.msra.mxu0 %v2474
    %3658 = vmatprep.subr.bf16.mxu0 0
    %3659 = vmatpush1.bf16.msra.mxu0 %v2477
    %3660 = vmatprep.subr.bf16.mxu0 0
    %3661 = vmatpush1.bf16.msra.mxu0 %v2480
    %3662 = vmatprep.subr.bf16.mxu0 0
    %3663 = vmatpush1.bf16.msra.mxu0 %v2483
    %3664 = vmatprep.subr.bf16.mxu0 0
    %3665 = vmatpush1.bf16.msra.mxu0 %v2486
    %3666 = vmatprep.subr.bf16.mxu0 0
    %3667 = vmatpush1.bf16.msra.mxu0 %v2489
    %3668 = vmatprep.subr.bf16.mxu0 0
    %3669 = vmatpush1.bf16.msra.mxu0 %v2492
    %3670 = vmatprep.mubr.bf16.mxu0 %v723
    %3671 = vmatmul.mubr.bf16.gmra.mrb[0].mxu0 %v721
    %v3672 = vpop.f32.mrb[0].mxu0
    %v3673 = vadd.f32 %v3633, %v3672
    %v3674 = vpop.f32.mrb[0].mxu0
    %v3675 = vpop.f32.mrb[0].mxu0
    %v3676 = vpop.f32.mrb[0].mxu0
    %3677 = vdwg.mxu0
    %3678 = vmatprep.subr.bf16.mxu0 0
    %3679 = vmatpush1.bf16.msra.mxu0 %v2495
    %3680 = vmatprep.subr.bf16.mxu0 0
    %3681 = vmatpush1.bf16.msra.mxu0 %v2498
    %3682 = vmatprep.subr.bf16.mxu0 0
    %3683 = vmatpush1.bf16.msra.mxu0 %v2501
    %3684 = vmatprep.subr.bf16.mxu0 0
    %3685 = vmatpush1.bf16.msra.mxu0 %v2504
    %3686 = vmatprep.subr.bf16.mxu0 0
    %3687 = vmatpush1.bf16.msra.mxu0 %v2507
    %3688 = vmatprep.subr.bf16.mxu0 0
    %3689 = vmatpush1.bf16.msra.mxu0 %v2510
    %3690 = vmatprep.subr.bf16.mxu0 0
    %3691 = vmatpush1.bf16.msra.mxu0 %v2513
    %3692 = vmatprep.subr.bf16.mxu0 0
    %3693 = vmatpush1.bf16.msra.mxu0 %v2516
    %3694 = vmatprep.subr.bf16.mxu0 0
    %3695 = vmatpush1.bf16.msra.mxu0 %v2519
    %3696 = vmatprep.subr.bf16.mxu0 0
    %3697 = vmatpush1.bf16.msra.mxu0 %v2522
    %3698 = vmatprep.subr.bf16.mxu0 0
    %3699 = vmatpush1.bf16.msra.mxu0 %v2525
    %3700 = vmatprep.subr.bf16.mxu0 0
    %3701 = vmatpush1.bf16.msra.mxu0 %v2528
    %3702 = vmatprep.subr.bf16.mxu0 0
    %3703 = vmatpush1.bf16.msra.mxu0 %v2531
    %3704 = vmatprep.subr.bf16.mxu0 0
    %3705 = vmatpush1.bf16.msra.mxu0 %v2534
    %3706 = vmatprep.subr.bf16.mxu0 0
    %3707 = vmatpush1.bf16.msra.mxu0 %v2537
    %3708 = vmatprep.subr.bf16.mxu0 0
    %3709 = vmatpush1.bf16.msra.mxu0 %v2540
    %3710 = vmatprep.mubr.bf16.mxu0 %v720
    %3711 = vmatmul.mubr.bf16.gmra.mrb[0].mxu0 %v706
    %v3712 = vpop.f32.mrb[0].mxu0
    %v3713 = vadd.f32 %v3673, %v3712
    %v3714 = vpop.f32.mrb[0].mxu0
    %v3715 = vpop.f32.mrb[0].mxu0
    %v3716 = vpop.f32.mrb[0].mxu0
    %3717 = vdwg.mxu0
    %3718 = vmatprep.subr.bf16.mxu0 0
    %3719 = vmatpush1.bf16.msra.mxu0 %v2543
    %3720 = vmatprep.subr.bf16.mxu0 0
    %3721 = vmatpush1.bf16.msra.mxu0 %v2546
    %3722 = vmatprep.subr.bf16.mxu0 0
    %3723 = vmatpush1.bf16.msra.mxu0 %v2549
    %3724 = vmatprep.subr.bf16.mxu0 0
    %3725 = vmatpush1.bf16.msra.mxu0 %v2552
    %3726 = vmatprep.subr.bf16.mxu0 0
    %3727 = vmatpush1.bf16.msra.mxu0 %v2555
    %3728 = vmatprep.subr.bf16.mxu0 0
    %3729 = vmatpush1.bf16.msra.mxu0 %v2558
    %3730 = vmatprep.subr.bf16.mxu0 0
    %3731 = vmatpush1.bf16.msra.mxu0 %v2561
    %3732 = vmatprep.subr.bf16.mxu0 0
    %3733 = vmatpush1.bf16.msra.mxu0 %v2564
    %3734 = vmatprep.subr.bf16.mxu0 0
    %3735 = vmatpush1.bf16.msra.mxu0 %v2567
    %3736 = vmatprep.subr.bf16.mxu0 0
    %3737 = vmatpush1.bf16.msra.mxu0 %v2570
    %3738 = vmatprep.subr.bf16.mxu0 0
    %3739 = vmatpush1.bf16.msra.mxu0 %v2573
    %3740 = vmatprep.subr.bf16.mxu0 0
    %3741 = vmatpush1.bf16.msra.mxu0 %v2576
    %3742 = vmatprep.subr.bf16.mxu0 0
    %3743 = vmatpush1.bf16.msra.mxu0 %v2579
    %3744 = vmatprep.subr.bf16.mxu0 0
    %3745 = vmatpush1.bf16.msra.mxu0 %v2582
    %3746 = vmatprep.subr.bf16.mxu0 0
    %3747 = vmatpush1.bf16.msra.mxu0 %v2585
    %3748 = vmatprep.subr.bf16.mxu0 0
    %3749 = vmatpush1.bf16.msra.mxu0 %v2588
    %3750 = vmatprep.mubr.bf16.mxu0 %v724
    %3751 = vmatmul.mubr.bf16.gmra.mrb[0].mxu0 %v722
    %v3752 = vpop.f32.mrb[0].mxu0
    %v3753 = vadd.f32 %v3713, %v3752
    %v3754 = vpop.f32.mrb[0].mxu0
    %v3755 = vpop.f32.mrb[0].mxu0
    %v3756 = vpop.f32.mrb[0].mxu0
    %3757 = vdwg.mxu0
    %3758 = vmatprep.subr.bf16.mxu0 0
    %3759 = vmatpush1.bf16.msra.mxu0 %v2591
    %3760 = vmatprep.subr.bf16.mxu0 0
    %3761 = vmatpush1.bf16.msra.mxu0 %v2594
    %3762 = vmatprep.subr.bf16.mxu0 0
    %3763 = vmatpush1.bf16.msra.mxu0 %v2597
    %3764 = vmatprep.subr.bf16.mxu0 0
    %3765 = vmatpush1.bf16.msra.mxu0 %v2600
    %3766 = vmatprep.subr.bf16.mxu0 0
    %3767 = vmatpush1.bf16.msra.mxu0 %v2603
    %3768 = vmatprep.subr.bf16.mxu0 0
    %3769 = vmatpush1.bf16.msra.mxu0 %v2606
    %3770 = vmatprep.subr.bf16.mxu0 0
    %3771 = vmatpush1.bf16.msra.mxu0 %v2609
    %3772 = vmatprep.subr.bf16.mxu0 0
    %3773 = vmatpush1.bf16.msra.mxu0 %v2612
    %3774 = vmatprep.subr.bf16.mxu0 0
    %3775 = vmatpush1.bf16.msra.mxu0 %v2615
    %3776 = vmatprep.subr.bf16.mxu0 0
    %3777 = vmatpush1.bf16.msra.mxu0 %v2618
    %3778 = vmatprep.subr.bf16.mxu0 0
    %3779 = vmatpush1.bf16.msra.mxu0 %v2621
    %3780 = vmatprep.subr.bf16.mxu0 0
    %3781 = vmatpush1.bf16.msra.mxu0 %v2624
    %3782 = vmatprep.subr.bf16.mxu0 0
    %3783 = vmatpush1.bf16.msra.mxu0 %v2627
    %3784 = vmatprep.subr.bf16.mxu0 0
    %3785 = vmatpush1.bf16.msra.mxu0 %v2630
    %3786 = vmatprep.subr.bf16.mxu0 0
    %3787 = vmatpush1.bf16.msra.mxu0 %v2633
    %3788 = vmatprep.subr.bf16.mxu0 0
    %3789 = vmatpush1.bf16.msra.mxu0 %v2636
    %3790 = vmatprep.mubr.bf16.mxu0 %v746
    %3791 = vmatmul.mubr.bf16.gmra.mrb[0].mxu0 %v739
    %v3792 = vpop.f32.mrb[0].mxu0
    %v3793 = vadd.f32 %v3753, %v3792
    %v3794 = vpop.f32.mrb[0].mxu0
    %v3795 = vpop.f32.mrb[0].mxu0
    %v3796 = vpop.f32.mrb[0].mxu0
    %3797 = vdwg.mxu0
    %vm3798 = vcmp.gt.f32.partialorder %v3432, 0.0
    %vm3799 = vcmp.gt.f32.partialorder %v3434, 0.0
    %vm3800 = vcmp.gt.f32.partialorder %v3793, 0.0
    %v3801 = vmin.f32 %v3432, 0.0
    %v3802 = vmin.f32 %v3434, 0.0
    %v3803 = vmin.f32 %v3793, 0.0
    %v3804 = vmul.f32 %v3801, 1.442695
    %v3805 = vpow.pop %v3804
    %v3806 = vmul.f32 %v3802, 1.442695
    %v3807 = vpow.pop %v3806
    %v3808 = vmul.f32 %v3803, 1.442695
    %v3809 = vpow.pop %v3808
    %v3810 = vsub.f32 %v3805, 1.0
    %v3811 = vsub.f32 %v3807, 1.0
    %v3812 = vsub.f32 %v3809, 1.0
    %v3813 = vsel %vm3798, %v3432, %v3810
    %v3814 = vsel %vm3799, %v3434, %v3811
    %v3815 = vsel %vm3800, %v3793, %v3812
    %v3816 = vld [vmem:[%s3] sm:$0x7]
    %v3818 = vlaneseq
    %v3819 = vshrl.u32 %v3818, 7
    %v3820 = vsub.s32 0, %v3819
    %v3821 = vrot.slane %v3816, %v3820
    %v3822 = vlaneseq
    %v3823 = vshrl.u32 %v3822, 7
    %v3824 = vsub.s32 1, %v3823
    %v3825 = vrot.slane %v3816, %v3824
    %v3826 = vlaneseq
    %v3827 = vshrl.u32 %v3826, 7
    %v3828 = vsub.s32 2, %v3827
    %v3829 = vrot.slane %v3816, %v3828
    %v3833 = vmul.f32 %v3813, %v3821
    %v3834 = vmul.f32 %v3814, %v3825
    %v3835 = vmul.f32 %v3815, %v3829
    %v3836 = vld [vmem:[%s4] sm:$0x7]
    %v3838 = vlaneseq
    %v3839 = vshrl.u32 %v3838, 7
    %v3840 = vsub.s32 0, %v3839
    %v3841 = vrot.slane %v3836, %v3840
    %v3842 = vlaneseq
    %v3843 = vshrl.u32 %v3842, 7
    %v3844 = vsub.s32 1, %v3843
    %v3845 = vrot.slane %v3836, %v3844
    %v3846 = vlaneseq
    %v3847 = vshrl.u32 %v3846, 7
    %v3848 = vsub.s32 2, %v3847
    %v3849 = vrot.slane %v3836, %v3848
    %v3853 = vadd.f32 %v3833, %v3841
    %v3854 = vadd.f32 %v3834, %v3845
    %v3855 = vadd.f32 %v3835, %v3849
    %v3856 = vpack.c.bf16 %v3853, %v3853
    %v3857 = vpack.c.bf16 %v3854, %v3854
    %v3858 = vpack.c.bf16 %v3855, %v3855
    %v3859 = vld [vmem:[%s5] sm:$0xf]
    %v3860 = vld [vmem:[%s5 + $0x4] sm:$0xf]
    %v3861 = vld [vmem:[%s5 + $0x8] sm:$0xf]
    %v3862 = vld [vmem:[%s5 + $0xc] sm:$0xf]
    %v3863 = vld [vmem:[%s5 + $0x10] sm:$0xf]
    %v3864 = vld [vmem:[%s5 + $0x14] sm:$0xf]
    %v3865 = vld [vmem:[%s5 + $0x18] sm:$0xf]
    %v3866 = vld [vmem:[%s5 + $0x1c] sm:$0xf]
    %v3867 = vld [vmem:[%s5 + $0x20] sm:$0xf]
    %v3868 = vld [vmem:[%s5 + $0x24] sm:$0xf]
    %v3869 = vld [vmem:[%s5 + $0x28] sm:$0xf]
    %v3870 = vld [vmem:[%s5 + $0x2c] sm:$0xf]
    %v3871 = vld [vmem:[%s5 + $0x30] sm:$0xf]
    %v3872 = vld [vmem:[%s5 + $0x34] sm:$0xf]
    %v3873 = vld [vmem:[%s5 + $0x38] sm:$0xf]
    %v3874 = vld [vmem:[%s5 + $0x3c] sm:$0xf]
    %v3875 = vld [vmem:[%s5 + $0x40] sm:$0xf]
    %v3876 = vld [vmem:[%s5 + $0x44] sm:$0xf]
    %v3877 = vld [vmem:[%s5 + $0x48] sm:$0xf]
    %v3878 = vld [vmem:[%s5 + $0x4c] sm:$0xf]
    %v3879 = vld [vmem:[%s5 + $0x50] sm:$0xf]
    %v3880 = vld [vmem:[%s5 + $0x54] sm:$0xf]
    %v3881 = vld [vmem:[%s5 + $0x58] sm:$0xf]
    %v3882 = vld [vmem:[%s5 + $0x5c] sm:$0xf]
    %v3883 = vld [vmem:[%s5 + $0x60] sm:$0xf]
    %v3884 = vld [vmem:[%s5 + $0x64] sm:$0xf]
    %v3885 = vld [vmem:[%s5 + $0x68] sm:$0xf]
    %v3886 = vld [vmem:[%s5 + $0x6c] sm:$0xf]
    %v3887 = vld [vmem:[%s5 + $0x70] sm:$0xf]
    %v3888 = vld [vmem:[%s5 + $0x74] sm:$0xf]
    %v3889 = vld [vmem:[%s5 + $0x78] sm:$0xf]
    %v3890 = vld [vmem:[%s5 + $0x7c] sm:$0xf]
    %v3891 = vld [vmem:[%s5 + $0x80] sm:$0xf]
    %v3892 = vld [vmem:[%s5 + $0x84] sm:$0xf]
    %v3893 = vld [vmem:[%s5 + $0x88] sm:$0xf]
    %v3894 = vld [vmem:[%s5 + $0x8c] sm:$0xf]
    %v3895 = vld [vmem:[%s5 + $0x90] sm:$0xf]
    %v3896 = vld [vmem:[%s5 + $0x94] sm:$0xf]
    %v3897 = vld [vmem:[%s5 + $0x98] sm:$0xf]
    %v3898 = vld [vmem:[%s5 + $0x9c] sm:$0xf]
    %v3899 = vld [vmem:[%s5 + $0xa0] sm:$0xf]
    %v3900 = vld [vmem:[%s5 + $0xa4] sm:$0xf]
    %v3901 = vld [vmem:[%s5 + $0xa8] sm:$0xf]
    %v3902 = vld [vmem:[%s5 + $0xac] sm:$0xf]
    %v3903 = vld [vmem:[%s5 + $0xb0] sm:$0xf]
    %v3904 = vld [vmem:[%s5 + $0xb4] sm:$0xf]
    %v3905 = vld [vmem:[%s5 + $0xb8] sm:$0xf]
    %v3906 = vld [vmem:[%s5 + $0xbc] sm:$0xf]
    %v3907 = vld [vmem:[%s6] sm:$0x1]
    %v3909 = vlaneseq
    %v3910 = vshrl.u32 %v3909, 7
    %v3911 = vsub.s32 0, %v3910
    %v3912 = vrot.slane %v3907, %v3911
    %v3962 = vunpack.c.l.b16 %v3859
    %v3963 = vunpack.c.l.b16 %v3860
    %v3964 = vunpack.c.l.b16 %v3861
    %v3965 = vunpack.c.l.b16 %v3862
    %v3966 = vunpack.c.l.b16 %v3863
    %v3967 = vunpack.c.l.b16 %v3864
    %v3968 = vunpack.c.l.b16 %v3865
    %v3969 = vunpack.c.l.b16 %v3866
    %v3970 = vunpack.c.l.b16 %v3867
    %v3971 = vunpack.c.l.b16 %v3868
    %v3972 = vunpack.c.l.b16 %v3869
    %v3973 = vunpack.c.l.b16 %v3870
    %v3974 = vunpack.c.l.b16 %v3871
    %v3975 = vunpack.c.l.b16 %v3872
    %v3976 = vunpack.c.l.b16 %v3873
    %v3977 = vunpack.c.l.b16 %v3874
    %v3978 = vunpack.c.l.b16 %v3875
    %v3979 = vunpack.c.l.b16 %v3876
    %v3980 = vunpack.c.l.b16 %v3877
    %v3981 = vunpack.c.l.b16 %v3878
    %v3982 = vunpack.c.l.b16 %v3879
    %v3983 = vunpack.c.l.b16 %v3880
    %v3984 = vunpack.c.l.b16 %v3881
    %v3985 = vunpack.c.l.b16 %v3882
    %v3986 = vunpack.c.l.b16 %v3883
    %v3987 = vunpack.c.l.b16 %v3884
    %v3988 = vunpack.c.l.b16 %v3885
    %v3989 = vunpack.c.l.b16 %v3886
    %v3990 = vunpack.c.l.b16 %v3887
    %v3991 = vunpack.c.l.b16 %v3888
    %v3992 = vunpack.c.l.b16 %v3889
    %v3993 = vunpack.c.l.b16 %v3890
    %v3994 = vunpack.c.l.b16 %v3891
    %v3995 = vunpack.c.l.b16 %v3892
    %v3996 = vunpack.c.l.b16 %v3893
    %v3997 = vunpack.c.l.b16 %v3894
    %v3998 = vunpack.c.l.b16 %v3895
    %v3999 = vunpack.c.l.b16 %v3896
    %v4000 = vunpack.c.l.b16 %v3897
    %v4001 = vunpack.c.l.b16 %v3898
    %v4002 = vunpack.c.l.b16 %v3899
    %v4003 = vunpack.c.l.b16 %v3900
    %v4004 = vunpack.c.l.b16 %v3901
    %v4005 = vunpack.c.l.b16 %v3902
    %v4006 = vunpack.c.l.b16 %v3903
    %v4007 = vunpack.c.l.b16 %v3904
    %v4008 = vunpack.c.l.b16 %v3905
    %v4009 = vunpack.c.l.b16 %v3906
    %v4010 = vpack.c.b16 %v3963, %v3962
    %v4011 = vpack.c.b16 %v3965, %v3964
    %v4012 = vpack.c.b16 %v3967, %v3966
    %v4013 = vpack.c.b16 %v3969, %v3968
    %v4014 = vpack.c.b16 %v3971, %v3970
    %v4015 = vpack.c.b16 %v3973, %v3972
    %v4016 = vpack.c.b16 %v3975, %v3974
    %v4017 = vpack.c.b16 %v3977, %v3976
    %v4018 = vpack.c.b16 %v3979, %v3978
    %v4019 = vpack.c.b16 %v3981, %v3980
    %v4020 = vpack.c.b16 %v3983, %v3982
    %v4021 = vpack.c.b16 %v3985, %v3984
    %v4022 = vpack.c.b16 %v3987, %v3986
    %v4023 = vpack.c.b16 %v3989, %v3988
    %v4024 = vpack.c.b16 %v3991, %v3990
    %v4025 = vpack.c.b16 %v3993, %v3992
    %v4026 = vpack.c.b16 %v3995, %v3994
    %v4027 = vpack.c.b16 %v3997, %v3996
    %v4028 = vpack.c.b16 %v3999, %v3998
    %v4029 = vpack.c.b16 %v4001, %v4000
    %v4030 = vpack.c.b16 %v4003, %v4002
    %v4031 = vpack.c.b16 %v4005, %v4004
    %v4032 = vpack.c.b16 %v4007, %v4006
    %v4033 = vpack.c.b16 %v4009, %v4008
    %4058 = vmatprep.subr.bf16.mxu0 0
    %4059 = vmatpush1.bf16.msra.mxu0 %v4010
    %4060 = vmatprep.subr.bf16.mxu0 0
    %4061 = vmatpush1.bf16.msra.mxu0 %v4011
    %4062 = vmatprep.subr.bf16.mxu0 0
    %4063 = vmatpush1.bf16.msra.mxu0 %v4012
    %4064 = vmatprep.subr.bf16.mxu0 0
    %4065 = vmatpush1.bf16.msra.mxu0 %v4013
    %4066 = vmatprep.subr.bf16.mxu0 0
    %4067 = vmatpush1.bf16.msra.mxu0 %v4014
    %4068 = vmatprep.subr.bf16.mxu0 0
    %4069 = vmatpush1.bf16.msra.mxu0 %v4015
    %4070 = vmatprep.subr.bf16.mxu0 0
    %4071 = vmatpush1.bf16.msra.mxu0 %v4016
    %4072 = vmatprep.subr.bf16.mxu0 0
    %4073 = vmatpush1.bf16.msra.mxu0 %v4017
    %4074 = vmatprep.subr.bf16.mxu0 0
    %4075 = vmatpush1.bf16.msra.mxu0 %v4018
    %4076 = vmatprep.subr.bf16.mxu0 0
    %4077 = vmatpush1.bf16.msra.mxu0 %v4019
    %4078 = vmatprep.subr.bf16.mxu0 0
    %4079 = vmatpush1.bf16.msra.mxu0 %v4020
    %4080 = vmatprep.subr.bf16.mxu0 0
    %4081 = vmatpush1.bf16.msra.mxu0 %v4021
    %4082 = vmatprep.subr.bf16.mxu0 0
    %4083 = vmatpush1.bf16.msra.mxu0 %v4022
    %4084 = vmatprep.subr.bf16.mxu0 0
    %4085 = vmatpush1.bf16.msra.mxu0 %v4023
    %4086 = vmatprep.subr.bf16.mxu0 0
    %4087 = vmatpush1.bf16.msra.mxu0 %v4024
    %4088 = vmatprep.subr.bf16.mxu0 0
    %4089 = vmatpush1.bf16.msra.mxu0 %v4025
    %4090 = vmatprep.mubr.bf16.mxu0 %v3857
    %4091 = vmatmul.mubr.bf16.gmra.mrb[0].mxu0 %v3856
    %v4092 = vpop.f32.mrb[0].mxu0
    %v4093 = vadd.f32 %v3912, %v4092
    %v4094 = vpop.f32.mrb[0].mxu0
    %v4095 = vpop.f32.mrb[0].mxu0
    %v4096 = vpop.f32.mrb[0].mxu0
    %4097 = vdwg.mxu0
    %4098 = vmatprep.subr.bf16.mxu0 0
    %4099 = vmatpush1.bf16.msra.mxu0 %v4026
    %4100 = vmatprep.subr.bf16.mxu0 0
    %4101 = vmatpush1.bf16.msra.mxu0 %v4027
    %4102 = vmatprep.subr.bf16.mxu0 0
    %4103 = vmatpush1.bf16.msra.mxu0 %v4028
    %4104 = vmatprep.subr.bf16.mxu0 0
    %4105 = vmatpush1.bf16.msra.mxu0 %v4029
    %4106 = vmatprep.subr.bf16.mxu0 0
    %4107 = vmatpush1.bf16.msra.mxu0 %v4030
    %4108 = vmatprep.subr.bf16.mxu0 0
    %4109 = vmatpush1.bf16.msra.mxu0 %v4031
    %4110 = vmatprep.subr.bf16.mxu0 0
    %4111 = vmatpush1.bf16.msra.mxu0 %v4032
    %4112 = vmatprep.subr.bf16.mxu0 0
    %4113 = vmatpush1.bf16.msra.mxu0 %v4033
    %4114 = vmatprep.subr.bf16.mxu0 0
    %4115 = vmatpush1.bf16.msra.mxu0 0
    %4116 = vmatprep.subr.bf16.mxu0 0
    %4117 = vmatpush1.bf16.msra.mxu0 0
    %4118 = vmatprep.subr.bf16.mxu0 0
    %4119 = vmatpush1.bf16.msra.mxu0 0
    %4120 = vmatprep.subr.bf16.mxu0 0
    %4121 = vmatpush1.bf16.msra.mxu0 0
    %4122 = vmatprep.subr.bf16.mxu0 0
    %4123 = vmatpush1.bf16.msra.mxu0 0
    %4124 = vmatprep.subr.bf16.mxu0 0
    %4125 = vmatpush1.bf16.msra.mxu0 0
    %4126 = vmatprep.subr.bf16.mxu0 0
    %4127 = vmatpush1.bf16.msra.mxu0 0
    %4128 = vmatprep.subr.bf16.mxu0 0
    %4129 = vmatpush1.bf16.msra.mxu0 0
    %4130 = vmatprep.mubr.bf16.mxu0 0
    %4131 = vmatmul.mubr.bf16.gmra.mrb[0].mxu0 %v3858
    %v4132 = vpop.f32.mrb[0].mxu0
    %v4133 = vadd.f32 %v4093, %v4132
    %v4134 = vpop.f32.mrb[0].mxu0
    %v4135 = vpop.f32.mrb[0].mxu0
    %v4136 = vpop.f32.mrb[0].mxu0
    %4137 = vdwg.mxu0
    %4138 = vst [vmem:[#allocation2] sm:$0x3] %v4133
    // Predicated region
    $region30: #{gtsrb_forward.7} parent=1 // pred_check
      _
    $region31: #{gtsrb_forward.7} parent=1 // pred_check_branch
      %4140 = sbr.rel (0) target = $region33
    $region32: #{gtsrb_forward.7} parent=1 // pred_region
      %s4142 = ssub.s32 32, 32
      %4143 = vsyncadd [#allocation3], %s4142
      %s4145 = sshll.u32 [#allocation2], 4
      %s4146 = int_to_ptr.vmem [resolvable:$true] %s4145
      %4148 = dma.vmem_to_hbm [thread:$0]  %s4146, 32, %s7, [#allocation3]
    $region33: #{gtsrb_forward.7} parent=1 // pred_fallthru
      _
    // Predicated region
    $region34: #{gtsrb_forward.7} parent=1 // pred_check
      _
    $region35: #{gtsrb_forward.7} parent=1 // pred_check_branch
      %4150 = sbr.rel (0) target = $region37
    $region36: #{gtsrb_forward.7} parent=1 // pred_region
      %4151 = dma.done [#allocation3], 32
    $region37: #{gtsrb_forward.7} parent=1 // pred_fallthru
      _
    %4152 = vsyncpa [#allocation3], 1

</llo_original>
